<compile_context>
chip_gen: v7x
topology: tpu7x:2x2x1
jax: 0.10.0
libtpu: 0.0.40
codegen_flags: <defaults>
</compile_context>

<pallas_src>
import jax
import jax.numpy as jnp
from jax.experimental import pallas as pl
from jax.experimental.pallas import tpu as pltpu

NEG_SLOPE = 0.01  # nn.LeakyReLU() default negative_slope

# one-time feature flag: single-buffer grid-invariant operands via pl.Buffered(1)
_SINGLE_BUFFER_WEIGHTS = hasattr(pl, "Buffered")
_CALL_CACHE = {}  # (B, B_pad, D_in, E2, E3, tile_b, dtype) -> jitted callable


def _leaky_relu(x):
    # max(x, a*x) == LeakyReLU for 0 < a < 1 (one mul + one max, no select)
    return jnp.maximum(x, NEG_SLOPE * x)


def autoencoder_kernel(x_ref, w1_ref, b1_ref, w2_ref, b2_ref, w3_ref, b3_ref,
                       o_ref):
    # encoder layer 1: Linear(input_dim -> enc2) + LeakyReLU
    x = x_ref[...].astype(jnp.bfloat16)
    h1 = jnp.dot(x, w1_ref[...],
                 preferred_element_type=jnp.float32) + b1_ref[...]
    h1 = _leaky_relu(h1).astype(jnp.bfloat16)
    # encoder layer 2: Linear(enc2 -> enc3) + LeakyReLU
    h2 = jnp.dot(h1, w2_ref[...],
                 preferred_element_type=jnp.float32) + b2_ref[...]
    h2 = _leaky_relu(h2).astype(jnp.bfloat16)
    # decoder: Linear(enc3 -> input_dim)
    out = jnp.dot(h2, w3_ref[...],
                  preferred_element_type=jnp.float32) + b3_ref[...]
    o_ref[...] = out.astype(o_ref.dtype)


def _pick_tile_b(B, cap=256):
    """Largest multiple-of-8 divisor of B giving >= 2 grid steps (no padding)."""
    hi = min(cap, B // 2 if B >= 16 else max(B, 8))
    best = 0
    t = 8
    while t <= hi:
        if B % t == 0:
            best = t
        t += 8
    if best:
        return best
    # No suitable divisor: pad the batch; keep >= 2 grid steps when possible.
    if B > cap // 2:
        return cap // 2
    return ((B + 7) // 8) * 8


def _build_jitted(B, B_pad, D_in, E2, E3, tile_b, out_dtype, single_buffer):
    """Build (once per signature) a jitted pad -> pallas_call -> slice function."""
    grid = (B_pad // tile_b,)

    def const_spec(shape):
        # grid-invariant operand: constant index_map; single-buffer if supported
        if single_buffer:
            return pl.BlockSpec(shape, lambda i: (0, 0),
                                pipeline_mode=pl.Buffered(1))
        return pl.BlockSpec(shape, lambda i: (0, 0))

    in_specs = [
        pl.BlockSpec((tile_b, D_in), lambda i: (i, 0)),   # x tile (f32)
        const_spec((D_in, E2)),                           # w1 (bf16)
        const_spec((1, E2)),                              # b1 (f32)
        const_spec((E2, E3)),                             # w2 (bf16)
        const_spec((1, E3)),                              # b2 (f32)
        const_spec((E3, D_in)),                           # w3 (bf16)
        const_spec((1, D_in)),                            # b3 (f32)
    ]

    flops = 2 * B_pad * (D_in * E2 + E2 * E3 + E3 * D_in)
    w_bytes = 2 * (D_in * E2 + E2 * E3 + E3 * D_in)       # bf16 weights
    b_bytes = 4 * (E2 + E3 + D_in)                        # f32 biases
    io_bytes = 4 * B_pad * D_in * 2                       # f32 x + out
    cost = pl.CostEstimate(flops=flops, transcendentals=0,
                           bytes_accessed=w_bytes + b_bytes + io_bytes)

    wbuf = 1 if single_buffer else 2
    vmem_need = (wbuf * (w_bytes + b_bytes)
                 + 2 * 2 * tile_b * D_in * 4               # double-buffered x/out tiles
                 + tile_b * (E2 + E3) * 6)                 # f32 + bf16 intermediates
    vmem_limit = max(4 << 20, min(48 << 20, int(1.5 * vmem_need)))

    call = pl.pallas_call(
        autoencoder_kernel,
        out_shape=jax.ShapeDtypeStruct((B_pad, D_in), out_dtype),
        grid_spec=pltpu.PrefetchScalarGridSpec(
            num_scalar_prefetch=0,
            grid=grid,
            in_specs=in_specs,
            out_specs=pl.BlockSpec((tile_b, D_in), lambda i: (i, 0)),
        ),
        compiler_params=pltpu.CompilerParams(
            dimension_semantics=("parallel",),
            vmem_limit_bytes=vmem_limit,
        ),
        cost_estimate=cost,
    )

    @jax.jit
    def fn(x, w1, b1, w2, b2, w3, b3):
        if B_pad != B:
            x = jnp.pad(x, ((0, B_pad - B), (0, 0)))
        out = call(x, w1, b1, w2, b2, w3, b3)
        return out[:B] if B_pad != B else out

    return fn


def deep_autoencoder(x, params, *, tile_b=None):
    """x: [B, input_dim]. params: (in,out) weights (bf16) + (1,out) biases (f32)."""
    global _SINGLE_BUFFER_WEIGHTS
    B, D_in = x.shape

    def as_weight(a):
        return a if a.dtype == jnp.bfloat16 else a.astype(jnp.bfloat16)

    def as_bias(a):
        a = a if a.dtype == jnp.float32 else a.astype(jnp.float32)
        return a.reshape(1, -1) if a.ndim == 1 else a

    w1, w2, w3 = as_weight(params["w1"]), as_weight(params["w2"]), as_weight(params["w3"])
    b1, b2, b3 = as_bias(params["b1"]), as_bias(params["b2"]), as_bias(params["b3"])
    E2, E3 = w1.shape[1], w2.shape[1]

    if tile_b is None:
        tile_b = _pick_tile_b(B)
    B_pad = pl.cdiv(B, tile_b) * tile_b

    key = (B, B_pad, D_in, E2, E3, tile_b, jnp.dtype(x.dtype).name)
    args = (x, w1, b1, w2, b2, w3, b3)

    fn = _CALL_CACHE.get(key)
    if fn is None:
        if _SINGLE_BUFFER_WEIGHTS:
            try:
                fn = _build_jitted(B, B_pad, D_in, E2, E3, tile_b, x.dtype, True)
                out = fn(*args)            # compile happens here, once per signature
                _CALL_CACHE[key] = fn
                return out
            except Exception:
                # One-time feature detection only: this jax/Mosaic rejects
                # pipeline_mode=pl.Buffered(1).  Genuine kernel bugs still
                # surface in the fallback build below (it will raise).
                _SINGLE_BUFFER_WEIGHTS = False
        fn = _build_jitted(B, B_pad, D_in, E2, E3, tile_b, x.dtype, False)
        _CALL_CACHE[key] = fn
    return fn(*args)


def init_params(key, input_dim, enc2=1024, enc3=512):
    """Matches torch.nn.Linear default init; weights stored as (in,out) bf16
    (one-time conversion), biases as (1,out) f32."""
    ks = jax.random.split(key, 6)

    def lin(kw, kb, fan_in, fan_out):
        bound = 1.0 / jnp.sqrt(fan_in)
        w = jax.random.uniform(kw, (fan_in, fan_out), jnp.float32, -bound, bound)
        b = jax.random.uniform(kb, (1, fan_out), jnp.float32, -bound, bound)
        return w.astype(jnp.bfloat16), b

    w1, b1 = lin(ks[0], ks[1], input_dim, enc2)
    w2, b2 = lin(ks[2], ks[3], enc2, enc3)
    w3, b3 = lin(ks[4], ks[5], enc3, input_dim)
    return {"w1": w1, "b1": b1, "w2": w2, "b2": b2, "w3": w3, "b3": b3}


def reference(x, p):
    """Pure-JAX reference mirroring the kernel's precision (bf16 matmul inputs,
    f32 accumulation / bias / LeakyReLU)."""
    def mm(a, w):
        return jnp.dot(a.astype(jnp.bfloat16), w,
                       preferred_element_type=jnp.float32)
    h = _leaky_relu(mm(x, p["w1"]) + p["b1"])
    h = _leaky_relu(mm(h, p["w2"]) + p["b2"])
    return mm(h, p["w3"]) + p["b3"]


if __name__ == "__main__":
    key = jax.random.PRNGKey(0)
    k_x, k_p = jax.random.split(key)

    batch, input_dim = 256, 256
    x = jax.random.normal(k_x, (batch, input_dim), jnp.float32)
    params = init_params(k_p, input_dim, enc2=1024, enc3=512)

    # First call builds + compiles + caches (tile_b auto -> 128, grid=(2,)).
    out = jax.block_until_ready(deep_autoencoder(x, params))
    # Second call exercises the cached hot path (no rebuild, no retrace).
    out2 = jax.block_until_ready(deep_autoencoder(x, params))

    ref = reference(x, params)
    assert out.shape == (batch, input_dim)
    max_err = float(jnp.max(jnp.abs(out - ref)))
    assert jnp.allclose(out, ref, atol=2e-2, rtol=2e-2), max_err
    assert jnp.allclose(out, out2), "cached-call mismatch"

    print("KERNEL_OK")
</pallas_src>

<mosaic_0001>
module attributes {stable_mosaic.version = 11 : i64} {
  func.func @autoencoder_kernel(%arg0: i32, %arg1: memref<128x256xf32, #tpu.memory_space<vmem>>, %arg2: memref<256x1024xbf16, #tpu.memory_space<vmem>>, %arg3: memref<1x1024xf32, #tpu.memory_space<vmem>>, %arg4: memref<1024x512xbf16, #tpu.memory_space<vmem>>, %arg5: memref<1x512xf32, #tpu.memory_space<vmem>>, %arg6: memref<512x256xbf16, #tpu.memory_space<vmem>>, %arg7: memref<1x256xf32, #tpu.memory_space<vmem>>, %arg8: memref<128x256xf32, #tpu.memory_space<vmem>>) attributes {dimension_semantics = [#tpu.dimension_semantics<parallel>], iteration_bounds = array<i64: 2>, scalar_prefetch = 0 : i64, scratch_operands = 0 : i64, tpu.core_type = #tpu.core_type<tc>, window_params = [{transform_indices = @transform_0, window_bounds = array<i64: 128, 256>}, {pipeline_mode = #tpu.pipeline_mode<synchronous>, transform_indices = @transform_1, window_bounds = array<i64: 256, 1024>}, {pipeline_mode = #tpu.pipeline_mode<synchronous>, transform_indices = @transform_2, window_bounds = array<i64: 1, 1024>}, {pipeline_mode = #tpu.pipeline_mode<synchronous>, transform_indices = @transform_3, window_bounds = array<i64: 1024, 512>}, {pipeline_mode = #tpu.pipeline_mode<synchronous>, transform_indices = @transform_4, window_bounds = array<i64: 1, 512>}, {pipeline_mode = #tpu.pipeline_mode<synchronous>, transform_indices = @transform_5, window_bounds = array<i64: 512, 256>}, {pipeline_mode = #tpu.pipeline_mode<synchronous>, transform_indices = @transform_6, window_bounds = array<i64: 1, 256>}, {transform_indices = @transform_7, window_bounds = array<i64: 128, 256>}]} {
    %c0 = arith.constant 0 : index
    %c0_0 = arith.constant 0 : index
    %0 = vector.load %arg1[%c0, %c0_0] : memref<128x256xf32, #tpu.memory_space<vmem>>, vector<128x256xf32>
    %1 = arith.truncf %0 : vector<128x256xf32> to vector<128x256xbf16>
    %c0_1 = arith.constant 0 : index
    %c0_2 = arith.constant 0 : index
    %2 = vector.load %arg2[%c0_1, %c0_2] : memref<256x1024xbf16, #tpu.memory_space<vmem>>, vector<256x1024xbf16>
    %cst = arith.constant dense<0.000000e+00> : vector<128x1024xf32>
    %3 = tpu.matmul %1, %2, %cst {dimension_numbers = #tpu.dot_dimension_numbers<[1], [0], [0], [1], [0, 0, 1, 1], [], []>} : vector<128x256xbf16>, vector<256x1024xbf16>, vector<128x1024xf32> -> vector<128x1024xf32>
    %c0_3 = arith.constant 0 : index
    %c0_4 = arith.constant 0 : index
    %4 = vector.load %arg3[%c0_3, %c0_4] : memref<1x1024xf32, #tpu.memory_space<vmem>>, vector<1x1024xf32>
    %5 = vector.broadcast %4 : vector<1x1024xf32> to vector<128x1024xf32>
    %6 = arith.addf %3, %5 : vector<128x1024xf32>
    %cst_5 = arith.constant 0.00999999977 : f32
    %7 = vector.broadcast %cst_5 : f32 to vector<128x1024xf32>
    %8 = arith.mulf %7, %6 : vector<128x1024xf32>
    %9 = arith.maximumf %6, %8 : vector<128x1024xf32>
    %10 = arith.truncf %9 : vector<128x1024xf32> to vector<128x1024xbf16>
    %c0_6 = arith.constant 0 : index
    %c0_7 = arith.constant 0 : index
    %11 = vector.load %arg4[%c0_6, %c0_7] : memref<1024x512xbf16, #tpu.memory_space<vmem>>, vector<1024x512xbf16>
    %cst_8 = arith.constant dense<0.000000e+00> : vector<128x512xf32>
    %12 = tpu.matmul %10, %11, %cst_8 {dimension_numbers = #tpu.dot_dimension_numbers<[1], [0], [0], [1], [0, 0, 1, 1], [], []>} : vector<128x1024xbf16>, vector<1024x512xbf16>, vector<128x512xf32> -> vector<128x512xf32>
    %c0_9 = arith.constant 0 : index
    %c0_10 = arith.constant 0 : index
    %13 = vector.load %arg5[%c0_9, %c0_10] : memref<1x512xf32, #tpu.memory_space<vmem>>, vector<1x512xf32>
    %14 = vector.broadcast %13 : vector<1x512xf32> to vector<128x512xf32>
    %15 = arith.addf %12, %14 : vector<128x512xf32>
    %cst_11 = arith.constant 0.00999999977 : f32
    %16 = vector.broadcast %cst_11 : f32 to vector<128x512xf32>
    %17 = arith.mulf %16, %15 : vector<128x512xf32>
    %18 = arith.maximumf %15, %17 : vector<128x512xf32>
    %19 = arith.truncf %18 : vector<128x512xf32> to vector<128x512xbf16>
    %c0_12 = arith.constant 0 : index
    %c0_13 = arith.constant 0 : index
    %20 = vector.load %arg6[%c0_12, %c0_13] : memref<512x256xbf16, #tpu.memory_space<vmem>>, vector<512x256xbf16>
    %cst_14 = arith.constant dense<0.000000e+00> : vector<128x256xf32>
    %21 = tpu.matmul %19, %20, %cst_14 {dimension_numbers = #tpu.dot_dimension_numbers<[1], [0], [0], [1], [0, 0, 1, 1], [], []>} : vector<128x512xbf16>, vector<512x256xbf16>, vector<128x256xf32> -> vector<128x256xf32>
    %c0_15 = arith.constant 0 : index
    %c0_16 = arith.constant 0 : index
    %22 = vector.load %arg7[%c0_15, %c0_16] : memref<1x256xf32, #tpu.memory_space<vmem>>, vector<1x256xf32>
    %23 = vector.broadcast %22 : vector<1x256xf32> to vector<128x256xf32>
    %24 = arith.addf %21, %23 : vector<128x256xf32>
    %c0_17 = arith.constant 0 : index
    %c0_18 = arith.constant 0 : index
    %25 = vector.load %arg8[%c0_17, %c0_18] : memref<128x256xf32, #tpu.memory_space<vmem>>, vector<128x256xf32>
    tpu.vector_store %arg8[%c0_17, %c0_18], %24 {strides = array<i32>} : memref<128x256xf32, #tpu.memory_space<vmem>>, vector<128x256xf32>,
    return
  }
  func.func @transform_0(%arg0: i32) -> (i32, i32) {
    %c0_i32 = arith.constant 0 : i32
    %c0_i32_0 = arith.constant 0 : i32
    return %arg0, %c0_i32 : i32, i32
  }
  func.func @transform_1(%arg0: i32) -> (i32, i32) {
    %c0_i32 = arith.constant 0 : i32
    %c0_i32_0 = arith.constant 0 : i32
    %c0_i32_1 = arith.constant 0 : i32
    return %c0_i32, %c0_i32_0 : i32, i32
  }
  func.func @transform_2(%arg0: i32) -> (i32, i32) {
    %c0_i32 = arith.constant 0 : i32
    %c0_i32_0 = arith.constant 0 : i32
    %c0_i32_1 = arith.constant 0 : i32
    return %c0_i32, %c0_i32_0 : i32, i32
  }
  func.func @transform_3(%arg0: i32) -> (i32, i32) {
    %c0_i32 = arith.constant 0 : i32
    %c0_i32_0 = arith.constant 0 : i32
    %c0_i32_1 = arith.constant 0 : i32
    return %c0_i32, %c0_i32_0 : i32, i32
  }
  func.func @transform_4(%arg0: i32) -> (i32, i32) {
    %c0_i32 = arith.constant 0 : i32
    %c0_i32_0 = arith.constant 0 : i32
    %c0_i32_1 = arith.constant 0 : i32
    return %c0_i32, %c0_i32_0 : i32, i32
  }
  func.func @transform_5(%arg0: i32) -> (i32, i32) {
    %c0_i32 = arith.constant 0 : i32
    %c0_i32_0 = arith.constant 0 : i32
    %c0_i32_1 = arith.constant 0 : i32
    return %c0_i32, %c0_i32_0 : i32, i32
  }
  func.func @transform_6(%arg0: i32) -> (i32, i32) {
    %c0_i32 = arith.constant 0 : i32
    %c0_i32_0 = arith.constant 0 : i32
    %c0_i32_1 = arith.constant 0 : i32
    return %c0_i32, %c0_i32_0 : i32, i32
  }
  func.func @transform_7(%arg0: i32) -> (i32, i32) {
    %c0_i32 = arith.constant 0 : i32
    %c0_i32_0 = arith.constant 0 : i32
    return %arg0, %c0_i32 : i32, i32
  }
}

module attributes {stable_mosaic.version = 11 : i64} {
  func.func @autoencoder_kernel(%arg0: i32, %arg1: memref<128x256xf32, #tpu.memory_space<vmem>>, %arg2: memref<256x1024xbf16, #tpu.memory_space<vmem>>, %arg3: memref<1x1024xf32, #tpu.memory_space<vmem>>, %arg4: memref<1024x512xbf16, #tpu.memory_space<vmem>>, %arg5: memref<1x512xf32, #tpu.memory_space<vmem>>, %arg6: memref<512x256xbf16, #tpu.memory_space<vmem>>, %arg7: memref<1x256xf32, #tpu.memory_space<vmem>>, %arg8: memref<128x256xf32, #tpu.memory_space<vmem>>) attributes {dimension_semantics = [#tpu.dimension_semantics<parallel>], iteration_bounds = array<i64: 2>, scalar_prefetch = 0 : i64, scratch_operands = 0 : i64, tpu.core_type = #tpu.core_type<tc>, window_params = [{transform_indices = @transform_0, window_bounds = array<i64: 128, 256>}, {pipeline_mode = #tpu.pipeline_mode<synchronous>, transform_indices = @transform_1, window_bounds = array<i64: 256, 1024>}, {pipeline_mode = #tpu.pipeline_mode<synchronous>, transform_indices = @transform_2, window_bounds = array<i64: 1, 1024>}, {pipeline_mode = #tpu.pipeline_mode<synchronous>, transform_indices = @transform_3, window_bounds = array<i64: 1024, 512>}, {pipeline_mode = #tpu.pipeline_mode<synchronous>, transform_indices = @transform_4, window_bounds = array<i64: 1, 512>}, {pipeline_mode = #tpu.pipeline_mode<synchronous>, transform_indices = @transform_5, window_bounds = array<i64: 512, 256>}, {pipeline_mode = #tpu.pipeline_mode<synchronous>, transform_indices = @transform_6, window_bounds = array<i64: 1, 256>}, {transform_indices = @transform_7, window_bounds = array<i64: 128, 256>}]} {
    %c0 = arith.constant 0 : index
    %c0_0 = arith.constant 0 : index
    %0 = vector.load %arg1[%c0, %c0_0] : memref<128x256xf32, #tpu.memory_space<vmem>>, vector<128x256xf32>
    %1 = arith.truncf %0 : vector<128x256xf32> to vector<128x256xbf16>
    %c0_1 = arith.constant 0 : index
    %c0_2 = arith.constant 0 : index
    %2 = vector.load %arg2[%c0_1, %c0_2] : memref<256x1024xbf16, #tpu.memory_space<vmem>>, vector<256x1024xbf16>
    %cst = arith.constant dense<0.000000e+00> : vector<128x1024xf32>
    %3 = tpu.matmul %1, %2, %cst {dimension_numbers = #tpu.dot_dimension_numbers<[1], [0], [0], [1], [0, 0, 1, 1], [], []>} : vector<128x256xbf16>, vector<256x1024xbf16>, vector<128x1024xf32> -> vector<128x1024xf32>
    %c0_3 = arith.constant 0 : index
    %c0_4 = arith.constant 0 : index
    %4 = vector.load %arg3[%c0_3, %c0_4] : memref<1x1024xf32, #tpu.memory_space<vmem>>, vector<1x1024xf32>
    %5 = vector.broadcast %4 : vector<1x1024xf32> to vector<128x1024xf32>
    %6 = arith.addf %3, %5 : vector<128x1024xf32>
    %cst_5 = arith.constant 0.00999999977 : f32
    %7 = vector.broadcast %cst_5 : f32 to vector<128x1024xf32>
    %8 = arith.mulf %7, %6 : vector<128x1024xf32>
    %9 = arith.maximumf %6, %8 : vector<128x1024xf32>
    %10 = arith.truncf %9 : vector<128x1024xf32> to vector<128x1024xbf16>
    %c0_6 = arith.constant 0 : index
    %c0_7 = arith.constant 0 : index
    %11 = vector.load %arg4[%c0_6, %c0_7] : memref<1024x512xbf16, #tpu.memory_space<vmem>>, vector<1024x512xbf16>
    %cst_8 = arith.constant dense<0.000000e+00> : vector<128x512xf32>
    %12 = tpu.matmul %10, %11, %cst_8 {dimension_numbers = #tpu.dot_dimension_numbers<[1], [0], [0], [1], [0, 0, 1, 1], [], []>} : vector<128x1024xbf16>, vector<1024x512xbf16>, vector<128x512xf32> -> vector<128x512xf32>
    %c0_9 = arith.constant 0 : index
    %c0_10 = arith.constant 0 : index
    %13 = vector.load %arg5[%c0_9, %c0_10] : memref<1x512xf32, #tpu.memory_space<vmem>>, vector<1x512xf32>
    %14 = vector.broadcast %13 : vector<1x512xf32> to vector<128x512xf32>
    %15 = arith.addf %12, %14 : vector<128x512xf32>
    %cst_11 = arith.constant 0.00999999977 : f32
    %16 = vector.broadcast %cst_11 : f32 to vector<128x512xf32>
    %17 = arith.mulf %16, %15 : vector<128x512xf32>
    %18 = arith.maximumf %15, %17 : vector<128x512xf32>
    %19 = arith.truncf %18 : vector<128x512xf32> to vector<128x512xbf16>
    %c0_12 = arith.constant 0 : index
    %c0_13 = arith.constant 0 : index
    %20 = vector.load %arg6[%c0_12, %c0_13] : memref<512x256xbf16, #tpu.memory_space<vmem>>, vector<512x256xbf16>
    %cst_14 = arith.constant dense<0.000000e+00> : vector<128x256xf32>
    %21 = tpu.matmul %19, %20, %cst_14 {dimension_numbers = #tpu.dot_dimension_numbers<[1], [0], [0], [1], [0, 0, 1, 1], [], []>} : vector<128x512xbf16>, vector<512x256xbf16>, vector<128x256xf32> -> vector<128x256xf32>
    %c0_15 = arith.constant 0 : index
    %c0_16 = arith.constant 0 : index
    %22 = vector.load %arg7[%c0_15, %c0_16] : memref<1x256xf32, #tpu.memory_space<vmem>>, vector<1x256xf32>
    %23 = vector.broadcast %22 : vector<1x256xf32> to vector<128x256xf32>
    %24 = arith.addf %21, %23 : vector<128x256xf32>
    %c0_17 = arith.constant 0 : index
    %c0_18 = arith.constant 0 : index
    %25 = vector.load %arg8[%c0_17, %c0_18] : memref<128x256xf32, #tpu.memory_space<vmem>>, vector<128x256xf32>
    tpu.vector_store %arg8[%c0_17, %c0_18], %24 {strides = array<i32>} : memref<128x256xf32, #tpu.memory_space<vmem>>, vector<128x256xf32>,
    return
  }
  func.func @transform_0(%arg0: i32) -> (i32, i32) {
    %c0_i32 = arith.constant 0 : i32
    %c0_i32_0 = arith.constant 0 : i32
    return %arg0, %c0_i32 : i32, i32
  }
  func.func @transform_1(%arg0: i32) -> (i32, i32) {
    %c0_i32 = arith.constant 0 : i32
    %c0_i32_0 = arith.constant 0 : i32
    %c0_i32_1 = arith.constant 0 : i32
    return %c0_i32, %c0_i32_0 : i32, i32
  }
  func.func @transform_2(%arg0: i32) -> (i32, i32) {
    %c0_i32 = arith.constant 0 : i32
    %c0_i32_0 = arith.constant 0 : i32
    %c0_i32_1 = arith.constant 0 : i32
    return %c0_i32, %c0_i32_0 : i32, i32
  }
  func.func @transform_3(%arg0: i32) -> (i32, i32) {
    %c0_i32 = arith.constant 0 : i32
    %c0_i32_0 = arith.constant 0 : i32
    %c0_i32_1 = arith.constant 0 : i32
    return %c0_i32, %c0_i32_0 : i32, i32
  }
  func.func @transform_4(%arg0: i32) -> (i32, i32) {
    %c0_i32 = arith.constant 0 : i32
    %c0_i32_0 = arith.constant 0 : i32
    %c0_i32_1 = arith.constant 0 : i32
    return %c0_i32, %c0_i32_0 : i32, i32
  }
  func.func @transform_5(%arg0: i32) -> (i32, i32) {
    %c0_i32 = arith.constant 0 : i32
    %c0_i32_0 = arith.constant 0 : i32
    %c0_i32_1 = arith.constant 0 : i32
    return %c0_i32, %c0_i32_0 : i32, i32
  }
  func.func @transform_6(%arg0: i32) -> (i32, i32) {
    %c0_i32 = arith.constant 0 : i32
    %c0_i32_0 = arith.constant 0 : i32
    %c0_i32_1 = arith.constant 0 : i32
    return %c0_i32, %c0_i32_0 : i32, i32
  }
  func.func @transform_7(%arg0: i32) -> (i32, i32) {
    %c0_i32 = arith.constant 0 : i32
    %c0_i32_0 = arith.constant 0 : i32
    return %arg0, %c0_i32 : i32, i32
  }
}

</mosaic_0001>

<llo_original>
// kernel: fn.1
$region0: #{fn.1}
  #allocation0 [shape = 'u32[]', space=smem, size = 0x4, offset = 0x4, fixed_abs, tag = 'smem constant byte address 0x4 - core index']
  #allocation1 [shape = 'u32[144,128]{1,0:T(1,128)}', space=vmem, size = 0x12000, scoped, tag = 'internal scratch']
  %s0 = inlined_call_operand.hbm [shape: f32[256,256], index: 0, kind: input, shape index: {}]
  %s1 = inlined_call_operand.hbm [shape: bf16[256,1024], index: 1, kind: input, shape index: {}]
  %s2 = inlined_call_operand.hbm [shape: f32[1,1024], index: 2, kind: input, shape index: {}]
  %s3 = inlined_call_operand.hbm [shape: bf16[1024,512], index: 3, kind: input, shape index: {}]
  %s4 = inlined_call_operand.vmem [shape: f32[1,512], index: 4, kind: input, shape index: {}]
  %s5 = inlined_call_operand.hbm [shape: bf16[512,256], index: 5, kind: input, shape index: {}]
  %s6 = inlined_call_operand.vmem [shape: f32[1,256], index: 6, kind: input, shape index: {}]
  %s7 = inlined_call_operand.hbm [shape: f32[256,256], index: 7, kind: output, shape index: {}]
  %s8 = sld [smem:[#allocation0]]
  $region81: #{fn.1} parent=0
    _
  %s10 = ssub.s32 1, %s8
  %s11 = scalar_select 0, %s10, %s8
  $region1: #{fn.1} parent=0
    #allocation2 [shape = 'u8[262144]{0}', space=vmem, size = 0x40000, scoped, tag = 'input window, operand 0']
    #allocation3 [shape = 's32[2]{0}', space=sflag, size = 0x8, scoped, tag = 'scoped memory for fn.1']
    #allocation4 [shape = 's32[2]{0}', space=sflag, size = 0x8, scoped, tag = 'scoped memory for fn.1']
    #allocation5 [shape = 'u8[524288]{0}', space=vmem, size = 0x80000, scoped, tag = 'input window, operand 1, single buffered']
    #allocation6 [shape = 's32[1]{0}', space=sflag, size = 0x4, scoped, tag = 'scoped memory for fn.1']
    #allocation7 [shape = 'u8[4096]{0}', space=vmem, size = 0x1000, scoped, tag = 'input window, operand 2, single buffered']
    #allocation8 [shape = 'u8[1048576]{0}', space=vmem, size = 0x100000, scoped, tag = 'input window, operand 3, single buffered']
    #allocation9 [shape = 's32[1]{0}', space=sflag, size = 0x4, scoped, tag = 'scoped memory for fn.1']
    #allocation10 [shape = 'u8[262144]{0}', space=vmem, size = 0x40000, scoped, tag = 'input window, operand 5, single buffered']
    #allocation11 [shape = 'u8[262144]{0}', space=vmem, size = 0x40000, scoped, tag = 'output window, operand 0']
    %12 = vsyncpa [#allocation3], 0
    %s13 = scalar_lea.sflag [#allocation3], 1
    %14 = vsyncpa %s13, 0
    %15 = vsyncpa [#allocation6], 0
    %16 = vsyncpa [#allocation9], 0
    %17 = vsyncpa [#allocation4], 0
    %s18 = scalar_lea.sflag [#allocation4], 1
    %19 = vsyncpa %s18, 0
    loop: start=0, step=1, limit=4
    $region2: #{fn.1} parent=1 // loop_pre_header
      _
    $region3: #{fn.1} parent=1 // loop_header
      %s21 = sphi 0, %s25
      %p22 = scmp.ge.s32.totalorder %s21, 4
      %s31 = sphi 0, %s33
      %s34 = sphi 0, %s31
      %s35 = sphi 0, %s34
      %s51 = sphi 0, %s35
      %s55 = sphi 0, %s55
      %s57 = sphi 0, %s55
      %s58 = sphi 0, %s57
      %s72 = sphi 0, %s58
      %s76 = sphi 0, %s76
      %s78 = sphi 0, %s76
      %s79 = sphi 0, %s78
      %s93 = sphi 0, %s79
      %s97 = sphi 0, %s97
      %s99 = sphi 0, %s97
      %s100 = sphi 0, %s99
      %s114 = sphi 0, %s100
      %s118 = sphi 0, %s118
      %s120 = sphi 0, %s118
      %s121 = sphi 0, %s120
      %s135 = sphi 0, %s121
      %s139 = sphi 0, %s139
      %s141 = sphi 0, %s139
      %s142 = sphi 0, %s141
      %s156 = sphi 0, %s142
      %s160 = sphi 0, %s160
      %s162 = sphi 0, %s160
      %s163 = sphi 0, %s162
      %s177 = sphi 0, %s163
      %s183 = sphi 0, %s185
      %s186 = sphi 0, %s183
      %s187 = sphi 0, %s186
      %s203 = sphi 0, %s187
    $region4: #{fn.1} parent=1 // loop_header_branch
      %24 = sbr.rel (%p22) target = $region8
    $region5: #{fn.1} parent=1 // loop_body
      %s26 = ssub.s32 %s21, 1
      %s27 = ssub.s32 %s21, 2
      %s28 = sadd.s32 %s21, 1
      %s29 = ssub.s32 %s21, %s28
      %p30 = scmp.eq.s32.totalorder %s29, 0
      %s32 = sadd.s32 %s31, 1
      %s33 = scalar_select %p30, %s31, %s32
      %p36 = pneg %p30
      %p37 = scmp.eq.s32.totalorder %s21, 1
      %p38 = por %p36, %p37
      %p39 = scmp.ne.s32.totalorder %s31, %s34
      %p40 = scmp.eq.s32.totalorder %s21, 0
      %p41 = por %p39, %p40
      %p42 = scmp.ne.s32.totalorder %s31, %s34
      %p43 = scmp.eq.s32.totalorder %s26, 1
      %p44 = por %p42, %p43
      %p45 = scmp.ne.s32.totalorder %s34, %s35
      %p46 = scmp.eq.s32.totalorder %s26, 0
      %p47 = por %p45, %p46
      %p48 = scmp.ne.s32.totalorder %s34, %s35
      %p49 = scmp.eq.s32.totalorder %s27, 1
      %p50 = por %p48, %p49
      %p52 = scmp.ne.s32.totalorder %s35, %s51
      %p53 = scmp.eq.s32.totalorder %s27, 0
      %p54 = por %p52, %p53
      %s56 = sadd.s32 %s55, 1
      %p59 = scmp.eq.s32.totalorder %s21, 1
      %p60 = scmp.ne.s32.totalorder %s55, %s57
      %p61 = scmp.eq.s32.totalorder %s21, 0
      %p62 = por %p60, %p61
      %p63 = scmp.ne.s32.totalorder %s55, %s57
      %p64 = scmp.eq.s32.totalorder %s26, 1
      %p65 = por %p63, %p64
      %p66 = scmp.ne.s32.totalorder %s57, %s58
      %p67 = scmp.eq.s32.totalorder %s26, 0
      %p68 = por %p66, %p67
      %p69 = scmp.ne.s32.totalorder %s57, %s58
      %p70 = scmp.eq.s32.totalorder %s27, 1
      %p71 = por %p69, %p70
      %p73 = scmp.ne.s32.totalorder %s58, %s72
      %p74 = scmp.eq.s32.totalorder %s27, 0
      %p75 = por %p73, %p74
      %s77 = sadd.s32 %s76, 1
      %p80 = scmp.eq.s32.totalorder %s21, 1
      %p81 = scmp.ne.s32.totalorder %s76, %s78
      %p82 = scmp.eq.s32.totalorder %s21, 0
      %p83 = por %p81, %p82
      %p84 = scmp.ne.s32.totalorder %s76, %s78
      %p85 = scmp.eq.s32.totalorder %s26, 1
      %p86 = por %p84, %p85
      %p87 = scmp.ne.s32.totalorder %s78, %s79
      %p88 = scmp.eq.s32.totalorder %s26, 0
      %p89 = por %p87, %p88
      %p90 = scmp.ne.s32.totalorder %s78, %s79
      %p91 = scmp.eq.s32.totalorder %s27, 1
      %p92 = por %p90, %p91
      %p94 = scmp.ne.s32.totalorder %s79, %s93
      %p95 = scmp.eq.s32.totalorder %s27, 0
      %p96 = por %p94, %p95
      %s98 = sadd.s32 %s97, 1
      %p101 = scmp.eq.s32.totalorder %s21, 1
      %p102 = scmp.ne.s32.totalorder %s97, %s99
      %p103 = scmp.eq.s32.totalorder %s21, 0
      %p104 = por %p102, %p103
      %p105 = scmp.ne.s32.totalorder %s97, %s99
      %p106 = scmp.eq.s32.totalorder %s26, 1
      %p107 = por %p105, %p106
      %p108 = scmp.ne.s32.totalorder %s99, %s100
      %p109 = scmp.eq.s32.totalorder %s26, 0
      %p110 = por %p108, %p109
      %p111 = scmp.ne.s32.totalorder %s99, %s100
      %p112 = scmp.eq.s32.totalorder %s27, 1
      %p113 = por %p111, %p112
      %p115 = scmp.ne.s32.totalorder %s100, %s114
      %p116 = scmp.eq.s32.totalorder %s27, 0
      %p117 = por %p115, %p116
      %s119 = sadd.s32 %s118, 1
      %p122 = scmp.eq.s32.totalorder %s21, 1
      %p123 = scmp.ne.s32.totalorder %s118, %s120
      %p124 = scmp.eq.s32.totalorder %s21, 0
      %p125 = por %p123, %p124
      %p126 = scmp.ne.s32.totalorder %s118, %s120
      %p127 = scmp.eq.s32.totalorder %s26, 1
      %p128 = por %p126, %p127
      %p129 = scmp.ne.s32.totalorder %s120, %s121
      %p130 = scmp.eq.s32.totalorder %s26, 0
      %p131 = por %p129, %p130
      %p132 = scmp.ne.s32.totalorder %s120, %s121
      %p133 = scmp.eq.s32.totalorder %s27, 1
      %p134 = por %p132, %p133
      %p136 = scmp.ne.s32.totalorder %s121, %s135
      %p137 = scmp.eq.s32.totalorder %s27, 0
      %p138 = por %p136, %p137
      %s140 = sadd.s32 %s139, 1
      %p143 = scmp.eq.s32.totalorder %s21, 1
      %p144 = scmp.ne.s32.totalorder %s139, %s141
      %p145 = scmp.eq.s32.totalorder %s21, 0
      %p146 = por %p144, %p145
      %p147 = scmp.ne.s32.totalorder %s139, %s141
      %p148 = scmp.eq.s32.totalorder %s26, 1
      %p149 = por %p147, %p148
      %p150 = scmp.ne.s32.totalorder %s141, %s142
      %p151 = scmp.eq.s32.totalorder %s26, 0
      %p152 = por %p150, %p151
      %p153 = scmp.ne.s32.totalorder %s141, %s142
      %p154 = scmp.eq.s32.totalorder %s27, 1
      %p155 = por %p153, %p154
      %p157 = scmp.ne.s32.totalorder %s142, %s156
      %p158 = scmp.eq.s32.totalorder %s27, 0
      %p159 = por %p157, %p158
      %s161 = sadd.s32 %s160, 1
      %p164 = scmp.eq.s32.totalorder %s21, 1
      %p165 = scmp.ne.s32.totalorder %s160, %s162
      %p166 = scmp.eq.s32.totalorder %s21, 0
      %p167 = por %p165, %p166
      %p168 = scmp.ne.s32.totalorder %s160, %s162
      %p169 = scmp.eq.s32.totalorder %s26, 1
      %p170 = por %p168, %p169
      %p171 = scmp.ne.s32.totalorder %s162, %s163
      %p172 = scmp.eq.s32.totalorder %s26, 0
      %p173 = por %p171, %p172
      %p174 = scmp.ne.s32.totalorder %s162, %s163
      %p175 = scmp.eq.s32.totalorder %s27, 1
      %p176 = por %p174, %p175
      %p178 = scmp.ne.s32.totalorder %s163, %s177
      %p179 = scmp.eq.s32.totalorder %s27, 0
      %p180 = por %p178, %p179
      %s181 = ssub.s32 %s21, %s28
      %p182 = scmp.eq.s32.totalorder %s181, 0
      %s184 = sadd.s32 %s183, 1
      %s185 = scalar_select %p182, %s183, %s184
      %p188 = pneg %p182
      %p189 = scmp.eq.s32.totalorder %s21, 1
      %p190 = por %p188, %p189
      %p191 = scmp.ne.s32.totalorder %s183, %s186
      %p192 = scmp.eq.s32.totalorder %s21, 0
      %p193 = por %p191, %p192
      %p194 = scmp.ne.s32.totalorder %s183, %s186
      %p195 = scmp.eq.s32.totalorder %s26, 1
      %p196 = por %p194, %p195
      %p197 = scmp.ne.s32.totalorder %s186, %s187
      %p198 = scmp.eq.s32.totalorder %s26, 0
      %p199 = por %p197, %p198
      %p200 = scmp.ne.s32.totalorder %s186, %s187
      %p201 = scmp.eq.s32.totalorder %s27, 1
      %p202 = por %p200, %p201
      %p204 = scmp.ne.s32.totalorder %s187, %s203
      %p205 = scmp.eq.s32.totalorder %s27, 0
      %p206 = por %p204, %p205
      %p207 = scmp.le.s32.totalorder 1, %s21
      %p208 = scmp.lt.s32.totalorder %s21, 3
      %p209 = pnand %p207, %p208
      %p210 = pneg %p209
      // Predicated region
      $region9: #{fn.1} parent=5 // pred_check
        _
      $region10: #{fn.1} parent=5 // pred_check_branch
        %212 = sbr.rel (%p209) target = $region12
      $region11: #{fn.1} parent=5 // pred_region
        %s213 = ssub.s32 %s21, 1
        // Predicated region
        $region13: #{fn.1} parent=11 // pred_check
          %p214 = pneg %p68
        $region14: #{fn.1} parent=11 // pred_check_branch
          %216 = sbr.rel (%p214) target = $region16
        $region15: #{fn.1} parent=11 // pred_region
          %s218 = ssub.s32 16384, 16384
          %219 = vsyncadd [#allocation6], %s218
          %s220 = sshll.u32 [#allocation5], 4
          %s221 = int_to_ptr.vmem [resolvable:$true] %s220
          %226 = dma.hbm_to_vmem [thread:$0]  %s1, 16384, %s221, [#allocation6], 512, 512, 32
        $region16: #{fn.1} parent=11 // pred_fallthru
          _
        // Predicated region
        $region17: #{fn.1} parent=11 // pred_check
          %p227 = pneg %p89
        $region18: #{fn.1} parent=11 // pred_check_branch
          %229 = sbr.rel (%p227) target = $region20
        $region19: #{fn.1} parent=11 // pred_region
          %s231 = ssub.s32 128, 128
          %232 = vsyncadd [#allocation6], %s231
          %s234 = sshll.u32 [#allocation7], 4
          %s235 = int_to_ptr.vmem [resolvable:$true] %s234
          %237 = dma.hbm_to_vmem [thread:$0]  %s2, 128, %s235, [#allocation6]
        $region20: #{fn.1} parent=11 // pred_fallthru
          _
        // Predicated region
        $region21: #{fn.1} parent=11 // pred_check
          %p238 = pneg %p110
        $region22: #{fn.1} parent=11 // pred_check_branch
          %240 = sbr.rel (%p238) target = $region24
        $region23: #{fn.1} parent=11 // pred_region
          %s242 = ssub.s32 32768, 32768
          %243 = vsyncadd [#allocation9], %s242
          %s244 = sshll.u32 [#allocation8], 4
          %s245 = int_to_ptr.vmem [resolvable:$true] %s244
          %250 = dma.hbm_to_vmem [thread:$0]  %s3, 32768, %s245, [#allocation9], 256, 256, 16
        $region24: #{fn.1} parent=11 // pred_fallthru
          _
        // Predicated region
        $region25: #{fn.1} parent=11 // pred_check
          %p251 = pneg %p131
        $region26: #{fn.1} parent=11 // pred_check_branch
          %253 = sbr.rel (%p251) target = $region28
        $region27: #{fn.1} parent=11 // pred_region
          _
        $region28: #{fn.1} parent=11 // pred_fallthru
          _
        // Predicated region
        $region29: #{fn.1} parent=11 // pred_check
          %p254 = pneg %p152
        $region30: #{fn.1} parent=11 // pred_check_branch
          %256 = sbr.rel (%p254) target = $region32
        $region31: #{fn.1} parent=11 // pred_region
          %s258 = ssub.s32 8192, 8192
          %259 = vsyncadd [#allocation9], %s258
          %s260 = sshll.u32 [#allocation10], 4
          %s261 = int_to_ptr.vmem [resolvable:$true] %s260
          %266 = dma.hbm_to_vmem [thread:$0]  %s5, 8192, %s261, [#allocation9], 128, 128, 8
        $region32: #{fn.1} parent=11 // pred_fallthru
          _
        // Predicated region
        $region33: #{fn.1} parent=11 // pred_check
          %p267 = pneg %p173
        $region34: #{fn.1} parent=11 // pred_check_branch
          %269 = sbr.rel (%p267) target = $region36
        $region35: #{fn.1} parent=11 // pred_region
          _
        $region36: #{fn.1} parent=11 // pred_fallthru
          _
      $region12: #{fn.1} parent=5 // pred_fallthru
        _
      %p270 = scmp.lt.s32.totalorder %s21, 2
      // Predicated region
      $region37: #{fn.1} parent=5 // pred_check
        %p271 = pneg %p270
      $region38: #{fn.1} parent=5 // pred_check_branch
        %273 = sbr.rel (%p271) target = $region40
      $region39: #{fn.1} parent=5 // pred_region
        // Predicated region
        $region41: #{fn.1} parent=39 // pred_check
          %p274 = pneg %p41
        $region42: #{fn.1} parent=39 // pred_check_branch
          %276 = sbr.rel (%p274) target = $region44
        $region43: #{fn.1} parent=39 // pred_region
          %s277 = sand.u32 %s31, 1
          %s278 = scalar_lea.sflag [#allocation3], %s277
          %s279 = sand.u32 %s31, 1
          %s280 = smul.addr %s279, 256
          %s281 = scalar_lea.vmem [#allocation2], %s280
          %s282 = smul.u32 16, %s21
          %s284 = ssub.s32 4096, 4096
          %285 = vsyncadd %s278, %s284
          %s286 = smul.addr %s282, 2
          %s287 = smul.addr %s286, 128
          %s288 = scalar_lea.hbm %s0, %s287
          %s289 = sshll.u32 %s281, 4
          %s290 = int_to_ptr.vmem [resolvable:$true] %s289
          %295 = dma.hbm_to_vmem [thread:$0]  %s288, 4096, %s290, %s278, 256, 256, 16
        $region44: #{fn.1} parent=39 // pred_fallthru
          _
      $region40: #{fn.1} parent=5 // pred_fallthru
        _
      %p296 = scmp.le.s32.totalorder 1, %s21
      %p297 = scmp.lt.s32.totalorder %s21, 3
      %p298 = pnand %p296, %p297
      %p299 = pneg %p298
      // Predicated region
      $region45: #{fn.1} parent=5 // pred_check
        _
      $region46: #{fn.1} parent=5 // pred_check_branch
        %301 = sbr.rel (%p298) target = $region48
      $region47: #{fn.1} parent=5 // pred_region
        %s302 = ssub.s32 %s21, 1
        %s303 = sand.u32 %s34, 1
        %s304 = scalar_lea.sflag [#allocation3], %s303
        %s305 = sand.u32 %s34, 1
        %s306 = smul.addr %s305, 256
        %s307 = scalar_lea.vmem [#allocation2], %s306
        // Predicated region
        $region49: #{fn.1} parent=47 // pred_check
          %p308 = pneg %p47
        $region50: #{fn.1} parent=47 // pred_check_branch
          %310 = sbr.rel (%p308) target = $region52
        $region51: #{fn.1} parent=47 // pred_region
          %311 = dma.done %s304, 4096
        $region52: #{fn.1} parent=47 // pred_fallthru
          _
        // Predicated region
        $region53: #{fn.1} parent=47 // pred_check
          %p312 = pneg %p68
        $region54: #{fn.1} parent=47 // pred_check_branch
          %314 = sbr.rel (%p312) target = $region56
        $region55: #{fn.1} parent=47 // pred_region
          %315 = dma.done [#allocation6], 16384
        $region56: #{fn.1} parent=47 // pred_fallthru
          _
        // Predicated region
        $region57: #{fn.1} parent=47 // pred_check
          %p316 = pneg %p89
        $region58: #{fn.1} parent=47 // pred_check_branch
          %318 = sbr.rel (%p316) target = $region60
        $region59: #{fn.1} parent=47 // pred_region
          %319 = dma.done [#allocation6], 128
        $region60: #{fn.1} parent=47 // pred_fallthru
          _
        // Predicated region
        $region61: #{fn.1} parent=47 // pred_check
          %p320 = pneg %p110
        $region62: #{fn.1} parent=47 // pred_check_branch
          %322 = sbr.rel (%p320) target = $region64
        $region63: #{fn.1} parent=47 // pred_region
          %323 = dma.done [#allocation9], 32768
        $region64: #{fn.1} parent=47 // pred_fallthru
          _
        // Predicated region
        $region65: #{fn.1} parent=47 // pred_check
          %p324 = pneg %p152
        $region66: #{fn.1} parent=47 // pred_check_branch
          %326 = sbr.rel (%p324) target = $region68
        $region67: #{fn.1} parent=47 // pred_region
          %327 = dma.done [#allocation9], 8192
        $region68: #{fn.1} parent=47 // pred_fallthru
          _
        %s328 = sand.u32 %s34, 1
        %s329 = scalar_lea.sflag [#allocation3], %s328
        %s330 = sand.u32 %s34, 1
        %s331 = smul.addr %s330, 256
        %s332 = scalar_lea.vmem [#allocation2], %s331
        %p333 = pneg %p47
        %p334 = pneg %p44
        %p335 = pneg %p68
        %p336 = pneg %p65
        %p337 = pneg %p89
        %p338 = pneg %p86
        %p339 = pneg %p110
        %p340 = pneg %p107
        %p341 = pneg %p131
        %p342 = pneg %p128
        %p343 = pneg %p152
        %p344 = pneg %p149
        %p345 = pneg %p173
        %p346 = pneg %p170
        %p347 = pneg %p199
        %p348 = pneg %p196
        %s349 = sand.u32 %s186, 1
        %s350 = scalar_lea.sflag [#allocation4], %s349
        %s351 = sand.u32 %s186, 1
        %s352 = smul.addr %s351, 256
        %s353 = scalar_lea.vmem [#allocation11], %s352
        %s354 = smul.u32 16, %s26
        %s355 = smul.u32 16, %s26
        %v356 = vld [vmem:[%s307] sm:$0xff]
        %v357 = vld [vmem:[%s307 + $0x8] sm:$0xff]
        %v358 = vld [vmem:[%s307 + $0x10] sm:$0xff]
        %v359 = vld [vmem:[%s307 + $0x18] sm:$0xff]
        %v360 = vld [vmem:[%s307 + $0x20] sm:$0xff]
        %v361 = vld [vmem:[%s307 + $0x28] sm:$0xff]
        %v362 = vld [vmem:[%s307 + $0x30] sm:$0xff]
        %v363 = vld [vmem:[%s307 + $0x38] sm:$0xff]
        %v364 = vld [vmem:[%s307 + $0x40] sm:$0xff]
        %v365 = vld [vmem:[%s307 + $0x48] sm:$0xff]
        %v366 = vld [vmem:[%s307 + $0x50] sm:$0xff]
        %v367 = vld [vmem:[%s307 + $0x58] sm:$0xff]
        %v368 = vld [vmem:[%s307 + $0x60] sm:$0xff]
        %v369 = vld [vmem:[%s307 + $0x68] sm:$0xff]
        %v370 = vld [vmem:[%s307 + $0x70] sm:$0xff]
        %v371 = vld [vmem:[%s307 + $0x78] sm:$0xff]
        %v372 = vld [vmem:[%s307 + $0x80] sm:$0xff]
        %v373 = vld [vmem:[%s307 + $0x88] sm:$0xff]
        %v374 = vld [vmem:[%s307 + $0x90] sm:$0xff]
        %v375 = vld [vmem:[%s307 + $0x98] sm:$0xff]
        %v376 = vld [vmem:[%s307 + $0xa0] sm:$0xff]
        %v377 = vld [vmem:[%s307 + $0xa8] sm:$0xff]
        %v378 = vld [vmem:[%s307 + $0xb0] sm:$0xff]
        %v379 = vld [vmem:[%s307 + $0xb8] sm:$0xff]
        %v380 = vld [vmem:[%s307 + $0xc0] sm:$0xff]
        %v381 = vld [vmem:[%s307 + $0xc8] sm:$0xff]
        %v382 = vld [vmem:[%s307 + $0xd0] sm:$0xff]
        %v383 = vld [vmem:[%s307 + $0xd8] sm:$0xff]
        %v384 = vld [vmem:[%s307 + $0xe0] sm:$0xff]
        %v385 = vld [vmem:[%s307 + $0xe8] sm:$0xff]
        %v386 = vld [vmem:[%s307 + $0xf0] sm:$0xff]
        %v387 = vld [vmem:[%s307 + $0xf8] sm:$0xff]
        %v388 = vpack.c.bf16 %v358, %v356
        %v389 = vpack.c.bf16 %v359, %v357
        %v390 = vpack.c.bf16 %v362, %v360
        %v391 = vpack.c.bf16 %v363, %v361
        %v392 = vpack.c.bf16 %v366, %v364
        %v393 = vpack.c.bf16 %v367, %v365
        %v394 = vpack.c.bf16 %v370, %v368
        %v395 = vpack.c.bf16 %v371, %v369
        %v396 = vpack.c.bf16 %v374, %v372
        %v397 = vpack.c.bf16 %v375, %v373
        %v398 = vpack.c.bf16 %v378, %v376
        %v399 = vpack.c.bf16 %v379, %v377
        %v400 = vpack.c.bf16 %v382, %v380
        %v401 = vpack.c.bf16 %v383, %v381
        %v402 = vpack.c.bf16 %v386, %v384
        %v403 = vpack.c.bf16 %v387, %v385
        %v404 = vld [vmem:[#allocation5] sm:$0xff]
        %v405 = vld [vmem:[#allocation5 + $0x8] sm:$0xff]
        %v406 = vld [vmem:[#allocation5 + $0x10] sm:$0xff]
        %v407 = vld [vmem:[#allocation5 + $0x18] sm:$0xff]
        %v408 = vld [vmem:[#allocation5 + $0x20] sm:$0xff]
        %v409 = vld [vmem:[#allocation5 + $0x28] sm:$0xff]
        %v410 = vld [vmem:[#allocation5 + $0x30] sm:$0xff]
        %v411 = vld [vmem:[#allocation5 + $0x38] sm:$0xff]
        %v412 = vld [vmem:[#allocation5 + $0x40] sm:$0xff]
        %v413 = vld [vmem:[#allocation5 + $0x48] sm:$0xff]
        %v414 = vld [vmem:[#allocation5 + $0x50] sm:$0xff]
        %v415 = vld [vmem:[#allocation5 + $0x58] sm:$0xff]
        %v416 = vld [vmem:[#allocation5 + $0x60] sm:$0xff]
        %v417 = vld [vmem:[#allocation5 + $0x68] sm:$0xff]
        %v418 = vld [vmem:[#allocation5 + $0x70] sm:$0xff]
        %v419 = vld [vmem:[#allocation5 + $0x78] sm:$0xff]
        %v420 = vld [vmem:[#allocation5 + $0x80] sm:$0xff]
        %v421 = vld [vmem:[#allocation5 + $0x88] sm:$0xff]
        %v422 = vld [vmem:[#allocation5 + $0x90] sm:$0xff]
        %v423 = vld [vmem:[#allocation5 + $0x98] sm:$0xff]
        %v424 = vld [vmem:[#allocation5 + $0xa0] sm:$0xff]
        %v425 = vld [vmem:[#allocation5 + $0xa8] sm:$0xff]
        %v426 = vld [vmem:[#allocation5 + $0xb0] sm:$0xff]
        %v427 = vld [vmem:[#allocation5 + $0xb8] sm:$0xff]
        %v428 = vld [vmem:[#allocation5 + $0xc0] sm:$0xff]
        %v429 = vld [vmem:[#allocation5 + $0xc8] sm:$0xff]
        %v430 = vld [vmem:[#allocation5 + $0xd0] sm:$0xff]
        %v431 = vld [vmem:[#allocation5 + $0xd8] sm:$0xff]
        %v432 = vld [vmem:[#allocation5 + $0xe0] sm:$0xff]
        %v433 = vld [vmem:[#allocation5 + $0xe8] sm:$0xff]
        %v434 = vld [vmem:[#allocation5 + $0xf0] sm:$0xff]
        %v435 = vld [vmem:[#allocation5 + $0xf8] sm:$0xff]
        %v436 = vld [vmem:[#allocation5 + $0x100] sm:$0xff]
        %v437 = vld [vmem:[#allocation5 + $0x108] sm:$0xff]
        %v438 = vld [vmem:[#allocation5 + $0x110] sm:$0xff]
        %v439 = vld [vmem:[#allocation5 + $0x118] sm:$0xff]
        %v440 = vld [vmem:[#allocation5 + $0x120] sm:$0xff]
        %v441 = vld [vmem:[#allocation5 + $0x128] sm:$0xff]
        %v442 = vld [vmem:[#allocation5 + $0x130] sm:$0xff]
        %v443 = vld [vmem:[#allocation5 + $0x138] sm:$0xff]
        %v444 = vld [vmem:[#allocation5 + $0x140] sm:$0xff]
        %v445 = vld [vmem:[#allocation5 + $0x148] sm:$0xff]
        %v446 = vld [vmem:[#allocation5 + $0x150] sm:$0xff]
        %v447 = vld [vmem:[#allocation5 + $0x158] sm:$0xff]
        %v448 = vld [vmem:[#allocation5 + $0x160] sm:$0xff]
        %v449 = vld [vmem:[#allocation5 + $0x168] sm:$0xff]
        %v450 = vld [vmem:[#allocation5 + $0x170] sm:$0xff]
        %v451 = vld [vmem:[#allocation5 + $0x178] sm:$0xff]
        %v452 = vld [vmem:[#allocation5 + $0x180] sm:$0xff]
        %v453 = vld [vmem:[#allocation5 + $0x188] sm:$0xff]
        %v454 = vld [vmem:[#allocation5 + $0x190] sm:$0xff]
        %v455 = vld [vmem:[#allocation5 + $0x198] sm:$0xff]
        %v456 = vld [vmem:[#allocation5 + $0x1a0] sm:$0xff]
        %v457 = vld [vmem:[#allocation5 + $0x1a8] sm:$0xff]
        %v458 = vld [vmem:[#allocation5 + $0x1b0] sm:$0xff]
        %v459 = vld [vmem:[#allocation5 + $0x1b8] sm:$0xff]
        %v460 = vld [vmem:[#allocation5 + $0x1c0] sm:$0xff]
        %v461 = vld [vmem:[#allocation5 + $0x1c8] sm:$0xff]
        %v462 = vld [vmem:[#allocation5 + $0x1d0] sm:$0xff]
        %v463 = vld [vmem:[#allocation5 + $0x1d8] sm:$0xff]
        %v464 = vld [vmem:[#allocation5 + $0x1e0] sm:$0xff]
        %v465 = vld [vmem:[#allocation5 + $0x1e8] sm:$0xff]
        %v466 = vld [vmem:[#allocation5 + $0x1f0] sm:$0xff]
        %v467 = vld [vmem:[#allocation5 + $0x1f8] sm:$0xff]
        %v468 = vld [vmem:[#allocation5 + $0x200] sm:$0xff]
        %v469 = vld [vmem:[#allocation5 + $0x208] sm:$0xff]
        %v470 = vld [vmem:[#allocation5 + $0x210] sm:$0xff]
        %v471 = vld [vmem:[#allocation5 + $0x218] sm:$0xff]
        %v472 = vld [vmem:[#allocation5 + $0x220] sm:$0xff]
        %v473 = vld [vmem:[#allocation5 + $0x228] sm:$0xff]
        %v474 = vld [vmem:[#allocation5 + $0x230] sm:$0xff]
        %v475 = vld [vmem:[#allocation5 + $0x238] sm:$0xff]
        %v476 = vld [vmem:[#allocation5 + $0x240] sm:$0xff]
        %v477 = vld [vmem:[#allocation5 + $0x248] sm:$0xff]
        %v478 = vld [vmem:[#allocation5 + $0x250] sm:$0xff]
        %v479 = vld [vmem:[#allocation5 + $0x258] sm:$0xff]
        %v480 = vld [vmem:[#allocation5 + $0x260] sm:$0xff]
        %v481 = vld [vmem:[#allocation5 + $0x268] sm:$0xff]
        %v482 = vld [vmem:[#allocation5 + $0x270] sm:$0xff]
        %v483 = vld [vmem:[#allocation5 + $0x278] sm:$0xff]
        %v484 = vld [vmem:[#allocation5 + $0x280] sm:$0xff]
        %v485 = vld [vmem:[#allocation5 + $0x288] sm:$0xff]
        %v486 = vld [vmem:[#allocation5 + $0x290] sm:$0xff]
        %v487 = vld [vmem:[#allocation5 + $0x298] sm:$0xff]
        %v488 = vld [vmem:[#allocation5 + $0x2a0] sm:$0xff]
        %v489 = vld [vmem:[#allocation5 + $0x2a8] sm:$0xff]
        %v490 = vld [vmem:[#allocation5 + $0x2b0] sm:$0xff]
        %v491 = vld [vmem:[#allocation5 + $0x2b8] sm:$0xff]
        %v492 = vld [vmem:[#allocation5 + $0x2c0] sm:$0xff]
        %v493 = vld [vmem:[#allocation5 + $0x2c8] sm:$0xff]
        %v494 = vld [vmem:[#allocation5 + $0x2d0] sm:$0xff]
        %v495 = vld [vmem:[#allocation5 + $0x2d8] sm:$0xff]
        %v496 = vld [vmem:[#allocation5 + $0x2e0] sm:$0xff]
        %v497 = vld [vmem:[#allocation5 + $0x2e8] sm:$0xff]
        %v498 = vld [vmem:[#allocation5 + $0x2f0] sm:$0xff]
        %v499 = vld [vmem:[#allocation5 + $0x2f8] sm:$0xff]
        %v500 = vld [vmem:[#allocation5 + $0x300] sm:$0xff]
        %v501 = vld [vmem:[#allocation5 + $0x308] sm:$0xff]
        %v502 = vld [vmem:[#allocation5 + $0x310] sm:$0xff]
        %v503 = vld [vmem:[#allocation5 + $0x318] sm:$0xff]
        %v504 = vld [vmem:[#allocation5 + $0x320] sm:$0xff]
        %v505 = vld [vmem:[#allocation5 + $0x328] sm:$0xff]
        %v506 = vld [vmem:[#allocation5 + $0x330] sm:$0xff]
        %v507 = vld [vmem:[#allocation5 + $0x338] sm:$0xff]
        %v508 = vld [vmem:[#allocation5 + $0x340] sm:$0xff]
        %v509 = vld [vmem:[#allocation5 + $0x348] sm:$0xff]
        %v510 = vld [vmem:[#allocation5 + $0x350] sm:$0xff]
        %v511 = vld [vmem:[#allocation5 + $0x358] sm:$0xff]
        %v512 = vld [vmem:[#allocation5 + $0x360] sm:$0xff]
        %v513 = vld [vmem:[#allocation5 + $0x368] sm:$0xff]
        %v514 = vld [vmem:[#allocation5 + $0x370] sm:$0xff]
        %v515 = vld [vmem:[#allocation5 + $0x378] sm:$0xff]
        %v516 = vld [vmem:[#allocation5 + $0x380] sm:$0xff]
        %v517 = vld [vmem:[#allocation5 + $0x388] sm:$0xff]
        %v518 = vld [vmem:[#allocation5 + $0x390] sm:$0xff]
        %v519 = vld [vmem:[#allocation5 + $0x398] sm:$0xff]
        %v520 = vld [vmem:[#allocation5 + $0x3a0] sm:$0xff]
        %v521 = vld [vmem:[#allocation5 + $0x3a8] sm:$0xff]
        %v522 = vld [vmem:[#allocation5 + $0x3b0] sm:$0xff]
        %v523 = vld [vmem:[#allocation5 + $0x3b8] sm:$0xff]
        %v524 = vld [vmem:[#allocation5 + $0x3c0] sm:$0xff]
        %v525 = vld [vmem:[#allocation5 + $0x3c8] sm:$0xff]
        %v526 = vld [vmem:[#allocation5 + $0x3d0] sm:$0xff]
        %v527 = vld [vmem:[#allocation5 + $0x3d8] sm:$0xff]
        %v528 = vld [vmem:[#allocation5 + $0x3e0] sm:$0xff]
        %v529 = vld [vmem:[#allocation5 + $0x3e8] sm:$0xff]
        %v530 = vld [vmem:[#allocation5 + $0x3f0] sm:$0xff]
        %v531 = vld [vmem:[#allocation5 + $0x3f8] sm:$0xff]
        %v532 = vld [vmem:[#allocation7] sm:$0xff]
        %v534 = vlaneseq
        %v535 = vshrl.u32 %v534, 7
        %v536 = vsub.s32 0, %v535
        %v537 = vrot.slane %v532, %v536
        %v538 = vlaneseq
        %v539 = vshrl.u32 %v538, 7
        %v540 = vsub.s32 1, %v539
        %v541 = vrot.slane %v532, %v540
        %v542 = vlaneseq
        %v543 = vshrl.u32 %v542, 7
        %v544 = vsub.s32 2, %v543
        %v545 = vrot.slane %v532, %v544
        %v546 = vlaneseq
        %v547 = vshrl.u32 %v546, 7
        %v548 = vsub.s32 3, %v547
        %v549 = vrot.slane %v532, %v548
        %v550 = vlaneseq
        %v551 = vshrl.u32 %v550, 7
        %v552 = vsub.s32 4, %v551
        %v553 = vrot.slane %v532, %v552
        %v554 = vlaneseq
        %v555 = vshrl.u32 %v554, 7
        %v556 = vsub.s32 5, %v555
        %v557 = vrot.slane %v532, %v556
        %v558 = vlaneseq
        %v559 = vshrl.u32 %v558, 7
        %v560 = vsub.s32 6, %v559
        %v561 = vrot.slane %v532, %v560
        %v562 = vlaneseq
        %v563 = vshrl.u32 %v562, 7
        %v564 = vsub.s32 7, %v563
        %v565 = vrot.slane %v532, %v564
        %v702 = vunpack.c.l.b16 %v404
        %v703 = vunpack.c.h.b16 %v404
        %v704 = vunpack.c.l.b16 %v405
        %v705 = vunpack.c.h.b16 %v405
        %v706 = vunpack.c.l.b16 %v406
        %v707 = vunpack.c.h.b16 %v406
        %v708 = vunpack.c.l.b16 %v407
        %v709 = vunpack.c.h.b16 %v407
        %v710 = vunpack.c.l.b16 %v408
        %v711 = vunpack.c.h.b16 %v408
        %v712 = vunpack.c.l.b16 %v409
        %v713 = vunpack.c.h.b16 %v409
        %v714 = vunpack.c.l.b16 %v410
        %v715 = vunpack.c.h.b16 %v410
        %v716 = vunpack.c.l.b16 %v411
        %v717 = vunpack.c.h.b16 %v411
        %v718 = vunpack.c.l.b16 %v412
        %v719 = vunpack.c.h.b16 %v412
        %v720 = vunpack.c.l.b16 %v413
        %v721 = vunpack.c.h.b16 %v413
        %v722 = vunpack.c.l.b16 %v414
        %v723 = vunpack.c.h.b16 %v414
        %v724 = vunpack.c.l.b16 %v415
        %v725 = vunpack.c.h.b16 %v415
        %v726 = vunpack.c.l.b16 %v416
        %v727 = vunpack.c.h.b16 %v416
        %v728 = vunpack.c.l.b16 %v417
        %v729 = vunpack.c.h.b16 %v417
        %v730 = vunpack.c.l.b16 %v418
        %v731 = vunpack.c.h.b16 %v418
        %v732 = vunpack.c.l.b16 %v419
        %v733 = vunpack.c.h.b16 %v419
        %v734 = vunpack.c.l.b16 %v420
        %v735 = vunpack.c.h.b16 %v420
        %v736 = vunpack.c.l.b16 %v421
        %v737 = vunpack.c.h.b16 %v421
        %v738 = vunpack.c.l.b16 %v422
        %v739 = vunpack.c.h.b16 %v422
        %v740 = vunpack.c.l.b16 %v423
        %v741 = vunpack.c.h.b16 %v423
        %v742 = vunpack.c.l.b16 %v424
        %v743 = vunpack.c.h.b16 %v424
        %v744 = vunpack.c.l.b16 %v425
        %v745 = vunpack.c.h.b16 %v425
        %v746 = vunpack.c.l.b16 %v426
        %v747 = vunpack.c.h.b16 %v426
        %v748 = vunpack.c.l.b16 %v427
        %v749 = vunpack.c.h.b16 %v427
        %v750 = vunpack.c.l.b16 %v428
        %v751 = vunpack.c.h.b16 %v428
        %v752 = vunpack.c.l.b16 %v429
        %v753 = vunpack.c.h.b16 %v429
        %v754 = vunpack.c.l.b16 %v430
        %v755 = vunpack.c.h.b16 %v430
        %v756 = vunpack.c.l.b16 %v431
        %v757 = vunpack.c.h.b16 %v431
        %v758 = vunpack.c.l.b16 %v432
        %v759 = vunpack.c.h.b16 %v432
        %v760 = vunpack.c.l.b16 %v433
        %v761 = vunpack.c.h.b16 %v433
        %v762 = vunpack.c.l.b16 %v434
        %v763 = vunpack.c.h.b16 %v434
        %v764 = vunpack.c.l.b16 %v435
        %v765 = vunpack.c.h.b16 %v435
        %v766 = vunpack.c.l.b16 %v436
        %v767 = vunpack.c.h.b16 %v436
        %v768 = vunpack.c.l.b16 %v437
        %v769 = vunpack.c.h.b16 %v437
        %v770 = vunpack.c.l.b16 %v438
        %v771 = vunpack.c.h.b16 %v438
        %v772 = vunpack.c.l.b16 %v439
        %v773 = vunpack.c.h.b16 %v439
        %v774 = vunpack.c.l.b16 %v440
        %v775 = vunpack.c.h.b16 %v440
        %v776 = vunpack.c.l.b16 %v441
        %v777 = vunpack.c.h.b16 %v441
        %v778 = vunpack.c.l.b16 %v442
        %v779 = vunpack.c.h.b16 %v442
        %v780 = vunpack.c.l.b16 %v443
        %v781 = vunpack.c.h.b16 %v443
        %v782 = vunpack.c.l.b16 %v444
        %v783 = vunpack.c.h.b16 %v444
        %v784 = vunpack.c.l.b16 %v445
        %v785 = vunpack.c.h.b16 %v445
        %v786 = vunpack.c.l.b16 %v446
        %v787 = vunpack.c.h.b16 %v446
        %v788 = vunpack.c.l.b16 %v447
        %v789 = vunpack.c.h.b16 %v447
        %v790 = vunpack.c.l.b16 %v448
        %v791 = vunpack.c.h.b16 %v448
        %v792 = vunpack.c.l.b16 %v449
        %v793 = vunpack.c.h.b16 %v449
        %v794 = vunpack.c.l.b16 %v450
        %v795 = vunpack.c.h.b16 %v450
        %v796 = vunpack.c.l.b16 %v451
        %v797 = vunpack.c.h.b16 %v451
        %v798 = vunpack.c.l.b16 %v452
        %v799 = vunpack.c.h.b16 %v452
        %v800 = vunpack.c.l.b16 %v453
        %v801 = vunpack.c.h.b16 %v453
        %v802 = vunpack.c.l.b16 %v454
        %v803 = vunpack.c.h.b16 %v454
        %v804 = vunpack.c.l.b16 %v455
        %v805 = vunpack.c.h.b16 %v455
        %v806 = vunpack.c.l.b16 %v456
        %v807 = vunpack.c.h.b16 %v456
        %v808 = vunpack.c.l.b16 %v457
        %v809 = vunpack.c.h.b16 %v457
        %v810 = vunpack.c.l.b16 %v458
        %v811 = vunpack.c.h.b16 %v458
        %v812 = vunpack.c.l.b16 %v459
        %v813 = vunpack.c.h.b16 %v459
        %v814 = vunpack.c.l.b16 %v460
        %v815 = vunpack.c.h.b16 %v460
        %v816 = vunpack.c.l.b16 %v461
        %v817 = vunpack.c.h.b16 %v461
        %v818 = vunpack.c.l.b16 %v462
        %v819 = vunpack.c.h.b16 %v462
        %v820 = vunpack.c.l.b16 %v463
        %v821 = vunpack.c.h.b16 %v463
        %v822 = vunpack.c.l.b16 %v464
        %v823 = vunpack.c.h.b16 %v464
        %v824 = vunpack.c.l.b16 %v465
        %v825 = vunpack.c.h.b16 %v465
        %v826 = vunpack.c.l.b16 %v466
        %v827 = vunpack.c.h.b16 %v466
        %v828 = vunpack.c.l.b16 %v467
        %v829 = vunpack.c.h.b16 %v467
        %v830 = vunpack.c.l.b16 %v468
        %v831 = vunpack.c.h.b16 %v468
        %v832 = vunpack.c.l.b16 %v469
        %v833 = vunpack.c.h.b16 %v469
        %v834 = vunpack.c.l.b16 %v470
        %v835 = vunpack.c.h.b16 %v470
        %v836 = vunpack.c.l.b16 %v471
        %v837 = vunpack.c.h.b16 %v471
        %v838 = vunpack.c.l.b16 %v472
        %v839 = vunpack.c.h.b16 %v472
        %v840 = vunpack.c.l.b16 %v473
        %v841 = vunpack.c.h.b16 %v473
        %v842 = vunpack.c.l.b16 %v474
        %v843 = vunpack.c.h.b16 %v474
        %v844 = vunpack.c.l.b16 %v475
        %v845 = vunpack.c.h.b16 %v475
        %v846 = vunpack.c.l.b16 %v476
        %v847 = vunpack.c.h.b16 %v476
        %v848 = vunpack.c.l.b16 %v477
        %v849 = vunpack.c.h.b16 %v477
        %v850 = vunpack.c.l.b16 %v478
        %v851 = vunpack.c.h.b16 %v478
        %v852 = vunpack.c.l.b16 %v479
        %v853 = vunpack.c.h.b16 %v479
        %v854 = vunpack.c.l.b16 %v480
        %v855 = vunpack.c.h.b16 %v480
        %v856 = vunpack.c.l.b16 %v481
        %v857 = vunpack.c.h.b16 %v481
        %v858 = vunpack.c.l.b16 %v482
        %v859 = vunpack.c.h.b16 %v482
        %v860 = vunpack.c.l.b16 %v483
        %v861 = vunpack.c.h.b16 %v483
        %v862 = vunpack.c.l.b16 %v484
        %v863 = vunpack.c.h.b16 %v484
        %v864 = vunpack.c.l.b16 %v485
        %v865 = vunpack.c.h.b16 %v485
        %v866 = vunpack.c.l.b16 %v486
        %v867 = vunpack.c.h.b16 %v486
        %v868 = vunpack.c.l.b16 %v487
        %v869 = vunpack.c.h.b16 %v487
        %v870 = vunpack.c.l.b16 %v488
        %v871 = vunpack.c.h.b16 %v488
        %v872 = vunpack.c.l.b16 %v489
        %v873 = vunpack.c.h.b16 %v489
        %v874 = vunpack.c.l.b16 %v490
        %v875 = vunpack.c.h.b16 %v490
        %v876 = vunpack.c.l.b16 %v491
        %v877 = vunpack.c.h.b16 %v491
        %v878 = vunpack.c.l.b16 %v492
        %v879 = vunpack.c.h.b16 %v492
        %v880 = vunpack.c.l.b16 %v493
        %v881 = vunpack.c.h.b16 %v493
        %v882 = vunpack.c.l.b16 %v494
        %v883 = vunpack.c.h.b16 %v494
        %v884 = vunpack.c.l.b16 %v495
        %v885 = vunpack.c.h.b16 %v495
        %v886 = vunpack.c.l.b16 %v496
        %v887 = vunpack.c.h.b16 %v496
        %v888 = vunpack.c.l.b16 %v497
        %v889 = vunpack.c.h.b16 %v497
        %v890 = vunpack.c.l.b16 %v498
        %v891 = vunpack.c.h.b16 %v498
        %v892 = vunpack.c.l.b16 %v499
        %v893 = vunpack.c.h.b16 %v499
        %v894 = vunpack.c.l.b16 %v500
        %v895 = vunpack.c.h.b16 %v500
        %v896 = vunpack.c.l.b16 %v501
        %v897 = vunpack.c.h.b16 %v501
        %v898 = vunpack.c.l.b16 %v502
        %v899 = vunpack.c.h.b16 %v502
        %v900 = vunpack.c.l.b16 %v503
        %v901 = vunpack.c.h.b16 %v503
        %v902 = vunpack.c.l.b16 %v504
        %v903 = vunpack.c.h.b16 %v504
        %v904 = vunpack.c.l.b16 %v505
        %v905 = vunpack.c.h.b16 %v505
        %v906 = vunpack.c.l.b16 %v506
        %v907 = vunpack.c.h.b16 %v506
        %v908 = vunpack.c.l.b16 %v507
        %v909 = vunpack.c.h.b16 %v507
        %v910 = vunpack.c.l.b16 %v508
        %v911 = vunpack.c.h.b16 %v508
        %v912 = vunpack.c.l.b16 %v509
        %v913 = vunpack.c.h.b16 %v509
        %v914 = vunpack.c.l.b16 %v510
        %v915 = vunpack.c.h.b16 %v510
        %v916 = vunpack.c.l.b16 %v511
        %v917 = vunpack.c.h.b16 %v511
        %v918 = vunpack.c.l.b16 %v512
        %v919 = vunpack.c.h.b16 %v512
        %v920 = vunpack.c.l.b16 %v513
        %v921 = vunpack.c.h.b16 %v513
        %v922 = vunpack.c.l.b16 %v514
        %v923 = vunpack.c.h.b16 %v514
        %v924 = vunpack.c.l.b16 %v515
        %v925 = vunpack.c.h.b16 %v515
        %v926 = vunpack.c.l.b16 %v516
        %v927 = vunpack.c.h.b16 %v516
        %v928 = vunpack.c.l.b16 %v517
        %v929 = vunpack.c.h.b16 %v517
        %v930 = vunpack.c.l.b16 %v518
        %v931 = vunpack.c.h.b16 %v518
        %v932 = vunpack.c.l.b16 %v519
        %v933 = vunpack.c.h.b16 %v519
        %v934 = vunpack.c.l.b16 %v520
        %v935 = vunpack.c.h.b16 %v520
        %v936 = vunpack.c.l.b16 %v521
        %v937 = vunpack.c.h.b16 %v521
        %v938 = vunpack.c.l.b16 %v522
        %v939 = vunpack.c.h.b16 %v522
        %v940 = vunpack.c.l.b16 %v523
        %v941 = vunpack.c.h.b16 %v523
        %v942 = vunpack.c.l.b16 %v524
        %v943 = vunpack.c.h.b16 %v524
        %v944 = vunpack.c.l.b16 %v525
        %v945 = vunpack.c.h.b16 %v525
        %v946 = vunpack.c.l.b16 %v526
        %v947 = vunpack.c.h.b16 %v526
        %v948 = vunpack.c.l.b16 %v527
        %v949 = vunpack.c.h.b16 %v527
        %v950 = vunpack.c.l.b16 %v528
        %v951 = vunpack.c.h.b16 %v528
        %v952 = vunpack.c.l.b16 %v529
        %v953 = vunpack.c.h.b16 %v529
        %v954 = vunpack.c.l.b16 %v530
        %v955 = vunpack.c.h.b16 %v530
        %v956 = vunpack.c.l.b16 %v531
        %v957 = vunpack.c.h.b16 %v531
        %v958 = vpack.c.b16 %v710, %v702
        %v959 = vpack.c.b16 %v711, %v703
        %v960 = vpack.c.b16 %v712, %v704
        %v961 = vpack.c.b16 %v713, %v705
        %v962 = vpack.c.b16 %v714, %v706
        %v963 = vpack.c.b16 %v715, %v707
        %v964 = vpack.c.b16 %v716, %v708
        %v965 = vpack.c.b16 %v717, %v709
        %v966 = vpack.c.b16 %v726, %v718
        %v967 = vpack.c.b16 %v727, %v719
        %v968 = vpack.c.b16 %v728, %v720
        %v969 = vpack.c.b16 %v729, %v721
        %v970 = vpack.c.b16 %v730, %v722
        %v971 = vpack.c.b16 %v731, %v723
        %v972 = vpack.c.b16 %v732, %v724
        %v973 = vpack.c.b16 %v733, %v725
        %v974 = vpack.c.b16 %v742, %v734
        %v975 = vpack.c.b16 %v743, %v735
        %v976 = vpack.c.b16 %v744, %v736
        %v977 = vpack.c.b16 %v745, %v737
        %v978 = vpack.c.b16 %v746, %v738
        %v979 = vpack.c.b16 %v747, %v739
        %v980 = vpack.c.b16 %v748, %v740
        %v981 = vpack.c.b16 %v749, %v741
        %v982 = vpack.c.b16 %v758, %v750
        %v983 = vpack.c.b16 %v759, %v751
        %v984 = vpack.c.b16 %v760, %v752
        %v985 = vpack.c.b16 %v761, %v753
        %v986 = vpack.c.b16 %v762, %v754
        %v987 = vpack.c.b16 %v763, %v755
        %v988 = vpack.c.b16 %v764, %v756
        %v989 = vpack.c.b16 %v765, %v757
        %v990 = vpack.c.b16 %v774, %v766
        %v991 = vpack.c.b16 %v775, %v767
        %v992 = vpack.c.b16 %v776, %v768
        %v993 = vpack.c.b16 %v777, %v769
        %v994 = vpack.c.b16 %v778, %v770
        %v995 = vpack.c.b16 %v779, %v771
        %v996 = vpack.c.b16 %v780, %v772
        %v997 = vpack.c.b16 %v781, %v773
        %v998 = vpack.c.b16 %v790, %v782
        %v999 = vpack.c.b16 %v791, %v783
        %v1000 = vpack.c.b16 %v792, %v784
        %v1001 = vpack.c.b16 %v793, %v785
        %v1002 = vpack.c.b16 %v794, %v786
        %v1003 = vpack.c.b16 %v795, %v787
        %v1004 = vpack.c.b16 %v796, %v788
        %v1005 = vpack.c.b16 %v797, %v789
        %v1006 = vpack.c.b16 %v806, %v798
        %v1007 = vpack.c.b16 %v807, %v799
        %v1008 = vpack.c.b16 %v808, %v800
        %v1009 = vpack.c.b16 %v809, %v801
        %v1010 = vpack.c.b16 %v810, %v802
        %v1011 = vpack.c.b16 %v811, %v803
        %v1012 = vpack.c.b16 %v812, %v804
        %v1013 = vpack.c.b16 %v813, %v805
        %v1014 = vpack.c.b16 %v822, %v814
        %v1015 = vpack.c.b16 %v823, %v815
        %v1016 = vpack.c.b16 %v824, %v816
        %v1017 = vpack.c.b16 %v825, %v817
        %v1018 = vpack.c.b16 %v826, %v818
        %v1019 = vpack.c.b16 %v827, %v819
        %v1020 = vpack.c.b16 %v828, %v820
        %v1021 = vpack.c.b16 %v829, %v821
        %v1022 = vpack.c.b16 %v838, %v830
        %v1023 = vpack.c.b16 %v839, %v831
        %v1024 = vpack.c.b16 %v840, %v832
        %v1025 = vpack.c.b16 %v841, %v833
        %v1026 = vpack.c.b16 %v842, %v834
        %v1027 = vpack.c.b16 %v843, %v835
        %v1028 = vpack.c.b16 %v844, %v836
        %v1029 = vpack.c.b16 %v845, %v837
        %v1030 = vpack.c.b16 %v854, %v846
        %v1031 = vpack.c.b16 %v855, %v847
        %v1032 = vpack.c.b16 %v856, %v848
        %v1033 = vpack.c.b16 %v857, %v849
        %v1034 = vpack.c.b16 %v858, %v850
        %v1035 = vpack.c.b16 %v859, %v851
        %v1036 = vpack.c.b16 %v860, %v852
        %v1037 = vpack.c.b16 %v861, %v853
        %v1038 = vpack.c.b16 %v870, %v862
        %v1039 = vpack.c.b16 %v871, %v863
        %v1040 = vpack.c.b16 %v872, %v864
        %v1041 = vpack.c.b16 %v873, %v865
        %v1042 = vpack.c.b16 %v874, %v866
        %v1043 = vpack.c.b16 %v875, %v867
        %v1044 = vpack.c.b16 %v876, %v868
        %v1045 = vpack.c.b16 %v877, %v869
        %v1046 = vpack.c.b16 %v886, %v878
        %v1047 = vpack.c.b16 %v887, %v879
        %v1048 = vpack.c.b16 %v888, %v880
        %v1049 = vpack.c.b16 %v889, %v881
        %v1050 = vpack.c.b16 %v890, %v882
        %v1051 = vpack.c.b16 %v891, %v883
        %v1052 = vpack.c.b16 %v892, %v884
        %v1053 = vpack.c.b16 %v893, %v885
        %v1054 = vpack.c.b16 %v902, %v894
        %v1055 = vpack.c.b16 %v903, %v895
        %v1056 = vpack.c.b16 %v904, %v896
        %v1057 = vpack.c.b16 %v905, %v897
        %v1058 = vpack.c.b16 %v906, %v898
        %v1059 = vpack.c.b16 %v907, %v899
        %v1060 = vpack.c.b16 %v908, %v900
        %v1061 = vpack.c.b16 %v909, %v901
        %v1062 = vpack.c.b16 %v918, %v910
        %v1063 = vpack.c.b16 %v919, %v911
        %v1064 = vpack.c.b16 %v920, %v912
        %v1065 = vpack.c.b16 %v921, %v913
        %v1066 = vpack.c.b16 %v922, %v914
        %v1067 = vpack.c.b16 %v923, %v915
        %v1068 = vpack.c.b16 %v924, %v916
        %v1069 = vpack.c.b16 %v925, %v917
        %v1070 = vpack.c.b16 %v934, %v926
        %v1071 = vpack.c.b16 %v935, %v927
        %v1072 = vpack.c.b16 %v936, %v928
        %v1073 = vpack.c.b16 %v937, %v929
        %v1074 = vpack.c.b16 %v938, %v930
        %v1075 = vpack.c.b16 %v939, %v931
        %v1076 = vpack.c.b16 %v940, %v932
        %v1077 = vpack.c.b16 %v941, %v933
        %v1078 = vpack.c.b16 %v950, %v942
        %v1079 = vpack.c.b16 %v951, %v943
        %v1080 = vpack.c.b16 %v952, %v944
        %v1081 = vpack.c.b16 %v953, %v945
        %v1082 = vpack.c.b16 %v954, %v946
        %v1083 = vpack.c.b16 %v955, %v947
        %v1084 = vpack.c.b16 %v956, %v948
        %v1085 = vpack.c.b16 %v957, %v949
        %1214 = vmatprep.subr.bf16.mxu0 %v959
        %1215 = vmatpush1.bf16.msra.mxu0 %v958
        %1216 = vmatprep.subr.bf16.mxu0 %v967
        %1217 = vmatpush1.bf16.msra.mxu0 %v966
        %1218 = vmatprep.subr.bf16.mxu0 %v975
        %1219 = vmatpush1.bf16.msra.mxu0 %v974
        %1220 = vmatprep.subr.bf16.mxu0 %v983
        %1221 = vmatpush1.bf16.msra.mxu0 %v982
        %1222 = vmatprep.subr.bf16.mxu0 %v991
        %1223 = vmatpush1.bf16.msra.mxu0 %v990
        %1224 = vmatprep.subr.bf16.mxu0 %v999
        %1225 = vmatpush1.bf16.msra.mxu0 %v998
        %1226 = vmatprep.subr.bf16.mxu0 %v1007
        %1227 = vmatpush1.bf16.msra.mxu0 %v1006
        %1228 = vmatprep.subr.bf16.mxu0 %v1015
        %1229 = vmatpush1.bf16.msra.mxu0 %v1014
        %1230 = vmatprep.subr.bf16.mxu0 %v1023
        %1231 = vmatpush1.bf16.msra.mxu0 %v1022
        %1232 = vmatprep.subr.bf16.mxu0 %v1031
        %1233 = vmatpush1.bf16.msra.mxu0 %v1030
        %1234 = vmatprep.subr.bf16.mxu0 %v1039
        %1235 = vmatpush1.bf16.msra.mxu0 %v1038
        %1236 = vmatprep.subr.bf16.mxu0 %v1047
        %1237 = vmatpush1.bf16.msra.mxu0 %v1046
        %1238 = vmatprep.subr.bf16.mxu0 %v1055
        %1239 = vmatpush1.bf16.msra.mxu0 %v1054
        %1240 = vmatprep.subr.bf16.mxu0 %v1063
        %1241 = vmatpush1.bf16.msra.mxu0 %v1062
        %1242 = vmatprep.subr.bf16.mxu0 %v1071
        %1243 = vmatpush1.bf16.msra.mxu0 %v1070
        %1244 = vmatprep.subr.bf16.mxu0 %v1079
        %1245 = vmatpush1.bf16.msra.mxu0 %v1078
        %1246 = vmatprep.mubr.bf16.mxu0 %v389
        %1247 = vmatmul.mubr.bf16.gmra.mrb[0].mxu0 %v388
        %v1248 = vpop.f32.mrb[0].mxu0
        %v1249 = vadd.f32 %v537, %v1248
        %v1250 = vpop.f32.mrb[0].mxu0
        %v1251 = vadd.f32 %v541, %v1250
        %v1252 = vpop.f32.mrb[0].mxu0
        %v1253 = vadd.f32 %v537, %v1252
        %v1254 = vpop.f32.mrb[0].mxu0
        %v1255 = vadd.f32 %v541, %v1254
        %1256 = vmatprep.mubr.bf16.mxu0 %v391
        %1257 = vmatmul.mubr.bf16.gmra.mrb[0].mxu0 %v390
        %v1258 = vpop.f32.mrb[0].mxu0
        %v1259 = vadd.f32 %v537, %v1258
        %v1260 = vpop.f32.mrb[0].mxu0
        %v1261 = vadd.f32 %v541, %v1260
        %v1262 = vpop.f32.mrb[0].mxu0
        %v1263 = vadd.f32 %v537, %v1262
        %v1264 = vpop.f32.mrb[0].mxu0
        %v1265 = vadd.f32 %v541, %v1264
        %1266 = vmatprep.mubr.bf16.mxu0 %v393
        %1267 = vmatmul.mubr.bf16.gmra.mrb[0].mxu0 %v392
        %v1268 = vpop.f32.mrb[0].mxu0
        %v1269 = vadd.f32 %v537, %v1268
        %v1270 = vpop.f32.mrb[0].mxu0
        %v1271 = vadd.f32 %v541, %v1270
        %v1272 = vpop.f32.mrb[0].mxu0
        %v1273 = vadd.f32 %v537, %v1272
        %v1274 = vpop.f32.mrb[0].mxu0
        %v1275 = vadd.f32 %v541, %v1274
        %1276 = vmatprep.mubr.bf16.mxu0 %v395
        %1277 = vmatmul.mubr.bf16.gmra.mrb[0].mxu0 %v394
        %v1278 = vpop.f32.mrb[0].mxu0
        %v1279 = vadd.f32 %v537, %v1278
        %v1280 = vpop.f32.mrb[0].mxu0
        %v1281 = vadd.f32 %v541, %v1280
        %v1282 = vpop.f32.mrb[0].mxu0
        %v1283 = vadd.f32 %v537, %v1282
        %v1284 = vpop.f32.mrb[0].mxu0
        %v1285 = vadd.f32 %v541, %v1284
        %1286 = vmatprep.mubr.bf16.mxu0 %v397
        %1287 = vmatmul.mubr.bf16.gmra.mrb[0].mxu0 %v396
        %v1288 = vpop.f32.mrb[0].mxu0
        %v1289 = vadd.f32 %v537, %v1288
        %v1290 = vpop.f32.mrb[0].mxu0
        %v1291 = vadd.f32 %v541, %v1290
        %v1292 = vpop.f32.mrb[0].mxu0
        %v1293 = vadd.f32 %v537, %v1292
        %v1294 = vpop.f32.mrb[0].mxu0
        %v1295 = vadd.f32 %v541, %v1294
        %1296 = vmatprep.mubr.bf16.mxu0 %v399
        %1297 = vmatmul.mubr.bf16.gmra.mrb[0].mxu0 %v398
        %v1298 = vpop.f32.mrb[0].mxu0
        %v1299 = vadd.f32 %v537, %v1298
        %v1300 = vpop.f32.mrb[0].mxu0
        %v1301 = vadd.f32 %v541, %v1300
        %v1302 = vpop.f32.mrb[0].mxu0
        %v1303 = vadd.f32 %v537, %v1302
        %v1304 = vpop.f32.mrb[0].mxu0
        %v1305 = vadd.f32 %v541, %v1304
        %1306 = vmatprep.mubr.bf16.mxu0 %v401
        %1307 = vmatmul.mubr.bf16.gmra.mrb[0].mxu0 %v400
        %v1308 = vpop.f32.mrb[0].mxu0
        %v1309 = vadd.f32 %v537, %v1308
        %v1310 = vpop.f32.mrb[0].mxu0
        %v1311 = vadd.f32 %v541, %v1310
        %v1312 = vpop.f32.mrb[0].mxu0
        %v1313 = vadd.f32 %v537, %v1312
        %v1314 = vpop.f32.mrb[0].mxu0
        %v1315 = vadd.f32 %v541, %v1314
        %1316 = vmatprep.mubr.bf16.mxu0 %v403
        %1317 = vmatmul.mubr.bf16.gmra.mrb[0].mxu0 %v402
        %v1318 = vpop.f32.mrb[0].mxu0
        %v1319 = vadd.f32 %v537, %v1318
        %v1320 = vpop.f32.mrb[0].mxu0
        %v1321 = vadd.f32 %v541, %v1320
        %v1322 = vpop.f32.mrb[0].mxu0
        %v1323 = vadd.f32 %v537, %v1322
        %v1324 = vpop.f32.mrb[0].mxu0
        %v1325 = vadd.f32 %v541, %v1324
        %1326 = vdwg.mxu0
        %1327 = vmatprep.subr.bf16.mxu0 %v961
        %1328 = vmatpush1.bf16.msra.mxu0 %v960
        %1329 = vmatprep.subr.bf16.mxu0 %v969
        %1330 = vmatpush1.bf16.msra.mxu0 %v968
        %1331 = vmatprep.subr.bf16.mxu0 %v977
        %1332 = vmatpush1.bf16.msra.mxu0 %v976
        %1333 = vmatprep.subr.bf16.mxu0 %v985
        %1334 = vmatpush1.bf16.msra.mxu0 %v984
        %1335 = vmatprep.subr.bf16.mxu0 %v993
        %1336 = vmatpush1.bf16.msra.mxu0 %v992
        %1337 = vmatprep.subr.bf16.mxu0 %v1001
        %1338 = vmatpush1.bf16.msra.mxu0 %v1000
        %1339 = vmatprep.subr.bf16.mxu0 %v1009
        %1340 = vmatpush1.bf16.msra.mxu0 %v1008
        %1341 = vmatprep.subr.bf16.mxu0 %v1017
        %1342 = vmatpush1.bf16.msra.mxu0 %v1016
        %1343 = vmatprep.subr.bf16.mxu0 %v1025
        %1344 = vmatpush1.bf16.msra.mxu0 %v1024
        %1345 = vmatprep.subr.bf16.mxu0 %v1033
        %1346 = vmatpush1.bf16.msra.mxu0 %v1032
        %1347 = vmatprep.subr.bf16.mxu0 %v1041
        %1348 = vmatpush1.bf16.msra.mxu0 %v1040
        %1349 = vmatprep.subr.bf16.mxu0 %v1049
        %1350 = vmatpush1.bf16.msra.mxu0 %v1048
        %1351 = vmatprep.subr.bf16.mxu0 %v1057
        %1352 = vmatpush1.bf16.msra.mxu0 %v1056
        %1353 = vmatprep.subr.bf16.mxu0 %v1065
        %1354 = vmatpush1.bf16.msra.mxu0 %v1064
        %1355 = vmatprep.subr.bf16.mxu0 %v1073
        %1356 = vmatpush1.bf16.msra.mxu0 %v1072
        %1357 = vmatprep.subr.bf16.mxu0 %v1081
        %1358 = vmatpush1.bf16.msra.mxu0 %v1080
        %1359 = vmatprep.mubr.bf16.mxu0 %v389
        %1360 = vmatmul.mubr.bf16.gmra.mrb[0].mxu0 %v388
        %v1361 = vpop.f32.mrb[0].mxu0
        %v1362 = vadd.f32 %v545, %v1361
        %v1363 = vpop.f32.mrb[0].mxu0
        %v1364 = vadd.f32 %v549, %v1363
        %v1365 = vpop.f32.mrb[0].mxu0
        %v1366 = vadd.f32 %v545, %v1365
        %v1367 = vpop.f32.mrb[0].mxu0
        %v1368 = vadd.f32 %v549, %v1367
        %1369 = vmatprep.mubr.bf16.mxu0 %v391
        %1370 = vmatmul.mubr.bf16.gmra.mrb[0].mxu0 %v390
        %v1371 = vpop.f32.mrb[0].mxu0
        %v1372 = vadd.f32 %v545, %v1371
        %v1373 = vpop.f32.mrb[0].mxu0
        %v1374 = vadd.f32 %v549, %v1373
        %v1375 = vpop.f32.mrb[0].mxu0
        %v1376 = vadd.f32 %v545, %v1375
        %v1377 = vpop.f32.mrb[0].mxu0
        %v1378 = vadd.f32 %v549, %v1377
        %1379 = vmatprep.mubr.bf16.mxu0 %v393
        %1380 = vmatmul.mubr.bf16.gmra.mrb[0].mxu0 %v392
        %v1381 = vpop.f32.mrb[0].mxu0
        %v1382 = vadd.f32 %v545, %v1381
        %v1383 = vpop.f32.mrb[0].mxu0
        %v1384 = vadd.f32 %v549, %v1383
        %v1385 = vpop.f32.mrb[0].mxu0
        %v1386 = vadd.f32 %v545, %v1385
        %v1387 = vpop.f32.mrb[0].mxu0
        %v1388 = vadd.f32 %v549, %v1387
        %1389 = vmatprep.mubr.bf16.mxu0 %v395
        %1390 = vmatmul.mubr.bf16.gmra.mrb[0].mxu0 %v394
        %v1391 = vpop.f32.mrb[0].mxu0
        %v1392 = vadd.f32 %v545, %v1391
        %v1393 = vpop.f32.mrb[0].mxu0
        %v1394 = vadd.f32 %v549, %v1393
        %v1395 = vpop.f32.mrb[0].mxu0
        %v1396 = vadd.f32 %v545, %v1395
        %v1397 = vpop.f32.mrb[0].mxu0
        %v1398 = vadd.f32 %v549, %v1397
        %1399 = vmatprep.mubr.bf16.mxu0 %v397
        %1400 = vmatmul.mubr.bf16.gmra.mrb[0].mxu0 %v396
        %v1401 = vpop.f32.mrb[0].mxu0
        %v1402 = vadd.f32 %v545, %v1401
        %v1403 = vpop.f32.mrb[0].mxu0
        %v1404 = vadd.f32 %v549, %v1403
        %v1405 = vpop.f32.mrb[0].mxu0
        %v1406 = vadd.f32 %v545, %v1405
        %v1407 = vpop.f32.mrb[0].mxu0
        %v1408 = vadd.f32 %v549, %v1407
        %1409 = vmatprep.mubr.bf16.mxu0 %v399
        %1410 = vmatmul.mubr.bf16.gmra.mrb[0].mxu0 %v398
        %v1411 = vpop.f32.mrb[0].mxu0
        %v1412 = vadd.f32 %v545, %v1411
        %v1413 = vpop.f32.mrb[0].mxu0
        %v1414 = vadd.f32 %v549, %v1413
        %v1415 = vpop.f32.mrb[0].mxu0
        %v1416 = vadd.f32 %v545, %v1415
        %v1417 = vpop.f32.mrb[0].mxu0
        %v1418 = vadd.f32 %v549, %v1417
        %1419 = vmatprep.mubr.bf16.mxu0 %v401
        %1420 = vmatmul.mubr.bf16.gmra.mrb[0].mxu0 %v400
        %v1421 = vpop.f32.mrb[0].mxu0
        %v1422 = vadd.f32 %v545, %v1421
        %v1423 = vpop.f32.mrb[0].mxu0
        %v1424 = vadd.f32 %v549, %v1423
        %v1425 = vpop.f32.mrb[0].mxu0
        %v1426 = vadd.f32 %v545, %v1425
        %v1427 = vpop.f32.mrb[0].mxu0
        %v1428 = vadd.f32 %v549, %v1427
        %1429 = vmatprep.mubr.bf16.mxu0 %v403
        %1430 = vmatmul.mubr.bf16.gmra.mrb[0].mxu0 %v402
        %v1431 = vpop.f32.mrb[0].mxu0
        %v1432 = vadd.f32 %v545, %v1431
        %v1433 = vpop.f32.mrb[0].mxu0
        %v1434 = vadd.f32 %v549, %v1433
        %v1435 = vpop.f32.mrb[0].mxu0
        %v1436 = vadd.f32 %v545, %v1435
        %v1437 = vpop.f32.mrb[0].mxu0
        %v1438 = vadd.f32 %v549, %v1437
        %1439 = vdwg.mxu0
        %1440 = vmatprep.subr.bf16.mxu0 %v963
        %1441 = vmatpush1.bf16.msra.mxu0 %v962
        %1442 = vmatprep.subr.bf16.mxu0 %v971
        %1443 = vmatpush1.bf16.msra.mxu0 %v970
        %1444 = vmatprep.subr.bf16.mxu0 %v979
        %1445 = vmatpush1.bf16.msra.mxu0 %v978
        %1446 = vmatprep.subr.bf16.mxu0 %v987
        %1447 = vmatpush1.bf16.msra.mxu0 %v986
        %1448 = vmatprep.subr.bf16.mxu0 %v995
        %1449 = vmatpush1.bf16.msra.mxu0 %v994
        %1450 = vmatprep.subr.bf16.mxu0 %v1003
        %1451 = vmatpush1.bf16.msra.mxu0 %v1002
        %1452 = vmatprep.subr.bf16.mxu0 %v1011
        %1453 = vmatpush1.bf16.msra.mxu0 %v1010
        %1454 = vmatprep.subr.bf16.mxu0 %v1019
        %1455 = vmatpush1.bf16.msra.mxu0 %v1018
        %1456 = vmatprep.subr.bf16.mxu0 %v1027
        %1457 = vmatpush1.bf16.msra.mxu0 %v1026
        %1458 = vmatprep.subr.bf16.mxu0 %v1035
        %1459 = vmatpush1.bf16.msra.mxu0 %v1034
        %1460 = vmatprep.subr.bf16.mxu0 %v1043
        %1461 = vmatpush1.bf16.msra.mxu0 %v1042
        %1462 = vmatprep.subr.bf16.mxu0 %v1051
        %1463 = vmatpush1.bf16.msra.mxu0 %v1050
        %1464 = vmatprep.subr.bf16.mxu0 %v1059
        %1465 = vmatpush1.bf16.msra.mxu0 %v1058
        %1466 = vmatprep.subr.bf16.mxu0 %v1067
        %1467 = vmatpush1.bf16.msra.mxu0 %v1066
        %1468 = vmatprep.subr.bf16.mxu0 %v1075
        %1469 = vmatpush1.bf16.msra.mxu0 %v1074
        %1470 = vmatprep.subr.bf16.mxu0 %v1083
        %1471 = vmatpush1.bf16.msra.mxu0 %v1082
        %1472 = vmatprep.mubr.bf16.mxu0 %v389
        %1473 = vmatmul.mubr.bf16.gmra.mrb[0].mxu0 %v388
        %v1474 = vpop.f32.mrb[0].mxu0
        %v1475 = vadd.f32 %v553, %v1474
        %v1476 = vpop.f32.mrb[0].mxu0
        %v1477 = vadd.f32 %v557, %v1476
        %v1478 = vpop.f32.mrb[0].mxu0
        %v1479 = vadd.f32 %v553, %v1478
        %v1480 = vpop.f32.mrb[0].mxu0
        %v1481 = vadd.f32 %v557, %v1480
        %1482 = vmatprep.mubr.bf16.mxu0 %v391
        %1483 = vmatmul.mubr.bf16.gmra.mrb[0].mxu0 %v390
        %v1484 = vpop.f32.mrb[0].mxu0
        %v1485 = vadd.f32 %v553, %v1484
        %v1486 = vpop.f32.mrb[0].mxu0
        %v1487 = vadd.f32 %v557, %v1486
        %v1488 = vpop.f32.mrb[0].mxu0
        %v1489 = vadd.f32 %v553, %v1488
        %v1490 = vpop.f32.mrb[0].mxu0
        %v1491 = vadd.f32 %v557, %v1490
        %1492 = vmatprep.mubr.bf16.mxu0 %v393
        %1493 = vmatmul.mubr.bf16.gmra.mrb[0].mxu0 %v392
        %v1494 = vpop.f32.mrb[0].mxu0
        %v1495 = vadd.f32 %v553, %v1494
        %v1496 = vpop.f32.mrb[0].mxu0
        %v1497 = vadd.f32 %v557, %v1496
        %v1498 = vpop.f32.mrb[0].mxu0
        %v1499 = vadd.f32 %v553, %v1498
        %v1500 = vpop.f32.mrb[0].mxu0
        %v1501 = vadd.f32 %v557, %v1500
        %1502 = vmatprep.mubr.bf16.mxu0 %v395
        %1503 = vmatmul.mubr.bf16.gmra.mrb[0].mxu0 %v394
        %v1504 = vpop.f32.mrb[0].mxu0
        %v1505 = vadd.f32 %v553, %v1504
        %v1506 = vpop.f32.mrb[0].mxu0
        %v1507 = vadd.f32 %v557, %v1506
        %v1508 = vpop.f32.mrb[0].mxu0
        %v1509 = vadd.f32 %v553, %v1508
        %v1510 = vpop.f32.mrb[0].mxu0
        %v1511 = vadd.f32 %v557, %v1510
        %1512 = vmatprep.mubr.bf16.mxu0 %v397
        %1513 = vmatmul.mubr.bf16.gmra.mrb[0].mxu0 %v396
        %v1514 = vpop.f32.mrb[0].mxu0
        %v1515 = vadd.f32 %v553, %v1514
        %v1516 = vpop.f32.mrb[0].mxu0
        %v1517 = vadd.f32 %v557, %v1516
        %v1518 = vpop.f32.mrb[0].mxu0
        %v1519 = vadd.f32 %v553, %v1518
        %v1520 = vpop.f32.mrb[0].mxu0
        %v1521 = vadd.f32 %v557, %v1520
        %1522 = vmatprep.mubr.bf16.mxu0 %v399
        %1523 = vmatmul.mubr.bf16.gmra.mrb[0].mxu0 %v398
        %v1524 = vpop.f32.mrb[0].mxu0
        %v1525 = vadd.f32 %v553, %v1524
        %v1526 = vpop.f32.mrb[0].mxu0
        %v1527 = vadd.f32 %v557, %v1526
        %v1528 = vpop.f32.mrb[0].mxu0
        %v1529 = vadd.f32 %v553, %v1528
        %v1530 = vpop.f32.mrb[0].mxu0
        %v1531 = vadd.f32 %v557, %v1530
        %1532 = vmatprep.mubr.bf16.mxu0 %v401
        %1533 = vmatmul.mubr.bf16.gmra.mrb[0].mxu0 %v400
        %v1534 = vpop.f32.mrb[0].mxu0
        %v1535 = vadd.f32 %v553, %v1534
        %v1536 = vpop.f32.mrb[0].mxu0
        %v1537 = vadd.f32 %v557, %v1536
        %v1538 = vpop.f32.mrb[0].mxu0
        %v1539 = vadd.f32 %v553, %v1538
        %v1540 = vpop.f32.mrb[0].mxu0
        %v1541 = vadd.f32 %v557, %v1540
        %1542 = vmatprep.mubr.bf16.mxu0 %v403
        %1543 = vmatmul.mubr.bf16.gmra.mrb[0].mxu0 %v402
        %v1544 = vpop.f32.mrb[0].mxu0
        %v1545 = vadd.f32 %v553, %v1544
        %v1546 = vpop.f32.mrb[0].mxu0
        %v1547 = vadd.f32 %v557, %v1546
        %v1548 = vpop.f32.mrb[0].mxu0
        %v1549 = vadd.f32 %v553, %v1548
        %v1550 = vpop.f32.mrb[0].mxu0
        %v1551 = vadd.f32 %v557, %v1550
        %1552 = vdwg.mxu0
        %1553 = vmatprep.subr.bf16.mxu0 %v965
        %1554 = vmatpush1.bf16.msra.mxu0 %v964
        %1555 = vmatprep.subr.bf16.mxu0 %v973
        %1556 = vmatpush1.bf16.msra.mxu0 %v972
        %1557 = vmatprep.subr.bf16.mxu0 %v981
        %1558 = vmatpush1.bf16.msra.mxu0 %v980
        %1559 = vmatprep.subr.bf16.mxu0 %v989
        %1560 = vmatpush1.bf16.msra.mxu0 %v988
        %1561 = vmatprep.subr.bf16.mxu0 %v997
        %1562 = vmatpush1.bf16.msra.mxu0 %v996
        %1563 = vmatprep.subr.bf16.mxu0 %v1005
        %1564 = vmatpush1.bf16.msra.mxu0 %v1004
        %1565 = vmatprep.subr.bf16.mxu0 %v1013
        %1566 = vmatpush1.bf16.msra.mxu0 %v1012
        %1567 = vmatprep.subr.bf16.mxu0 %v1021
        %1568 = vmatpush1.bf16.msra.mxu0 %v1020
        %1569 = vmatprep.subr.bf16.mxu0 %v1029
        %1570 = vmatpush1.bf16.msra.mxu0 %v1028
        %1571 = vmatprep.subr.bf16.mxu0 %v1037
        %1572 = vmatpush1.bf16.msra.mxu0 %v1036
        %1573 = vmatprep.subr.bf16.mxu0 %v1045
        %1574 = vmatpush1.bf16.msra.mxu0 %v1044
        %1575 = vmatprep.subr.bf16.mxu0 %v1053
        %1576 = vmatpush1.bf16.msra.mxu0 %v1052
        %1577 = vmatprep.subr.bf16.mxu0 %v1061
        %1578 = vmatpush1.bf16.msra.mxu0 %v1060
        %1579 = vmatprep.subr.bf16.mxu0 %v1069
        %1580 = vmatpush1.bf16.msra.mxu0 %v1068
        %1581 = vmatprep.subr.bf16.mxu0 %v1077
        %1582 = vmatpush1.bf16.msra.mxu0 %v1076
        %1583 = vmatprep.subr.bf16.mxu0 %v1085
        %1584 = vmatpush1.bf16.msra.mxu0 %v1084
        %1585 = vmatprep.mubr.bf16.mxu0 %v389
        %1586 = vmatmul.mubr.bf16.gmra.mrb[0].mxu0 %v388
        %v1587 = vpop.f32.mrb[0].mxu0
        %v1588 = vadd.f32 %v561, %v1587
        %v1589 = vpop.f32.mrb[0].mxu0
        %v1590 = vadd.f32 %v565, %v1589
        %v1591 = vpop.f32.mrb[0].mxu0
        %v1592 = vadd.f32 %v561, %v1591
        %v1593 = vpop.f32.mrb[0].mxu0
        %v1594 = vadd.f32 %v565, %v1593
        %1595 = vmatprep.mubr.bf16.mxu0 %v391
        %1596 = vmatmul.mubr.bf16.gmra.mrb[0].mxu0 %v390
        %v1597 = vpop.f32.mrb[0].mxu0
        %v1598 = vadd.f32 %v561, %v1597
        %v1599 = vpop.f32.mrb[0].mxu0
        %v1600 = vadd.f32 %v565, %v1599
        %v1601 = vpop.f32.mrb[0].mxu0
        %v1602 = vadd.f32 %v561, %v1601
        %v1603 = vpop.f32.mrb[0].mxu0
        %v1604 = vadd.f32 %v565, %v1603
        %1605 = vmatprep.mubr.bf16.mxu0 %v393
        %1606 = vmatmul.mubr.bf16.gmra.mrb[0].mxu0 %v392
        %v1607 = vpop.f32.mrb[0].mxu0
        %v1608 = vadd.f32 %v561, %v1607
        %v1609 = vpop.f32.mrb[0].mxu0
        %v1610 = vadd.f32 %v565, %v1609
        %v1611 = vpop.f32.mrb[0].mxu0
        %v1612 = vadd.f32 %v561, %v1611
        %v1613 = vpop.f32.mrb[0].mxu0
        %v1614 = vadd.f32 %v565, %v1613
        %1615 = vmatprep.mubr.bf16.mxu0 %v395
        %1616 = vmatmul.mubr.bf16.gmra.mrb[0].mxu0 %v394
        %v1617 = vpop.f32.mrb[0].mxu0
        %v1618 = vadd.f32 %v561, %v1617
        %v1619 = vpop.f32.mrb[0].mxu0
        %v1620 = vadd.f32 %v565, %v1619
        %v1621 = vpop.f32.mrb[0].mxu0
        %v1622 = vadd.f32 %v561, %v1621
        %v1623 = vpop.f32.mrb[0].mxu0
        %v1624 = vadd.f32 %v565, %v1623
        %1625 = vmatprep.mubr.bf16.mxu0 %v397
        %1626 = vmatmul.mubr.bf16.gmra.mrb[0].mxu0 %v396
        %v1627 = vpop.f32.mrb[0].mxu0
        %v1628 = vadd.f32 %v561, %v1627
        %v1629 = vpop.f32.mrb[0].mxu0
        %v1630 = vadd.f32 %v565, %v1629
        %v1631 = vpop.f32.mrb[0].mxu0
        %v1632 = vadd.f32 %v561, %v1631
        %v1633 = vpop.f32.mrb[0].mxu0
        %v1634 = vadd.f32 %v565, %v1633
        %1635 = vmatprep.mubr.bf16.mxu0 %v399
        %1636 = vmatmul.mubr.bf16.gmra.mrb[0].mxu0 %v398
        %v1637 = vpop.f32.mrb[0].mxu0
        %v1638 = vadd.f32 %v561, %v1637
        %v1639 = vpop.f32.mrb[0].mxu0
        %v1640 = vadd.f32 %v565, %v1639
        %v1641 = vpop.f32.mrb[0].mxu0
        %v1642 = vadd.f32 %v561, %v1641
        %v1643 = vpop.f32.mrb[0].mxu0
        %v1644 = vadd.f32 %v565, %v1643
        %1645 = vmatprep.mubr.bf16.mxu0 %v401
        %1646 = vmatmul.mubr.bf16.gmra.mrb[0].mxu0 %v400
        %v1647 = vpop.f32.mrb[0].mxu0
        %v1648 = vadd.f32 %v561, %v1647
        %v1649 = vpop.f32.mrb[0].mxu0
        %v1650 = vadd.f32 %v565, %v1649
        %v1651 = vpop.f32.mrb[0].mxu0
        %v1652 = vadd.f32 %v561, %v1651
        %v1653 = vpop.f32.mrb[0].mxu0
        %v1654 = vadd.f32 %v565, %v1653
        %1655 = vmatprep.mubr.bf16.mxu0 %v403
        %1656 = vmatmul.mubr.bf16.gmra.mrb[0].mxu0 %v402
        %v1657 = vpop.f32.mrb[0].mxu0
        %v1658 = vadd.f32 %v561, %v1657
        %v1659 = vpop.f32.mrb[0].mxu0
        %v1660 = vadd.f32 %v565, %v1659
        %v1661 = vpop.f32.mrb[0].mxu0
        %v1662 = vadd.f32 %v561, %v1661
        %v1663 = vpop.f32.mrb[0].mxu0
        %v1664 = vadd.f32 %v565, %v1663
        %1665 = vdwg.mxu0
        %v1666 = vmul.f32 %v1249, 0.01
        %v1667 = vmul.f32 %v1251, 0.01
        %v1668 = vmul.f32 %v1362, 0.01
        %v1669 = vmul.f32 %v1364, 0.01
        %v1670 = vmul.f32 %v1475, 0.01
        %v1671 = vmul.f32 %v1477, 0.01
        %v1672 = vmul.f32 %v1588, 0.01
        %v1673 = vmul.f32 %v1590, 0.01
        %v1674 = vmul.f32 %v1253, 0.01
        %v1675 = vmul.f32 %v1255, 0.01
        %v1676 = vmul.f32 %v1366, 0.01
        %v1677 = vmul.f32 %v1368, 0.01
        %v1678 = vmul.f32 %v1479, 0.01
        %v1679 = vmul.f32 %v1481, 0.01
        %v1680 = vmul.f32 %v1592, 0.01
        %v1681 = vmul.f32 %v1594, 0.01
        %v1682 = vmul.f32 %v1259, 0.01
        %v1683 = vmul.f32 %v1261, 0.01
        %v1684 = vmul.f32 %v1372, 0.01
        %v1685 = vmul.f32 %v1374, 0.01
        %v1686 = vmul.f32 %v1485, 0.01
        %v1687 = vmul.f32 %v1487, 0.01
        %v1688 = vmul.f32 %v1598, 0.01
        %v1689 = vmul.f32 %v1600, 0.01
        %v1690 = vmul.f32 %v1263, 0.01
        %v1691 = vmul.f32 %v1265, 0.01
        %v1692 = vmul.f32 %v1376, 0.01
        %v1693 = vmul.f32 %v1378, 0.01
        %v1694 = vmul.f32 %v1489, 0.01
        %v1695 = vmul.f32 %v1491, 0.01
        %v1696 = vmul.f32 %v1602, 0.01
        %v1697 = vmul.f32 %v1604, 0.01
        %v1698 = vmul.f32 %v1269, 0.01
        %v1699 = vmul.f32 %v1271, 0.01
        %v1700 = vmul.f32 %v1382, 0.01
        %v1701 = vmul.f32 %v1384, 0.01
        %v1702 = vmul.f32 %v1495, 0.01
        %v1703 = vmul.f32 %v1497, 0.01
        %v1704 = vmul.f32 %v1608, 0.01
        %v1705 = vmul.f32 %v1610, 0.01
        %v1706 = vmul.f32 %v1273, 0.01
        %v1707 = vmul.f32 %v1275, 0.01
        %v1708 = vmul.f32 %v1386, 0.01
        %v1709 = vmul.f32 %v1388, 0.01
        %v1710 = vmul.f32 %v1499, 0.01
        %v1711 = vmul.f32 %v1501, 0.01
        %v1712 = vmul.f32 %v1612, 0.01
        %v1713 = vmul.f32 %v1614, 0.01
        %v1714 = vmul.f32 %v1279, 0.01
        %v1715 = vmul.f32 %v1281, 0.01
        %v1716 = vmul.f32 %v1392, 0.01
        %v1717 = vmul.f32 %v1394, 0.01
        %v1718 = vmul.f32 %v1505, 0.01
        %v1719 = vmul.f32 %v1507, 0.01
        %v1720 = vmul.f32 %v1618, 0.01
        %v1721 = vmul.f32 %v1620, 0.01
        %v1722 = vmul.f32 %v1283, 0.01
        %v1723 = vmul.f32 %v1285, 0.01
        %v1724 = vmul.f32 %v1396, 0.01
        %v1725 = vmul.f32 %v1398, 0.01
        %v1726 = vmul.f32 %v1509, 0.01
        %v1727 = vmul.f32 %v1511, 0.01
        %v1728 = vmul.f32 %v1622, 0.01
        %v1729 = vmul.f32 %v1624, 0.01
        %v1730 = vmul.f32 %v1289, 0.01
        %v1731 = vmul.f32 %v1291, 0.01
        %v1732 = vmul.f32 %v1402, 0.01
        %v1733 = vmul.f32 %v1404, 0.01
        %v1734 = vmul.f32 %v1515, 0.01
        %v1735 = vmul.f32 %v1517, 0.01
        %v1736 = vmul.f32 %v1628, 0.01
        %v1737 = vmul.f32 %v1630, 0.01
        %v1738 = vmul.f32 %v1293, 0.01
        %v1739 = vmul.f32 %v1295, 0.01
        %v1740 = vmul.f32 %v1406, 0.01
        %v1741 = vmul.f32 %v1408, 0.01
        %v1742 = vmul.f32 %v1519, 0.01
        %v1743 = vmul.f32 %v1521, 0.01
        %v1744 = vmul.f32 %v1632, 0.01
        %v1745 = vmul.f32 %v1634, 0.01
        %v1746 = vmul.f32 %v1299, 0.01
        %v1747 = vmul.f32 %v1301, 0.01
        %v1748 = vmul.f32 %v1412, 0.01
        %v1749 = vmul.f32 %v1414, 0.01
        %v1750 = vmul.f32 %v1525, 0.01
        %v1751 = vmul.f32 %v1527, 0.01
        %v1752 = vmul.f32 %v1638, 0.01
        %v1753 = vmul.f32 %v1640, 0.01
        %v1754 = vmul.f32 %v1303, 0.01
        %v1755 = vmul.f32 %v1305, 0.01
        %v1756 = vmul.f32 %v1416, 0.01
        %v1757 = vmul.f32 %v1418, 0.01
        %v1758 = vmul.f32 %v1529, 0.01
        %v1759 = vmul.f32 %v1531, 0.01
        %v1760 = vmul.f32 %v1642, 0.01
        %v1761 = vmul.f32 %v1644, 0.01
        %v1762 = vmul.f32 %v1309, 0.01
        %v1763 = vmul.f32 %v1311, 0.01
        %v1764 = vmul.f32 %v1422, 0.01
        %v1765 = vmul.f32 %v1424, 0.01
        %v1766 = vmul.f32 %v1535, 0.01
        %v1767 = vmul.f32 %v1537, 0.01
        %v1768 = vmul.f32 %v1648, 0.01
        %v1769 = vmul.f32 %v1650, 0.01
        %v1770 = vmul.f32 %v1313, 0.01
        %v1771 = vmul.f32 %v1315, 0.01
        %v1772 = vmul.f32 %v1426, 0.01
        %v1773 = vmul.f32 %v1428, 0.01
        %v1774 = vmul.f32 %v1539, 0.01
        %v1775 = vmul.f32 %v1541, 0.01
        %v1776 = vmul.f32 %v1652, 0.01
        %v1777 = vmul.f32 %v1654, 0.01
        %v1778 = vmul.f32 %v1319, 0.01
        %v1779 = vmul.f32 %v1321, 0.01
        %v1780 = vmul.f32 %v1432, 0.01
        %v1781 = vmul.f32 %v1434, 0.01
        %v1782 = vmul.f32 %v1545, 0.01
        %v1783 = vmul.f32 %v1547, 0.01
        %v1784 = vmul.f32 %v1658, 0.01
        %v1785 = vmul.f32 %v1660, 0.01
        %v1786 = vmul.f32 %v1323, 0.01
        %v1787 = vmul.f32 %v1325, 0.01
        %v1788 = vmul.f32 %v1436, 0.01
        %v1789 = vmul.f32 %v1438, 0.01
        %v1790 = vmul.f32 %v1549, 0.01
        %v1791 = vmul.f32 %v1551, 0.01
        %v1792 = vmul.f32 %v1662, 0.01
        %v1793 = vmul.f32 %v1664, 0.01
        %v1794 = vmax.f32 %v1249, %v1666
        %v1795 = vmax.f32 %v1251, %v1667
        %v1796 = vmax.f32 %v1362, %v1668
        %v1797 = vmax.f32 %v1364, %v1669
        %v1798 = vmax.f32 %v1475, %v1670
        %v1799 = vmax.f32 %v1477, %v1671
        %v1800 = vmax.f32 %v1588, %v1672
        %v1801 = vmax.f32 %v1590, %v1673
        %v1802 = vmax.f32 %v1253, %v1674
        %v1803 = vmax.f32 %v1255, %v1675
        %v1804 = vmax.f32 %v1366, %v1676
        %v1805 = vmax.f32 %v1368, %v1677
        %v1806 = vmax.f32 %v1479, %v1678
        %v1807 = vmax.f32 %v1481, %v1679
        %v1808 = vmax.f32 %v1592, %v1680
        %v1809 = vmax.f32 %v1594, %v1681
        %v1810 = vmax.f32 %v1259, %v1682
        %v1811 = vmax.f32 %v1261, %v1683
        %v1812 = vmax.f32 %v1372, %v1684
        %v1813 = vmax.f32 %v1374, %v1685
        %v1814 = vmax.f32 %v1485, %v1686
        %v1815 = vmax.f32 %v1487, %v1687
        %v1816 = vmax.f32 %v1598, %v1688
        %v1817 = vmax.f32 %v1600, %v1689
        %v1818 = vmax.f32 %v1263, %v1690
        %v1819 = vmax.f32 %v1265, %v1691
        %v1820 = vmax.f32 %v1376, %v1692
        %v1821 = vmax.f32 %v1378, %v1693
        %v1822 = vmax.f32 %v1489, %v1694
        %v1823 = vmax.f32 %v1491, %v1695
        %v1824 = vmax.f32 %v1602, %v1696
        %v1825 = vmax.f32 %v1604, %v1697
        %v1826 = vmax.f32 %v1269, %v1698
        %v1827 = vmax.f32 %v1271, %v1699
        %v1828 = vmax.f32 %v1382, %v1700
        %v1829 = vmax.f32 %v1384, %v1701
        %v1830 = vmax.f32 %v1495, %v1702
        %v1831 = vmax.f32 %v1497, %v1703
        %v1832 = vmax.f32 %v1608, %v1704
        %v1833 = vmax.f32 %v1610, %v1705
        %v1834 = vmax.f32 %v1273, %v1706
        %v1835 = vmax.f32 %v1275, %v1707
        %v1836 = vmax.f32 %v1386, %v1708
        %v1837 = vmax.f32 %v1388, %v1709
        %v1838 = vmax.f32 %v1499, %v1710
        %v1839 = vmax.f32 %v1501, %v1711
        %v1840 = vmax.f32 %v1612, %v1712
        %v1841 = vmax.f32 %v1614, %v1713
        %v1842 = vmax.f32 %v1279, %v1714
        %v1843 = vmax.f32 %v1281, %v1715
        %v1844 = vmax.f32 %v1392, %v1716
        %v1845 = vmax.f32 %v1394, %v1717
        %v1846 = vmax.f32 %v1505, %v1718
        %v1847 = vmax.f32 %v1507, %v1719
        %v1848 = vmax.f32 %v1618, %v1720
        %v1849 = vmax.f32 %v1620, %v1721
        %v1850 = vmax.f32 %v1283, %v1722
        %v1851 = vmax.f32 %v1285, %v1723
        %v1852 = vmax.f32 %v1396, %v1724
        %v1853 = vmax.f32 %v1398, %v1725
        %v1854 = vmax.f32 %v1509, %v1726
        %v1855 = vmax.f32 %v1511, %v1727
        %v1856 = vmax.f32 %v1622, %v1728
        %v1857 = vmax.f32 %v1624, %v1729
        %v1858 = vmax.f32 %v1289, %v1730
        %v1859 = vmax.f32 %v1291, %v1731
        %v1860 = vmax.f32 %v1402, %v1732
        %v1861 = vmax.f32 %v1404, %v1733
        %v1862 = vmax.f32 %v1515, %v1734
        %v1863 = vmax.f32 %v1517, %v1735
        %v1864 = vmax.f32 %v1628, %v1736
        %v1865 = vmax.f32 %v1630, %v1737
        %v1866 = vmax.f32 %v1293, %v1738
        %v1867 = vmax.f32 %v1295, %v1739
        %v1868 = vmax.f32 %v1406, %v1740
        %v1869 = vmax.f32 %v1408, %v1741
        %v1870 = vmax.f32 %v1519, %v1742
        %v1871 = vmax.f32 %v1521, %v1743
        %v1872 = vmax.f32 %v1632, %v1744
        %v1873 = vmax.f32 %v1634, %v1745
        %v1874 = vmax.f32 %v1299, %v1746
        %v1875 = vmax.f32 %v1301, %v1747
        %v1876 = vmax.f32 %v1412, %v1748
        %v1877 = vmax.f32 %v1414, %v1749
        %v1878 = vmax.f32 %v1525, %v1750
        %v1879 = vmax.f32 %v1527, %v1751
        %v1880 = vmax.f32 %v1638, %v1752
        %v1881 = vmax.f32 %v1640, %v1753
        %v1882 = vmax.f32 %v1303, %v1754
        %v1883 = vmax.f32 %v1305, %v1755
        %v1884 = vmax.f32 %v1416, %v1756
        %v1885 = vmax.f32 %v1418, %v1757
        %v1886 = vmax.f32 %v1529, %v1758
        %v1887 = vmax.f32 %v1531, %v1759
        %v1888 = vmax.f32 %v1642, %v1760
        %v1889 = vmax.f32 %v1644, %v1761
        %v1890 = vmax.f32 %v1309, %v1762
        %v1891 = vmax.f32 %v1311, %v1763
        %v1892 = vmax.f32 %v1422, %v1764
        %v1893 = vmax.f32 %v1424, %v1765
        %v1894 = vmax.f32 %v1535, %v1766
        %v1895 = vmax.f32 %v1537, %v1767
        %v1896 = vmax.f32 %v1648, %v1768
        %v1897 = vmax.f32 %v1650, %v1769
        %v1898 = vmax.f32 %v1313, %v1770
        %v1899 = vmax.f32 %v1315, %v1771
        %v1900 = vmax.f32 %v1426, %v1772
        %v1901 = vmax.f32 %v1428, %v1773
        %v1902 = vmax.f32 %v1539, %v1774
        %v1903 = vmax.f32 %v1541, %v1775
        %v1904 = vmax.f32 %v1652, %v1776
        %v1905 = vmax.f32 %v1654, %v1777
        %v1906 = vmax.f32 %v1319, %v1778
        %v1907 = vmax.f32 %v1321, %v1779
        %v1908 = vmax.f32 %v1432, %v1780
        %v1909 = vmax.f32 %v1434, %v1781
        %v1910 = vmax.f32 %v1545, %v1782
        %v1911 = vmax.f32 %v1547, %v1783
        %v1912 = vmax.f32 %v1658, %v1784
        %v1913 = vmax.f32 %v1660, %v1785
        %v1914 = vmax.f32 %v1323, %v1786
        %v1915 = vmax.f32 %v1325, %v1787
        %v1916 = vmax.f32 %v1436, %v1788
        %v1917 = vmax.f32 %v1438, %v1789
        %v1918 = vmax.f32 %v1549, %v1790
        %v1919 = vmax.f32 %v1551, %v1791
        %v1920 = vmax.f32 %v1662, %v1792
        %v1921 = vmax.f32 %v1664, %v1793
        %v1922 = vpack.c.bf16 %v1802, %v1794
        %v1923 = vpack.c.bf16 %v1803, %v1795
        %v1924 = vpack.c.bf16 %v1804, %v1796
        %v1925 = vpack.c.bf16 %v1805, %v1797
        %v1926 = vpack.c.bf16 %v1806, %v1798
        %v1927 = vpack.c.bf16 %v1807, %v1799
        %v1928 = vpack.c.bf16 %v1808, %v1800
        %v1929 = vpack.c.bf16 %v1809, %v1801
        %v1930 = vpack.c.bf16 %v1818, %v1810
        %v1931 = vpack.c.bf16 %v1819, %v1811
        %v1932 = vpack.c.bf16 %v1820, %v1812
        %v1933 = vpack.c.bf16 %v1821, %v1813
        %v1934 = vpack.c.bf16 %v1822, %v1814
        %v1935 = vpack.c.bf16 %v1823, %v1815
        %v1936 = vpack.c.bf16 %v1824, %v1816
        %v1937 = vpack.c.bf16 %v1825, %v1817
        %v1938 = vpack.c.bf16 %v1834, %v1826
        %v1939 = vpack.c.bf16 %v1835, %v1827
        %v1940 = vpack.c.bf16 %v1836, %v1828
        %v1941 = vpack.c.bf16 %v1837, %v1829
        %v1942 = vpack.c.bf16 %v1838, %v1830
        %v1943 = vpack.c.bf16 %v1839, %v1831
        %v1944 = vpack.c.bf16 %v1840, %v1832
        %v1945 = vpack.c.bf16 %v1841, %v1833
        %v1946 = vpack.c.bf16 %v1850, %v1842
        %v1947 = vpack.c.bf16 %v1851, %v1843
        %v1948 = vpack.c.bf16 %v1852, %v1844
        %v1949 = vpack.c.bf16 %v1853, %v1845
        %v1950 = vpack.c.bf16 %v1854, %v1846
        %v1951 = vpack.c.bf16 %v1855, %v1847
        %v1952 = vpack.c.bf16 %v1856, %v1848
        %v1953 = vpack.c.bf16 %v1857, %v1849
        %v1954 = vpack.c.bf16 %v1866, %v1858
        %v1955 = vpack.c.bf16 %v1867, %v1859
        %v1956 = vpack.c.bf16 %v1868, %v1860
        %v1957 = vpack.c.bf16 %v1869, %v1861
        %v1958 = vpack.c.bf16 %v1870, %v1862
        %v1959 = vpack.c.bf16 %v1871, %v1863
        %v1960 = vpack.c.bf16 %v1872, %v1864
        %v1961 = vpack.c.bf16 %v1873, %v1865
        %v1962 = vpack.c.bf16 %v1882, %v1874
        %v1963 = vpack.c.bf16 %v1883, %v1875
        %v1964 = vpack.c.bf16 %v1884, %v1876
        %v1965 = vpack.c.bf16 %v1885, %v1877
        %v1966 = vpack.c.bf16 %v1886, %v1878
        %v1967 = vpack.c.bf16 %v1887, %v1879
        %v1968 = vpack.c.bf16 %v1888, %v1880
        %v1969 = vpack.c.bf16 %v1889, %v1881
        %v1970 = vpack.c.bf16 %v1898, %v1890
        %v1971 = vpack.c.bf16 %v1899, %v1891
        %v1972 = vpack.c.bf16 %v1900, %v1892
        %v1973 = vpack.c.bf16 %v1901, %v1893
        %v1974 = vpack.c.bf16 %v1902, %v1894
        %v1975 = vpack.c.bf16 %v1903, %v1895
        %v1976 = vpack.c.bf16 %v1904, %v1896
        %v1977 = vpack.c.bf16 %v1905, %v1897
        %v1978 = vpack.c.bf16 %v1914, %v1906
        %v1979 = vpack.c.bf16 %v1915, %v1907
        %v1980 = vpack.c.bf16 %v1916, %v1908
        %v1981 = vpack.c.bf16 %v1917, %v1909
        %v1982 = vpack.c.bf16 %v1918, %v1910
        %v1983 = vpack.c.bf16 %v1919, %v1911
        %v1984 = vpack.c.bf16 %v1920, %v1912
        %v1985 = vpack.c.bf16 %v1921, %v1913
        %v1986 = vld [vmem:[#allocation8] sm:$0xff]
        %v1987 = vld [vmem:[#allocation8 + $0x8] sm:$0xff]
        %v1988 = vld [vmem:[#allocation8 + $0x10] sm:$0xff]
        %v1989 = vld [vmem:[#allocation8 + $0x18] sm:$0xff]
        %v1990 = vld [vmem:[#allocation8 + $0x20] sm:$0xff]
        %v1991 = vld [vmem:[#allocation8 + $0x28] sm:$0xff]
        %v1992 = vld [vmem:[#allocation8 + $0x30] sm:$0xff]
        %v1993 = vld [vmem:[#allocation8 + $0x38] sm:$0xff]
        %v1994 = vld [vmem:[#allocation8 + $0x40] sm:$0xff]
        %v1995 = vld [vmem:[#allocation8 + $0x48] sm:$0xff]
        %v1996 = vld [vmem:[#allocation8 + $0x50] sm:$0xff]
        %v1997 = vld [vmem:[#allocation8 + $0x58] sm:$0xff]
        %v1998 = vld [vmem:[#allocation8 + $0x60] sm:$0xff]
        %v1999 = vld [vmem:[#allocation8 + $0x68] sm:$0xff]
        %v2000 = vld [vmem:[#allocation8 + $0x70] sm:$0xff]
        %v2001 = vld [vmem:[#allocation8 + $0x78] sm:$0xff]
        %v2002 = vld [vmem:[#allocation8 + $0x80] sm:$0xff]
        %v2003 = vld [vmem:[#allocation8 + $0x88] sm:$0xff]
        %v2004 = vld [vmem:[#allocation8 + $0x90] sm:$0xff]
        %v2005 = vld [vmem:[#allocation8 + $0x98] sm:$0xff]
        %v2006 = vld [vmem:[#allocation8 + $0xa0] sm:$0xff]
        %v2007 = vld [vmem:[#allocation8 + $0xa8] sm:$0xff]
        %v2008 = vld [vmem:[#allocation8 + $0xb0] sm:$0xff]
        %v2009 = vld [vmem:[#allocation8 + $0xb8] sm:$0xff]
        %v2010 = vld [vmem:[#allocation8 + $0xc0] sm:$0xff]
        %v2011 = vld [vmem:[#allocation8 + $0xc8] sm:$0xff]
        %v2012 = vld [vmem:[#allocation8 + $0xd0] sm:$0xff]
        %v2013 = vld [vmem:[#allocation8 + $0xd8] sm:$0xff]
        %v2014 = vld [vmem:[#allocation8 + $0xe0] sm:$0xff]
        %v2015 = vld [vmem:[#allocation8 + $0xe8] sm:$0xff]
        %v2016 = vld [vmem:[#allocation8 + $0xf0] sm:$0xff]
        %v2017 = vld [vmem:[#allocation8 + $0xf8] sm:$0xff]
        %v2018 = vld [vmem:[#allocation8 + $0x100] sm:$0xff]
        %v2019 = vld [vmem:[#allocation8 + $0x108] sm:$0xff]
        %v2020 = vld [vmem:[#allocation8 + $0x110] sm:$0xff]
        %v2021 = vld [vmem:[#allocation8 + $0x118] sm:$0xff]
        %v2022 = vld [vmem:[#allocation8 + $0x120] sm:$0xff]
        %v2023 = vld [vmem:[#allocation8 + $0x128] sm:$0xff]
        %v2024 = vld [vmem:[#allocation8 + $0x130] sm:$0xff]
        %v2025 = vld [vmem:[#allocation8 + $0x138] sm:$0xff]
        %v2026 = vld [vmem:[#allocation8 + $0x140] sm:$0xff]
        %v2027 = vld [vmem:[#allocation8 + $0x148] sm:$0xff]
        %v2028 = vld [vmem:[#allocation8 + $0x150] sm:$0xff]
        %v2029 = vld [vmem:[#allocation8 + $0x158] sm:$0xff]
        %v2030 = vld [vmem:[#allocation8 + $0x160] sm:$0xff]
        %v2031 = vld [vmem:[#allocation8 + $0x168] sm:$0xff]
        %v2032 = vld [vmem:[#allocation8 + $0x170] sm:$0xff]
        %v2033 = vld [vmem:[#allocation8 + $0x178] sm:$0xff]
        %v2034 = vld [vmem:[#allocation8 + $0x180] sm:$0xff]
        %v2035 = vld [vmem:[#allocation8 + $0x188] sm:$0xff]
        %v2036 = vld [vmem:[#allocation8 + $0x190] sm:$0xff]
        %v2037 = vld [vmem:[#allocation8 + $0x198] sm:$0xff]
        %v2038 = vld [vmem:[#allocation8 + $0x1a0] sm:$0xff]
        %v2039 = vld [vmem:[#allocation8 + $0x1a8] sm:$0xff]
        %v2040 = vld [vmem:[#allocation8 + $0x1b0] sm:$0xff]
        %v2041 = vld [vmem:[#allocation8 + $0x1b8] sm:$0xff]
        %v2042 = vld [vmem:[#allocation8 + $0x1c0] sm:$0xff]
        %v2043 = vld [vmem:[#allocation8 + $0x1c8] sm:$0xff]
        %v2044 = vld [vmem:[#allocation8 + $0x1d0] sm:$0xff]
        %v2045 = vld [vmem:[#allocation8 + $0x1d8] sm:$0xff]
        %v2046 = vld [vmem:[#allocation8 + $0x1e0] sm:$0xff]
        %v2047 = vld [vmem:[#allocation8 + $0x1e8] sm:$0xff]
        %v2048 = vld [vmem:[#allocation8 + $0x1f0] sm:$0xff]
        %v2049 = vld [vmem:[#allocation8 + $0x1f8] sm:$0xff]
        %v2050 = vld [vmem:[#allocation8 + $0x200] sm:$0xff]
        %v2051 = vld [vmem:[#allocation8 + $0x208] sm:$0xff]
        %v2052 = vld [vmem:[#allocation8 + $0x210] sm:$0xff]
        %v2053 = vld [vmem:[#allocation8 + $0x218] sm:$0xff]
        %v2054 = vld [vmem:[#allocation8 + $0x220] sm:$0xff]
        %v2055 = vld [vmem:[#allocation8 + $0x228] sm:$0xff]
        %v2056 = vld [vmem:[#allocation8 + $0x230] sm:$0xff]
        %v2057 = vld [vmem:[#allocation8 + $0x238] sm:$0xff]
        %v2058 = vld [vmem:[#allocation8 + $0x240] sm:$0xff]
        %v2059 = vld [vmem:[#allocation8 + $0x248] sm:$0xff]
        %v2060 = vld [vmem:[#allocation8 + $0x250] sm:$0xff]
        %v2061 = vld [vmem:[#allocation8 + $0x258] sm:$0xff]
        %v2062 = vld [vmem:[#allocation8 + $0x260] sm:$0xff]
        %v2063 = vld [vmem:[#allocation8 + $0x268] sm:$0xff]
        %v2064 = vld [vmem:[#allocation8 + $0x270] sm:$0xff]
        %v2065 = vld [vmem:[#allocation8 + $0x278] sm:$0xff]
        %v2066 = vld [vmem:[#allocation8 + $0x280] sm:$0xff]
        %v2067 = vld [vmem:[#allocation8 + $0x288] sm:$0xff]
        %v2068 = vld [vmem:[#allocation8 + $0x290] sm:$0xff]
        %v2069 = vld [vmem:[#allocation8 + $0x298] sm:$0xff]
        %v2070 = vld [vmem:[#allocation8 + $0x2a0] sm:$0xff]
        %v2071 = vld [vmem:[#allocation8 + $0x2a8] sm:$0xff]
        %v2072 = vld [vmem:[#allocation8 + $0x2b0] sm:$0xff]
        %v2073 = vld [vmem:[#allocation8 + $0x2b8] sm:$0xff]
        %v2074 = vld [vmem:[#allocation8 + $0x2c0] sm:$0xff]
        %v2075 = vld [vmem:[#allocation8 + $0x2c8] sm:$0xff]
        %v2076 = vld [vmem:[#allocation8 + $0x2d0] sm:$0xff]
        %v2077 = vld [vmem:[#allocation8 + $0x2d8] sm:$0xff]
        %v2078 = vld [vmem:[#allocation8 + $0x2e0] sm:$0xff]
        %v2079 = vld [vmem:[#allocation8 + $0x2e8] sm:$0xff]
        %v2080 = vld [vmem:[#allocation8 + $0x2f0] sm:$0xff]
        %v2081 = vld [vmem:[#allocation8 + $0x2f8] sm:$0xff]
        %v2082 = vld [vmem:[#allocation8 + $0x300] sm:$0xff]
        %v2083 = vld [vmem:[#allocation8 + $0x308] sm:$0xff]
        %v2084 = vld [vmem:[#allocation8 + $0x310] sm:$0xff]
        %v2085 = vld [vmem:[#allocation8 + $0x318] sm:$0xff]
        %v2086 = vld [vmem:[#allocation8 + $0x320] sm:$0xff]
        %v2087 = vld [vmem:[#allocation8 + $0x328] sm:$0xff]
        %v2088 = vld [vmem:[#allocation8 + $0x330] sm:$0xff]
        %v2089 = vld [vmem:[#allocation8 + $0x338] sm:$0xff]
        %v2090 = vld [vmem:[#allocation8 + $0x340] sm:$0xff]
        %v2091 = vld [vmem:[#allocation8 + $0x348] sm:$0xff]
        %v2092 = vld [vmem:[#allocation8 + $0x350] sm:$0xff]
        %v2093 = vld [vmem:[#allocation8 + $0x358] sm:$0xff]
        %v2094 = vld [vmem:[#allocation8 + $0x360] sm:$0xff]
        %v2095 = vld [vmem:[#allocation8 + $0x368] sm:$0xff]
        %v2096 = vld [vmem:[#allocation8 + $0x370] sm:$0xff]
        %v2097 = vld [vmem:[#allocation8 + $0x378] sm:$0xff]
        %v2098 = vld [vmem:[#allocation8 + $0x380] sm:$0xff]
        %v2099 = vld [vmem:[#allocation8 + $0x388] sm:$0xff]
        %v2100 = vld [vmem:[#allocation8 + $0x390] sm:$0xff]
        %v2101 = vld [vmem:[#allocation8 + $0x398] sm:$0xff]
        %v2102 = vld [vmem:[#allocation8 + $0x3a0] sm:$0xff]
        %v2103 = vld [vmem:[#allocation8 + $0x3a8] sm:$0xff]
        %v2104 = vld [vmem:[#allocation8 + $0x3b0] sm:$0xff]
        %v2105 = vld [vmem:[#allocation8 + $0x3b8] sm:$0xff]
        %v2106 = vld [vmem:[#allocation8 + $0x3c0] sm:$0xff]
        %v2107 = vld [vmem:[#allocation8 + $0x3c8] sm:$0xff]
        %v2108 = vld [vmem:[#allocation8 + $0x3d0] sm:$0xff]
        %v2109 = vld [vmem:[#allocation8 + $0x3d8] sm:$0xff]
        %v2110 = vld [vmem:[#allocation8 + $0x3e0] sm:$0xff]
        %v2111 = vld [vmem:[#allocation8 + $0x3e8] sm:$0xff]
        %v2112 = vld [vmem:[#allocation8 + $0x3f0] sm:$0xff]
        %v2113 = vld [vmem:[#allocation8 + $0x3f8] sm:$0xff]
        %v2114 = vld [vmem:[#allocation8 + $0x400] sm:$0xff]
        %v2115 = vld [vmem:[#allocation8 + $0x408] sm:$0xff]
        %v2116 = vld [vmem:[#allocation8 + $0x410] sm:$0xff]
        %v2117 = vld [vmem:[#allocation8 + $0x418] sm:$0xff]
        %v2118 = vld [vmem:[#allocation8 + $0x420] sm:$0xff]
        %v2119 = vld [vmem:[#allocation8 + $0x428] sm:$0xff]
        %v2120 = vld [vmem:[#allocation8 + $0x430] sm:$0xff]
        %v2121 = vld [vmem:[#allocation8 + $0x438] sm:$0xff]
        %v2122 = vld [vmem:[#allocation8 + $0x440] sm:$0xff]
        %v2123 = vld [vmem:[#allocation8 + $0x448] sm:$0xff]
        %v2124 = vld [vmem:[#allocation8 + $0x450] sm:$0xff]
        %v2125 = vld [vmem:[#allocation8 + $0x458] sm:$0xff]
        %v2126 = vld [vmem:[#allocation8 + $0x460] sm:$0xff]
        %v2127 = vld [vmem:[#allocation8 + $0x468] sm:$0xff]
        %v2128 = vld [vmem:[#allocation8 + $0x470] sm:$0xff]
        %v2129 = vld [vmem:[#allocation8 + $0x478] sm:$0xff]
        %v2130 = vld [vmem:[#allocation8 + $0x480] sm:$0xff]
        %v2131 = vld [vmem:[#allocation8 + $0x488] sm:$0xff]
        %v2132 = vld [vmem:[#allocation8 + $0x490] sm:$0xff]
        %v2133 = vld [vmem:[#allocation8 + $0x498] sm:$0xff]
        %v2134 = vld [vmem:[#allocation8 + $0x4a0] sm:$0xff]
        %v2135 = vld [vmem:[#allocation8 + $0x4a8] sm:$0xff]
        %v2136 = vld [vmem:[#allocation8 + $0x4b0] sm:$0xff]
        %v2137 = vld [vmem:[#allocation8 + $0x4b8] sm:$0xff]
        %v2138 = vld [vmem:[#allocation8 + $0x4c0] sm:$0xff]
        %v2139 = vld [vmem:[#allocation8 + $0x4c8] sm:$0xff]
        %v2140 = vld [vmem:[#allocation8 + $0x4d0] sm:$0xff]
        %v2141 = vld [vmem:[#allocation8 + $0x4d8] sm:$0xff]
        %v2142 = vld [vmem:[#allocation8 + $0x4e0] sm:$0xff]
        %v2143 = vld [vmem:[#allocation8 + $0x4e8] sm:$0xff]
        %v2144 = vld [vmem:[#allocation8 + $0x4f0] sm:$0xff]
        %v2145 = vld [vmem:[#allocation8 + $0x4f8] sm:$0xff]
        %v2146 = vld [vmem:[#allocation8 + $0x500] sm:$0xff]
        %v2147 = vld [vmem:[#allocation8 + $0x508] sm:$0xff]
        %v2148 = vld [vmem:[#allocation8 + $0x510] sm:$0xff]
        %v2149 = vld [vmem:[#allocation8 + $0x518] sm:$0xff]
        %v2150 = vld [vmem:[#allocation8 + $0x520] sm:$0xff]
        %v2151 = vld [vmem:[#allocation8 + $0x528] sm:$0xff]
        %v2152 = vld [vmem:[#allocation8 + $0x530] sm:$0xff]
        %v2153 = vld [vmem:[#allocation8 + $0x538] sm:$0xff]
        %v2154 = vld [vmem:[#allocation8 + $0x540] sm:$0xff]
        %v2155 = vld [vmem:[#allocation8 + $0x548] sm:$0xff]
        %v2156 = vld [vmem:[#allocation8 + $0x550] sm:$0xff]
        %v2157 = vld [vmem:[#allocation8 + $0x558] sm:$0xff]
        %v2158 = vld [vmem:[#allocation8 + $0x560] sm:$0xff]
        %v2159 = vld [vmem:[#allocation8 + $0x568] sm:$0xff]
        %v2160 = vld [vmem:[#allocation8 + $0x570] sm:$0xff]
        %v2161 = vld [vmem:[#allocation8 + $0x578] sm:$0xff]
        %v2162 = vld [vmem:[#allocation8 + $0x580] sm:$0xff]
        %v2163 = vld [vmem:[#allocation8 + $0x588] sm:$0xff]
        %v2164 = vld [vmem:[#allocation8 + $0x590] sm:$0xff]
        %v2165 = vld [vmem:[#allocation8 + $0x598] sm:$0xff]
        %v2166 = vld [vmem:[#allocation8 + $0x5a0] sm:$0xff]
        %v2167 = vld [vmem:[#allocation8 + $0x5a8] sm:$0xff]
        %v2168 = vld [vmem:[#allocation8 + $0x5b0] sm:$0xff]
        %v2169 = vld [vmem:[#allocation8 + $0x5b8] sm:$0xff]
        %v2170 = vld [vmem:[#allocation8 + $0x5c0] sm:$0xff]
        %v2171 = vld [vmem:[#allocation8 + $0x5c8] sm:$0xff]
        %v2172 = vld [vmem:[#allocation8 + $0x5d0] sm:$0xff]
        %v2173 = vld [vmem:[#allocation8 + $0x5d8] sm:$0xff]
        %v2174 = vld [vmem:[#allocation8 + $0x5e0] sm:$0xff]
        %v2175 = vld [vmem:[#allocation8 + $0x5e8] sm:$0xff]
        %v2176 = vld [vmem:[#allocation8 + $0x5f0] sm:$0xff]
        %v2177 = vld [vmem:[#allocation8 + $0x5f8] sm:$0xff]
        %v2178 = vld [vmem:[#allocation8 + $0x600] sm:$0xff]
        %v2179 = vld [vmem:[#allocation8 + $0x608] sm:$0xff]
        %v2180 = vld [vmem:[#allocation8 + $0x610] sm:$0xff]
        %v2181 = vld [vmem:[#allocation8 + $0x618] sm:$0xff]
        %v2182 = vld [vmem:[#allocation8 + $0x620] sm:$0xff]
        %v2183 = vld [vmem:[#allocation8 + $0x628] sm:$0xff]
        %v2184 = vld [vmem:[#allocation8 + $0x630] sm:$0xff]
        %v2185 = vld [vmem:[#allocation8 + $0x638] sm:$0xff]
        %v2186 = vld [vmem:[#allocation8 + $0x640] sm:$0xff]
        %v2187 = vld [vmem:[#allocation8 + $0x648] sm:$0xff]
        %v2188 = vld [vmem:[#allocation8 + $0x650] sm:$0xff]
        %v2189 = vld [vmem:[#allocation8 + $0x658] sm:$0xff]
        %v2190 = vld [vmem:[#allocation8 + $0x660] sm:$0xff]
        %v2191 = vld [vmem:[#allocation8 + $0x668] sm:$0xff]
        %v2192 = vld [vmem:[#allocation8 + $0x670] sm:$0xff]
        %v2193 = vld [vmem:[#allocation8 + $0x678] sm:$0xff]
        %v2194 = vld [vmem:[#allocation8 + $0x680] sm:$0xff]
        %v2195 = vld [vmem:[#allocation8 + $0x688] sm:$0xff]
        %v2196 = vld [vmem:[#allocation8 + $0x690] sm:$0xff]
        %v2197 = vld [vmem:[#allocation8 + $0x698] sm:$0xff]
        %v2198 = vld [vmem:[#allocation8 + $0x6a0] sm:$0xff]
        %v2199 = vld [vmem:[#allocation8 + $0x6a8] sm:$0xff]
        %v2200 = vld [vmem:[#allocation8 + $0x6b0] sm:$0xff]
        %v2201 = vld [vmem:[#allocation8 + $0x6b8] sm:$0xff]
        %v2202 = vld [vmem:[#allocation8 + $0x6c0] sm:$0xff]
        %v2203 = vld [vmem:[#allocation8 + $0x6c8] sm:$0xff]
        %v2204 = vld [vmem:[#allocation8 + $0x6d0] sm:$0xff]
        %v2205 = vld [vmem:[#allocation8 + $0x6d8] sm:$0xff]
        %v2206 = vld [vmem:[#allocation8 + $0x6e0] sm:$0xff]
        %v2207 = vld [vmem:[#allocation8 + $0x6e8] sm:$0xff]
        %v2208 = vld [vmem:[#allocation8 + $0x6f0] sm:$0xff]
        %v2209 = vld [vmem:[#allocation8 + $0x6f8] sm:$0xff]
        %v2210 = vld [vmem:[#allocation8 + $0x700] sm:$0xff]
        %v2211 = vld [vmem:[#allocation8 + $0x708] sm:$0xff]
        %v2212 = vld [vmem:[#allocation8 + $0x710] sm:$0xff]
        %v2213 = vld [vmem:[#allocation8 + $0x718] sm:$0xff]
        %v2214 = vld [vmem:[#allocation8 + $0x720] sm:$0xff]
        %v2215 = vld [vmem:[#allocation8 + $0x728] sm:$0xff]
        %v2216 = vld [vmem:[#allocation8 + $0x730] sm:$0xff]
        %v2217 = vld [vmem:[#allocation8 + $0x738] sm:$0xff]
        %v2218 = vld [vmem:[#allocation8 + $0x740] sm:$0xff]
        %v2219 = vld [vmem:[#allocation8 + $0x748] sm:$0xff]
        %v2220 = vld [vmem:[#allocation8 + $0x750] sm:$0xff]
        %v2221 = vld [vmem:[#allocation8 + $0x758] sm:$0xff]
        %v2222 = vld [vmem:[#allocation8 + $0x760] sm:$0xff]
        %v2223 = vld [vmem:[#allocation8 + $0x768] sm:$0xff]
        %v2224 = vld [vmem:[#allocation8 + $0x770] sm:$0xff]
        %v2225 = vld [vmem:[#allocation8 + $0x778] sm:$0xff]
        %v2226 = vld [vmem:[#allocation8 + $0x780] sm:$0xff]
        %v2227 = vld [vmem:[#allocation8 + $0x788] sm:$0xff]
        %v2228 = vld [vmem:[#allocation8 + $0x790] sm:$0xff]
        %v2229 = vld [vmem:[#allocation8 + $0x798] sm:$0xff]
        %v2230 = vld [vmem:[#allocation8 + $0x7a0] sm:$0xff]
        %v2231 = vld [vmem:[#allocation8 + $0x7a8] sm:$0xff]
        %v2232 = vld [vmem:[#allocation8 + $0x7b0] sm:$0xff]
        %v2233 = vld [vmem:[#allocation8 + $0x7b8] sm:$0xff]
        %v2234 = vld [vmem:[#allocation8 + $0x7c0] sm:$0xff]
        %v2235 = vld [vmem:[#allocation8 + $0x7c8] sm:$0xff]
        %v2236 = vld [vmem:[#allocation8 + $0x7d0] sm:$0xff]
        %v2237 = vld [vmem:[#allocation8 + $0x7d8] sm:$0xff]
        %v2238 = vld [vmem:[#allocation8 + $0x7e0] sm:$0xff]
        %v2239 = vld [vmem:[#allocation8 + $0x7e8] sm:$0xff]
        %v2240 = vld [vmem:[#allocation8 + $0x7f0] sm:$0xff]
        %v2241 = vld [vmem:[#allocation8 + $0x7f8] sm:$0xff]
        %v2242 = vld [vmem:[%s4] sm:$0xf]
        %v2244 = vlaneseq
        %v2245 = vshrl.u32 %v2244, 7
        %v2246 = vsub.s32 0, %v2245
        %v2247 = vrot.slane %v2242, %v2246
        %v2248 = vlaneseq
        %v2249 = vshrl.u32 %v2248, 7
        %v2250 = vsub.s32 1, %v2249
        %v2251 = vrot.slane %v2242, %v2250
        %v2252 = vlaneseq
        %v2253 = vshrl.u32 %v2252, 7
        %v2254 = vsub.s32 2, %v2253
        %v2255 = vrot.slane %v2242, %v2254
        %v2256 = vlaneseq
        %v2257 = vshrl.u32 %v2256, 7
        %v2258 = vsub.s32 3, %v2257
        %v2259 = vrot.slane %v2242, %v2258
        %v2520 = vunpack.c.l.b16 %v1986
        %v2521 = vunpack.c.h.b16 %v1986
        %v2522 = vunpack.c.l.b16 %v1987
        %v2523 = vunpack.c.h.b16 %v1987
        %v2524 = vunpack.c.l.b16 %v1988
        %v2525 = vunpack.c.h.b16 %v1988
        %v2526 = vunpack.c.l.b16 %v1989
        %v2527 = vunpack.c.h.b16 %v1989
        %v2528 = vunpack.c.l.b16 %v1990
        %v2529 = vunpack.c.h.b16 %v1990
        %v2530 = vunpack.c.l.b16 %v1991
        %v2531 = vunpack.c.h.b16 %v1991
        %v2532 = vunpack.c.l.b16 %v1992
        %v2533 = vunpack.c.h.b16 %v1992
        %v2534 = vunpack.c.l.b16 %v1993
        %v2535 = vunpack.c.h.b16 %v1993
        %v2536 = vunpack.c.l.b16 %v1994
        %v2537 = vunpack.c.h.b16 %v1994
        %v2538 = vunpack.c.l.b16 %v1995
        %v2539 = vunpack.c.h.b16 %v1995
        %v2540 = vunpack.c.l.b16 %v1996
        %v2541 = vunpack.c.h.b16 %v1996
        %v2542 = vunpack.c.l.b16 %v1997
        %v2543 = vunpack.c.h.b16 %v1997
        %v2544 = vunpack.c.l.b16 %v1998
        %v2545 = vunpack.c.h.b16 %v1998
        %v2546 = vunpack.c.l.b16 %v1999
        %v2547 = vunpack.c.h.b16 %v1999
        %v2548 = vunpack.c.l.b16 %v2000
        %v2549 = vunpack.c.h.b16 %v2000
        %v2550 = vunpack.c.l.b16 %v2001
        %v2551 = vunpack.c.h.b16 %v2001
        %v2552 = vunpack.c.l.b16 %v2002
        %v2553 = vunpack.c.h.b16 %v2002
        %v2554 = vunpack.c.l.b16 %v2003
        %v2555 = vunpack.c.h.b16 %v2003
        %v2556 = vunpack.c.l.b16 %v2004
        %v2557 = vunpack.c.h.b16 %v2004
        %v2558 = vunpack.c.l.b16 %v2005
        %v2559 = vunpack.c.h.b16 %v2005
        %v2560 = vunpack.c.l.b16 %v2006
        %v2561 = vunpack.c.h.b16 %v2006
        %v2562 = vunpack.c.l.b16 %v2007
        %v2563 = vunpack.c.h.b16 %v2007
        %v2564 = vunpack.c.l.b16 %v2008
        %v2565 = vunpack.c.h.b16 %v2008
        %v2566 = vunpack.c.l.b16 %v2009
        %v2567 = vunpack.c.h.b16 %v2009
        %v2568 = vunpack.c.l.b16 %v2010
        %v2569 = vunpack.c.h.b16 %v2010
        %v2570 = vunpack.c.l.b16 %v2011
        %v2571 = vunpack.c.h.b16 %v2011
        %v2572 = vunpack.c.l.b16 %v2012
        %v2573 = vunpack.c.h.b16 %v2012
        %v2574 = vunpack.c.l.b16 %v2013
        %v2575 = vunpack.c.h.b16 %v2013
        %v2576 = vunpack.c.l.b16 %v2014
        %v2577 = vunpack.c.h.b16 %v2014
        %v2578 = vunpack.c.l.b16 %v2015
        %v2579 = vunpack.c.h.b16 %v2015
        %v2580 = vunpack.c.l.b16 %v2016
        %v2581 = vunpack.c.h.b16 %v2016
        %v2582 = vunpack.c.l.b16 %v2017
        %v2583 = vunpack.c.h.b16 %v2017
        %v2584 = vunpack.c.l.b16 %v2018
        %v2585 = vunpack.c.h.b16 %v2018
        %v2586 = vunpack.c.l.b16 %v2019
        %v2587 = vunpack.c.h.b16 %v2019
        %v2588 = vunpack.c.l.b16 %v2020
        %v2589 = vunpack.c.h.b16 %v2020
        %v2590 = vunpack.c.l.b16 %v2021
        %v2591 = vunpack.c.h.b16 %v2021
        %v2592 = vunpack.c.l.b16 %v2022
        %v2593 = vunpack.c.h.b16 %v2022
        %v2594 = vunpack.c.l.b16 %v2023
        %v2595 = vunpack.c.h.b16 %v2023
        %v2596 = vunpack.c.l.b16 %v2024
        %v2597 = vunpack.c.h.b16 %v2024
        %v2598 = vunpack.c.l.b16 %v2025
        %v2599 = vunpack.c.h.b16 %v2025
        %v2600 = vunpack.c.l.b16 %v2026
        %v2601 = vunpack.c.h.b16 %v2026
        %v2602 = vunpack.c.l.b16 %v2027
        %v2603 = vunpack.c.h.b16 %v2027
        %v2604 = vunpack.c.l.b16 %v2028
        %v2605 = vunpack.c.h.b16 %v2028
        %v2606 = vunpack.c.l.b16 %v2029
        %v2607 = vunpack.c.h.b16 %v2029
        %v2608 = vunpack.c.l.b16 %v2030
        %v2609 = vunpack.c.h.b16 %v2030
        %v2610 = vunpack.c.l.b16 %v2031
        %v2611 = vunpack.c.h.b16 %v2031
        %v2612 = vunpack.c.l.b16 %v2032
        %v2613 = vunpack.c.h.b16 %v2032
        %v2614 = vunpack.c.l.b16 %v2033
        %v2615 = vunpack.c.h.b16 %v2033
        %v2616 = vunpack.c.l.b16 %v2034
        %v2617 = vunpack.c.h.b16 %v2034
        %v2618 = vunpack.c.l.b16 %v2035
        %v2619 = vunpack.c.h.b16 %v2035
        %v2620 = vunpack.c.l.b16 %v2036
        %v2621 = vunpack.c.h.b16 %v2036
        %v2622 = vunpack.c.l.b16 %v2037
        %v2623 = vunpack.c.h.b16 %v2037
        %v2624 = vunpack.c.l.b16 %v2038
        %v2625 = vunpack.c.h.b16 %v2038
        %v2626 = vunpack.c.l.b16 %v2039
        %v2627 = vunpack.c.h.b16 %v2039
        %v2628 = vunpack.c.l.b16 %v2040
        %v2629 = vunpack.c.h.b16 %v2040
        %v2630 = vunpack.c.l.b16 %v2041
        %v2631 = vunpack.c.h.b16 %v2041
        %v2632 = vunpack.c.l.b16 %v2042
        %v2633 = vunpack.c.h.b16 %v2042
        %v2634 = vunpack.c.l.b16 %v2043
        %v2635 = vunpack.c.h.b16 %v2043
        %v2636 = vunpack.c.l.b16 %v2044
        %v2637 = vunpack.c.h.b16 %v2044
        %v2638 = vunpack.c.l.b16 %v2045
        %v2639 = vunpack.c.h.b16 %v2045
        %v2640 = vunpack.c.l.b16 %v2046
        %v2641 = vunpack.c.h.b16 %v2046
        %v2642 = vunpack.c.l.b16 %v2047
        %v2643 = vunpack.c.h.b16 %v2047
        %v2644 = vunpack.c.l.b16 %v2048
        %v2645 = vunpack.c.h.b16 %v2048
        %v2646 = vunpack.c.l.b16 %v2049
        %v2647 = vunpack.c.h.b16 %v2049
        %v2648 = vunpack.c.l.b16 %v2050
        %v2649 = vunpack.c.h.b16 %v2050
        %v2650 = vunpack.c.l.b16 %v2051
        %v2651 = vunpack.c.h.b16 %v2051
        %v2652 = vunpack.c.l.b16 %v2052
        %v2653 = vunpack.c.h.b16 %v2052
        %v2654 = vunpack.c.l.b16 %v2053
        %v2655 = vunpack.c.h.b16 %v2053
        %v2656 = vunpack.c.l.b16 %v2054
        %v2657 = vunpack.c.h.b16 %v2054
        %v2658 = vunpack.c.l.b16 %v2055
        %v2659 = vunpack.c.h.b16 %v2055
        %v2660 = vunpack.c.l.b16 %v2056
        %v2661 = vunpack.c.h.b16 %v2056
        %v2662 = vunpack.c.l.b16 %v2057
        %v2663 = vunpack.c.h.b16 %v2057
        %v2664 = vunpack.c.l.b16 %v2058
        %v2665 = vunpack.c.h.b16 %v2058
        %v2666 = vunpack.c.l.b16 %v2059
        %v2667 = vunpack.c.h.b16 %v2059
        %v2668 = vunpack.c.l.b16 %v2060
        %v2669 = vunpack.c.h.b16 %v2060
        %v2670 = vunpack.c.l.b16 %v2061
        %v2671 = vunpack.c.h.b16 %v2061
        %v2672 = vunpack.c.l.b16 %v2062
        %v2673 = vunpack.c.h.b16 %v2062
        %v2674 = vunpack.c.l.b16 %v2063
        %v2675 = vunpack.c.h.b16 %v2063
        %v2676 = vunpack.c.l.b16 %v2064
        %v2677 = vunpack.c.h.b16 %v2064
        %v2678 = vunpack.c.l.b16 %v2065
        %v2679 = vunpack.c.h.b16 %v2065
        %v2680 = vunpack.c.l.b16 %v2066
        %v2681 = vunpack.c.h.b16 %v2066
        %v2682 = vunpack.c.l.b16 %v2067
        %v2683 = vunpack.c.h.b16 %v2067
        %v2684 = vunpack.c.l.b16 %v2068
        %v2685 = vunpack.c.h.b16 %v2068
        %v2686 = vunpack.c.l.b16 %v2069
        %v2687 = vunpack.c.h.b16 %v2069
        %v2688 = vunpack.c.l.b16 %v2070
        %v2689 = vunpack.c.h.b16 %v2070
        %v2690 = vunpack.c.l.b16 %v2071
        %v2691 = vunpack.c.h.b16 %v2071
        %v2692 = vunpack.c.l.b16 %v2072
        %v2693 = vunpack.c.h.b16 %v2072
        %v2694 = vunpack.c.l.b16 %v2073
        %v2695 = vunpack.c.h.b16 %v2073
        %v2696 = vunpack.c.l.b16 %v2074
        %v2697 = vunpack.c.h.b16 %v2074
        %v2698 = vunpack.c.l.b16 %v2075
        %v2699 = vunpack.c.h.b16 %v2075
        %v2700 = vunpack.c.l.b16 %v2076
        %v2701 = vunpack.c.h.b16 %v2076
        %v2702 = vunpack.c.l.b16 %v2077
        %v2703 = vunpack.c.h.b16 %v2077
        %v2704 = vunpack.c.l.b16 %v2078
        %v2705 = vunpack.c.h.b16 %v2078
        %v2706 = vunpack.c.l.b16 %v2079
        %v2707 = vunpack.c.h.b16 %v2079
        %v2708 = vunpack.c.l.b16 %v2080
        %v2709 = vunpack.c.h.b16 %v2080
        %v2710 = vunpack.c.l.b16 %v2081
        %v2711 = vunpack.c.h.b16 %v2081
        %v2712 = vunpack.c.l.b16 %v2082
        %v2713 = vunpack.c.h.b16 %v2082
        %v2714 = vunpack.c.l.b16 %v2083
        %v2715 = vunpack.c.h.b16 %v2083
        %v2716 = vunpack.c.l.b16 %v2084
        %v2717 = vunpack.c.h.b16 %v2084
        %v2718 = vunpack.c.l.b16 %v2085
        %v2719 = vunpack.c.h.b16 %v2085
        %v2720 = vunpack.c.l.b16 %v2086
        %v2721 = vunpack.c.h.b16 %v2086
        %v2722 = vunpack.c.l.b16 %v2087
        %v2723 = vunpack.c.h.b16 %v2087
        %v2724 = vunpack.c.l.b16 %v2088
        %v2725 = vunpack.c.h.b16 %v2088
        %v2726 = vunpack.c.l.b16 %v2089
        %v2727 = vunpack.c.h.b16 %v2089
        %v2728 = vunpack.c.l.b16 %v2090
        %v2729 = vunpack.c.h.b16 %v2090
        %v2730 = vunpack.c.l.b16 %v2091
        %v2731 = vunpack.c.h.b16 %v2091
        %v2732 = vunpack.c.l.b16 %v2092
        %v2733 = vunpack.c.h.b16 %v2092
        %v2734 = vunpack.c.l.b16 %v2093
        %v2735 = vunpack.c.h.b16 %v2093
        %v2736 = vunpack.c.l.b16 %v2094
        %v2737 = vunpack.c.h.b16 %v2094
        %v2738 = vunpack.c.l.b16 %v2095
        %v2739 = vunpack.c.h.b16 %v2095
        %v2740 = vunpack.c.l.b16 %v2096
        %v2741 = vunpack.c.h.b16 %v2096
        %v2742 = vunpack.c.l.b16 %v2097
        %v2743 = vunpack.c.h.b16 %v2097
        %v2744 = vunpack.c.l.b16 %v2098
        %v2745 = vunpack.c.h.b16 %v2098
        %v2746 = vunpack.c.l.b16 %v2099
        %v2747 = vunpack.c.h.b16 %v2099
        %v2748 = vunpack.c.l.b16 %v2100
        %v2749 = vunpack.c.h.b16 %v2100
        %v2750 = vunpack.c.l.b16 %v2101
        %v2751 = vunpack.c.h.b16 %v2101
        %v2752 = vunpack.c.l.b16 %v2102
        %v2753 = vunpack.c.h.b16 %v2102
        %v2754 = vunpack.c.l.b16 %v2103
        %v2755 = vunpack.c.h.b16 %v2103
        %v2756 = vunpack.c.l.b16 %v2104
        %v2757 = vunpack.c.h.b16 %v2104
        %v2758 = vunpack.c.l.b16 %v2105
        %v2759 = vunpack.c.h.b16 %v2105
        %v2760 = vunpack.c.l.b16 %v2106
        %v2761 = vunpack.c.h.b16 %v2106
        %v2762 = vunpack.c.l.b16 %v2107
        %v2763 = vunpack.c.h.b16 %v2107
        %v2764 = vunpack.c.l.b16 %v2108
        %v2765 = vunpack.c.h.b16 %v2108
        %v2766 = vunpack.c.l.b16 %v2109
        %v2767 = vunpack.c.h.b16 %v2109
        %v2768 = vunpack.c.l.b16 %v2110
        %v2769 = vunpack.c.h.b16 %v2110
        %v2770 = vunpack.c.l.b16 %v2111
        %v2771 = vunpack.c.h.b16 %v2111
        %v2772 = vunpack.c.l.b16 %v2112
        %v2773 = vunpack.c.h.b16 %v2112
        %v2774 = vunpack.c.l.b16 %v2113
        %v2775 = vunpack.c.h.b16 %v2113
        %v2776 = vunpack.c.l.b16 %v2114
        %v2777 = vunpack.c.h.b16 %v2114
        %v2778 = vunpack.c.l.b16 %v2115
        %v2779 = vunpack.c.h.b16 %v2115
        %v2780 = vunpack.c.l.b16 %v2116
        %v2781 = vunpack.c.h.b16 %v2116
        %v2782 = vunpack.c.l.b16 %v2117
        %v2783 = vunpack.c.h.b16 %v2117
        %v2784 = vunpack.c.l.b16 %v2118
        %v2785 = vunpack.c.h.b16 %v2118
        %v2786 = vunpack.c.l.b16 %v2119
        %v2787 = vunpack.c.h.b16 %v2119
        %v2788 = vunpack.c.l.b16 %v2120
        %v2789 = vunpack.c.h.b16 %v2120
        %v2790 = vunpack.c.l.b16 %v2121
        %v2791 = vunpack.c.h.b16 %v2121
        %v2792 = vunpack.c.l.b16 %v2122
        %v2793 = vunpack.c.h.b16 %v2122
        %v2794 = vunpack.c.l.b16 %v2123
        %v2795 = vunpack.c.h.b16 %v2123
        %v2796 = vunpack.c.l.b16 %v2124
        %v2797 = vunpack.c.h.b16 %v2124
        %v2798 = vunpack.c.l.b16 %v2125
        %v2799 = vunpack.c.h.b16 %v2125
        %v2800 = vunpack.c.l.b16 %v2126
        %v2801 = vunpack.c.h.b16 %v2126
        %v2802 = vunpack.c.l.b16 %v2127
        %v2803 = vunpack.c.h.b16 %v2127
        %v2804 = vunpack.c.l.b16 %v2128
        %v2805 = vunpack.c.h.b16 %v2128
        %v2806 = vunpack.c.l.b16 %v2129
        %v2807 = vunpack.c.h.b16 %v2129
        %v2808 = vunpack.c.l.b16 %v2130
        %v2809 = vunpack.c.h.b16 %v2130
        %v2810 = vunpack.c.l.b16 %v2131
        %v2811 = vunpack.c.h.b16 %v2131
        %v2812 = vunpack.c.l.b16 %v2132
        %v2813 = vunpack.c.h.b16 %v2132
        %v2814 = vunpack.c.l.b16 %v2133
        %v2815 = vunpack.c.h.b16 %v2133
        %v2816 = vunpack.c.l.b16 %v2134
        %v2817 = vunpack.c.h.b16 %v2134
        %v2818 = vunpack.c.l.b16 %v2135
        %v2819 = vunpack.c.h.b16 %v2135
        %v2820 = vunpack.c.l.b16 %v2136
        %v2821 = vunpack.c.h.b16 %v2136
        %v2822 = vunpack.c.l.b16 %v2137
        %v2823 = vunpack.c.h.b16 %v2137
        %v2824 = vunpack.c.l.b16 %v2138
        %v2825 = vunpack.c.h.b16 %v2138
        %v2826 = vunpack.c.l.b16 %v2139
        %v2827 = vunpack.c.h.b16 %v2139
        %v2828 = vunpack.c.l.b16 %v2140
        %v2829 = vunpack.c.h.b16 %v2140
        %v2830 = vunpack.c.l.b16 %v2141
        %v2831 = vunpack.c.h.b16 %v2141
        %v2832 = vunpack.c.l.b16 %v2142
        %v2833 = vunpack.c.h.b16 %v2142
        %v2834 = vunpack.c.l.b16 %v2143
        %v2835 = vunpack.c.h.b16 %v2143
        %v2836 = vunpack.c.l.b16 %v2144
        %v2837 = vunpack.c.h.b16 %v2144
        %v2838 = vunpack.c.l.b16 %v2145
        %v2839 = vunpack.c.h.b16 %v2145
        %v2840 = vunpack.c.l.b16 %v2146
        %v2841 = vunpack.c.h.b16 %v2146
        %v2842 = vunpack.c.l.b16 %v2147
        %v2843 = vunpack.c.h.b16 %v2147
        %v2844 = vunpack.c.l.b16 %v2148
        %v2845 = vunpack.c.h.b16 %v2148
        %v2846 = vunpack.c.l.b16 %v2149
        %v2847 = vunpack.c.h.b16 %v2149
        %v2848 = vunpack.c.l.b16 %v2150
        %v2849 = vunpack.c.h.b16 %v2150
        %v2850 = vunpack.c.l.b16 %v2151
        %v2851 = vunpack.c.h.b16 %v2151
        %v2852 = vunpack.c.l.b16 %v2152
        %v2853 = vunpack.c.h.b16 %v2152
        %v2854 = vunpack.c.l.b16 %v2153
        %v2855 = vunpack.c.h.b16 %v2153
        %v2856 = vunpack.c.l.b16 %v2154
        %v2857 = vunpack.c.h.b16 %v2154
        %v2858 = vunpack.c.l.b16 %v2155
        %v2859 = vunpack.c.h.b16 %v2155
        %v2860 = vunpack.c.l.b16 %v2156
        %v2861 = vunpack.c.h.b16 %v2156
        %v2862 = vunpack.c.l.b16 %v2157
        %v2863 = vunpack.c.h.b16 %v2157
        %v2864 = vunpack.c.l.b16 %v2158
        %v2865 = vunpack.c.h.b16 %v2158
        %v2866 = vunpack.c.l.b16 %v2159
        %v2867 = vunpack.c.h.b16 %v2159
        %v2868 = vunpack.c.l.b16 %v2160
        %v2869 = vunpack.c.h.b16 %v2160
        %v2870 = vunpack.c.l.b16 %v2161
        %v2871 = vunpack.c.h.b16 %v2161
        %v2872 = vunpack.c.l.b16 %v2162
        %v2873 = vunpack.c.h.b16 %v2162
        %v2874 = vunpack.c.l.b16 %v2163
        %v2875 = vunpack.c.h.b16 %v2163
        %v2876 = vunpack.c.l.b16 %v2164
        %v2877 = vunpack.c.h.b16 %v2164
        %v2878 = vunpack.c.l.b16 %v2165
        %v2879 = vunpack.c.h.b16 %v2165
        %v2880 = vunpack.c.l.b16 %v2166
        %v2881 = vunpack.c.h.b16 %v2166
        %v2882 = vunpack.c.l.b16 %v2167
        %v2883 = vunpack.c.h.b16 %v2167
        %v2884 = vunpack.c.l.b16 %v2168
        %v2885 = vunpack.c.h.b16 %v2168
        %v2886 = vunpack.c.l.b16 %v2169
        %v2887 = vunpack.c.h.b16 %v2169
        %v2888 = vunpack.c.l.b16 %v2170
        %v2889 = vunpack.c.h.b16 %v2170
        %v2890 = vunpack.c.l.b16 %v2171
        %v2891 = vunpack.c.h.b16 %v2171
        %v2892 = vunpack.c.l.b16 %v2172
        %v2893 = vunpack.c.h.b16 %v2172
        %v2894 = vunpack.c.l.b16 %v2173
        %v2895 = vunpack.c.h.b16 %v2173
        %v2896 = vunpack.c.l.b16 %v2174
        %v2897 = vunpack.c.h.b16 %v2174
        %v2898 = vunpack.c.l.b16 %v2175
        %v2899 = vunpack.c.h.b16 %v2175
        %v2900 = vunpack.c.l.b16 %v2176
        %v2901 = vunpack.c.h.b16 %v2176
        %v2902 = vunpack.c.l.b16 %v2177
        %v2903 = vunpack.c.h.b16 %v2177
        %v2904 = vunpack.c.l.b16 %v2178
        %v2905 = vunpack.c.h.b16 %v2178
        %v2906 = vunpack.c.l.b16 %v2179
        %v2907 = vunpack.c.h.b16 %v2179
        %v2908 = vunpack.c.l.b16 %v2180
        %v2909 = vunpack.c.h.b16 %v2180
        %v2910 = vunpack.c.l.b16 %v2181
        %v2911 = vunpack.c.h.b16 %v2181
        %v2912 = vunpack.c.l.b16 %v2182
        %v2913 = vunpack.c.h.b16 %v2182
        %v2914 = vunpack.c.l.b16 %v2183
        %v2915 = vunpack.c.h.b16 %v2183
        %v2916 = vunpack.c.l.b16 %v2184
        %v2917 = vunpack.c.h.b16 %v2184
        %v2918 = vunpack.c.l.b16 %v2185
        %v2919 = vunpack.c.h.b16 %v2185
        %v2920 = vunpack.c.l.b16 %v2186
        %v2921 = vunpack.c.h.b16 %v2186
        %v2922 = vunpack.c.l.b16 %v2187
        %v2923 = vunpack.c.h.b16 %v2187
        %v2924 = vunpack.c.l.b16 %v2188
        %v2925 = vunpack.c.h.b16 %v2188
        %v2926 = vunpack.c.l.b16 %v2189
        %v2927 = vunpack.c.h.b16 %v2189
        %v2928 = vunpack.c.l.b16 %v2190
        %v2929 = vunpack.c.h.b16 %v2190
        %v2930 = vunpack.c.l.b16 %v2191
        %v2931 = vunpack.c.h.b16 %v2191
        %v2932 = vunpack.c.l.b16 %v2192
        %v2933 = vunpack.c.h.b16 %v2192
        %v2934 = vunpack.c.l.b16 %v2193
        %v2935 = vunpack.c.h.b16 %v2193
        %v2936 = vunpack.c.l.b16 %v2194
        %v2937 = vunpack.c.h.b16 %v2194
        %v2938 = vunpack.c.l.b16 %v2195
        %v2939 = vunpack.c.h.b16 %v2195
        %v2940 = vunpack.c.l.b16 %v2196
        %v2941 = vunpack.c.h.b16 %v2196
        %v2942 = vunpack.c.l.b16 %v2197
        %v2943 = vunpack.c.h.b16 %v2197
        %v2944 = vunpack.c.l.b16 %v2198
        %v2945 = vunpack.c.h.b16 %v2198
        %v2946 = vunpack.c.l.b16 %v2199
        %v2947 = vunpack.c.h.b16 %v2199
        %v2948 = vunpack.c.l.b16 %v2200
        %v2949 = vunpack.c.h.b16 %v2200
        %v2950 = vunpack.c.l.b16 %v2201
        %v2951 = vunpack.c.h.b16 %v2201
        %v2952 = vunpack.c.l.b16 %v2202
        %v2953 = vunpack.c.h.b16 %v2202
        %v2954 = vunpack.c.l.b16 %v2203
        %v2955 = vunpack.c.h.b16 %v2203
        %v2956 = vunpack.c.l.b16 %v2204
        %v2957 = vunpack.c.h.b16 %v2204
        %v2958 = vunpack.c.l.b16 %v2205
        %v2959 = vunpack.c.h.b16 %v2205
        %v2960 = vunpack.c.l.b16 %v2206
        %v2961 = vunpack.c.h.b16 %v2206
        %v2962 = vunpack.c.l.b16 %v2207
        %v2963 = vunpack.c.h.b16 %v2207
        %v2964 = vunpack.c.l.b16 %v2208
        %v2965 = vunpack.c.h.b16 %v2208
        %v2966 = vunpack.c.l.b16 %v2209
        %v2967 = vunpack.c.h.b16 %v2209
        %v2968 = vunpack.c.l.b16 %v2210
        %v2969 = vunpack.c.h.b16 %v2210
        %v2970 = vunpack.c.l.b16 %v2211
        %v2971 = vunpack.c.h.b16 %v2211
        %v2972 = vunpack.c.l.b16 %v2212
        %v2973 = vunpack.c.h.b16 %v2212
        %v2974 = vunpack.c.l.b16 %v2213
        %v2975 = vunpack.c.h.b16 %v2213
        %v2976 = vunpack.c.l.b16 %v2214
        %v2977 = vunpack.c.h.b16 %v2214
        %v2978 = vunpack.c.l.b16 %v2215
        %v2979 = vunpack.c.h.b16 %v2215
        %v2980 = vunpack.c.l.b16 %v2216
        %v2981 = vunpack.c.h.b16 %v2216
        %v2982 = vunpack.c.l.b16 %v2217
        %v2983 = vunpack.c.h.b16 %v2217
        %v2984 = vunpack.c.l.b16 %v2218
        %v2985 = vunpack.c.h.b16 %v2218
        %v2986 = vunpack.c.l.b16 %v2219
        %v2987 = vunpack.c.h.b16 %v2219
        %v2988 = vunpack.c.l.b16 %v2220
        %v2989 = vunpack.c.h.b16 %v2220
        %v2990 = vunpack.c.l.b16 %v2221
        %v2991 = vunpack.c.h.b16 %v2221
        %v2992 = vunpack.c.l.b16 %v2222
        %v2993 = vunpack.c.h.b16 %v2222
        %v2994 = vunpack.c.l.b16 %v2223
        %v2995 = vunpack.c.h.b16 %v2223
        %v2996 = vunpack.c.l.b16 %v2224
        %v2997 = vunpack.c.h.b16 %v2224
        %v2998 = vunpack.c.l.b16 %v2225
        %v2999 = vunpack.c.h.b16 %v2225
        %v3000 = vunpack.c.l.b16 %v2226
        %v3001 = vunpack.c.h.b16 %v2226
        %v3002 = vunpack.c.l.b16 %v2227
        %v3003 = vunpack.c.h.b16 %v2227
        %v3004 = vunpack.c.l.b16 %v2228
        %v3005 = vunpack.c.h.b16 %v2228
        %v3006 = vunpack.c.l.b16 %v2229
        %v3007 = vunpack.c.h.b16 %v2229
        %v3008 = vunpack.c.l.b16 %v2230
        %v3009 = vunpack.c.h.b16 %v2230
        %v3010 = vunpack.c.l.b16 %v2231
        %v3011 = vunpack.c.h.b16 %v2231
        %v3012 = vunpack.c.l.b16 %v2232
        %v3013 = vunpack.c.h.b16 %v2232
        %v3014 = vunpack.c.l.b16 %v2233
        %v3015 = vunpack.c.h.b16 %v2233
        %v3016 = vunpack.c.l.b16 %v2234
        %v3017 = vunpack.c.h.b16 %v2234
        %v3018 = vunpack.c.l.b16 %v2235
        %v3019 = vunpack.c.h.b16 %v2235
        %v3020 = vunpack.c.l.b16 %v2236
        %v3021 = vunpack.c.h.b16 %v2236
        %v3022 = vunpack.c.l.b16 %v2237
        %v3023 = vunpack.c.h.b16 %v2237
        %v3024 = vunpack.c.l.b16 %v2238
        %v3025 = vunpack.c.h.b16 %v2238
        %v3026 = vunpack.c.l.b16 %v2239
        %v3027 = vunpack.c.h.b16 %v2239
        %v3028 = vunpack.c.l.b16 %v2240
        %v3029 = vunpack.c.h.b16 %v2240
        %v3030 = vunpack.c.l.b16 %v2241
        %v3031 = vunpack.c.h.b16 %v2241
        %v3032 = vpack.c.b16 %v2524, %v2520
        %v3033 = vpack.c.b16 %v2525, %v2521
        %v3034 = vpack.c.b16 %v2526, %v2522
        %v3035 = vpack.c.b16 %v2527, %v2523
        %v3036 = vpack.c.b16 %v2532, %v2528
        %v3037 = vpack.c.b16 %v2533, %v2529
        %v3038 = vpack.c.b16 %v2534, %v2530
        %v3039 = vpack.c.b16 %v2535, %v2531
        %v3040 = vpack.c.b16 %v2540, %v2536
        %v3041 = vpack.c.b16 %v2541, %v2537
        %v3042 = vpack.c.b16 %v2542, %v2538
        %v3043 = vpack.c.b16 %v2543, %v2539
        %v3044 = vpack.c.b16 %v2548, %v2544
        %v3045 = vpack.c.b16 %v2549, %v2545
        %v3046 = vpack.c.b16 %v2550, %v2546
        %v3047 = vpack.c.b16 %v2551, %v2547
        %v3048 = vpack.c.b16 %v2556, %v2552
        %v3049 = vpack.c.b16 %v2557, %v2553
        %v3050 = vpack.c.b16 %v2558, %v2554
        %v3051 = vpack.c.b16 %v2559, %v2555
        %v3052 = vpack.c.b16 %v2564, %v2560
        %v3053 = vpack.c.b16 %v2565, %v2561
        %v3054 = vpack.c.b16 %v2566, %v2562
        %v3055 = vpack.c.b16 %v2567, %v2563
        %v3056 = vpack.c.b16 %v2572, %v2568
        %v3057 = vpack.c.b16 %v2573, %v2569
        %v3058 = vpack.c.b16 %v2574, %v2570
        %v3059 = vpack.c.b16 %v2575, %v2571
        %v3060 = vpack.c.b16 %v2580, %v2576
        %v3061 = vpack.c.b16 %v2581, %v2577
        %v3062 = vpack.c.b16 %v2582, %v2578
        %v3063 = vpack.c.b16 %v2583, %v2579
        %v3064 = vpack.c.b16 %v2588, %v2584
        %v3065 = vpack.c.b16 %v2589, %v2585
        %v3066 = vpack.c.b16 %v2590, %v2586
        %v3067 = vpack.c.b16 %v2591, %v2587
        %v3068 = vpack.c.b16 %v2596, %v2592
        %v3069 = vpack.c.b16 %v2597, %v2593
        %v3070 = vpack.c.b16 %v2598, %v2594
        %v3071 = vpack.c.b16 %v2599, %v2595
        %v3072 = vpack.c.b16 %v2604, %v2600
        %v3073 = vpack.c.b16 %v2605, %v2601
        %v3074 = vpack.c.b16 %v2606, %v2602
        %v3075 = vpack.c.b16 %v2607, %v2603
        %v3076 = vpack.c.b16 %v2612, %v2608
        %v3077 = vpack.c.b16 %v2613, %v2609
        %v3078 = vpack.c.b16 %v2614, %v2610
        %v3079 = vpack.c.b16 %v2615, %v2611
        %v3080 = vpack.c.b16 %v2620, %v2616
        %v3081 = vpack.c.b16 %v2621, %v2617
        %v3082 = vpack.c.b16 %v2622, %v2618
        %v3083 = vpack.c.b16 %v2623, %v2619
        %v3084 = vpack.c.b16 %v2628, %v2624
        %v3085 = vpack.c.b16 %v2629, %v2625
        %v3086 = vpack.c.b16 %v2630, %v2626
        %v3087 = vpack.c.b16 %v2631, %v2627
        %v3088 = vpack.c.b16 %v2636, %v2632
        %v3089 = vpack.c.b16 %v2637, %v2633
        %v3090 = vpack.c.b16 %v2638, %v2634
        %v3091 = vpack.c.b16 %v2639, %v2635
        %v3092 = vpack.c.b16 %v2644, %v2640
        %v3093 = vpack.c.b16 %v2645, %v2641
        %v3094 = vpack.c.b16 %v2646, %v2642
        %v3095 = vpack.c.b16 %v2647, %v2643
        %v3096 = vpack.c.b16 %v2652, %v2648
        %v3097 = vpack.c.b16 %v2653, %v2649
        %v3098 = vpack.c.b16 %v2654, %v2650
        %v3099 = vpack.c.b16 %v2655, %v2651
        %v3100 = vpack.c.b16 %v2660, %v2656
        %v3101 = vpack.c.b16 %v2661, %v2657
        %v3102 = vpack.c.b16 %v2662, %v2658
        %v3103 = vpack.c.b16 %v2663, %v2659
        %v3104 = vpack.c.b16 %v2668, %v2664
        %v3105 = vpack.c.b16 %v2669, %v2665
        %v3106 = vpack.c.b16 %v2670, %v2666
        %v3107 = vpack.c.b16 %v2671, %v2667
        %v3108 = vpack.c.b16 %v2676, %v2672
        %v3109 = vpack.c.b16 %v2677, %v2673
        %v3110 = vpack.c.b16 %v2678, %v2674
        %v3111 = vpack.c.b16 %v2679, %v2675
        %v3112 = vpack.c.b16 %v2684, %v2680
        %v3113 = vpack.c.b16 %v2685, %v2681
        %v3114 = vpack.c.b16 %v2686, %v2682
        %v3115 = vpack.c.b16 %v2687, %v2683
        %v3116 = vpack.c.b16 %v2692, %v2688
        %v3117 = vpack.c.b16 %v2693, %v2689
        %v3118 = vpack.c.b16 %v2694, %v2690
        %v3119 = vpack.c.b16 %v2695, %v2691
        %v3120 = vpack.c.b16 %v2700, %v2696
        %v3121 = vpack.c.b16 %v2701, %v2697
        %v3122 = vpack.c.b16 %v2702, %v2698
        %v3123 = vpack.c.b16 %v2703, %v2699
        %v3124 = vpack.c.b16 %v2708, %v2704
        %v3125 = vpack.c.b16 %v2709, %v2705
        %v3126 = vpack.c.b16 %v2710, %v2706
        %v3127 = vpack.c.b16 %v2711, %v2707
        %v3128 = vpack.c.b16 %v2716, %v2712
        %v3129 = vpack.c.b16 %v2717, %v2713
        %v3130 = vpack.c.b16 %v2718, %v2714
        %v3131 = vpack.c.b16 %v2719, %v2715
        %v3132 = vpack.c.b16 %v2724, %v2720
        %v3133 = vpack.c.b16 %v2725, %v2721
        %v3134 = vpack.c.b16 %v2726, %v2722
        %v3135 = vpack.c.b16 %v2727, %v2723
        %v3136 = vpack.c.b16 %v2732, %v2728
        %v3137 = vpack.c.b16 %v2733, %v2729
        %v3138 = vpack.c.b16 %v2734, %v2730
        %v3139 = vpack.c.b16 %v2735, %v2731
        %v3140 = vpack.c.b16 %v2740, %v2736
        %v3141 = vpack.c.b16 %v2741, %v2737
        %v3142 = vpack.c.b16 %v2742, %v2738
        %v3143 = vpack.c.b16 %v2743, %v2739
        %v3144 = vpack.c.b16 %v2748, %v2744
        %v3145 = vpack.c.b16 %v2749, %v2745
        %v3146 = vpack.c.b16 %v2750, %v2746
        %v3147 = vpack.c.b16 %v2751, %v2747
        %v3148 = vpack.c.b16 %v2756, %v2752
        %v3149 = vpack.c.b16 %v2757, %v2753
        %v3150 = vpack.c.b16 %v2758, %v2754
        %v3151 = vpack.c.b16 %v2759, %v2755
        %v3152 = vpack.c.b16 %v2764, %v2760
        %v3153 = vpack.c.b16 %v2765, %v2761
        %v3154 = vpack.c.b16 %v2766, %v2762
        %v3155 = vpack.c.b16 %v2767, %v2763
        %v3156 = vpack.c.b16 %v2772, %v2768
        %v3157 = vpack.c.b16 %v2773, %v2769
        %v3158 = vpack.c.b16 %v2774, %v2770
        %v3159 = vpack.c.b16 %v2775, %v2771
        %v3160 = vpack.c.b16 %v2780, %v2776
        %v3161 = vpack.c.b16 %v2781, %v2777
        %v3162 = vpack.c.b16 %v2782, %v2778
        %v3163 = vpack.c.b16 %v2783, %v2779
        %v3164 = vpack.c.b16 %v2788, %v2784
        %v3165 = vpack.c.b16 %v2789, %v2785
        %v3166 = vpack.c.b16 %v2790, %v2786
        %v3167 = vpack.c.b16 %v2791, %v2787
        %v3168 = vpack.c.b16 %v2796, %v2792
        %v3169 = vpack.c.b16 %v2797, %v2793
        %v3170 = vpack.c.b16 %v2798, %v2794
        %v3171 = vpack.c.b16 %v2799, %v2795
        %v3172 = vpack.c.b16 %v2804, %v2800
        %v3173 = vpack.c.b16 %v2805, %v2801
        %v3174 = vpack.c.b16 %v2806, %v2802
        %v3175 = vpack.c.b16 %v2807, %v2803
        %v3176 = vpack.c.b16 %v2812, %v2808
        %v3177 = vpack.c.b16 %v2813, %v2809
        %v3178 = vpack.c.b16 %v2814, %v2810
        %v3179 = vpack.c.b16 %v2815, %v2811
        %v3180 = vpack.c.b16 %v2820, %v2816
        %v3181 = vpack.c.b16 %v2821, %v2817
        %v3182 = vpack.c.b16 %v2822, %v2818
        %v3183 = vpack.c.b16 %v2823, %v2819
        %v3184 = vpack.c.b16 %v2828, %v2824
        %v3185 = vpack.c.b16 %v2829, %v2825
        %v3186 = vpack.c.b16 %v2830, %v2826
        %v3187 = vpack.c.b16 %v2831, %v2827
        %v3188 = vpack.c.b16 %v2836, %v2832
        %v3189 = vpack.c.b16 %v2837, %v2833
        %v3190 = vpack.c.b16 %v2838, %v2834
        %v3191 = vpack.c.b16 %v2839, %v2835
        %v3192 = vpack.c.b16 %v2844, %v2840
        %v3193 = vpack.c.b16 %v2845, %v2841
        %v3194 = vpack.c.b16 %v2846, %v2842
        %v3195 = vpack.c.b16 %v2847, %v2843
        %v3196 = vpack.c.b16 %v2852, %v2848
        %v3197 = vpack.c.b16 %v2853, %v2849
        %v3198 = vpack.c.b16 %v2854, %v2850
        %v3199 = vpack.c.b16 %v2855, %v2851
        %v3200 = vpack.c.b16 %v2860, %v2856
        %v3201 = vpack.c.b16 %v2861, %v2857
        %v3202 = vpack.c.b16 %v2862, %v2858
        %v3203 = vpack.c.b16 %v2863, %v2859
        %v3204 = vpack.c.b16 %v2868, %v2864
        %v3205 = vpack.c.b16 %v2869, %v2865
        %v3206 = vpack.c.b16 %v2870, %v2866
        %v3207 = vpack.c.b16 %v2871, %v2867
        %v3208 = vpack.c.b16 %v2876, %v2872
        %v3209 = vpack.c.b16 %v2877, %v2873
        %v3210 = vpack.c.b16 %v2878, %v2874
        %v3211 = vpack.c.b16 %v2879, %v2875
        %v3212 = vpack.c.b16 %v2884, %v2880
        %v3213 = vpack.c.b16 %v2885, %v2881
        %v3214 = vpack.c.b16 %v2886, %v2882
        %v3215 = vpack.c.b16 %v2887, %v2883
        %v3216 = vpack.c.b16 %v2892, %v2888
        %v3217 = vpack.c.b16 %v2893, %v2889
        %v3218 = vpack.c.b16 %v2894, %v2890
        %v3219 = vpack.c.b16 %v2895, %v2891
        %v3220 = vpack.c.b16 %v2900, %v2896
        %v3221 = vpack.c.b16 %v2901, %v2897
        %v3222 = vpack.c.b16 %v2902, %v2898
        %v3223 = vpack.c.b16 %v2903, %v2899
        %v3224 = vpack.c.b16 %v2908, %v2904
        %v3225 = vpack.c.b16 %v2909, %v2905
        %v3226 = vpack.c.b16 %v2910, %v2906
        %v3227 = vpack.c.b16 %v2911, %v2907
        %v3228 = vpack.c.b16 %v2916, %v2912
        %v3229 = vpack.c.b16 %v2917, %v2913
        %v3230 = vpack.c.b16 %v2918, %v2914
        %v3231 = vpack.c.b16 %v2919, %v2915
        %v3232 = vpack.c.b16 %v2924, %v2920
        %v3233 = vpack.c.b16 %v2925, %v2921
        %v3234 = vpack.c.b16 %v2926, %v2922
        %v3235 = vpack.c.b16 %v2927, %v2923
        %v3236 = vpack.c.b16 %v2932, %v2928
        %v3237 = vpack.c.b16 %v2933, %v2929
        %v3238 = vpack.c.b16 %v2934, %v2930
        %v3239 = vpack.c.b16 %v2935, %v2931
        %v3240 = vpack.c.b16 %v2940, %v2936
        %v3241 = vpack.c.b16 %v2941, %v2937
        %v3242 = vpack.c.b16 %v2942, %v2938
        %v3243 = vpack.c.b16 %v2943, %v2939
        %v3244 = vpack.c.b16 %v2948, %v2944
        %v3245 = vpack.c.b16 %v2949, %v2945
        %v3246 = vpack.c.b16 %v2950, %v2946
        %v3247 = vpack.c.b16 %v2951, %v2947
        %v3248 = vpack.c.b16 %v2956, %v2952
        %v3249 = vpack.c.b16 %v2957, %v2953
        %v3250 = vpack.c.b16 %v2958, %v2954
        %v3251 = vpack.c.b16 %v2959, %v2955
        %v3252 = vpack.c.b16 %v2964, %v2960
        %v3253 = vpack.c.b16 %v2965, %v2961
        %v3254 = vpack.c.b16 %v2966, %v2962
        %v3255 = vpack.c.b16 %v2967, %v2963
        %v3256 = vpack.c.b16 %v2972, %v2968
        %v3257 = vpack.c.b16 %v2973, %v2969
        %v3258 = vpack.c.b16 %v2974, %v2970
        %v3259 = vpack.c.b16 %v2975, %v2971
        %v3260 = vpack.c.b16 %v2980, %v2976
        %v3261 = vpack.c.b16 %v2981, %v2977
        %v3262 = vpack.c.b16 %v2982, %v2978
        %v3263 = vpack.c.b16 %v2983, %v2979
        %v3264 = vpack.c.b16 %v2988, %v2984
        %v3265 = vpack.c.b16 %v2989, %v2985
        %v3266 = vpack.c.b16 %v2990, %v2986
        %v3267 = vpack.c.b16 %v2991, %v2987
        %v3268 = vpack.c.b16 %v2996, %v2992
        %v3269 = vpack.c.b16 %v2997, %v2993
        %v3270 = vpack.c.b16 %v2998, %v2994
        %v3271 = vpack.c.b16 %v2999, %v2995
        %v3272 = vpack.c.b16 %v3004, %v3000
        %v3273 = vpack.c.b16 %v3005, %v3001
        %v3274 = vpack.c.b16 %v3006, %v3002
        %v3275 = vpack.c.b16 %v3007, %v3003
        %v3276 = vpack.c.b16 %v3012, %v3008
        %v3277 = vpack.c.b16 %v3013, %v3009
        %v3278 = vpack.c.b16 %v3014, %v3010
        %v3279 = vpack.c.b16 %v3015, %v3011
        %v3280 = vpack.c.b16 %v3020, %v3016
        %v3281 = vpack.c.b16 %v3021, %v3017
        %v3282 = vpack.c.b16 %v3022, %v3018
        %v3283 = vpack.c.b16 %v3023, %v3019
        %v3284 = vpack.c.b16 %v3028, %v3024
        %v3285 = vpack.c.b16 %v3029, %v3025
        %v3286 = vpack.c.b16 %v3030, %v3026
        %v3287 = vpack.c.b16 %v3031, %v3027
        %3544 = vmatprep.subr.bf16.mxu0 %v3033
        %3545 = vmatpush1.bf16.msra.mxu0 %v3032
        %3546 = vmatprep.subr.bf16.mxu0 %v3037
        %3547 = vmatpush1.bf16.msra.mxu0 %v3036
        %3548 = vmatprep.subr.bf16.mxu0 %v3041
        %3549 = vmatpush1.bf16.msra.mxu0 %v3040
        %3550 = vmatprep.subr.bf16.mxu0 %v3045
        %3551 = vmatpush1.bf16.msra.mxu0 %v3044
        %3552 = vmatprep.subr.bf16.mxu0 %v3049
        %3553 = vmatpush1.bf16.msra.mxu0 %v3048
        %3554 = vmatprep.subr.bf16.mxu0 %v3053
        %3555 = vmatpush1.bf16.msra.mxu0 %v3052
        %3556 = vmatprep.subr.bf16.mxu0 %v3057
        %3557 = vmatpush1.bf16.msra.mxu0 %v3056
        %3558 = vmatprep.subr.bf16.mxu0 %v3061
        %3559 = vmatpush1.bf16.msra.mxu0 %v3060
        %3560 = vmatprep.subr.bf16.mxu0 %v3065
        %3561 = vmatpush1.bf16.msra.mxu0 %v3064
        %3562 = vmatprep.subr.bf16.mxu0 %v3069
        %3563 = vmatpush1.bf16.msra.mxu0 %v3068
        %3564 = vmatprep.subr.bf16.mxu0 %v3073
        %3565 = vmatpush1.bf16.msra.mxu0 %v3072
        %3566 = vmatprep.subr.bf16.mxu0 %v3077
        %3567 = vmatpush1.bf16.msra.mxu0 %v3076
        %3568 = vmatprep.subr.bf16.mxu0 %v3081
        %3569 = vmatpush1.bf16.msra.mxu0 %v3080
        %3570 = vmatprep.subr.bf16.mxu0 %v3085
        %3571 = vmatpush1.bf16.msra.mxu0 %v3084
        %3572 = vmatprep.subr.bf16.mxu0 %v3089
        %3573 = vmatpush1.bf16.msra.mxu0 %v3088
        %3574 = vmatprep.subr.bf16.mxu0 %v3093
        %3575 = vmatpush1.bf16.msra.mxu0 %v3092
        %3576 = vmatprep.mubr.bf16.mxu0 %v1923
        %3577 = vmatmul.mubr.bf16.gmra.mrb[0].mxu0 %v1922
        %v3578 = vpop.f32.mrb[0].mxu0
        %v3579 = vadd.f32 %v2247, %v3578
        %v3580 = vpop.f32.mrb[0].mxu0
        %v3581 = vadd.f32 %v2251, %v3580
        %v3582 = vpop.f32.mrb[0].mxu0
        %v3583 = vadd.f32 %v2247, %v3582
        %v3584 = vpop.f32.mrb[0].mxu0
        %v3585 = vadd.f32 %v2251, %v3584
        %3586 = vmatprep.mubr.bf16.mxu0 %v1931
        %3587 = vmatmul.mubr.bf16.gmra.mrb[0].mxu0 %v1930
        %v3588 = vpop.f32.mrb[0].mxu0
        %v3589 = vadd.f32 %v2247, %v3588
        %v3590 = vpop.f32.mrb[0].mxu0
        %v3591 = vadd.f32 %v2251, %v3590
        %v3592 = vpop.f32.mrb[0].mxu0
        %v3593 = vadd.f32 %v2247, %v3592
        %v3594 = vpop.f32.mrb[0].mxu0
        %v3595 = vadd.f32 %v2251, %v3594
        %3596 = vmatprep.mubr.bf16.mxu0 %v1939
        %3597 = vmatmul.mubr.bf16.gmra.mrb[0].mxu0 %v1938
        %v3598 = vpop.f32.mrb[0].mxu0
        %v3599 = vadd.f32 %v2247, %v3598
        %v3600 = vpop.f32.mrb[0].mxu0
        %v3601 = vadd.f32 %v2251, %v3600
        %v3602 = vpop.f32.mrb[0].mxu0
        %v3603 = vadd.f32 %v2247, %v3602
        %v3604 = vpop.f32.mrb[0].mxu0
        %v3605 = vadd.f32 %v2251, %v3604
        %3606 = vmatprep.mubr.bf16.mxu0 %v1947
        %3607 = vmatmul.mubr.bf16.gmra.mrb[0].mxu0 %v1946
        %v3608 = vpop.f32.mrb[0].mxu0
        %v3609 = vadd.f32 %v2247, %v3608
        %v3610 = vpop.f32.mrb[0].mxu0
        %v3611 = vadd.f32 %v2251, %v3610
        %v3612 = vpop.f32.mrb[0].mxu0
        %v3613 = vadd.f32 %v2247, %v3612
        %v3614 = vpop.f32.mrb[0].mxu0
        %v3615 = vadd.f32 %v2251, %v3614
        %3616 = vmatprep.mubr.bf16.mxu0 %v1955
        %3617 = vmatmul.mubr.bf16.gmra.mrb[0].mxu0 %v1954
        %v3618 = vpop.f32.mrb[0].mxu0
        %v3619 = vadd.f32 %v2247, %v3618
        %v3620 = vpop.f32.mrb[0].mxu0
        %v3621 = vadd.f32 %v2251, %v3620
        %v3622 = vpop.f32.mrb[0].mxu0
        %v3623 = vadd.f32 %v2247, %v3622
        %v3624 = vpop.f32.mrb[0].mxu0
        %v3625 = vadd.f32 %v2251, %v3624
        %3626 = vmatprep.mubr.bf16.mxu0 %v1963
        %3627 = vmatmul.mubr.bf16.gmra.mrb[0].mxu0 %v1962
        %v3628 = vpop.f32.mrb[0].mxu0
        %v3629 = vadd.f32 %v2247, %v3628
        %v3630 = vpop.f32.mrb[0].mxu0
        %v3631 = vadd.f32 %v2251, %v3630
        %v3632 = vpop.f32.mrb[0].mxu0
        %v3633 = vadd.f32 %v2247, %v3632
        %v3634 = vpop.f32.mrb[0].mxu0
        %v3635 = vadd.f32 %v2251, %v3634
        %3636 = vmatprep.mubr.bf16.mxu0 %v1971
        %3637 = vmatmul.mubr.bf16.gmra.mrb[0].mxu0 %v1970
        %v3638 = vpop.f32.mrb[0].mxu0
        %v3639 = vadd.f32 %v2247, %v3638
        %v3640 = vpop.f32.mrb[0].mxu0
        %v3641 = vadd.f32 %v2251, %v3640
        %v3642 = vpop.f32.mrb[0].mxu0
        %v3643 = vadd.f32 %v2247, %v3642
        %v3644 = vpop.f32.mrb[0].mxu0
        %v3645 = vadd.f32 %v2251, %v3644
        %3646 = vmatprep.mubr.bf16.mxu0 %v1979
        %3647 = vmatmul.mubr.bf16.gmra.mrb[0].mxu0 %v1978
        %v3648 = vpop.f32.mrb[0].mxu0
        %v3649 = vadd.f32 %v2247, %v3648
        %v3650 = vpop.f32.mrb[0].mxu0
        %v3651 = vadd.f32 %v2251, %v3650
        %v3652 = vpop.f32.mrb[0].mxu0
        %v3653 = vadd.f32 %v2247, %v3652
        %v3654 = vpop.f32.mrb[0].mxu0
        %v3655 = vadd.f32 %v2251, %v3654
        %3656 = vdwg.mxu0
        %3657 = vmatprep.subr.bf16.mxu0 %v3097
        %3658 = vmatpush1.bf16.msra.mxu0 %v3096
        %3659 = vmatprep.subr.bf16.mxu0 %v3101
        %3660 = vmatpush1.bf16.msra.mxu0 %v3100
        %3661 = vmatprep.subr.bf16.mxu0 %v3105
        %3662 = vmatpush1.bf16.msra.mxu0 %v3104
        %3663 = vmatprep.subr.bf16.mxu0 %v3109
        %3664 = vmatpush1.bf16.msra.mxu0 %v3108
        %3665 = vmatprep.subr.bf16.mxu0 %v3113
        %3666 = vmatpush1.bf16.msra.mxu0 %v3112
        %3667 = vmatprep.subr.bf16.mxu0 %v3117
        %3668 = vmatpush1.bf16.msra.mxu0 %v3116
        %3669 = vmatprep.subr.bf16.mxu0 %v3121
        %3670 = vmatpush1.bf16.msra.mxu0 %v3120
        %3671 = vmatprep.subr.bf16.mxu0 %v3125
        %3672 = vmatpush1.bf16.msra.mxu0 %v3124
        %3673 = vmatprep.subr.bf16.mxu0 %v3129
        %3674 = vmatpush1.bf16.msra.mxu0 %v3128
        %3675 = vmatprep.subr.bf16.mxu0 %v3133
        %3676 = vmatpush1.bf16.msra.mxu0 %v3132
        %3677 = vmatprep.subr.bf16.mxu0 %v3137
        %3678 = vmatpush1.bf16.msra.mxu0 %v3136
        %3679 = vmatprep.subr.bf16.mxu0 %v3141
        %3680 = vmatpush1.bf16.msra.mxu0 %v3140
        %3681 = vmatprep.subr.bf16.mxu0 %v3145
        %3682 = vmatpush1.bf16.msra.mxu0 %v3144
        %3683 = vmatprep.subr.bf16.mxu0 %v3149
        %3684 = vmatpush1.bf16.msra.mxu0 %v3148
        %3685 = vmatprep.subr.bf16.mxu0 %v3153
        %3686 = vmatpush1.bf16.msra.mxu0 %v3152
        %3687 = vmatprep.subr.bf16.mxu0 %v3157
        %3688 = vmatpush1.bf16.msra.mxu0 %v3156
        %3689 = vmatprep.mubr.bf16.mxu0 %v1925
        %3690 = vmatmul.mubr.bf16.gmra.mrb[0].mxu0 %v1924
        %v3691 = vpop.f32.mrb[0].mxu0
        %v3692 = vadd.f32 %v3579, %v3691
        %v3693 = vpop.f32.mrb[0].mxu0
        %v3694 = vadd.f32 %v3581, %v3693
        %v3695 = vpop.f32.mrb[0].mxu0
        %v3696 = vadd.f32 %v3583, %v3695
        %v3697 = vpop.f32.mrb[0].mxu0
        %v3698 = vadd.f32 %v3585, %v3697
        %3699 = vmatprep.mubr.bf16.mxu0 %v1933
        %3700 = vmatmul.mubr.bf16.gmra.mrb[0].mxu0 %v1932
        %v3701 = vpop.f32.mrb[0].mxu0
        %v3702 = vadd.f32 %v3589, %v3701
        %v3703 = vpop.f32.mrb[0].mxu0
        %v3704 = vadd.f32 %v3591, %v3703
        %v3705 = vpop.f32.mrb[0].mxu0
        %v3706 = vadd.f32 %v3593, %v3705
        %v3707 = vpop.f32.mrb[0].mxu0
        %v3708 = vadd.f32 %v3595, %v3707
        %3709 = vmatprep.mubr.bf16.mxu0 %v1941
        %3710 = vmatmul.mubr.bf16.gmra.mrb[0].mxu0 %v1940
        %v3711 = vpop.f32.mrb[0].mxu0
        %v3712 = vadd.f32 %v3599, %v3711
        %v3713 = vpop.f32.mrb[0].mxu0
        %v3714 = vadd.f32 %v3601, %v3713
        %v3715 = vpop.f32.mrb[0].mxu0
        %v3716 = vadd.f32 %v3603, %v3715
        %v3717 = vpop.f32.mrb[0].mxu0
        %v3718 = vadd.f32 %v3605, %v3717
        %3719 = vmatprep.mubr.bf16.mxu0 %v1949
        %3720 = vmatmul.mubr.bf16.gmra.mrb[0].mxu0 %v1948
        %v3721 = vpop.f32.mrb[0].mxu0
        %v3722 = vadd.f32 %v3609, %v3721
        %v3723 = vpop.f32.mrb[0].mxu0
        %v3724 = vadd.f32 %v3611, %v3723
        %v3725 = vpop.f32.mrb[0].mxu0
        %v3726 = vadd.f32 %v3613, %v3725
        %v3727 = vpop.f32.mrb[0].mxu0
        %v3728 = vadd.f32 %v3615, %v3727
        %3729 = vmatprep.mubr.bf16.mxu0 %v1957
        %3730 = vmatmul.mubr.bf16.gmra.mrb[0].mxu0 %v1956
        %v3731 = vpop.f32.mrb[0].mxu0
        %v3732 = vadd.f32 %v3619, %v3731
        %v3733 = vpop.f32.mrb[0].mxu0
        %v3734 = vadd.f32 %v3621, %v3733
        %v3735 = vpop.f32.mrb[0].mxu0
        %v3736 = vadd.f32 %v3623, %v3735
        %v3737 = vpop.f32.mrb[0].mxu0
        %v3738 = vadd.f32 %v3625, %v3737
        %3739 = vmatprep.mubr.bf16.mxu0 %v1965
        %3740 = vmatmul.mubr.bf16.gmra.mrb[0].mxu0 %v1964
        %v3741 = vpop.f32.mrb[0].mxu0
        %v3742 = vadd.f32 %v3629, %v3741
        %v3743 = vpop.f32.mrb[0].mxu0
        %v3744 = vadd.f32 %v3631, %v3743
        %v3745 = vpop.f32.mrb[0].mxu0
        %v3746 = vadd.f32 %v3633, %v3745
        %v3747 = vpop.f32.mrb[0].mxu0
        %v3748 = vadd.f32 %v3635, %v3747
        %3749 = vmatprep.mubr.bf16.mxu0 %v1973
        %3750 = vmatmul.mubr.bf16.gmra.mrb[0].mxu0 %v1972
        %v3751 = vpop.f32.mrb[0].mxu0
        %v3752 = vadd.f32 %v3639, %v3751
        %v3753 = vpop.f32.mrb[0].mxu0
        %v3754 = vadd.f32 %v3641, %v3753
        %v3755 = vpop.f32.mrb[0].mxu0
        %v3756 = vadd.f32 %v3643, %v3755
        %v3757 = vpop.f32.mrb[0].mxu0
        %v3758 = vadd.f32 %v3645, %v3757
        %3759 = vmatprep.mubr.bf16.mxu0 %v1981
        %3760 = vmatmul.mubr.bf16.gmra.mrb[0].mxu0 %v1980
        %v3761 = vpop.f32.mrb[0].mxu0
        %v3762 = vadd.f32 %v3649, %v3761
        %v3763 = vpop.f32.mrb[0].mxu0
        %v3764 = vadd.f32 %v3651, %v3763
        %v3765 = vpop.f32.mrb[0].mxu0
        %v3766 = vadd.f32 %v3653, %v3765
        %v3767 = vpop.f32.mrb[0].mxu0
        %v3768 = vadd.f32 %v3655, %v3767
        %3769 = vdwg.mxu0
        %3770 = vmatprep.subr.bf16.mxu0 %v3161
        %3771 = vmatpush1.bf16.msra.mxu0 %v3160
        %3772 = vmatprep.subr.bf16.mxu0 %v3165
        %3773 = vmatpush1.bf16.msra.mxu0 %v3164
        %3774 = vmatprep.subr.bf16.mxu0 %v3169
        %3775 = vmatpush1.bf16.msra.mxu0 %v3168
        %3776 = vmatprep.subr.bf16.mxu0 %v3173
        %3777 = vmatpush1.bf16.msra.mxu0 %v3172
        %3778 = vmatprep.subr.bf16.mxu0 %v3177
        %3779 = vmatpush1.bf16.msra.mxu0 %v3176
        %3780 = vmatprep.subr.bf16.mxu0 %v3181
        %3781 = vmatpush1.bf16.msra.mxu0 %v3180
        %3782 = vmatprep.subr.bf16.mxu0 %v3185
        %3783 = vmatpush1.bf16.msra.mxu0 %v3184
        %3784 = vmatprep.subr.bf16.mxu0 %v3189
        %3785 = vmatpush1.bf16.msra.mxu0 %v3188
        %3786 = vmatprep.subr.bf16.mxu0 %v3193
        %3787 = vmatpush1.bf16.msra.mxu0 %v3192
        %3788 = vmatprep.subr.bf16.mxu0 %v3197
        %3789 = vmatpush1.bf16.msra.mxu0 %v3196
        %3790 = vmatprep.subr.bf16.mxu0 %v3201
        %3791 = vmatpush1.bf16.msra.mxu0 %v3200
        %3792 = vmatprep.subr.bf16.mxu0 %v3205
        %3793 = vmatpush1.bf16.msra.mxu0 %v3204
        %3794 = vmatprep.subr.bf16.mxu0 %v3209
        %3795 = vmatpush1.bf16.msra.mxu0 %v3208
        %3796 = vmatprep.subr.bf16.mxu0 %v3213
        %3797 = vmatpush1.bf16.msra.mxu0 %v3212
        %3798 = vmatprep.subr.bf16.mxu0 %v3217
        %3799 = vmatpush1.bf16.msra.mxu0 %v3216
        %3800 = vmatprep.subr.bf16.mxu0 %v3221
        %3801 = vmatpush1.bf16.msra.mxu0 %v3220
        %3802 = vmatprep.mubr.bf16.mxu0 %v1927
        %3803 = vmatmul.mubr.bf16.gmra.mrb[0].mxu0 %v1926
        %v3804 = vpop.f32.mrb[0].mxu0
        %v3805 = vadd.f32 %v3692, %v3804
        %v3806 = vpop.f32.mrb[0].mxu0
        %v3807 = vadd.f32 %v3694, %v3806
        %v3808 = vpop.f32.mrb[0].mxu0
        %v3809 = vadd.f32 %v3696, %v3808
        %v3810 = vpop.f32.mrb[0].mxu0
        %v3811 = vadd.f32 %v3698, %v3810
        %3812 = vmatprep.mubr.bf16.mxu0 %v1935
        %3813 = vmatmul.mubr.bf16.gmra.mrb[0].mxu0 %v1934
        %v3814 = vpop.f32.mrb[0].mxu0
        %v3815 = vadd.f32 %v3702, %v3814
        %v3816 = vpop.f32.mrb[0].mxu0
        %v3817 = vadd.f32 %v3704, %v3816
        %v3818 = vpop.f32.mrb[0].mxu0
        %v3819 = vadd.f32 %v3706, %v3818
        %v3820 = vpop.f32.mrb[0].mxu0
        %v3821 = vadd.f32 %v3708, %v3820
        %3822 = vmatprep.mubr.bf16.mxu0 %v1943
        %3823 = vmatmul.mubr.bf16.gmra.mrb[0].mxu0 %v1942
        %v3824 = vpop.f32.mrb[0].mxu0
        %v3825 = vadd.f32 %v3712, %v3824
        %v3826 = vpop.f32.mrb[0].mxu0
        %v3827 = vadd.f32 %v3714, %v3826
        %v3828 = vpop.f32.mrb[0].mxu0
        %v3829 = vadd.f32 %v3716, %v3828
        %v3830 = vpop.f32.mrb[0].mxu0
        %v3831 = vadd.f32 %v3718, %v3830
        %3832 = vmatprep.mubr.bf16.mxu0 %v1951
        %3833 = vmatmul.mubr.bf16.gmra.mrb[0].mxu0 %v1950
        %v3834 = vpop.f32.mrb[0].mxu0
        %v3835 = vadd.f32 %v3722, %v3834
        %v3836 = vpop.f32.mrb[0].mxu0
        %v3837 = vadd.f32 %v3724, %v3836
        %v3838 = vpop.f32.mrb[0].mxu0
        %v3839 = vadd.f32 %v3726, %v3838
        %v3840 = vpop.f32.mrb[0].mxu0
        %v3841 = vadd.f32 %v3728, %v3840
        %3842 = vmatprep.mubr.bf16.mxu0 %v1959
        %3843 = vmatmul.mubr.bf16.gmra.mrb[0].mxu0 %v1958
        %v3844 = vpop.f32.mrb[0].mxu0
        %v3845 = vadd.f32 %v3732, %v3844
        %v3846 = vpop.f32.mrb[0].mxu0
        %v3847 = vadd.f32 %v3734, %v3846
        %v3848 = vpop.f32.mrb[0].mxu0
        %v3849 = vadd.f32 %v3736, %v3848
        %v3850 = vpop.f32.mrb[0].mxu0
        %v3851 = vadd.f32 %v3738, %v3850
        %3852 = vmatprep.mubr.bf16.mxu0 %v1967
        %3853 = vmatmul.mubr.bf16.gmra.mrb[0].mxu0 %v1966
        %v3854 = vpop.f32.mrb[0].mxu0
        %v3855 = vadd.f32 %v3742, %v3854
        %v3856 = vpop.f32.mrb[0].mxu0
        %v3857 = vadd.f32 %v3744, %v3856
        %v3858 = vpop.f32.mrb[0].mxu0
        %v3859 = vadd.f32 %v3746, %v3858
        %v3860 = vpop.f32.mrb[0].mxu0
        %v3861 = vadd.f32 %v3748, %v3860
        %3862 = vmatprep.mubr.bf16.mxu0 %v1975
        %3863 = vmatmul.mubr.bf16.gmra.mrb[0].mxu0 %v1974
        %v3864 = vpop.f32.mrb[0].mxu0
        %v3865 = vadd.f32 %v3752, %v3864
        %v3866 = vpop.f32.mrb[0].mxu0
        %v3867 = vadd.f32 %v3754, %v3866
        %v3868 = vpop.f32.mrb[0].mxu0
        %v3869 = vadd.f32 %v3756, %v3868
        %v3870 = vpop.f32.mrb[0].mxu0
        %v3871 = vadd.f32 %v3758, %v3870
        %3872 = vmatprep.mubr.bf16.mxu0 %v1983
        %3873 = vmatmul.mubr.bf16.gmra.mrb[0].mxu0 %v1982
        %v3874 = vpop.f32.mrb[0].mxu0
        %v3875 = vadd.f32 %v3762, %v3874
        %v3876 = vpop.f32.mrb[0].mxu0
        %v3877 = vadd.f32 %v3764, %v3876
        %v3878 = vpop.f32.mrb[0].mxu0
        %v3879 = vadd.f32 %v3766, %v3878
        %v3880 = vpop.f32.mrb[0].mxu0
        %v3881 = vadd.f32 %v3768, %v3880
        %3882 = vdwg.mxu0
        %3883 = vmatprep.subr.bf16.mxu0 %v3225
        %3884 = vmatpush1.bf16.msra.mxu0 %v3224
        %3885 = vmatprep.subr.bf16.mxu0 %v3229
        %3886 = vmatpush1.bf16.msra.mxu0 %v3228
        %3887 = vmatprep.subr.bf16.mxu0 %v3233
        %3888 = vmatpush1.bf16.msra.mxu0 %v3232
        %3889 = vmatprep.subr.bf16.mxu0 %v3237
        %3890 = vmatpush1.bf16.msra.mxu0 %v3236
        %3891 = vmatprep.subr.bf16.mxu0 %v3241
        %3892 = vmatpush1.bf16.msra.mxu0 %v3240
        %3893 = vmatprep.subr.bf16.mxu0 %v3245
        %3894 = vmatpush1.bf16.msra.mxu0 %v3244
        %3895 = vmatprep.subr.bf16.mxu0 %v3249
        %3896 = vmatpush1.bf16.msra.mxu0 %v3248
        %3897 = vmatprep.subr.bf16.mxu0 %v3253
        %3898 = vmatpush1.bf16.msra.mxu0 %v3252
        %3899 = vmatprep.subr.bf16.mxu0 %v3257
        %3900 = vmatpush1.bf16.msra.mxu0 %v3256
        %3901 = vmatprep.subr.bf16.mxu0 %v3261
        %3902 = vmatpush1.bf16.msra.mxu0 %v3260
        %3903 = vmatprep.subr.bf16.mxu0 %v3265
        %3904 = vmatpush1.bf16.msra.mxu0 %v3264
        %3905 = vmatprep.subr.bf16.mxu0 %v3269
        %3906 = vmatpush1.bf16.msra.mxu0 %v3268
        %3907 = vmatprep.subr.bf16.mxu0 %v3273
        %3908 = vmatpush1.bf16.msra.mxu0 %v3272
        %3909 = vmatprep.subr.bf16.mxu0 %v3277
        %3910 = vmatpush1.bf16.msra.mxu0 %v3276
        %3911 = vmatprep.subr.bf16.mxu0 %v3281
        %3912 = vmatpush1.bf16.msra.mxu0 %v3280
        %3913 = vmatprep.subr.bf16.mxu0 %v3285
        %3914 = vmatpush1.bf16.msra.mxu0 %v3284
        %3915 = vmatprep.mubr.bf16.mxu0 %v1929
        %3916 = vmatmul.mubr.bf16.gmra.mrb[0].mxu0 %v1928
        %v3917 = vpop.f32.mrb[0].mxu0
        %v3918 = vadd.f32 %v3805, %v3917
        %v3919 = vpop.f32.mrb[0].mxu0
        %v3920 = vadd.f32 %v3807, %v3919
        %v3921 = vpop.f32.mrb[0].mxu0
        %v3922 = vadd.f32 %v3809, %v3921
        %v3923 = vpop.f32.mrb[0].mxu0
        %v3924 = vadd.f32 %v3811, %v3923
        %3925 = vmatprep.mubr.bf16.mxu0 %v1937
        %3926 = vmatmul.mubr.bf16.gmra.mrb[0].mxu0 %v1936
        %v3927 = vpop.f32.mrb[0].mxu0
        %v3928 = vadd.f32 %v3815, %v3927
        %v3929 = vpop.f32.mrb[0].mxu0
        %v3930 = vadd.f32 %v3817, %v3929
        %v3931 = vpop.f32.mrb[0].mxu0
        %v3932 = vadd.f32 %v3819, %v3931
        %v3933 = vpop.f32.mrb[0].mxu0
        %v3934 = vadd.f32 %v3821, %v3933
        %3935 = vmatprep.mubr.bf16.mxu0 %v1945
        %3936 = vmatmul.mubr.bf16.gmra.mrb[0].mxu0 %v1944
        %v3937 = vpop.f32.mrb[0].mxu0
        %v3938 = vadd.f32 %v3825, %v3937
        %v3939 = vpop.f32.mrb[0].mxu0
        %v3940 = vadd.f32 %v3827, %v3939
        %v3941 = vpop.f32.mrb[0].mxu0
        %v3942 = vadd.f32 %v3829, %v3941
        %v3943 = vpop.f32.mrb[0].mxu0
        %v3944 = vadd.f32 %v3831, %v3943
        %3945 = vmatprep.mubr.bf16.mxu0 %v1953
        %3946 = vmatmul.mubr.bf16.gmra.mrb[0].mxu0 %v1952
        %v3947 = vpop.f32.mrb[0].mxu0
        %v3948 = vadd.f32 %v3835, %v3947
        %v3949 = vpop.f32.mrb[0].mxu0
        %v3950 = vadd.f32 %v3837, %v3949
        %v3951 = vpop.f32.mrb[0].mxu0
        %v3952 = vadd.f32 %v3839, %v3951
        %v3953 = vpop.f32.mrb[0].mxu0
        %v3954 = vadd.f32 %v3841, %v3953
        %3955 = vmatprep.mubr.bf16.mxu0 %v1961
        %3956 = vmatmul.mubr.bf16.gmra.mrb[0].mxu0 %v1960
        %v3957 = vpop.f32.mrb[0].mxu0
        %v3958 = vadd.f32 %v3845, %v3957
        %v3959 = vpop.f32.mrb[0].mxu0
        %v3960 = vadd.f32 %v3847, %v3959
        %v3961 = vpop.f32.mrb[0].mxu0
        %v3962 = vadd.f32 %v3849, %v3961
        %v3963 = vpop.f32.mrb[0].mxu0
        %v3964 = vadd.f32 %v3851, %v3963
        %3965 = vmatprep.mubr.bf16.mxu0 %v1969
        %3966 = vmatmul.mubr.bf16.gmra.mrb[0].mxu0 %v1968
        %v3967 = vpop.f32.mrb[0].mxu0
        %v3968 = vadd.f32 %v3855, %v3967
        %v3969 = vpop.f32.mrb[0].mxu0
        %v3970 = vadd.f32 %v3857, %v3969
        %v3971 = vpop.f32.mrb[0].mxu0
        %v3972 = vadd.f32 %v3859, %v3971
        %v3973 = vpop.f32.mrb[0].mxu0
        %v3974 = vadd.f32 %v3861, %v3973
        %3975 = vmatprep.mubr.bf16.mxu0 %v1977
        %3976 = vmatmul.mubr.bf16.gmra.mrb[0].mxu0 %v1976
        %v3977 = vpop.f32.mrb[0].mxu0
        %v3978 = vadd.f32 %v3865, %v3977
        %v3979 = vpop.f32.mrb[0].mxu0
        %v3980 = vadd.f32 %v3867, %v3979
        %v3981 = vpop.f32.mrb[0].mxu0
        %v3982 = vadd.f32 %v3869, %v3981
        %v3983 = vpop.f32.mrb[0].mxu0
        %v3984 = vadd.f32 %v3871, %v3983
        %3985 = vmatprep.mubr.bf16.mxu0 %v1985
        %3986 = vmatmul.mubr.bf16.gmra.mrb[0].mxu0 %v1984
        %v3987 = vpop.f32.mrb[0].mxu0
        %v3988 = vadd.f32 %v3875, %v3987
        %v3989 = vpop.f32.mrb[0].mxu0
        %v3990 = vadd.f32 %v3877, %v3989
        %v3991 = vpop.f32.mrb[0].mxu0
        %v3992 = vadd.f32 %v3879, %v3991
        %v3993 = vpop.f32.mrb[0].mxu0
        %v3994 = vadd.f32 %v3881, %v3993
        %3995 = vdwg.mxu0
        %3996 = vmatprep.subr.bf16.mxu0 %v3035
        %3997 = vmatpush1.bf16.msra.mxu0 %v3034
        %3998 = vmatprep.subr.bf16.mxu0 %v3039
        %3999 = vmatpush1.bf16.msra.mxu0 %v3038
        %4000 = vmatprep.subr.bf16.mxu0 %v3043
        %4001 = vmatpush1.bf16.msra.mxu0 %v3042
        %4002 = vmatprep.subr.bf16.mxu0 %v3047
        %4003 = vmatpush1.bf16.msra.mxu0 %v3046
        %4004 = vmatprep.subr.bf16.mxu0 %v3051
        %4005 = vmatpush1.bf16.msra.mxu0 %v3050
        %4006 = vmatprep.subr.bf16.mxu0 %v3055
        %4007 = vmatpush1.bf16.msra.mxu0 %v3054
        %4008 = vmatprep.subr.bf16.mxu0 %v3059
        %4009 = vmatpush1.bf16.msra.mxu0 %v3058
        %4010 = vmatprep.subr.bf16.mxu0 %v3063
        %4011 = vmatpush1.bf16.msra.mxu0 %v3062
        %4012 = vmatprep.subr.bf16.mxu0 %v3067
        %4013 = vmatpush1.bf16.msra.mxu0 %v3066
        %4014 = vmatprep.subr.bf16.mxu0 %v3071
        %4015 = vmatpush1.bf16.msra.mxu0 %v3070
        %4016 = vmatprep.subr.bf16.mxu0 %v3075
        %4017 = vmatpush1.bf16.msra.mxu0 %v3074
        %4018 = vmatprep.subr.bf16.mxu0 %v3079
        %4019 = vmatpush1.bf16.msra.mxu0 %v3078
        %4020 = vmatprep.subr.bf16.mxu0 %v3083
        %4021 = vmatpush1.bf16.msra.mxu0 %v3082
        %4022 = vmatprep.subr.bf16.mxu0 %v3087
        %4023 = vmatpush1.bf16.msra.mxu0 %v3086
        %4024 = vmatprep.subr.bf16.mxu0 %v3091
        %4025 = vmatpush1.bf16.msra.mxu0 %v3090
        %4026 = vmatprep.subr.bf16.mxu0 %v3095
        %4027 = vmatpush1.bf16.msra.mxu0 %v3094
        %4028 = vmatprep.mubr.bf16.mxu0 %v1923
        %4029 = vmatmul.mubr.bf16.gmra.mrb[0].mxu0 %v1922
        %v4030 = vpop.f32.mrb[0].mxu0
        %v4031 = vadd.f32 %v2255, %v4030
        %v4032 = vpop.f32.mrb[0].mxu0
        %v4033 = vadd.f32 %v2259, %v4032
        %v4034 = vpop.f32.mrb[0].mxu0
        %v4035 = vadd.f32 %v2255, %v4034
        %v4036 = vpop.f32.mrb[0].mxu0
        %v4037 = vadd.f32 %v2259, %v4036
        %4038 = vmatprep.mubr.bf16.mxu0 %v1931
        %4039 = vmatmul.mubr.bf16.gmra.mrb[0].mxu0 %v1930
        %v4040 = vpop.f32.mrb[0].mxu0
        %v4041 = vadd.f32 %v2255, %v4040
        %v4042 = vpop.f32.mrb[0].mxu0
        %v4043 = vadd.f32 %v2259, %v4042
        %v4044 = vpop.f32.mrb[0].mxu0
        %v4045 = vadd.f32 %v2255, %v4044
        %v4046 = vpop.f32.mrb[0].mxu0
        %v4047 = vadd.f32 %v2259, %v4046
        %4048 = vmatprep.mubr.bf16.mxu0 %v1939
        %4049 = vmatmul.mubr.bf16.gmra.mrb[0].mxu0 %v1938
        %v4050 = vpop.f32.mrb[0].mxu0
        %v4051 = vadd.f32 %v2255, %v4050
        %v4052 = vpop.f32.mrb[0].mxu0
        %v4053 = vadd.f32 %v2259, %v4052
        %v4054 = vpop.f32.mrb[0].mxu0
        %v4055 = vadd.f32 %v2255, %v4054
        %v4056 = vpop.f32.mrb[0].mxu0
        %v4057 = vadd.f32 %v2259, %v4056
        %4058 = vmatprep.mubr.bf16.mxu0 %v1947
        %4059 = vmatmul.mubr.bf16.gmra.mrb[0].mxu0 %v1946
        %v4060 = vpop.f32.mrb[0].mxu0
        %v4061 = vadd.f32 %v2255, %v4060
        %v4062 = vpop.f32.mrb[0].mxu0
        %v4063 = vadd.f32 %v2259, %v4062
        %v4064 = vpop.f32.mrb[0].mxu0
        %v4065 = vadd.f32 %v2255, %v4064
        %v4066 = vpop.f32.mrb[0].mxu0
        %v4067 = vadd.f32 %v2259, %v4066
        %4068 = vmatprep.mubr.bf16.mxu0 %v1955
        %4069 = vmatmul.mubr.bf16.gmra.mrb[0].mxu0 %v1954
        %v4070 = vpop.f32.mrb[0].mxu0
        %v4071 = vadd.f32 %v2255, %v4070
        %v4072 = vpop.f32.mrb[0].mxu0
        %v4073 = vadd.f32 %v2259, %v4072
        %v4074 = vpop.f32.mrb[0].mxu0
        %v4075 = vadd.f32 %v2255, %v4074
        %v4076 = vpop.f32.mrb[0].mxu0
        %v4077 = vadd.f32 %v2259, %v4076
        %4078 = vmatprep.mubr.bf16.mxu0 %v1963
        %4079 = vmatmul.mubr.bf16.gmra.mrb[0].mxu0 %v1962
        %v4080 = vpop.f32.mrb[0].mxu0
        %v4081 = vadd.f32 %v2255, %v4080
        %v4082 = vpop.f32.mrb[0].mxu0
        %v4083 = vadd.f32 %v2259, %v4082
        %v4084 = vpop.f32.mrb[0].mxu0
        %v4085 = vadd.f32 %v2255, %v4084
        %v4086 = vpop.f32.mrb[0].mxu0
        %v4087 = vadd.f32 %v2259, %v4086
        %4088 = vmatprep.mubr.bf16.mxu0 %v1971
        %4089 = vmatmul.mubr.bf16.gmra.mrb[0].mxu0 %v1970
        %v4090 = vpop.f32.mrb[0].mxu0
        %v4091 = vadd.f32 %v2255, %v4090
        %v4092 = vpop.f32.mrb[0].mxu0
        %v4093 = vadd.f32 %v2259, %v4092
        %v4094 = vpop.f32.mrb[0].mxu0
        %v4095 = vadd.f32 %v2255, %v4094
        %v4096 = vpop.f32.mrb[0].mxu0
        %v4097 = vadd.f32 %v2259, %v4096
        %4098 = vmatprep.mubr.bf16.mxu0 %v1979
        %4099 = vmatmul.mubr.bf16.gmra.mrb[0].mxu0 %v1978
        %v4100 = vpop.f32.mrb[0].mxu0
        %v4101 = vadd.f32 %v2255, %v4100
        %v4102 = vpop.f32.mrb[0].mxu0
        %v4103 = vadd.f32 %v2259, %v4102
        %v4104 = vpop.f32.mrb[0].mxu0
        %v4105 = vadd.f32 %v2255, %v4104
        %v4106 = vpop.f32.mrb[0].mxu0
        %v4107 = vadd.f32 %v2259, %v4106
        %4108 = vdwg.mxu0
        %4109 = vmatprep.subr.bf16.mxu0 %v3099
        %4110 = vmatpush1.bf16.msra.mxu0 %v3098
        %4111 = vmatprep.subr.bf16.mxu0 %v3103
        %4112 = vmatpush1.bf16.msra.mxu0 %v3102
        %4113 = vmatprep.subr.bf16.mxu0 %v3107
        %4114 = vmatpush1.bf16.msra.mxu0 %v3106
        %4115 = vmatprep.subr.bf16.mxu0 %v3111
        %4116 = vmatpush1.bf16.msra.mxu0 %v3110
        %4117 = vmatprep.subr.bf16.mxu0 %v3115
        %4118 = vmatpush1.bf16.msra.mxu0 %v3114
        %4119 = vmatprep.subr.bf16.mxu0 %v3119
        %4120 = vmatpush1.bf16.msra.mxu0 %v3118
        %4121 = vmatprep.subr.bf16.mxu0 %v3123
        %4122 = vmatpush1.bf16.msra.mxu0 %v3122
        %4123 = vmatprep.subr.bf16.mxu0 %v3127
        %4124 = vmatpush1.bf16.msra.mxu0 %v3126
        %4125 = vmatprep.subr.bf16.mxu0 %v3131
        %4126 = vmatpush1.bf16.msra.mxu0 %v3130
        %4127 = vmatprep.subr.bf16.mxu0 %v3135
        %4128 = vmatpush1.bf16.msra.mxu0 %v3134
        %4129 = vmatprep.subr.bf16.mxu0 %v3139
        %4130 = vmatpush1.bf16.msra.mxu0 %v3138
        %4131 = vmatprep.subr.bf16.mxu0 %v3143
        %4132 = vmatpush1.bf16.msra.mxu0 %v3142
        %4133 = vmatprep.subr.bf16.mxu0 %v3147
        %4134 = vmatpush1.bf16.msra.mxu0 %v3146
        %4135 = vmatprep.subr.bf16.mxu0 %v3151
        %4136 = vmatpush1.bf16.msra.mxu0 %v3150
        %4137 = vmatprep.subr.bf16.mxu0 %v3155
        %4138 = vmatpush1.bf16.msra.mxu0 %v3154
        %4139 = vmatprep.subr.bf16.mxu0 %v3159
        %4140 = vmatpush1.bf16.msra.mxu0 %v3158
        %4141 = vmatprep.mubr.bf16.mxu0 %v1925
        %4142 = vmatmul.mubr.bf16.gmra.mrb[0].mxu0 %v1924
        %v4143 = vpop.f32.mrb[0].mxu0
        %v4144 = vadd.f32 %v4031, %v4143
        %v4145 = vpop.f32.mrb[0].mxu0
        %v4146 = vadd.f32 %v4033, %v4145
        %v4147 = vpop.f32.mrb[0].mxu0
        %v4148 = vadd.f32 %v4035, %v4147
        %v4149 = vpop.f32.mrb[0].mxu0
        %v4150 = vadd.f32 %v4037, %v4149
        %4151 = vmatprep.mubr.bf16.mxu0 %v1933
        %4152 = vmatmul.mubr.bf16.gmra.mrb[0].mxu0 %v1932
        %v4153 = vpop.f32.mrb[0].mxu0
        %v4154 = vadd.f32 %v4041, %v4153
        %v4155 = vpop.f32.mrb[0].mxu0
        %v4156 = vadd.f32 %v4043, %v4155
        %v4157 = vpop.f32.mrb[0].mxu0
        %v4158 = vadd.f32 %v4045, %v4157
        %v4159 = vpop.f32.mrb[0].mxu0
        %v4160 = vadd.f32 %v4047, %v4159
        %4161 = vmatprep.mubr.bf16.mxu0 %v1941
        %4162 = vmatmul.mubr.bf16.gmra.mrb[0].mxu0 %v1940
        %v4163 = vpop.f32.mrb[0].mxu0
        %v4164 = vadd.f32 %v4051, %v4163
        %v4165 = vpop.f32.mrb[0].mxu0
        %v4166 = vadd.f32 %v4053, %v4165
        %v4167 = vpop.f32.mrb[0].mxu0
        %v4168 = vadd.f32 %v4055, %v4167
        %v4169 = vpop.f32.mrb[0].mxu0
        %v4170 = vadd.f32 %v4057, %v4169
        %4171 = vmatprep.mubr.bf16.mxu0 %v1949
        %4172 = vmatmul.mubr.bf16.gmra.mrb[0].mxu0 %v1948
        %v4173 = vpop.f32.mrb[0].mxu0
        %v4174 = vadd.f32 %v4061, %v4173
        %v4175 = vpop.f32.mrb[0].mxu0
        %v4176 = vadd.f32 %v4063, %v4175
        %v4177 = vpop.f32.mrb[0].mxu0
        %v4178 = vadd.f32 %v4065, %v4177
        %v4179 = vpop.f32.mrb[0].mxu0
        %v4180 = vadd.f32 %v4067, %v4179
        %4181 = vmatprep.mubr.bf16.mxu0 %v1957
        %4182 = vmatmul.mubr.bf16.gmra.mrb[0].mxu0 %v1956
        %v4183 = vpop.f32.mrb[0].mxu0
        %v4184 = vadd.f32 %v4071, %v4183
        %v4185 = vpop.f32.mrb[0].mxu0
        %v4186 = vadd.f32 %v4073, %v4185
        %v4187 = vpop.f32.mrb[0].mxu0
        %v4188 = vadd.f32 %v4075, %v4187
        %v4189 = vpop.f32.mrb[0].mxu0
        %v4190 = vadd.f32 %v4077, %v4189
        %4191 = vmatprep.mubr.bf16.mxu0 %v1965
        %4192 = vmatmul.mubr.bf16.gmra.mrb[0].mxu0 %v1964
        %v4193 = vpop.f32.mrb[0].mxu0
        %v4194 = vadd.f32 %v4081, %v4193
        %v4195 = vpop.f32.mrb[0].mxu0
        %v4196 = vadd.f32 %v4083, %v4195
        %v4197 = vpop.f32.mrb[0].mxu0
        %v4198 = vadd.f32 %v4085, %v4197
        %v4199 = vpop.f32.mrb[0].mxu0
        %v4200 = vadd.f32 %v4087, %v4199
        %4201 = vmatprep.mubr.bf16.mxu0 %v1973
        %4202 = vmatmul.mubr.bf16.gmra.mrb[0].mxu0 %v1972
        %v4203 = vpop.f32.mrb[0].mxu0
        %v4204 = vadd.f32 %v4091, %v4203
        %v4205 = vpop.f32.mrb[0].mxu0
        %v4206 = vadd.f32 %v4093, %v4205
        %v4207 = vpop.f32.mrb[0].mxu0
        %v4208 = vadd.f32 %v4095, %v4207
        %v4209 = vpop.f32.mrb[0].mxu0
        %v4210 = vadd.f32 %v4097, %v4209
        %4211 = vmatprep.mubr.bf16.mxu0 %v1981
        %4212 = vmatmul.mubr.bf16.gmra.mrb[0].mxu0 %v1980
        %v4213 = vpop.f32.mrb[0].mxu0
        %v4214 = vadd.f32 %v4101, %v4213
        %v4215 = vpop.f32.mrb[0].mxu0
        %v4216 = vadd.f32 %v4103, %v4215
        %v4217 = vpop.f32.mrb[0].mxu0
        %v4218 = vadd.f32 %v4105, %v4217
        %v4219 = vpop.f32.mrb[0].mxu0
        %v4220 = vadd.f32 %v4107, %v4219
        %4221 = vdwg.mxu0
        %4222 = vmatprep.subr.bf16.mxu0 %v3163
        %4223 = vmatpush1.bf16.msra.mxu0 %v3162
        %4224 = vmatprep.subr.bf16.mxu0 %v3167
        %4225 = vmatpush1.bf16.msra.mxu0 %v3166
        %4226 = vmatprep.subr.bf16.mxu0 %v3171
        %4227 = vmatpush1.bf16.msra.mxu0 %v3170
        %4228 = vmatprep.subr.bf16.mxu0 %v3175
        %4229 = vmatpush1.bf16.msra.mxu0 %v3174
        %4230 = vmatprep.subr.bf16.mxu0 %v3179
        %4231 = vmatpush1.bf16.msra.mxu0 %v3178
        %4232 = vmatprep.subr.bf16.mxu0 %v3183
        %4233 = vmatpush1.bf16.msra.mxu0 %v3182
        %4234 = vmatprep.subr.bf16.mxu0 %v3187
        %4235 = vmatpush1.bf16.msra.mxu0 %v3186
        %4236 = vmatprep.subr.bf16.mxu0 %v3191
        %4237 = vmatpush1.bf16.msra.mxu0 %v3190
        %4238 = vmatprep.subr.bf16.mxu0 %v3195
        %4239 = vmatpush1.bf16.msra.mxu0 %v3194
        %4240 = vmatprep.subr.bf16.mxu0 %v3199
        %4241 = vmatpush1.bf16.msra.mxu0 %v3198
        %4242 = vmatprep.subr.bf16.mxu0 %v3203
        %4243 = vmatpush1.bf16.msra.mxu0 %v3202
        %4244 = vmatprep.subr.bf16.mxu0 %v3207
        %4245 = vmatpush1.bf16.msra.mxu0 %v3206
        %4246 = vmatprep.subr.bf16.mxu0 %v3211
        %4247 = vmatpush1.bf16.msra.mxu0 %v3210
        %4248 = vmatprep.subr.bf16.mxu0 %v3215
        %4249 = vmatpush1.bf16.msra.mxu0 %v3214
        %4250 = vmatprep.subr.bf16.mxu0 %v3219
        %4251 = vmatpush1.bf16.msra.mxu0 %v3218
        %4252 = vmatprep.subr.bf16.mxu0 %v3223
        %4253 = vmatpush1.bf16.msra.mxu0 %v3222
        %4254 = vmatprep.mubr.bf16.mxu0 %v1927
        %4255 = vmatmul.mubr.bf16.gmra.mrb[0].mxu0 %v1926
        %v4256 = vpop.f32.mrb[0].mxu0
        %v4257 = vadd.f32 %v4144, %v4256
        %v4258 = vpop.f32.mrb[0].mxu0
        %v4259 = vadd.f32 %v4146, %v4258
        %v4260 = vpop.f32.mrb[0].mxu0
        %v4261 = vadd.f32 %v4148, %v4260
        %v4262 = vpop.f32.mrb[0].mxu0
        %v4263 = vadd.f32 %v4150, %v4262
        %4264 = vmatprep.mubr.bf16.mxu0 %v1935
        %4265 = vmatmul.mubr.bf16.gmra.mrb[0].mxu0 %v1934
        %v4266 = vpop.f32.mrb[0].mxu0
        %v4267 = vadd.f32 %v4154, %v4266
        %v4268 = vpop.f32.mrb[0].mxu0
        %v4269 = vadd.f32 %v4156, %v4268
        %v4270 = vpop.f32.mrb[0].mxu0
        %v4271 = vadd.f32 %v4158, %v4270
        %v4272 = vpop.f32.mrb[0].mxu0
        %v4273 = vadd.f32 %v4160, %v4272
        %4274 = vmatprep.mubr.bf16.mxu0 %v1943
        %4275 = vmatmul.mubr.bf16.gmra.mrb[0].mxu0 %v1942
        %v4276 = vpop.f32.mrb[0].mxu0
        %v4277 = vadd.f32 %v4164, %v4276
        %v4278 = vpop.f32.mrb[0].mxu0
        %v4279 = vadd.f32 %v4166, %v4278
        %v4280 = vpop.f32.mrb[0].mxu0
        %v4281 = vadd.f32 %v4168, %v4280
        %v4282 = vpop.f32.mrb[0].mxu0
        %v4283 = vadd.f32 %v4170, %v4282
        %4284 = vmatprep.mubr.bf16.mxu0 %v1951
        %4285 = vmatmul.mubr.bf16.gmra.mrb[0].mxu0 %v1950
        %v4286 = vpop.f32.mrb[0].mxu0
        %v4287 = vadd.f32 %v4174, %v4286
        %v4288 = vpop.f32.mrb[0].mxu0
        %v4289 = vadd.f32 %v4176, %v4288
        %v4290 = vpop.f32.mrb[0].mxu0
        %v4291 = vadd.f32 %v4178, %v4290
        %v4292 = vpop.f32.mrb[0].mxu0
        %v4293 = vadd.f32 %v4180, %v4292
        %4294 = vmatprep.mubr.bf16.mxu0 %v1959
        %4295 = vmatmul.mubr.bf16.gmra.mrb[0].mxu0 %v1958
        %v4296 = vpop.f32.mrb[0].mxu0
        %v4297 = vadd.f32 %v4184, %v4296
        %v4298 = vpop.f32.mrb[0].mxu0
        %v4299 = vadd.f32 %v4186, %v4298
        %v4300 = vpop.f32.mrb[0].mxu0
        %v4301 = vadd.f32 %v4188, %v4300
        %v4302 = vpop.f32.mrb[0].mxu0
        %v4303 = vadd.f32 %v4190, %v4302
        %4304 = vmatprep.mubr.bf16.mxu0 %v1967
        %4305 = vmatmul.mubr.bf16.gmra.mrb[0].mxu0 %v1966
        %v4306 = vpop.f32.mrb[0].mxu0
        %v4307 = vadd.f32 %v4194, %v4306
        %v4308 = vpop.f32.mrb[0].mxu0
        %v4309 = vadd.f32 %v4196, %v4308
        %v4310 = vpop.f32.mrb[0].mxu0
        %v4311 = vadd.f32 %v4198, %v4310
        %v4312 = vpop.f32.mrb[0].mxu0
        %v4313 = vadd.f32 %v4200, %v4312
        %4314 = vmatprep.mubr.bf16.mxu0 %v1975
        %4315 = vmatmul.mubr.bf16.gmra.mrb[0].mxu0 %v1974
        %v4316 = vpop.f32.mrb[0].mxu0
        %v4317 = vadd.f32 %v4204, %v4316
        %v4318 = vpop.f32.mrb[0].mxu0
        %v4319 = vadd.f32 %v4206, %v4318
        %v4320 = vpop.f32.mrb[0].mxu0
        %v4321 = vadd.f32 %v4208, %v4320
        %v4322 = vpop.f32.mrb[0].mxu0
        %v4323 = vadd.f32 %v4210, %v4322
        %4324 = vmatprep.mubr.bf16.mxu0 %v1983
        %4325 = vmatmul.mubr.bf16.gmra.mrb[0].mxu0 %v1982
        %v4326 = vpop.f32.mrb[0].mxu0
        %v4327 = vadd.f32 %v4214, %v4326
        %v4328 = vpop.f32.mrb[0].mxu0
        %v4329 = vadd.f32 %v4216, %v4328
        %v4330 = vpop.f32.mrb[0].mxu0
        %v4331 = vadd.f32 %v4218, %v4330
        %v4332 = vpop.f32.mrb[0].mxu0
        %v4333 = vadd.f32 %v4220, %v4332
        %4334 = vdwg.mxu0
        %4335 = vmatprep.subr.bf16.mxu0 %v3227
        %4336 = vmatpush1.bf16.msra.mxu0 %v3226
        %4337 = vmatprep.subr.bf16.mxu0 %v3231
        %4338 = vmatpush1.bf16.msra.mxu0 %v3230
        %4339 = vmatprep.subr.bf16.mxu0 %v3235
        %4340 = vmatpush1.bf16.msra.mxu0 %v3234
        %4341 = vmatprep.subr.bf16.mxu0 %v3239
        %4342 = vmatpush1.bf16.msra.mxu0 %v3238
        %4343 = vmatprep.subr.bf16.mxu0 %v3243
        %4344 = vmatpush1.bf16.msra.mxu0 %v3242
        %4345 = vmatprep.subr.bf16.mxu0 %v3247
        %4346 = vmatpush1.bf16.msra.mxu0 %v3246
        %4347 = vmatprep.subr.bf16.mxu0 %v3251
        %4348 = vmatpush1.bf16.msra.mxu0 %v3250
        %4349 = vmatprep.subr.bf16.mxu0 %v3255
        %4350 = vmatpush1.bf16.msra.mxu0 %v3254
        %4351 = vmatprep.subr.bf16.mxu0 %v3259
        %4352 = vmatpush1.bf16.msra.mxu0 %v3258
        %4353 = vmatprep.subr.bf16.mxu0 %v3263
        %4354 = vmatpush1.bf16.msra.mxu0 %v3262
        %4355 = vmatprep.subr.bf16.mxu0 %v3267
        %4356 = vmatpush1.bf16.msra.mxu0 %v3266
        %4357 = vmatprep.subr.bf16.mxu0 %v3271
        %4358 = vmatpush1.bf16.msra.mxu0 %v3270
        %4359 = vmatprep.subr.bf16.mxu0 %v3275
        %4360 = vmatpush1.bf16.msra.mxu0 %v3274
        %4361 = vmatprep.subr.bf16.mxu0 %v3279
        %4362 = vmatpush1.bf16.msra.mxu0 %v3278
        %4363 = vmatprep.subr.bf16.mxu0 %v3283
        %4364 = vmatpush1.bf16.msra.mxu0 %v3282
        %4365 = vmatprep.subr.bf16.mxu0 %v3287
        %4366 = vmatpush1.bf16.msra.mxu0 %v3286
        %4367 = vmatprep.mubr.bf16.mxu0 %v1929
        %4368 = vmatmul.mubr.bf16.gmra.mrb[0].mxu0 %v1928
        %v4369 = vpop.f32.mrb[0].mxu0
        %v4370 = vadd.f32 %v4257, %v4369
        %v4371 = vpop.f32.mrb[0].mxu0
        %v4372 = vadd.f32 %v4259, %v4371
        %v4373 = vpop.f32.mrb[0].mxu0
        %v4374 = vadd.f32 %v4261, %v4373
        %v4375 = vpop.f32.mrb[0].mxu0
        %v4376 = vadd.f32 %v4263, %v4375
        %4377 = vmatprep.mubr.bf16.mxu0 %v1937
        %4378 = vmatmul.mubr.bf16.gmra.mrb[0].mxu0 %v1936
        %v4379 = vpop.f32.mrb[0].mxu0
        %v4380 = vadd.f32 %v4267, %v4379
        %v4381 = vpop.f32.mrb[0].mxu0
        %v4382 = vadd.f32 %v4269, %v4381
        %v4383 = vpop.f32.mrb[0].mxu0
        %v4384 = vadd.f32 %v4271, %v4383
        %v4385 = vpop.f32.mrb[0].mxu0
        %v4386 = vadd.f32 %v4273, %v4385
        %4387 = vmatprep.mubr.bf16.mxu0 %v1945
        %4388 = vmatmul.mubr.bf16.gmra.mrb[0].mxu0 %v1944
        %v4389 = vpop.f32.mrb[0].mxu0
        %v4390 = vadd.f32 %v4277, %v4389
        %v4391 = vpop.f32.mrb[0].mxu0
        %v4392 = vadd.f32 %v4279, %v4391
        %v4393 = vpop.f32.mrb[0].mxu0
        %v4394 = vadd.f32 %v4281, %v4393
        %v4395 = vpop.f32.mrb[0].mxu0
        %v4396 = vadd.f32 %v4283, %v4395
        %4397 = vmatprep.mubr.bf16.mxu0 %v1953
        %4398 = vmatmul.mubr.bf16.gmra.mrb[0].mxu0 %v1952
        %v4399 = vpop.f32.mrb[0].mxu0
        %v4400 = vadd.f32 %v4287, %v4399
        %v4401 = vpop.f32.mrb[0].mxu0
        %v4402 = vadd.f32 %v4289, %v4401
        %v4403 = vpop.f32.mrb[0].mxu0
        %v4404 = vadd.f32 %v4291, %v4403
        %v4405 = vpop.f32.mrb[0].mxu0
        %v4406 = vadd.f32 %v4293, %v4405
        %4407 = vmatprep.mubr.bf16.mxu0 %v1961
        %4408 = vmatmul.mubr.bf16.gmra.mrb[0].mxu0 %v1960
        %v4409 = vpop.f32.mrb[0].mxu0
        %v4410 = vadd.f32 %v4297, %v4409
        %v4411 = vpop.f32.mrb[0].mxu0
        %v4412 = vadd.f32 %v4299, %v4411
        %v4413 = vpop.f32.mrb[0].mxu0
        %v4414 = vadd.f32 %v4301, %v4413
        %v4415 = vpop.f32.mrb[0].mxu0
        %v4416 = vadd.f32 %v4303, %v4415
        %4417 = vmatprep.mubr.bf16.mxu0 %v1969
        %4418 = vmatmul.mubr.bf16.gmra.mrb[0].mxu0 %v1968
        %v4419 = vpop.f32.mrb[0].mxu0
        %v4420 = vadd.f32 %v4307, %v4419
        %v4421 = vpop.f32.mrb[0].mxu0
        %v4422 = vadd.f32 %v4309, %v4421
        %v4423 = vpop.f32.mrb[0].mxu0
        %v4424 = vadd.f32 %v4311, %v4423
        %v4425 = vpop.f32.mrb[0].mxu0
        %v4426 = vadd.f32 %v4313, %v4425
        %4427 = vmatprep.mubr.bf16.mxu0 %v1977
        %4428 = vmatmul.mubr.bf16.gmra.mrb[0].mxu0 %v1976
        %v4429 = vpop.f32.mrb[0].mxu0
        %v4430 = vadd.f32 %v4317, %v4429
        %v4431 = vpop.f32.mrb[0].mxu0
        %v4432 = vadd.f32 %v4319, %v4431
        %v4433 = vpop.f32.mrb[0].mxu0
        %v4434 = vadd.f32 %v4321, %v4433
        %v4435 = vpop.f32.mrb[0].mxu0
        %v4436 = vadd.f32 %v4323, %v4435
        %4437 = vmatprep.mubr.bf16.mxu0 %v1985
        %4438 = vmatmul.mubr.bf16.gmra.mrb[0].mxu0 %v1984
        %v4439 = vpop.f32.mrb[0].mxu0
        %v4440 = vadd.f32 %v4327, %v4439
        %v4441 = vpop.f32.mrb[0].mxu0
        %v4442 = vadd.f32 %v4329, %v4441
        %v4443 = vpop.f32.mrb[0].mxu0
        %v4444 = vadd.f32 %v4331, %v4443
        %v4445 = vpop.f32.mrb[0].mxu0
        %v4446 = vadd.f32 %v4333, %v4445
        %4447 = vdwg.mxu0
        %v4448 = vmul.f32 %v3918, 0.01
        %v4449 = vmul.f32 %v3920, 0.01
        %v4450 = vmul.f32 %v4370, 0.01
        %v4451 = vmul.f32 %v4372, 0.01
        %v4452 = vmul.f32 %v3922, 0.01
        %v4453 = vmul.f32 %v3924, 0.01
        %v4454 = vmul.f32 %v4374, 0.01
        %v4455 = vmul.f32 %v4376, 0.01
        %v4456 = vmul.f32 %v3928, 0.01
        %v4457 = vmul.f32 %v3930, 0.01
        %v4458 = vmul.f32 %v4380, 0.01
        %v4459 = vmul.f32 %v4382, 0.01
        %v4460 = vmul.f32 %v3932, 0.01
        %v4461 = vmul.f32 %v3934, 0.01
        %v4462 = vmul.f32 %v4384, 0.01
        %v4463 = vmul.f32 %v4386, 0.01
        %v4464 = vmul.f32 %v3938, 0.01
        %v4465 = vmul.f32 %v3940, 0.01
        %v4466 = vmul.f32 %v4390, 0.01
        %v4467 = vmul.f32 %v4392, 0.01
        %v4468 = vmul.f32 %v3942, 0.01
        %v4469 = vmul.f32 %v3944, 0.01
        %v4470 = vmul.f32 %v4394, 0.01
        %v4471 = vmul.f32 %v4396, 0.01
        %v4472 = vmul.f32 %v3948, 0.01
        %v4473 = vmul.f32 %v3950, 0.01
        %v4474 = vmul.f32 %v4400, 0.01
        %v4475 = vmul.f32 %v4402, 0.01
        %v4476 = vmul.f32 %v3952, 0.01
        %v4477 = vmul.f32 %v3954, 0.01
        %v4478 = vmul.f32 %v4404, 0.01
        %v4479 = vmul.f32 %v4406, 0.01
        %v4480 = vmul.f32 %v3958, 0.01
        %v4481 = vmul.f32 %v3960, 0.01
        %v4482 = vmul.f32 %v4410, 0.01
        %v4483 = vmul.f32 %v4412, 0.01
        %v4484 = vmul.f32 %v3962, 0.01
        %v4485 = vmul.f32 %v3964, 0.01
        %v4486 = vmul.f32 %v4414, 0.01
        %v4487 = vmul.f32 %v4416, 0.01
        %v4488 = vmul.f32 %v3968, 0.01
        %v4489 = vmul.f32 %v3970, 0.01
        %v4490 = vmul.f32 %v4420, 0.01
        %v4491 = vmul.f32 %v4422, 0.01
        %v4492 = vmul.f32 %v3972, 0.01
        %v4493 = vmul.f32 %v3974, 0.01
        %v4494 = vmul.f32 %v4424, 0.01
        %v4495 = vmul.f32 %v4426, 0.01
        %v4496 = vmul.f32 %v3978, 0.01
        %v4497 = vmul.f32 %v3980, 0.01
        %v4498 = vmul.f32 %v4430, 0.01
        %v4499 = vmul.f32 %v4432, 0.01
        %v4500 = vmul.f32 %v3982, 0.01
        %v4501 = vmul.f32 %v3984, 0.01
        %v4502 = vmul.f32 %v4434, 0.01
        %v4503 = vmul.f32 %v4436, 0.01
        %v4504 = vmul.f32 %v3988, 0.01
        %v4505 = vmul.f32 %v3990, 0.01
        %v4506 = vmul.f32 %v4440, 0.01
        %v4507 = vmul.f32 %v4442, 0.01
        %v4508 = vmul.f32 %v3992, 0.01
        %v4509 = vmul.f32 %v3994, 0.01
        %v4510 = vmul.f32 %v4444, 0.01
        %v4511 = vmul.f32 %v4446, 0.01
        %v4512 = vmax.f32 %v3918, %v4448
        %v4513 = vmax.f32 %v3920, %v4449
        %v4514 = vmax.f32 %v4370, %v4450
        %v4515 = vmax.f32 %v4372, %v4451
        %v4516 = vmax.f32 %v3922, %v4452
        %v4517 = vmax.f32 %v3924, %v4453
        %v4518 = vmax.f32 %v4374, %v4454
        %v4519 = vmax.f32 %v4376, %v4455
        %v4520 = vmax.f32 %v3928, %v4456
        %v4521 = vmax.f32 %v3930, %v4457
        %v4522 = vmax.f32 %v4380, %v4458
        %v4523 = vmax.f32 %v4382, %v4459
        %v4524 = vmax.f32 %v3932, %v4460
        %v4525 = vmax.f32 %v3934, %v4461
        %v4526 = vmax.f32 %v4384, %v4462
        %v4527 = vmax.f32 %v4386, %v4463
        %v4528 = vmax.f32 %v3938, %v4464
        %v4529 = vmax.f32 %v3940, %v4465
        %v4530 = vmax.f32 %v4390, %v4466
        %v4531 = vmax.f32 %v4392, %v4467
        %v4532 = vmax.f32 %v3942, %v4468
        %v4533 = vmax.f32 %v3944, %v4469
        %v4534 = vmax.f32 %v4394, %v4470
        %v4535 = vmax.f32 %v4396, %v4471
        %v4536 = vmax.f32 %v3948, %v4472
        %v4537 = vmax.f32 %v3950, %v4473
        %v4538 = vmax.f32 %v4400, %v4474
        %v4539 = vmax.f32 %v4402, %v4475
        %v4540 = vmax.f32 %v3952, %v4476
        %v4541 = vmax.f32 %v3954, %v4477
        %v4542 = vmax.f32 %v4404, %v4478
        %v4543 = vmax.f32 %v4406, %v4479
        %v4544 = vmax.f32 %v3958, %v4480
        %v4545 = vmax.f32 %v3960, %v4481
        %v4546 = vmax.f32 %v4410, %v4482
        %v4547 = vmax.f32 %v4412, %v4483
        %v4548 = vmax.f32 %v3962, %v4484
        %v4549 = vmax.f32 %v3964, %v4485
        %v4550 = vmax.f32 %v4414, %v4486
        %v4551 = vmax.f32 %v4416, %v4487
        %v4552 = vmax.f32 %v3968, %v4488
        %v4553 = vmax.f32 %v3970, %v4489
        %v4554 = vmax.f32 %v4420, %v4490
        %v4555 = vmax.f32 %v4422, %v4491
        %v4556 = vmax.f32 %v3972, %v4492
        %v4557 = vmax.f32 %v3974, %v4493
        %v4558 = vmax.f32 %v4424, %v4494
        %v4559 = vmax.f32 %v4426, %v4495
        %v4560 = vmax.f32 %v3978, %v4496
        %v4561 = vmax.f32 %v3980, %v4497
        %v4562 = vmax.f32 %v4430, %v4498
        %v4563 = vmax.f32 %v4432, %v4499
        %v4564 = vmax.f32 %v3982, %v4500
        %v4565 = vmax.f32 %v3984, %v4501
        %v4566 = vmax.f32 %v4434, %v4502
        %v4567 = vmax.f32 %v4436, %v4503
        %v4568 = vmax.f32 %v3988, %v4504
        %v4569 = vmax.f32 %v3990, %v4505
        %v4570 = vmax.f32 %v4440, %v4506
        %v4571 = vmax.f32 %v4442, %v4507
        %v4572 = vmax.f32 %v3992, %v4508
        %v4573 = vmax.f32 %v3994, %v4509
        %v4574 = vmax.f32 %v4444, %v4510
        %v4575 = vmax.f32 %v4446, %v4511
        %v4576 = vpack.c.bf16 %v4516, %v4512
        %v4577 = vpack.c.bf16 %v4517, %v4513
        %v4578 = vpack.c.bf16 %v4518, %v4514
        %v4579 = vpack.c.bf16 %v4519, %v4515
        %v4580 = vpack.c.bf16 %v4524, %v4520
        %v4581 = vpack.c.bf16 %v4525, %v4521
        %v4582 = vpack.c.bf16 %v4526, %v4522
        %v4583 = vpack.c.bf16 %v4527, %v4523
        %v4584 = vpack.c.bf16 %v4532, %v4528
        %v4585 = vpack.c.bf16 %v4533, %v4529
        %v4586 = vpack.c.bf16 %v4534, %v4530
        %v4587 = vpack.c.bf16 %v4535, %v4531
        %v4588 = vpack.c.bf16 %v4540, %v4536
        %v4589 = vpack.c.bf16 %v4541, %v4537
        %v4590 = vpack.c.bf16 %v4542, %v4538
        %v4591 = vpack.c.bf16 %v4543, %v4539
        %v4592 = vpack.c.bf16 %v4548, %v4544
        %v4593 = vpack.c.bf16 %v4549, %v4545
        %v4594 = vpack.c.bf16 %v4550, %v4546
        %v4595 = vpack.c.bf16 %v4551, %v4547
        %v4596 = vpack.c.bf16 %v4556, %v4552
        %v4597 = vpack.c.bf16 %v4557, %v4553
        %v4598 = vpack.c.bf16 %v4558, %v4554
        %v4599 = vpack.c.bf16 %v4559, %v4555
        %v4600 = vpack.c.bf16 %v4564, %v4560
        %v4601 = vpack.c.bf16 %v4565, %v4561
        %v4602 = vpack.c.bf16 %v4566, %v4562
        %v4603 = vpack.c.bf16 %v4567, %v4563
        %v4604 = vpack.c.bf16 %v4572, %v4568
        %v4605 = vpack.c.bf16 %v4573, %v4569
        %v4606 = vpack.c.bf16 %v4574, %v4570
        %v4607 = vpack.c.bf16 %v4575, %v4571
        %v4608 = vld [vmem:[#allocation10] sm:$0xff]
        %v4609 = vld [vmem:[#allocation10 + $0x8] sm:$0xff]
        %v4610 = vld [vmem:[#allocation10 + $0x10] sm:$0xff]
        %v4611 = vld [vmem:[#allocation10 + $0x18] sm:$0xff]
        %v4612 = vld [vmem:[#allocation10 + $0x20] sm:$0xff]
        %v4613 = vld [vmem:[#allocation10 + $0x28] sm:$0xff]
        %v4614 = vld [vmem:[#allocation10 + $0x30] sm:$0xff]
        %v4615 = vld [vmem:[#allocation10 + $0x38] sm:$0xff]
        %v4616 = vld [vmem:[#allocation10 + $0x40] sm:$0xff]
        %v4617 = vld [vmem:[#allocation10 + $0x48] sm:$0xff]
        %v4618 = vld [vmem:[#allocation10 + $0x50] sm:$0xff]
        %v4619 = vld [vmem:[#allocation10 + $0x58] sm:$0xff]
        %v4620 = vld [vmem:[#allocation10 + $0x60] sm:$0xff]
        %v4621 = vld [vmem:[#allocation10 + $0x68] sm:$0xff]
        %v4622 = vld [vmem:[#allocation10 + $0x70] sm:$0xff]
        %v4623 = vld [vmem:[#allocation10 + $0x78] sm:$0xff]
        %v4624 = vld [vmem:[#allocation10 + $0x80] sm:$0xff]
        %v4625 = vld [vmem:[#allocation10 + $0x88] sm:$0xff]
        %v4626 = vld [vmem:[#allocation10 + $0x90] sm:$0xff]
        %v4627 = vld [vmem:[#allocation10 + $0x98] sm:$0xff]
        %v4628 = vld [vmem:[#allocation10 + $0xa0] sm:$0xff]
        %v4629 = vld [vmem:[#allocation10 + $0xa8] sm:$0xff]
        %v4630 = vld [vmem:[#allocation10 + $0xb0] sm:$0xff]
        %v4631 = vld [vmem:[#allocation10 + $0xb8] sm:$0xff]
        %v4632 = vld [vmem:[#allocation10 + $0xc0] sm:$0xff]
        %v4633 = vld [vmem:[#allocation10 + $0xc8] sm:$0xff]
        %v4634 = vld [vmem:[#allocation10 + $0xd0] sm:$0xff]
        %v4635 = vld [vmem:[#allocation10 + $0xd8] sm:$0xff]
        %v4636 = vld [vmem:[#allocation10 + $0xe0] sm:$0xff]
        %v4637 = vld [vmem:[#allocation10 + $0xe8] sm:$0xff]
        %v4638 = vld [vmem:[#allocation10 + $0xf0] sm:$0xff]
        %v4639 = vld [vmem:[#allocation10 + $0xf8] sm:$0xff]
        %v4640 = vld [vmem:[#allocation10 + $0x100] sm:$0xff]
        %v4641 = vld [vmem:[#allocation10 + $0x108] sm:$0xff]
        %v4642 = vld [vmem:[#allocation10 + $0x110] sm:$0xff]
        %v4643 = vld [vmem:[#allocation10 + $0x118] sm:$0xff]
        %v4644 = vld [vmem:[#allocation10 + $0x120] sm:$0xff]
        %v4645 = vld [vmem:[#allocation10 + $0x128] sm:$0xff]
        %v4646 = vld [vmem:[#allocation10 + $0x130] sm:$0xff]
        %v4647 = vld [vmem:[#allocation10 + $0x138] sm:$0xff]
        %v4648 = vld [vmem:[#allocation10 + $0x140] sm:$0xff]
        %v4649 = vld [vmem:[#allocation10 + $0x148] sm:$0xff]
        %v4650 = vld [vmem:[#allocation10 + $0x150] sm:$0xff]
        %v4651 = vld [vmem:[#allocation10 + $0x158] sm:$0xff]
        %v4652 = vld [vmem:[#allocation10 + $0x160] sm:$0xff]
        %v4653 = vld [vmem:[#allocation10 + $0x168] sm:$0xff]
        %v4654 = vld [vmem:[#allocation10 + $0x170] sm:$0xff]
        %v4655 = vld [vmem:[#allocation10 + $0x178] sm:$0xff]
        %v4656 = vld [vmem:[#allocation10 + $0x180] sm:$0xff]
        %v4657 = vld [vmem:[#allocation10 + $0x188] sm:$0xff]
        %v4658 = vld [vmem:[#allocation10 + $0x190] sm:$0xff]
        %v4659 = vld [vmem:[#allocation10 + $0x198] sm:$0xff]
        %v4660 = vld [vmem:[#allocation10 + $0x1a0] sm:$0xff]
        %v4661 = vld [vmem:[#allocation10 + $0x1a8] sm:$0xff]
        %v4662 = vld [vmem:[#allocation10 + $0x1b0] sm:$0xff]
        %v4663 = vld [vmem:[#allocation10 + $0x1b8] sm:$0xff]
        %v4664 = vld [vmem:[#allocation10 + $0x1c0] sm:$0xff]
        %v4665 = vld [vmem:[#allocation10 + $0x1c8] sm:$0xff]
        %v4666 = vld [vmem:[#allocation10 + $0x1d0] sm:$0xff]
        %v4667 = vld [vmem:[#allocation10 + $0x1d8] sm:$0xff]
        %v4668 = vld [vmem:[#allocation10 + $0x1e0] sm:$0xff]
        %v4669 = vld [vmem:[#allocation10 + $0x1e8] sm:$0xff]
        %v4670 = vld [vmem:[#allocation10 + $0x1f0] sm:$0xff]
        %v4671 = vld [vmem:[#allocation10 + $0x1f8] sm:$0xff]
        %v4672 = vld [vmem:[%s6] sm:$0x3]
        %v4674 = vlaneseq
        %v4675 = vshrl.u32 %v4674, 7
        %v4676 = vsub.s32 0, %v4675
        %v4677 = vrot.slane %v4672, %v4676
        %v4678 = vlaneseq
        %v4679 = vshrl.u32 %v4678, 7
        %v4680 = vsub.s32 1, %v4679
        %v4681 = vrot.slane %v4672, %v4680
        %v4748 = vunpack.c.l.b16 %v4608
        %v4749 = vunpack.c.h.b16 %v4608
        %v4750 = vunpack.c.l.b16 %v4609
        %v4751 = vunpack.c.h.b16 %v4609
        %v4752 = vunpack.c.l.b16 %v4610
        %v4753 = vunpack.c.h.b16 %v4610
        %v4754 = vunpack.c.l.b16 %v4611
        %v4755 = vunpack.c.h.b16 %v4611
        %v4756 = vunpack.c.l.b16 %v4612
        %v4757 = vunpack.c.h.b16 %v4612
        %v4758 = vunpack.c.l.b16 %v4613
        %v4759 = vunpack.c.h.b16 %v4613
        %v4760 = vunpack.c.l.b16 %v4614
        %v4761 = vunpack.c.h.b16 %v4614
        %v4762 = vunpack.c.l.b16 %v4615
        %v4763 = vunpack.c.h.b16 %v4615
        %v4764 = vunpack.c.l.b16 %v4616
        %v4765 = vunpack.c.h.b16 %v4616
        %v4766 = vunpack.c.l.b16 %v4617
        %v4767 = vunpack.c.h.b16 %v4617
        %v4768 = vunpack.c.l.b16 %v4618
        %v4769 = vunpack.c.h.b16 %v4618
        %v4770 = vunpack.c.l.b16 %v4619
        %v4771 = vunpack.c.h.b16 %v4619
        %v4772 = vunpack.c.l.b16 %v4620
        %v4773 = vunpack.c.h.b16 %v4620
        %v4774 = vunpack.c.l.b16 %v4621
        %v4775 = vunpack.c.h.b16 %v4621
        %v4776 = vunpack.c.l.b16 %v4622
        %v4777 = vunpack.c.h.b16 %v4622
        %v4778 = vunpack.c.l.b16 %v4623
        %v4779 = vunpack.c.h.b16 %v4623
        %v4780 = vunpack.c.l.b16 %v4624
        %v4781 = vunpack.c.h.b16 %v4624
        %v4782 = vunpack.c.l.b16 %v4625
        %v4783 = vunpack.c.h.b16 %v4625
        %v4784 = vunpack.c.l.b16 %v4626
        %v4785 = vunpack.c.h.b16 %v4626
        %v4786 = vunpack.c.l.b16 %v4627
        %v4787 = vunpack.c.h.b16 %v4627
        %v4788 = vunpack.c.l.b16 %v4628
        %v4789 = vunpack.c.h.b16 %v4628
        %v4790 = vunpack.c.l.b16 %v4629
        %v4791 = vunpack.c.h.b16 %v4629
        %v4792 = vunpack.c.l.b16 %v4630
        %v4793 = vunpack.c.h.b16 %v4630
        %v4794 = vunpack.c.l.b16 %v4631
        %v4795 = vunpack.c.h.b16 %v4631
        %v4796 = vunpack.c.l.b16 %v4632
        %v4797 = vunpack.c.h.b16 %v4632
        %v4798 = vunpack.c.l.b16 %v4633
        %v4799 = vunpack.c.h.b16 %v4633
        %v4800 = vunpack.c.l.b16 %v4634
        %v4801 = vunpack.c.h.b16 %v4634
        %v4802 = vunpack.c.l.b16 %v4635
        %v4803 = vunpack.c.h.b16 %v4635
        %v4804 = vunpack.c.l.b16 %v4636
        %v4805 = vunpack.c.h.b16 %v4636
        %v4806 = vunpack.c.l.b16 %v4637
        %v4807 = vunpack.c.h.b16 %v4637
        %v4808 = vunpack.c.l.b16 %v4638
        %v4809 = vunpack.c.h.b16 %v4638
        %v4810 = vunpack.c.l.b16 %v4639
        %v4811 = vunpack.c.h.b16 %v4639
        %v4812 = vunpack.c.l.b16 %v4640
        %v4813 = vunpack.c.h.b16 %v4640
        %v4814 = vunpack.c.l.b16 %v4641
        %v4815 = vunpack.c.h.b16 %v4641
        %v4816 = vunpack.c.l.b16 %v4642
        %v4817 = vunpack.c.h.b16 %v4642
        %v4818 = vunpack.c.l.b16 %v4643
        %v4819 = vunpack.c.h.b16 %v4643
        %v4820 = vunpack.c.l.b16 %v4644
        %v4821 = vunpack.c.h.b16 %v4644
        %v4822 = vunpack.c.l.b16 %v4645
        %v4823 = vunpack.c.h.b16 %v4645
        %v4824 = vunpack.c.l.b16 %v4646
        %v4825 = vunpack.c.h.b16 %v4646
        %v4826 = vunpack.c.l.b16 %v4647
        %v4827 = vunpack.c.h.b16 %v4647
        %v4828 = vunpack.c.l.b16 %v4648
        %v4829 = vunpack.c.h.b16 %v4648
        %v4830 = vunpack.c.l.b16 %v4649
        %v4831 = vunpack.c.h.b16 %v4649
        %v4832 = vunpack.c.l.b16 %v4650
        %v4833 = vunpack.c.h.b16 %v4650
        %v4834 = vunpack.c.l.b16 %v4651
        %v4835 = vunpack.c.h.b16 %v4651
        %v4836 = vunpack.c.l.b16 %v4652
        %v4837 = vunpack.c.h.b16 %v4652
        %v4838 = vunpack.c.l.b16 %v4653
        %v4839 = vunpack.c.h.b16 %v4653
        %v4840 = vunpack.c.l.b16 %v4654
        %v4841 = vunpack.c.h.b16 %v4654
        %v4842 = vunpack.c.l.b16 %v4655
        %v4843 = vunpack.c.h.b16 %v4655
        %v4844 = vunpack.c.l.b16 %v4656
        %v4845 = vunpack.c.h.b16 %v4656
        %v4846 = vunpack.c.l.b16 %v4657
        %v4847 = vunpack.c.h.b16 %v4657
        %v4848 = vunpack.c.l.b16 %v4658
        %v4849 = vunpack.c.h.b16 %v4658
        %v4850 = vunpack.c.l.b16 %v4659
        %v4851 = vunpack.c.h.b16 %v4659
        %v4852 = vunpack.c.l.b16 %v4660
        %v4853 = vunpack.c.h.b16 %v4660
        %v4854 = vunpack.c.l.b16 %v4661
        %v4855 = vunpack.c.h.b16 %v4661
        %v4856 = vunpack.c.l.b16 %v4662
        %v4857 = vunpack.c.h.b16 %v4662
        %v4858 = vunpack.c.l.b16 %v4663
        %v4859 = vunpack.c.h.b16 %v4663
        %v4860 = vunpack.c.l.b16 %v4664
        %v4861 = vunpack.c.h.b16 %v4664
        %v4862 = vunpack.c.l.b16 %v4665
        %v4863 = vunpack.c.h.b16 %v4665
        %v4864 = vunpack.c.l.b16 %v4666
        %v4865 = vunpack.c.h.b16 %v4666
        %v4866 = vunpack.c.l.b16 %v4667
        %v4867 = vunpack.c.h.b16 %v4667
        %v4868 = vunpack.c.l.b16 %v4668
        %v4869 = vunpack.c.h.b16 %v4668
        %v4870 = vunpack.c.l.b16 %v4669
        %v4871 = vunpack.c.h.b16 %v4669
        %v4872 = vunpack.c.l.b16 %v4670
        %v4873 = vunpack.c.h.b16 %v4670
        %v4874 = vunpack.c.l.b16 %v4671
        %v4875 = vunpack.c.h.b16 %v4671
        %v4876 = vpack.c.b16 %v4750, %v4748
        %v4877 = vpack.c.b16 %v4751, %v4749
        %v4878 = vpack.c.b16 %v4754, %v4752
        %v4879 = vpack.c.b16 %v4755, %v4753
        %v4880 = vpack.c.b16 %v4758, %v4756
        %v4881 = vpack.c.b16 %v4759, %v4757
        %v4882 = vpack.c.b16 %v4762, %v4760
        %v4883 = vpack.c.b16 %v4763, %v4761
        %v4884 = vpack.c.b16 %v4766, %v4764
        %v4885 = vpack.c.b16 %v4767, %v4765
        %v4886 = vpack.c.b16 %v4770, %v4768
        %v4887 = vpack.c.b16 %v4771, %v4769
        %v4888 = vpack.c.b16 %v4774, %v4772
        %v4889 = vpack.c.b16 %v4775, %v4773
        %v4890 = vpack.c.b16 %v4778, %v4776
        %v4891 = vpack.c.b16 %v4779, %v4777
        %v4892 = vpack.c.b16 %v4782, %v4780
        %v4893 = vpack.c.b16 %v4783, %v4781
        %v4894 = vpack.c.b16 %v4786, %v4784
        %v4895 = vpack.c.b16 %v4787, %v4785
        %v4896 = vpack.c.b16 %v4790, %v4788
        %v4897 = vpack.c.b16 %v4791, %v4789
        %v4898 = vpack.c.b16 %v4794, %v4792
        %v4899 = vpack.c.b16 %v4795, %v4793
        %v4900 = vpack.c.b16 %v4798, %v4796
        %v4901 = vpack.c.b16 %v4799, %v4797
        %v4902 = vpack.c.b16 %v4802, %v4800
        %v4903 = vpack.c.b16 %v4803, %v4801
        %v4904 = vpack.c.b16 %v4806, %v4804
        %v4905 = vpack.c.b16 %v4807, %v4805
        %v4906 = vpack.c.b16 %v4810, %v4808
        %v4907 = vpack.c.b16 %v4811, %v4809
        %v4908 = vpack.c.b16 %v4814, %v4812
        %v4909 = vpack.c.b16 %v4815, %v4813
        %v4910 = vpack.c.b16 %v4818, %v4816
        %v4911 = vpack.c.b16 %v4819, %v4817
        %v4912 = vpack.c.b16 %v4822, %v4820
        %v4913 = vpack.c.b16 %v4823, %v4821
        %v4914 = vpack.c.b16 %v4826, %v4824
        %v4915 = vpack.c.b16 %v4827, %v4825
        %v4916 = vpack.c.b16 %v4830, %v4828
        %v4917 = vpack.c.b16 %v4831, %v4829
        %v4918 = vpack.c.b16 %v4834, %v4832
        %v4919 = vpack.c.b16 %v4835, %v4833
        %v4920 = vpack.c.b16 %v4838, %v4836
        %v4921 = vpack.c.b16 %v4839, %v4837
        %v4922 = vpack.c.b16 %v4842, %v4840
        %v4923 = vpack.c.b16 %v4843, %v4841
        %v4924 = vpack.c.b16 %v4846, %v4844
        %v4925 = vpack.c.b16 %v4847, %v4845
        %v4926 = vpack.c.b16 %v4850, %v4848
        %v4927 = vpack.c.b16 %v4851, %v4849
        %v4928 = vpack.c.b16 %v4854, %v4852
        %v4929 = vpack.c.b16 %v4855, %v4853
        %v4930 = vpack.c.b16 %v4858, %v4856
        %v4931 = vpack.c.b16 %v4859, %v4857
        %v4932 = vpack.c.b16 %v4862, %v4860
        %v4933 = vpack.c.b16 %v4863, %v4861
        %v4934 = vpack.c.b16 %v4866, %v4864
        %v4935 = vpack.c.b16 %v4867, %v4865
        %v4936 = vpack.c.b16 %v4870, %v4868
        %v4937 = vpack.c.b16 %v4871, %v4869
        %v4938 = vpack.c.b16 %v4874, %v4872
        %v4939 = vpack.c.b16 %v4875, %v4873
        %5004 = vmatprep.subr.bf16.mxu0 %v4877
        %5005 = vmatpush1.bf16.msra.mxu0 %v4876
        %5006 = vmatprep.subr.bf16.mxu0 %v4879
        %5007 = vmatpush1.bf16.msra.mxu0 %v4878
        %5008 = vmatprep.subr.bf16.mxu0 %v4881
        %5009 = vmatpush1.bf16.msra.mxu0 %v4880
        %5010 = vmatprep.subr.bf16.mxu0 %v4883
        %5011 = vmatpush1.bf16.msra.mxu0 %v4882
        %5012 = vmatprep.subr.bf16.mxu0 %v4885
        %5013 = vmatpush1.bf16.msra.mxu0 %v4884
        %5014 = vmatprep.subr.bf16.mxu0 %v4887
        %5015 = vmatpush1.bf16.msra.mxu0 %v4886
        %5016 = vmatprep.subr.bf16.mxu0 %v4889
        %5017 = vmatpush1.bf16.msra.mxu0 %v4888
        %5018 = vmatprep.subr.bf16.mxu0 %v4891
        %5019 = vmatpush1.bf16.msra.mxu0 %v4890
        %5020 = vmatprep.subr.bf16.mxu0 %v4893
        %5021 = vmatpush1.bf16.msra.mxu0 %v4892
        %5022 = vmatprep.subr.bf16.mxu0 %v4895
        %5023 = vmatpush1.bf16.msra.mxu0 %v4894
        %5024 = vmatprep.subr.bf16.mxu0 %v4897
        %5025 = vmatpush1.bf16.msra.mxu0 %v4896
        %5026 = vmatprep.subr.bf16.mxu0 %v4899
        %5027 = vmatpush1.bf16.msra.mxu0 %v4898
        %5028 = vmatprep.subr.bf16.mxu0 %v4901
        %5029 = vmatpush1.bf16.msra.mxu0 %v4900
        %5030 = vmatprep.subr.bf16.mxu0 %v4903
        %5031 = vmatpush1.bf16.msra.mxu0 %v4902
        %5032 = vmatprep.subr.bf16.mxu0 %v4905
        %5033 = vmatpush1.bf16.msra.mxu0 %v4904
        %5034 = vmatprep.subr.bf16.mxu0 %v4907
        %5035 = vmatpush1.bf16.msra.mxu0 %v4906
        %5036 = vmatprep.mubr.bf16.mxu0 %v4577
        %5037 = vmatmul.mubr.bf16.gmra.mrb[0].mxu0 %v4576
        %v5038 = vpop.f32.mrb[0].mxu0
        %v5039 = vadd.f32 %v4677, %v5038
        %v5040 = vpop.f32.mrb[0].mxu0
        %v5041 = vadd.f32 %v4681, %v5040
        %v5042 = vpop.f32.mrb[0].mxu0
        %v5043 = vadd.f32 %v4677, %v5042
        %v5044 = vpop.f32.mrb[0].mxu0
        %v5045 = vadd.f32 %v4681, %v5044
        %5046 = vmatprep.mubr.bf16.mxu0 %v4581
        %5047 = vmatmul.mubr.bf16.gmra.mrb[0].mxu0 %v4580
        %v5048 = vpop.f32.mrb[0].mxu0
        %v5049 = vadd.f32 %v4677, %v5048
        %v5050 = vpop.f32.mrb[0].mxu0
        %v5051 = vadd.f32 %v4681, %v5050
        %v5052 = vpop.f32.mrb[0].mxu0
        %v5053 = vadd.f32 %v4677, %v5052
        %v5054 = vpop.f32.mrb[0].mxu0
        %v5055 = vadd.f32 %v4681, %v5054
        %5056 = vmatprep.mubr.bf16.mxu0 %v4585
        %5057 = vmatmul.mubr.bf16.gmra.mrb[0].mxu0 %v4584
        %v5058 = vpop.f32.mrb[0].mxu0
        %v5059 = vadd.f32 %v4677, %v5058
        %v5060 = vpop.f32.mrb[0].mxu0
        %v5061 = vadd.f32 %v4681, %v5060
        %v5062 = vpop.f32.mrb[0].mxu0
        %v5063 = vadd.f32 %v4677, %v5062
        %v5064 = vpop.f32.mrb[0].mxu0
        %v5065 = vadd.f32 %v4681, %v5064
        %5066 = vmatprep.mubr.bf16.mxu0 %v4589
        %5067 = vmatmul.mubr.bf16.gmra.mrb[0].mxu0 %v4588
        %v5068 = vpop.f32.mrb[0].mxu0
        %v5069 = vadd.f32 %v4677, %v5068
        %v5070 = vpop.f32.mrb[0].mxu0
        %v5071 = vadd.f32 %v4681, %v5070
        %v5072 = vpop.f32.mrb[0].mxu0
        %v5073 = vadd.f32 %v4677, %v5072
        %v5074 = vpop.f32.mrb[0].mxu0
        %v5075 = vadd.f32 %v4681, %v5074
        %5076 = vmatprep.mubr.bf16.mxu0 %v4593
        %5077 = vmatmul.mubr.bf16.gmra.mrb[0].mxu0 %v4592
        %v5078 = vpop.f32.mrb[0].mxu0
        %v5079 = vadd.f32 %v4677, %v5078
        %v5080 = vpop.f32.mrb[0].mxu0
        %v5081 = vadd.f32 %v4681, %v5080
        %v5082 = vpop.f32.mrb[0].mxu0
        %v5083 = vadd.f32 %v4677, %v5082
        %v5084 = vpop.f32.mrb[0].mxu0
        %v5085 = vadd.f32 %v4681, %v5084
        %5086 = vmatprep.mubr.bf16.mxu0 %v4597
        %5087 = vmatmul.mubr.bf16.gmra.mrb[0].mxu0 %v4596
        %v5088 = vpop.f32.mrb[0].mxu0
        %v5089 = vadd.f32 %v4677, %v5088
        %v5090 = vpop.f32.mrb[0].mxu0
        %v5091 = vadd.f32 %v4681, %v5090
        %v5092 = vpop.f32.mrb[0].mxu0
        %v5093 = vadd.f32 %v4677, %v5092
        %v5094 = vpop.f32.mrb[0].mxu0
        %v5095 = vadd.f32 %v4681, %v5094
        %5096 = vmatprep.mubr.bf16.mxu0 %v4601
        %5097 = vmatmul.mubr.bf16.gmra.mrb[0].mxu0 %v4600
        %v5098 = vpop.f32.mrb[0].mxu0
        %v5099 = vadd.f32 %v4677, %v5098
        %v5100 = vpop.f32.mrb[0].mxu0
        %v5101 = vadd.f32 %v4681, %v5100
        %v5102 = vpop.f32.mrb[0].mxu0
        %v5103 = vadd.f32 %v4677, %v5102
        %v5104 = vpop.f32.mrb[0].mxu0
        %v5105 = vadd.f32 %v4681, %v5104
        %5106 = vmatprep.mubr.bf16.mxu0 %v4605
        %5107 = vmatmul.mubr.bf16.gmra.mrb[0].mxu0 %v4604
        %v5108 = vpop.f32.mrb[0].mxu0
        %v5109 = vadd.f32 %v4677, %v5108
        %v5110 = vpop.f32.mrb[0].mxu0
        %v5111 = vadd.f32 %v4681, %v5110
        %v5112 = vpop.f32.mrb[0].mxu0
        %v5113 = vadd.f32 %v4677, %v5112
        %v5114 = vpop.f32.mrb[0].mxu0
        %v5115 = vadd.f32 %v4681, %v5114
        %5116 = vdwg.mxu0
        %5117 = vmatprep.subr.bf16.mxu0 %v4909
        %5118 = vmatpush1.bf16.msra.mxu0 %v4908
        %5119 = vmatprep.subr.bf16.mxu0 %v4911
        %5120 = vmatpush1.bf16.msra.mxu0 %v4910
        %5121 = vmatprep.subr.bf16.mxu0 %v4913
        %5122 = vmatpush1.bf16.msra.mxu0 %v4912
        %5123 = vmatprep.subr.bf16.mxu0 %v4915
        %5124 = vmatpush1.bf16.msra.mxu0 %v4914
        %5125 = vmatprep.subr.bf16.mxu0 %v4917
        %5126 = vmatpush1.bf16.msra.mxu0 %v4916
        %5127 = vmatprep.subr.bf16.mxu0 %v4919
        %5128 = vmatpush1.bf16.msra.mxu0 %v4918
        %5129 = vmatprep.subr.bf16.mxu0 %v4921
        %5130 = vmatpush1.bf16.msra.mxu0 %v4920
        %5131 = vmatprep.subr.bf16.mxu0 %v4923
        %5132 = vmatpush1.bf16.msra.mxu0 %v4922
        %5133 = vmatprep.subr.bf16.mxu0 %v4925
        %5134 = vmatpush1.bf16.msra.mxu0 %v4924
        %5135 = vmatprep.subr.bf16.mxu0 %v4927
        %5136 = vmatpush1.bf16.msra.mxu0 %v4926
        %5137 = vmatprep.subr.bf16.mxu0 %v4929
        %5138 = vmatpush1.bf16.msra.mxu0 %v4928
        %5139 = vmatprep.subr.bf16.mxu0 %v4931
        %5140 = vmatpush1.bf16.msra.mxu0 %v4930
        %5141 = vmatprep.subr.bf16.mxu0 %v4933
        %5142 = vmatpush1.bf16.msra.mxu0 %v4932
        %5143 = vmatprep.subr.bf16.mxu0 %v4935
        %5144 = vmatpush1.bf16.msra.mxu0 %v4934
        %5145 = vmatprep.subr.bf16.mxu0 %v4937
        %5146 = vmatpush1.bf16.msra.mxu0 %v4936
        %5147 = vmatprep.subr.bf16.mxu0 %v4939
        %5148 = vmatpush1.bf16.msra.mxu0 %v4938
        %5149 = vmatprep.mubr.bf16.mxu0 %v4579
        %5150 = vmatmul.mubr.bf16.gmra.mrb[0].mxu0 %v4578
        %v5151 = vpop.f32.mrb[0].mxu0
        %v5152 = vadd.f32 %v5039, %v5151
        %v5153 = vpop.f32.mrb[0].mxu0
        %v5154 = vadd.f32 %v5041, %v5153
        %v5155 = vpop.f32.mrb[0].mxu0
        %v5156 = vadd.f32 %v5043, %v5155
        %v5157 = vpop.f32.mrb[0].mxu0
        %v5158 = vadd.f32 %v5045, %v5157
        %5159 = vmatprep.mubr.bf16.mxu0 %v4583
        %5160 = vmatmul.mubr.bf16.gmra.mrb[0].mxu0 %v4582
        %v5161 = vpop.f32.mrb[0].mxu0
        %v5162 = vadd.f32 %v5049, %v5161
        %v5163 = vpop.f32.mrb[0].mxu0
        %v5164 = vadd.f32 %v5051, %v5163
        %v5165 = vpop.f32.mrb[0].mxu0
        %v5166 = vadd.f32 %v5053, %v5165
        %v5167 = vpop.f32.mrb[0].mxu0
        %v5168 = vadd.f32 %v5055, %v5167
        %5169 = vmatprep.mubr.bf16.mxu0 %v4587
        %5170 = vmatmul.mubr.bf16.gmra.mrb[0].mxu0 %v4586
        %v5171 = vpop.f32.mrb[0].mxu0
        %v5172 = vadd.f32 %v5059, %v5171
        %v5173 = vpop.f32.mrb[0].mxu0
        %v5174 = vadd.f32 %v5061, %v5173
        %v5175 = vpop.f32.mrb[0].mxu0
        %v5176 = vadd.f32 %v5063, %v5175
        %v5177 = vpop.f32.mrb[0].mxu0
        %v5178 = vadd.f32 %v5065, %v5177
        %5179 = vmatprep.mubr.bf16.mxu0 %v4591
        %5180 = vmatmul.mubr.bf16.gmra.mrb[0].mxu0 %v4590
        %v5181 = vpop.f32.mrb[0].mxu0
        %v5182 = vadd.f32 %v5069, %v5181
        %v5183 = vpop.f32.mrb[0].mxu0
        %v5184 = vadd.f32 %v5071, %v5183
        %v5185 = vpop.f32.mrb[0].mxu0
        %v5186 = vadd.f32 %v5073, %v5185
        %v5187 = vpop.f32.mrb[0].mxu0
        %v5188 = vadd.f32 %v5075, %v5187
        %5189 = vmatprep.mubr.bf16.mxu0 %v4595
        %5190 = vmatmul.mubr.bf16.gmra.mrb[0].mxu0 %v4594
        %v5191 = vpop.f32.mrb[0].mxu0
        %v5192 = vadd.f32 %v5079, %v5191
        %v5193 = vpop.f32.mrb[0].mxu0
        %v5194 = vadd.f32 %v5081, %v5193
        %v5195 = vpop.f32.mrb[0].mxu0
        %v5196 = vadd.f32 %v5083, %v5195
        %v5197 = vpop.f32.mrb[0].mxu0
        %v5198 = vadd.f32 %v5085, %v5197
        %5199 = vmatprep.mubr.bf16.mxu0 %v4599
        %5200 = vmatmul.mubr.bf16.gmra.mrb[0].mxu0 %v4598
        %v5201 = vpop.f32.mrb[0].mxu0
        %v5202 = vadd.f32 %v5089, %v5201
        %v5203 = vpop.f32.mrb[0].mxu0
        %v5204 = vadd.f32 %v5091, %v5203
        %v5205 = vpop.f32.mrb[0].mxu0
        %v5206 = vadd.f32 %v5093, %v5205
        %v5207 = vpop.f32.mrb[0].mxu0
        %v5208 = vadd.f32 %v5095, %v5207
        %5209 = vmatprep.mubr.bf16.mxu0 %v4603
        %5210 = vmatmul.mubr.bf16.gmra.mrb[0].mxu0 %v4602
        %v5211 = vpop.f32.mrb[0].mxu0
        %v5212 = vadd.f32 %v5099, %v5211
        %v5213 = vpop.f32.mrb[0].mxu0
        %v5214 = vadd.f32 %v5101, %v5213
        %v5215 = vpop.f32.mrb[0].mxu0
        %v5216 = vadd.f32 %v5103, %v5215
        %v5217 = vpop.f32.mrb[0].mxu0
        %v5218 = vadd.f32 %v5105, %v5217
        %5219 = vmatprep.mubr.bf16.mxu0 %v4607
        %5220 = vmatmul.mubr.bf16.gmra.mrb[0].mxu0 %v4606
        %v5221 = vpop.f32.mrb[0].mxu0
        %v5222 = vadd.f32 %v5109, %v5221
        %v5223 = vpop.f32.mrb[0].mxu0
        %v5224 = vadd.f32 %v5111, %v5223
        %v5225 = vpop.f32.mrb[0].mxu0
        %v5226 = vadd.f32 %v5113, %v5225
        %v5227 = vpop.f32.mrb[0].mxu0
        %v5228 = vadd.f32 %v5115, %v5227
        %5229 = vdwg.mxu0
        %5230 = vst [vmem:[%s353] sm:$0xff] %v5152
        %5231 = vst [vmem:[%s353 + $0x8] sm:$0xff] %v5154
        %5232 = vst [vmem:[%s353 + $0x10] sm:$0xff] %v5156
        %5233 = vst [vmem:[%s353 + $0x18] sm:$0xff] %v5158
        %5234 = vst [vmem:[%s353 + $0x20] sm:$0xff] %v5162
        %5235 = vst [vmem:[%s353 + $0x28] sm:$0xff] %v5164
        %5236 = vst [vmem:[%s353 + $0x30] sm:$0xff] %v5166
        %5237 = vst [vmem:[%s353 + $0x38] sm:$0xff] %v5168
        %5238 = vst [vmem:[%s353 + $0x40] sm:$0xff] %v5172
        %5239 = vst [vmem:[%s353 + $0x48] sm:$0xff] %v5174
        %5240 = vst [vmem:[%s353 + $0x50] sm:$0xff] %v5176
        %5241 = vst [vmem:[%s353 + $0x58] sm:$0xff] %v5178
        %5242 = vst [vmem:[%s353 + $0x60] sm:$0xff] %v5182
        %5243 = vst [vmem:[%s353 + $0x68] sm:$0xff] %v5184
        %5244 = vst [vmem:[%s353 + $0x70] sm:$0xff] %v5186
        %5245 = vst [vmem:[%s353 + $0x78] sm:$0xff] %v5188
        %5246 = vst [vmem:[%s353 + $0x80] sm:$0xff] %v5192
        %5247 = vst [vmem:[%s353 + $0x88] sm:$0xff] %v5194
        %5248 = vst [vmem:[%s353 + $0x90] sm:$0xff] %v5196
        %5249 = vst [vmem:[%s353 + $0x98] sm:$0xff] %v5198
        %5250 = vst [vmem:[%s353 + $0xa0] sm:$0xff] %v5202
        %5251 = vst [vmem:[%s353 + $0xa8] sm:$0xff] %v5204
        %5252 = vst [vmem:[%s353 + $0xb0] sm:$0xff] %v5206
        %5253 = vst [vmem:[%s353 + $0xb8] sm:$0xff] %v5208
        %5254 = vst [vmem:[%s353 + $0xc0] sm:$0xff] %v5212
        %5255 = vst [vmem:[%s353 + $0xc8] sm:$0xff] %v5214
        %5256 = vst [vmem:[%s353 + $0xd0] sm:$0xff] %v5216
        %5257 = vst [vmem:[%s353 + $0xd8] sm:$0xff] %v5218
        %5258 = vst [vmem:[%s353 + $0xe0] sm:$0xff] %v5222
        %5259 = vst [vmem:[%s353 + $0xe8] sm:$0xff] %v5224
        %5260 = vst [vmem:[%s353 + $0xf0] sm:$0xff] %v5226
        %5261 = vst [vmem:[%s353 + $0xf8] sm:$0xff] %v5228
        %s5262 = sand.u32 %s186, 1
        %s5263 = scalar_lea.sflag [#allocation4], %s5262
        %s5264 = sand.u32 %s186, 1
        %s5265 = smul.addr %s5264, 256
        %s5266 = scalar_lea.vmem [#allocation11], %s5265
        // Predicated region
        $region69: #{fn.1} parent=47 // pred_check
          %p5267 = pneg %p196
        $region70: #{fn.1} parent=47 // pred_check_branch
          %5269 = sbr.rel (%p5267) target = $region72
        $region71: #{fn.1} parent=47 // pred_region
          %s5270 = smul.u32 16, %s26
          %s5272 = ssub.s32 4096, 4096
          %5273 = vsyncadd %s5263, %s5272
          %s5274 = smul.addr %s5270, 2
          %s5275 = smul.addr %s5274, 128
          %s5276 = scalar_lea.hbm %s7, %s5275
          %s5277 = sshll.u32 %s5266, 4
          %s5278 = int_to_ptr.vmem [resolvable:$true] %s5277
          %5283 = dma.vmem_to_hbm [thread:$0]  %s5278, 4096, %s5276, %s5263, 256, 256, 16
        $region72: #{fn.1} parent=47 // pred_fallthru
          _
      $region48: #{fn.1} parent=5 // pred_fallthru
        _
      %p5284 = scmp.le.s32.totalorder 2, %s21
      // Predicated region
      $region73: #{fn.1} parent=5 // pred_check
        %p5285 = pneg %p5284
      $region74: #{fn.1} parent=5 // pred_check_branch
        %5287 = sbr.rel (%p5285) target = $region76
      $region75: #{fn.1} parent=5 // pred_region
        %s5288 = ssub.s32 %s21, 2
        // Predicated region
        $region77: #{fn.1} parent=75 // pred_check
          %p5289 = pneg %p202
        $region78: #{fn.1} parent=75 // pred_check_branch
          %5291 = sbr.rel (%p5289) target = $region80
        $region79: #{fn.1} parent=75 // pred_region
          %s5292 = sand.u32 %s187, 1
          %s5293 = scalar_lea.sflag [#allocation4], %s5292
          %s5294 = sand.u32 %s187, 1
          %s5295 = smul.addr %s5294, 256
          %s5296 = scalar_lea.vmem [#allocation11], %s5295
          %5297 = dma.done %s5293, 4096
        $region80: #{fn.1} parent=75 // pred_fallthru
          _
      $region76: #{fn.1} parent=5 // pred_fallthru
        _
    $region6: #{fn.1} parent=1 // loop_footer
      %s25 = sadd.s32 1, %s21
    $region7: #{fn.1} parent=1 // loop_footer_branch
      %20 = sbr.rel target = $region3
    $region8: #{fn.1} parent=1 // loop_exit
      _
    %5298 = vsyncpa [#allocation3], 1
    %s5299 = scalar_lea.sflag [#allocation3], 1
    %5300 = vsyncpa %s5299, 1
    %5301 = vsyncpa [#allocation6], 1
    %5302 = vsyncpa [#allocation9], 1
    %5303 = vsyncpa [#allocation4], 1
    %s5304 = scalar_lea.sflag [#allocation4], 1
    %5305 = vsyncpa %s5304, 1

// kernel: fn.1
$region0: #{fn.1}
  #allocation0 [shape = 'u32[]', space=smem, size = 0x4, offset = 0x4, fixed_abs, tag = 'smem constant byte address 0x4 - core index']
  #allocation1 [shape = 'u32[144,128]{1,0:T(1,128)}', space=vmem, size = 0x12000, scoped, tag = 'internal scratch']
  %s0 = inlined_call_operand.hbm [shape: f32[256,256], index: 0, kind: input, shape index: {}]
  %s1 = inlined_call_operand.hbm [shape: bf16[256,1024], index: 1, kind: input, shape index: {}]
  %s2 = inlined_call_operand.hbm [shape: f32[1,1024], index: 2, kind: input, shape index: {}]
  %s3 = inlined_call_operand.hbm [shape: bf16[1024,512], index: 3, kind: input, shape index: {}]
  %s4 = inlined_call_operand.vmem [shape: f32[1,512], index: 4, kind: input, shape index: {}]
  %s5 = inlined_call_operand.hbm [shape: bf16[512,256], index: 5, kind: input, shape index: {}]
  %s6 = inlined_call_operand.vmem [shape: f32[1,256], index: 6, kind: input, shape index: {}]
  %s7 = inlined_call_operand.hbm [shape: f32[256,256], index: 7, kind: output, shape index: {}]
  %s8 = sld [smem:[#allocation0]]
  $region81: #{fn.1} parent=0
    _
  %s10 = ssub.s32 1, %s8
  %s11 = scalar_select 0, %s10, %s8
  $region1: #{fn.1} parent=0
    #allocation2 [shape = 'u8[262144]{0}', space=vmem, size = 0x40000, scoped, tag = 'input window, operand 0']
    #allocation3 [shape = 's32[2]{0}', space=sflag, size = 0x8, scoped, tag = 'scoped memory for fn.1']
    #allocation4 [shape = 's32[2]{0}', space=sflag, size = 0x8, scoped, tag = 'scoped memory for fn.1']
    #allocation5 [shape = 'u8[524288]{0}', space=vmem, size = 0x80000, scoped, tag = 'input window, operand 1, single buffered']
    #allocation6 [shape = 's32[1]{0}', space=sflag, size = 0x4, scoped, tag = 'scoped memory for fn.1']
    #allocation7 [shape = 'u8[4096]{0}', space=vmem, size = 0x1000, scoped, tag = 'input window, operand 2, single buffered']
    #allocation8 [shape = 'u8[1048576]{0}', space=vmem, size = 0x100000, scoped, tag = 'input window, operand 3, single buffered']
    #allocation9 [shape = 's32[1]{0}', space=sflag, size = 0x4, scoped, tag = 'scoped memory for fn.1']
    #allocation10 [shape = 'u8[262144]{0}', space=vmem, size = 0x40000, scoped, tag = 'input window, operand 5, single buffered']
    #allocation11 [shape = 'u8[262144]{0}', space=vmem, size = 0x40000, scoped, tag = 'output window, operand 0']
    %12 = vsyncpa [#allocation3], 0
    %s13 = scalar_lea.sflag [#allocation3], 1
    %14 = vsyncpa %s13, 0
    %15 = vsyncpa [#allocation6], 0
    %16 = vsyncpa [#allocation9], 0
    %17 = vsyncpa [#allocation4], 0
    %s18 = scalar_lea.sflag [#allocation4], 1
    %19 = vsyncpa %s18, 0
    loop: start=0, step=1, limit=4
    $region2: #{fn.1} parent=1 // loop_pre_header
      _
    $region3: #{fn.1} parent=1 // loop_header
      %s21 = sphi 0, %s25
      %p22 = scmp.ge.s32.totalorder %s21, 4
      %s31 = sphi 0, %s33
      %s34 = sphi 0, %s31
      %s35 = sphi 0, %s34
      %s51 = sphi 0, %s35
      %s55 = sphi 0, %s55
      %s57 = sphi 0, %s55
      %s58 = sphi 0, %s57
      %s72 = sphi 0, %s58
      %s76 = sphi 0, %s76
      %s78 = sphi 0, %s76
      %s79 = sphi 0, %s78
      %s93 = sphi 0, %s79
      %s97 = sphi 0, %s97
      %s99 = sphi 0, %s97
      %s100 = sphi 0, %s99
      %s114 = sphi 0, %s100
      %s118 = sphi 0, %s118
      %s120 = sphi 0, %s118
      %s121 = sphi 0, %s120
      %s135 = sphi 0, %s121
      %s139 = sphi 0, %s139
      %s141 = sphi 0, %s139
      %s142 = sphi 0, %s141
      %s156 = sphi 0, %s142
      %s160 = sphi 0, %s160
      %s162 = sphi 0, %s160
      %s163 = sphi 0, %s162
      %s177 = sphi 0, %s163
      %s183 = sphi 0, %s185
      %s186 = sphi 0, %s183
      %s187 = sphi 0, %s186
      %s203 = sphi 0, %s187
    $region4: #{fn.1} parent=1 // loop_header_branch
      %24 = sbr.rel (%p22) target = $region8
    $region5: #{fn.1} parent=1 // loop_body
      %s26 = ssub.s32 %s21, 1
      %s27 = ssub.s32 %s21, 2
      %s28 = sadd.s32 %s21, 1
      %s29 = ssub.s32 %s21, %s28
      %p30 = scmp.eq.s32.totalorder %s29, 0
      %s32 = sadd.s32 %s31, 1
      %s33 = scalar_select %p30, %s31, %s32
      %p36 = pneg %p30
      %p37 = scmp.eq.s32.totalorder %s21, 1
      %p38 = por %p36, %p37
      %p39 = scmp.ne.s32.totalorder %s31, %s34
      %p40 = scmp.eq.s32.totalorder %s21, 0
      %p41 = por %p39, %p40
      %p42 = scmp.ne.s32.totalorder %s31, %s34
      %p43 = scmp.eq.s32.totalorder %s26, 1
      %p44 = por %p42, %p43
      %p45 = scmp.ne.s32.totalorder %s34, %s35
      %p46 = scmp.eq.s32.totalorder %s26, 0
      %p47 = por %p45, %p46
      %p48 = scmp.ne.s32.totalorder %s34, %s35
      %p49 = scmp.eq.s32.totalorder %s27, 1
      %p50 = por %p48, %p49
      %p52 = scmp.ne.s32.totalorder %s35, %s51
      %p53 = scmp.eq.s32.totalorder %s27, 0
      %p54 = por %p52, %p53
      %s56 = sadd.s32 %s55, 1
      %p59 = scmp.eq.s32.totalorder %s21, 1
      %p60 = scmp.ne.s32.totalorder %s55, %s57
      %p61 = scmp.eq.s32.totalorder %s21, 0
      %p62 = por %p60, %p61
      %p63 = scmp.ne.s32.totalorder %s55, %s57
      %p64 = scmp.eq.s32.totalorder %s26, 1
      %p65 = por %p63, %p64
      %p66 = scmp.ne.s32.totalorder %s57, %s58
      %p67 = scmp.eq.s32.totalorder %s26, 0
      %p68 = por %p66, %p67
      %p69 = scmp.ne.s32.totalorder %s57, %s58
      %p70 = scmp.eq.s32.totalorder %s27, 1
      %p71 = por %p69, %p70
      %p73 = scmp.ne.s32.totalorder %s58, %s72
      %p74 = scmp.eq.s32.totalorder %s27, 0
      %p75 = por %p73, %p74
      %s77 = sadd.s32 %s76, 1
      %p80 = scmp.eq.s32.totalorder %s21, 1
      %p81 = scmp.ne.s32.totalorder %s76, %s78
      %p82 = scmp.eq.s32.totalorder %s21, 0
      %p83 = por %p81, %p82
      %p84 = scmp.ne.s32.totalorder %s76, %s78
      %p85 = scmp.eq.s32.totalorder %s26, 1
      %p86 = por %p84, %p85
      %p87 = scmp.ne.s32.totalorder %s78, %s79
      %p88 = scmp.eq.s32.totalorder %s26, 0
      %p89 = por %p87, %p88
      %p90 = scmp.ne.s32.totalorder %s78, %s79
      %p91 = scmp.eq.s32.totalorder %s27, 1
      %p92 = por %p90, %p91
      %p94 = scmp.ne.s32.totalorder %s79, %s93
      %p95 = scmp.eq.s32.totalorder %s27, 0
      %p96 = por %p94, %p95
      %s98 = sadd.s32 %s97, 1
      %p101 = scmp.eq.s32.totalorder %s21, 1
      %p102 = scmp.ne.s32.totalorder %s97, %s99
      %p103 = scmp.eq.s32.totalorder %s21, 0
      %p104 = por %p102, %p103
      %p105 = scmp.ne.s32.totalorder %s97, %s99
      %p106 = scmp.eq.s32.totalorder %s26, 1
      %p107 = por %p105, %p106
      %p108 = scmp.ne.s32.totalorder %s99, %s100
      %p109 = scmp.eq.s32.totalorder %s26, 0
      %p110 = por %p108, %p109
      %p111 = scmp.ne.s32.totalorder %s99, %s100
      %p112 = scmp.eq.s32.totalorder %s27, 1
      %p113 = por %p111, %p112
      %p115 = scmp.ne.s32.totalorder %s100, %s114
      %p116 = scmp.eq.s32.totalorder %s27, 0
      %p117 = por %p115, %p116
      %s119 = sadd.s32 %s118, 1
      %p122 = scmp.eq.s32.totalorder %s21, 1
      %p123 = scmp.ne.s32.totalorder %s118, %s120
      %p124 = scmp.eq.s32.totalorder %s21, 0
      %p125 = por %p123, %p124
      %p126 = scmp.ne.s32.totalorder %s118, %s120
      %p127 = scmp.eq.s32.totalorder %s26, 1
      %p128 = por %p126, %p127
      %p129 = scmp.ne.s32.totalorder %s120, %s121
      %p130 = scmp.eq.s32.totalorder %s26, 0
      %p131 = por %p129, %p130
      %p132 = scmp.ne.s32.totalorder %s120, %s121
      %p133 = scmp.eq.s32.totalorder %s27, 1
      %p134 = por %p132, %p133
      %p136 = scmp.ne.s32.totalorder %s121, %s135
      %p137 = scmp.eq.s32.totalorder %s27, 0
      %p138 = por %p136, %p137
      %s140 = sadd.s32 %s139, 1
      %p143 = scmp.eq.s32.totalorder %s21, 1
      %p144 = scmp.ne.s32.totalorder %s139, %s141
      %p145 = scmp.eq.s32.totalorder %s21, 0
      %p146 = por %p144, %p145
      %p147 = scmp.ne.s32.totalorder %s139, %s141
      %p148 = scmp.eq.s32.totalorder %s26, 1
      %p149 = por %p147, %p148
      %p150 = scmp.ne.s32.totalorder %s141, %s142
      %p151 = scmp.eq.s32.totalorder %s26, 0
      %p152 = por %p150, %p151
      %p153 = scmp.ne.s32.totalorder %s141, %s142
      %p154 = scmp.eq.s32.totalorder %s27, 1
      %p155 = por %p153, %p154
      %p157 = scmp.ne.s32.totalorder %s142, %s156
      %p158 = scmp.eq.s32.totalorder %s27, 0
      %p159 = por %p157, %p158
      %s161 = sadd.s32 %s160, 1
      %p164 = scmp.eq.s32.totalorder %s21, 1
      %p165 = scmp.ne.s32.totalorder %s160, %s162
      %p166 = scmp.eq.s32.totalorder %s21, 0
      %p167 = por %p165, %p166
      %p168 = scmp.ne.s32.totalorder %s160, %s162
      %p169 = scmp.eq.s32.totalorder %s26, 1
      %p170 = por %p168, %p169
      %p171 = scmp.ne.s32.totalorder %s162, %s163
      %p172 = scmp.eq.s32.totalorder %s26, 0
      %p173 = por %p171, %p172
      %p174 = scmp.ne.s32.totalorder %s162, %s163
      %p175 = scmp.eq.s32.totalorder %s27, 1
      %p176 = por %p174, %p175
      %p178 = scmp.ne.s32.totalorder %s163, %s177
      %p179 = scmp.eq.s32.totalorder %s27, 0
      %p180 = por %p178, %p179
      %s181 = ssub.s32 %s21, %s28
      %p182 = scmp.eq.s32.totalorder %s181, 0
      %s184 = sadd.s32 %s183, 1
      %s185 = scalar_select %p182, %s183, %s184
      %p188 = pneg %p182
      %p189 = scmp.eq.s32.totalorder %s21, 1
      %p190 = por %p188, %p189
      %p191 = scmp.ne.s32.totalorder %s183, %s186
      %p192 = scmp.eq.s32.totalorder %s21, 0
      %p193 = por %p191, %p192
      %p194 = scmp.ne.s32.totalorder %s183, %s186
      %p195 = scmp.eq.s32.totalorder %s26, 1
      %p196 = por %p194, %p195
      %p197 = scmp.ne.s32.totalorder %s186, %s187
      %p198 = scmp.eq.s32.totalorder %s26, 0
      %p199 = por %p197, %p198
      %p200 = scmp.ne.s32.totalorder %s186, %s187
      %p201 = scmp.eq.s32.totalorder %s27, 1
      %p202 = por %p200, %p201
      %p204 = scmp.ne.s32.totalorder %s187, %s203
      %p205 = scmp.eq.s32.totalorder %s27, 0
      %p206 = por %p204, %p205
      %p207 = scmp.le.s32.totalorder 1, %s21
      %p208 = scmp.lt.s32.totalorder %s21, 3
      %p209 = pnand %p207, %p208
      %p210 = pneg %p209
      // Predicated region
      $region9: #{fn.1} parent=5 // pred_check
        _
      $region10: #{fn.1} parent=5 // pred_check_branch
        %212 = sbr.rel (%p209) target = $region12
      $region11: #{fn.1} parent=5 // pred_region
        %s213 = ssub.s32 %s21, 1
        // Predicated region
        $region13: #{fn.1} parent=11 // pred_check
          %p214 = pneg %p68
        $region14: #{fn.1} parent=11 // pred_check_branch
          %216 = sbr.rel (%p214) target = $region16
        $region15: #{fn.1} parent=11 // pred_region
          %s218 = ssub.s32 16384, 16384
          %219 = vsyncadd [#allocation6], %s218
          %s220 = sshll.u32 [#allocation5], 4
          %s221 = int_to_ptr.vmem [resolvable:$true] %s220
          %226 = dma.hbm_to_vmem [thread:$0]  %s1, 16384, %s221, [#allocation6], 512, 512, 32
        $region16: #{fn.1} parent=11 // pred_fallthru
          _
        // Predicated region
        $region17: #{fn.1} parent=11 // pred_check
          %p227 = pneg %p89
        $region18: #{fn.1} parent=11 // pred_check_branch
          %229 = sbr.rel (%p227) target = $region20
        $region19: #{fn.1} parent=11 // pred_region
          %s231 = ssub.s32 128, 128
          %232 = vsyncadd [#allocation6], %s231
          %s234 = sshll.u32 [#allocation7], 4
          %s235 = int_to_ptr.vmem [resolvable:$true] %s234
          %237 = dma.hbm_to_vmem [thread:$0]  %s2, 128, %s235, [#allocation6]
        $region20: #{fn.1} parent=11 // pred_fallthru
          _
        // Predicated region
        $region21: #{fn.1} parent=11 // pred_check
          %p238 = pneg %p110
        $region22: #{fn.1} parent=11 // pred_check_branch
          %240 = sbr.rel (%p238) target = $region24
        $region23: #{fn.1} parent=11 // pred_region
          %s242 = ssub.s32 32768, 32768
          %243 = vsyncadd [#allocation9], %s242
          %s244 = sshll.u32 [#allocation8], 4
          %s245 = int_to_ptr.vmem [resolvable:$true] %s244
          %250 = dma.hbm_to_vmem [thread:$0]  %s3, 32768, %s245, [#allocation9], 256, 256, 16
        $region24: #{fn.1} parent=11 // pred_fallthru
          _
        // Predicated region
        $region25: #{fn.1} parent=11 // pred_check
          %p251 = pneg %p131
        $region26: #{fn.1} parent=11 // pred_check_branch
          %253 = sbr.rel (%p251) target = $region28
        $region27: #{fn.1} parent=11 // pred_region
          _
        $region28: #{fn.1} parent=11 // pred_fallthru
          _
        // Predicated region
        $region29: #{fn.1} parent=11 // pred_check
          %p254 = pneg %p152
        $region30: #{fn.1} parent=11 // pred_check_branch
          %256 = sbr.rel (%p254) target = $region32
        $region31: #{fn.1} parent=11 // pred_region
          %s258 = ssub.s32 8192, 8192
          %259 = vsyncadd [#allocation9], %s258
          %s260 = sshll.u32 [#allocation10], 4
          %s261 = int_to_ptr.vmem [resolvable:$true] %s260
          %266 = dma.hbm_to_vmem [thread:$0]  %s5, 8192, %s261, [#allocation9], 128, 128, 8
        $region32: #{fn.1} parent=11 // pred_fallthru
          _
        // Predicated region
        $region33: #{fn.1} parent=11 // pred_check
          %p267 = pneg %p173
        $region34: #{fn.1} parent=11 // pred_check_branch
          %269 = sbr.rel (%p267) target = $region36
        $region35: #{fn.1} parent=11 // pred_region
          _
        $region36: #{fn.1} parent=11 // pred_fallthru
          _
      $region12: #{fn.1} parent=5 // pred_fallthru
        _
      %p270 = scmp.lt.s32.totalorder %s21, 2
      // Predicated region
      $region37: #{fn.1} parent=5 // pred_check
        %p271 = pneg %p270
      $region38: #{fn.1} parent=5 // pred_check_branch
        %273 = sbr.rel (%p271) target = $region40
      $region39: #{fn.1} parent=5 // pred_region
        // Predicated region
        $region41: #{fn.1} parent=39 // pred_check
          %p274 = pneg %p41
        $region42: #{fn.1} parent=39 // pred_check_branch
          %276 = sbr.rel (%p274) target = $region44
        $region43: #{fn.1} parent=39 // pred_region
          %s277 = sand.u32 %s31, 1
          %s278 = scalar_lea.sflag [#allocation3], %s277
          %s279 = sand.u32 %s31, 1
          %s280 = smul.addr %s279, 256
          %s281 = scalar_lea.vmem [#allocation2], %s280
          %s282 = smul.u32 16, %s21
          %s284 = ssub.s32 4096, 4096
          %285 = vsyncadd %s278, %s284
          %s286 = smul.addr %s282, 2
          %s287 = smul.addr %s286, 128
          %s288 = scalar_lea.hbm %s0, %s287
          %s289 = sshll.u32 %s281, 4
          %s290 = int_to_ptr.vmem [resolvable:$true] %s289
          %295 = dma.hbm_to_vmem [thread:$0]  %s288, 4096, %s290, %s278, 256, 256, 16
        $region44: #{fn.1} parent=39 // pred_fallthru
          _
      $region40: #{fn.1} parent=5 // pred_fallthru
        _
      %p296 = scmp.le.s32.totalorder 1, %s21
      %p297 = scmp.lt.s32.totalorder %s21, 3
      %p298 = pnand %p296, %p297
      %p299 = pneg %p298
      // Predicated region
      $region45: #{fn.1} parent=5 // pred_check
        _
      $region46: #{fn.1} parent=5 // pred_check_branch
        %301 = sbr.rel (%p298) target = $region48
      $region47: #{fn.1} parent=5 // pred_region
        %s302 = ssub.s32 %s21, 1
        %s303 = sand.u32 %s34, 1
        %s304 = scalar_lea.sflag [#allocation3], %s303
        %s305 = sand.u32 %s34, 1
        %s306 = smul.addr %s305, 256
        %s307 = scalar_lea.vmem [#allocation2], %s306
        // Predicated region
        $region49: #{fn.1} parent=47 // pred_check
          %p308 = pneg %p47
        $region50: #{fn.1} parent=47 // pred_check_branch
          %310 = sbr.rel (%p308) target = $region52
        $region51: #{fn.1} parent=47 // pred_region
          %311 = dma.done %s304, 4096
        $region52: #{fn.1} parent=47 // pred_fallthru
          _
        // Predicated region
        $region53: #{fn.1} parent=47 // pred_check
          %p312 = pneg %p68
        $region54: #{fn.1} parent=47 // pred_check_branch
          %314 = sbr.rel (%p312) target = $region56
        $region55: #{fn.1} parent=47 // pred_region
          %315 = dma.done [#allocation6], 16384
        $region56: #{fn.1} parent=47 // pred_fallthru
          _
        // Predicated region
        $region57: #{fn.1} parent=47 // pred_check
          %p316 = pneg %p89
        $region58: #{fn.1} parent=47 // pred_check_branch
          %318 = sbr.rel (%p316) target = $region60
        $region59: #{fn.1} parent=47 // pred_region
          %319 = dma.done [#allocation6], 128
        $region60: #{fn.1} parent=47 // pred_fallthru
          _
        // Predicated region
        $region61: #{fn.1} parent=47 // pred_check
          %p320 = pneg %p110
        $region62: #{fn.1} parent=47 // pred_check_branch
          %322 = sbr.rel (%p320) target = $region64
        $region63: #{fn.1} parent=47 // pred_region
          %323 = dma.done [#allocation9], 32768
        $region64: #{fn.1} parent=47 // pred_fallthru
          _
        // Predicated region
        $region65: #{fn.1} parent=47 // pred_check
          %p324 = pneg %p152
        $region66: #{fn.1} parent=47 // pred_check_branch
          %326 = sbr.rel (%p324) target = $region68
        $region67: #{fn.1} parent=47 // pred_region
          %327 = dma.done [#allocation9], 8192
        $region68: #{fn.1} parent=47 // pred_fallthru
          _
        %s328 = sand.u32 %s34, 1
        %s329 = scalar_lea.sflag [#allocation3], %s328
        %s330 = sand.u32 %s34, 1
        %s331 = smul.addr %s330, 256
        %s332 = scalar_lea.vmem [#allocation2], %s331
        %p333 = pneg %p47
        %p334 = pneg %p44
        %p335 = pneg %p68
        %p336 = pneg %p65
        %p337 = pneg %p89
        %p338 = pneg %p86
        %p339 = pneg %p110
        %p340 = pneg %p107
        %p341 = pneg %p131
        %p342 = pneg %p128
        %p343 = pneg %p152
        %p344 = pneg %p149
        %p345 = pneg %p173
        %p346 = pneg %p170
        %p347 = pneg %p199
        %p348 = pneg %p196
        %s349 = sand.u32 %s186, 1
        %s350 = scalar_lea.sflag [#allocation4], %s349
        %s351 = sand.u32 %s186, 1
        %s352 = smul.addr %s351, 256
        %s353 = scalar_lea.vmem [#allocation11], %s352
        %s354 = smul.u32 16, %s26
        %s355 = smul.u32 16, %s26
        %v356 = vld [vmem:[%s307] sm:$0xff]
        %v357 = vld [vmem:[%s307 + $0x8] sm:$0xff]
        %v358 = vld [vmem:[%s307 + $0x10] sm:$0xff]
        %v359 = vld [vmem:[%s307 + $0x18] sm:$0xff]
        %v360 = vld [vmem:[%s307 + $0x20] sm:$0xff]
        %v361 = vld [vmem:[%s307 + $0x28] sm:$0xff]
        %v362 = vld [vmem:[%s307 + $0x30] sm:$0xff]
        %v363 = vld [vmem:[%s307 + $0x38] sm:$0xff]
        %v364 = vld [vmem:[%s307 + $0x40] sm:$0xff]
        %v365 = vld [vmem:[%s307 + $0x48] sm:$0xff]
        %v366 = vld [vmem:[%s307 + $0x50] sm:$0xff]
        %v367 = vld [vmem:[%s307 + $0x58] sm:$0xff]
        %v368 = vld [vmem:[%s307 + $0x60] sm:$0xff]
        %v369 = vld [vmem:[%s307 + $0x68] sm:$0xff]
        %v370 = vld [vmem:[%s307 + $0x70] sm:$0xff]
        %v371 = vld [vmem:[%s307 + $0x78] sm:$0xff]
        %v372 = vld [vmem:[%s307 + $0x80] sm:$0xff]
        %v373 = vld [vmem:[%s307 + $0x88] sm:$0xff]
        %v374 = vld [vmem:[%s307 + $0x90] sm:$0xff]
        %v375 = vld [vmem:[%s307 + $0x98] sm:$0xff]
        %v376 = vld [vmem:[%s307 + $0xa0] sm:$0xff]
        %v377 = vld [vmem:[%s307 + $0xa8] sm:$0xff]
        %v378 = vld [vmem:[%s307 + $0xb0] sm:$0xff]
        %v379 = vld [vmem:[%s307 + $0xb8] sm:$0xff]
        %v380 = vld [vmem:[%s307 + $0xc0] sm:$0xff]
        %v381 = vld [vmem:[%s307 + $0xc8] sm:$0xff]
        %v382 = vld [vmem:[%s307 + $0xd0] sm:$0xff]
        %v383 = vld [vmem:[%s307 + $0xd8] sm:$0xff]
        %v384 = vld [vmem:[%s307 + $0xe0] sm:$0xff]
        %v385 = vld [vmem:[%s307 + $0xe8] sm:$0xff]
        %v386 = vld [vmem:[%s307 + $0xf0] sm:$0xff]
        %v387 = vld [vmem:[%s307 + $0xf8] sm:$0xff]
        %v388 = vpack.c.bf16 %v358, %v356
        %v389 = vpack.c.bf16 %v359, %v357
        %v390 = vpack.c.bf16 %v362, %v360
        %v391 = vpack.c.bf16 %v363, %v361
        %v392 = vpack.c.bf16 %v366, %v364
        %v393 = vpack.c.bf16 %v367, %v365
        %v394 = vpack.c.bf16 %v370, %v368
        %v395 = vpack.c.bf16 %v371, %v369
        %v396 = vpack.c.bf16 %v374, %v372
        %v397 = vpack.c.bf16 %v375, %v373
        %v398 = vpack.c.bf16 %v378, %v376
        %v399 = vpack.c.bf16 %v379, %v377
        %v400 = vpack.c.bf16 %v382, %v380
        %v401 = vpack.c.bf16 %v383, %v381
        %v402 = vpack.c.bf16 %v386, %v384
        %v403 = vpack.c.bf16 %v387, %v385
        %v404 = vld [vmem:[#allocation5] sm:$0xff]
        %v405 = vld [vmem:[#allocation5 + $0x8] sm:$0xff]
        %v406 = vld [vmem:[#allocation5 + $0x10] sm:$0xff]
        %v407 = vld [vmem:[#allocation5 + $0x18] sm:$0xff]
        %v408 = vld [vmem:[#allocation5 + $0x20] sm:$0xff]
        %v409 = vld [vmem:[#allocation5 + $0x28] sm:$0xff]
        %v410 = vld [vmem:[#allocation5 + $0x30] sm:$0xff]
        %v411 = vld [vmem:[#allocation5 + $0x38] sm:$0xff]
        %v412 = vld [vmem:[#allocation5 + $0x40] sm:$0xff]
        %v413 = vld [vmem:[#allocation5 + $0x48] sm:$0xff]
        %v414 = vld [vmem:[#allocation5 + $0x50] sm:$0xff]
        %v415 = vld [vmem:[#allocation5 + $0x58] sm:$0xff]
        %v416 = vld [vmem:[#allocation5 + $0x60] sm:$0xff]
        %v417 = vld [vmem:[#allocation5 + $0x68] sm:$0xff]
        %v418 = vld [vmem:[#allocation5 + $0x70] sm:$0xff]
        %v419 = vld [vmem:[#allocation5 + $0x78] sm:$0xff]
        %v420 = vld [vmem:[#allocation5 + $0x80] sm:$0xff]
        %v421 = vld [vmem:[#allocation5 + $0x88] sm:$0xff]
        %v422 = vld [vmem:[#allocation5 + $0x90] sm:$0xff]
        %v423 = vld [vmem:[#allocation5 + $0x98] sm:$0xff]
        %v424 = vld [vmem:[#allocation5 + $0xa0] sm:$0xff]
        %v425 = vld [vmem:[#allocation5 + $0xa8] sm:$0xff]
        %v426 = vld [vmem:[#allocation5 + $0xb0] sm:$0xff]
        %v427 = vld [vmem:[#allocation5 + $0xb8] sm:$0xff]
        %v428 = vld [vmem:[#allocation5 + $0xc0] sm:$0xff]
        %v429 = vld [vmem:[#allocation5 + $0xc8] sm:$0xff]
        %v430 = vld [vmem:[#allocation5 + $0xd0] sm:$0xff]
        %v431 = vld [vmem:[#allocation5 + $0xd8] sm:$0xff]
        %v432 = vld [vmem:[#allocation5 + $0xe0] sm:$0xff]
        %v433 = vld [vmem:[#allocation5 + $0xe8] sm:$0xff]
        %v434 = vld [vmem:[#allocation5 + $0xf0] sm:$0xff]
        %v435 = vld [vmem:[#allocation5 + $0xf8] sm:$0xff]
        %v436 = vld [vmem:[#allocation5 + $0x100] sm:$0xff]
        %v437 = vld [vmem:[#allocation5 + $0x108] sm:$0xff]
        %v438 = vld [vmem:[#allocation5 + $0x110] sm:$0xff]
        %v439 = vld [vmem:[#allocation5 + $0x118] sm:$0xff]
        %v440 = vld [vmem:[#allocation5 + $0x120] sm:$0xff]
        %v441 = vld [vmem:[#allocation5 + $0x128] sm:$0xff]
        %v442 = vld [vmem:[#allocation5 + $0x130] sm:$0xff]
        %v443 = vld [vmem:[#allocation5 + $0x138] sm:$0xff]
        %v444 = vld [vmem:[#allocation5 + $0x140] sm:$0xff]
        %v445 = vld [vmem:[#allocation5 + $0x148] sm:$0xff]
        %v446 = vld [vmem:[#allocation5 + $0x150] sm:$0xff]
        %v447 = vld [vmem:[#allocation5 + $0x158] sm:$0xff]
        %v448 = vld [vmem:[#allocation5 + $0x160] sm:$0xff]
        %v449 = vld [vmem:[#allocation5 + $0x168] sm:$0xff]
        %v450 = vld [vmem:[#allocation5 + $0x170] sm:$0xff]
        %v451 = vld [vmem:[#allocation5 + $0x178] sm:$0xff]
        %v452 = vld [vmem:[#allocation5 + $0x180] sm:$0xff]
        %v453 = vld [vmem:[#allocation5 + $0x188] sm:$0xff]
        %v454 = vld [vmem:[#allocation5 + $0x190] sm:$0xff]
        %v455 = vld [vmem:[#allocation5 + $0x198] sm:$0xff]
        %v456 = vld [vmem:[#allocation5 + $0x1a0] sm:$0xff]
        %v457 = vld [vmem:[#allocation5 + $0x1a8] sm:$0xff]
        %v458 = vld [vmem:[#allocation5 + $0x1b0] sm:$0xff]
        %v459 = vld [vmem:[#allocation5 + $0x1b8] sm:$0xff]
        %v460 = vld [vmem:[#allocation5 + $0x1c0] sm:$0xff]
        %v461 = vld [vmem:[#allocation5 + $0x1c8] sm:$0xff]
        %v462 = vld [vmem:[#allocation5 + $0x1d0] sm:$0xff]
        %v463 = vld [vmem:[#allocation5 + $0x1d8] sm:$0xff]
        %v464 = vld [vmem:[#allocation5 + $0x1e0] sm:$0xff]
        %v465 = vld [vmem:[#allocation5 + $0x1e8] sm:$0xff]
        %v466 = vld [vmem:[#allocation5 + $0x1f0] sm:$0xff]
        %v467 = vld [vmem:[#allocation5 + $0x1f8] sm:$0xff]
        %v468 = vld [vmem:[#allocation5 + $0x200] sm:$0xff]
        %v469 = vld [vmem:[#allocation5 + $0x208] sm:$0xff]
        %v470 = vld [vmem:[#allocation5 + $0x210] sm:$0xff]
        %v471 = vld [vmem:[#allocation5 + $0x218] sm:$0xff]
        %v472 = vld [vmem:[#allocation5 + $0x220] sm:$0xff]
        %v473 = vld [vmem:[#allocation5 + $0x228] sm:$0xff]
        %v474 = vld [vmem:[#allocation5 + $0x230] sm:$0xff]
        %v475 = vld [vmem:[#allocation5 + $0x238] sm:$0xff]
        %v476 = vld [vmem:[#allocation5 + $0x240] sm:$0xff]
        %v477 = vld [vmem:[#allocation5 + $0x248] sm:$0xff]
        %v478 = vld [vmem:[#allocation5 + $0x250] sm:$0xff]
        %v479 = vld [vmem:[#allocation5 + $0x258] sm:$0xff]
        %v480 = vld [vmem:[#allocation5 + $0x260] sm:$0xff]
        %v481 = vld [vmem:[#allocation5 + $0x268] sm:$0xff]
        %v482 = vld [vmem:[#allocation5 + $0x270] sm:$0xff]
        %v483 = vld [vmem:[#allocation5 + $0x278] sm:$0xff]
        %v484 = vld [vmem:[#allocation5 + $0x280] sm:$0xff]
        %v485 = vld [vmem:[#allocation5 + $0x288] sm:$0xff]
        %v486 = vld [vmem:[#allocation5 + $0x290] sm:$0xff]
        %v487 = vld [vmem:[#allocation5 + $0x298] sm:$0xff]
        %v488 = vld [vmem:[#allocation5 + $0x2a0] sm:$0xff]
        %v489 = vld [vmem:[#allocation5 + $0x2a8] sm:$0xff]
        %v490 = vld [vmem:[#allocation5 + $0x2b0] sm:$0xff]
        %v491 = vld [vmem:[#allocation5 + $0x2b8] sm:$0xff]
        %v492 = vld [vmem:[#allocation5 + $0x2c0] sm:$0xff]
        %v493 = vld [vmem:[#allocation5 + $0x2c8] sm:$0xff]
        %v494 = vld [vmem:[#allocation5 + $0x2d0] sm:$0xff]
        %v495 = vld [vmem:[#allocation5 + $0x2d8] sm:$0xff]
        %v496 = vld [vmem:[#allocation5 + $0x2e0] sm:$0xff]
        %v497 = vld [vmem:[#allocation5 + $0x2e8] sm:$0xff]
        %v498 = vld [vmem:[#allocation5 + $0x2f0] sm:$0xff]
        %v499 = vld [vmem:[#allocation5 + $0x2f8] sm:$0xff]
        %v500 = vld [vmem:[#allocation5 + $0x300] sm:$0xff]
        %v501 = vld [vmem:[#allocation5 + $0x308] sm:$0xff]
        %v502 = vld [vmem:[#allocation5 + $0x310] sm:$0xff]
        %v503 = vld [vmem:[#allocation5 + $0x318] sm:$0xff]
        %v504 = vld [vmem:[#allocation5 + $0x320] sm:$0xff]
        %v505 = vld [vmem:[#allocation5 + $0x328] sm:$0xff]
        %v506 = vld [vmem:[#allocation5 + $0x330] sm:$0xff]
        %v507 = vld [vmem:[#allocation5 + $0x338] sm:$0xff]
        %v508 = vld [vmem:[#allocation5 + $0x340] sm:$0xff]
        %v509 = vld [vmem:[#allocation5 + $0x348] sm:$0xff]
        %v510 = vld [vmem:[#allocation5 + $0x350] sm:$0xff]
        %v511 = vld [vmem:[#allocation5 + $0x358] sm:$0xff]
        %v512 = vld [vmem:[#allocation5 + $0x360] sm:$0xff]
        %v513 = vld [vmem:[#allocation5 + $0x368] sm:$0xff]
        %v514 = vld [vmem:[#allocation5 + $0x370] sm:$0xff]
        %v515 = vld [vmem:[#allocation5 + $0x378] sm:$0xff]
        %v516 = vld [vmem:[#allocation5 + $0x380] sm:$0xff]
        %v517 = vld [vmem:[#allocation5 + $0x388] sm:$0xff]
        %v518 = vld [vmem:[#allocation5 + $0x390] sm:$0xff]
        %v519 = vld [vmem:[#allocation5 + $0x398] sm:$0xff]
        %v520 = vld [vmem:[#allocation5 + $0x3a0] sm:$0xff]
        %v521 = vld [vmem:[#allocation5 + $0x3a8] sm:$0xff]
        %v522 = vld [vmem:[#allocation5 + $0x3b0] sm:$0xff]
        %v523 = vld [vmem:[#allocation5 + $0x3b8] sm:$0xff]
        %v524 = vld [vmem:[#allocation5 + $0x3c0] sm:$0xff]
        %v525 = vld [vmem:[#allocation5 + $0x3c8] sm:$0xff]
        %v526 = vld [vmem:[#allocation5 + $0x3d0] sm:$0xff]
        %v527 = vld [vmem:[#allocation5 + $0x3d8] sm:$0xff]
        %v528 = vld [vmem:[#allocation5 + $0x3e0] sm:$0xff]
        %v529 = vld [vmem:[#allocation5 + $0x3e8] sm:$0xff]
        %v530 = vld [vmem:[#allocation5 + $0x3f0] sm:$0xff]
        %v531 = vld [vmem:[#allocation5 + $0x3f8] sm:$0xff]
        %v532 = vld [vmem:[#allocation7] sm:$0xff]
        %v534 = vlaneseq
        %v535 = vshrl.u32 %v534, 7
        %v536 = vsub.s32 0, %v535
        %v537 = vrot.slane %v532, %v536
        %v538 = vlaneseq
        %v539 = vshrl.u32 %v538, 7
        %v540 = vsub.s32 1, %v539
        %v541 = vrot.slane %v532, %v540
        %v542 = vlaneseq
        %v543 = vshrl.u32 %v542, 7
        %v544 = vsub.s32 2, %v543
        %v545 = vrot.slane %v532, %v544
        %v546 = vlaneseq
        %v547 = vshrl.u32 %v546, 7
        %v548 = vsub.s32 3, %v547
        %v549 = vrot.slane %v532, %v548
        %v550 = vlaneseq
        %v551 = vshrl.u32 %v550, 7
        %v552 = vsub.s32 4, %v551
        %v553 = vrot.slane %v532, %v552
        %v554 = vlaneseq
        %v555 = vshrl.u32 %v554, 7
        %v556 = vsub.s32 5, %v555
        %v557 = vrot.slane %v532, %v556
        %v558 = vlaneseq
        %v559 = vshrl.u32 %v558, 7
        %v560 = vsub.s32 6, %v559
        %v561 = vrot.slane %v532, %v560
        %v562 = vlaneseq
        %v563 = vshrl.u32 %v562, 7
        %v564 = vsub.s32 7, %v563
        %v565 = vrot.slane %v532, %v564
        %v702 = vunpack.c.l.b16 %v404
        %v703 = vunpack.c.h.b16 %v404
        %v704 = vunpack.c.l.b16 %v405
        %v705 = vunpack.c.h.b16 %v405
        %v706 = vunpack.c.l.b16 %v406
        %v707 = vunpack.c.h.b16 %v406
        %v708 = vunpack.c.l.b16 %v407
        %v709 = vunpack.c.h.b16 %v407
        %v710 = vunpack.c.l.b16 %v408
        %v711 = vunpack.c.h.b16 %v408
        %v712 = vunpack.c.l.b16 %v409
        %v713 = vunpack.c.h.b16 %v409
        %v714 = vunpack.c.l.b16 %v410
        %v715 = vunpack.c.h.b16 %v410
        %v716 = vunpack.c.l.b16 %v411
        %v717 = vunpack.c.h.b16 %v411
        %v718 = vunpack.c.l.b16 %v412
        %v719 = vunpack.c.h.b16 %v412
        %v720 = vunpack.c.l.b16 %v413
        %v721 = vunpack.c.h.b16 %v413
        %v722 = vunpack.c.l.b16 %v414
        %v723 = vunpack.c.h.b16 %v414
        %v724 = vunpack.c.l.b16 %v415
        %v725 = vunpack.c.h.b16 %v415
        %v726 = vunpack.c.l.b16 %v416
        %v727 = vunpack.c.h.b16 %v416
        %v728 = vunpack.c.l.b16 %v417
        %v729 = vunpack.c.h.b16 %v417
        %v730 = vunpack.c.l.b16 %v418
        %v731 = vunpack.c.h.b16 %v418
        %v732 = vunpack.c.l.b16 %v419
        %v733 = vunpack.c.h.b16 %v419
        %v734 = vunpack.c.l.b16 %v420
        %v735 = vunpack.c.h.b16 %v420
        %v736 = vunpack.c.l.b16 %v421
        %v737 = vunpack.c.h.b16 %v421
        %v738 = vunpack.c.l.b16 %v422
        %v739 = vunpack.c.h.b16 %v422
        %v740 = vunpack.c.l.b16 %v423
        %v741 = vunpack.c.h.b16 %v423
        %v742 = vunpack.c.l.b16 %v424
        %v743 = vunpack.c.h.b16 %v424
        %v744 = vunpack.c.l.b16 %v425
        %v745 = vunpack.c.h.b16 %v425
        %v746 = vunpack.c.l.b16 %v426
        %v747 = vunpack.c.h.b16 %v426
        %v748 = vunpack.c.l.b16 %v427
        %v749 = vunpack.c.h.b16 %v427
        %v750 = vunpack.c.l.b16 %v428
        %v751 = vunpack.c.h.b16 %v428
        %v752 = vunpack.c.l.b16 %v429
        %v753 = vunpack.c.h.b16 %v429
        %v754 = vunpack.c.l.b16 %v430
        %v755 = vunpack.c.h.b16 %v430
        %v756 = vunpack.c.l.b16 %v431
        %v757 = vunpack.c.h.b16 %v431
        %v758 = vunpack.c.l.b16 %v432
        %v759 = vunpack.c.h.b16 %v432
        %v760 = vunpack.c.l.b16 %v433
        %v761 = vunpack.c.h.b16 %v433
        %v762 = vunpack.c.l.b16 %v434
        %v763 = vunpack.c.h.b16 %v434
        %v764 = vunpack.c.l.b16 %v435
        %v765 = vunpack.c.h.b16 %v435
        %v766 = vunpack.c.l.b16 %v436
        %v767 = vunpack.c.h.b16 %v436
        %v768 = vunpack.c.l.b16 %v437
        %v769 = vunpack.c.h.b16 %v437
        %v770 = vunpack.c.l.b16 %v438
        %v771 = vunpack.c.h.b16 %v438
        %v772 = vunpack.c.l.b16 %v439
        %v773 = vunpack.c.h.b16 %v439
        %v774 = vunpack.c.l.b16 %v440
        %v775 = vunpack.c.h.b16 %v440
        %v776 = vunpack.c.l.b16 %v441
        %v777 = vunpack.c.h.b16 %v441
        %v778 = vunpack.c.l.b16 %v442
        %v779 = vunpack.c.h.b16 %v442
        %v780 = vunpack.c.l.b16 %v443
        %v781 = vunpack.c.h.b16 %v443
        %v782 = vunpack.c.l.b16 %v444
        %v783 = vunpack.c.h.b16 %v444
        %v784 = vunpack.c.l.b16 %v445
        %v785 = vunpack.c.h.b16 %v445
        %v786 = vunpack.c.l.b16 %v446
        %v787 = vunpack.c.h.b16 %v446
        %v788 = vunpack.c.l.b16 %v447
        %v789 = vunpack.c.h.b16 %v447
        %v790 = vunpack.c.l.b16 %v448
        %v791 = vunpack.c.h.b16 %v448
        %v792 = vunpack.c.l.b16 %v449
        %v793 = vunpack.c.h.b16 %v449
        %v794 = vunpack.c.l.b16 %v450
        %v795 = vunpack.c.h.b16 %v450
        %v796 = vunpack.c.l.b16 %v451
        %v797 = vunpack.c.h.b16 %v451
        %v798 = vunpack.c.l.b16 %v452
        %v799 = vunpack.c.h.b16 %v452
        %v800 = vunpack.c.l.b16 %v453
        %v801 = vunpack.c.h.b16 %v453
        %v802 = vunpack.c.l.b16 %v454
        %v803 = vunpack.c.h.b16 %v454
        %v804 = vunpack.c.l.b16 %v455
        %v805 = vunpack.c.h.b16 %v455
        %v806 = vunpack.c.l.b16 %v456
        %v807 = vunpack.c.h.b16 %v456
        %v808 = vunpack.c.l.b16 %v457
        %v809 = vunpack.c.h.b16 %v457
        %v810 = vunpack.c.l.b16 %v458
        %v811 = vunpack.c.h.b16 %v458
        %v812 = vunpack.c.l.b16 %v459
        %v813 = vunpack.c.h.b16 %v459
        %v814 = vunpack.c.l.b16 %v460
        %v815 = vunpack.c.h.b16 %v460
        %v816 = vunpack.c.l.b16 %v461
        %v817 = vunpack.c.h.b16 %v461
        %v818 = vunpack.c.l.b16 %v462
        %v819 = vunpack.c.h.b16 %v462
        %v820 = vunpack.c.l.b16 %v463
        %v821 = vunpack.c.h.b16 %v463
        %v822 = vunpack.c.l.b16 %v464
        %v823 = vunpack.c.h.b16 %v464
        %v824 = vunpack.c.l.b16 %v465
        %v825 = vunpack.c.h.b16 %v465
        %v826 = vunpack.c.l.b16 %v466
        %v827 = vunpack.c.h.b16 %v466
        %v828 = vunpack.c.l.b16 %v467
        %v829 = vunpack.c.h.b16 %v467
        %v830 = vunpack.c.l.b16 %v468
        %v831 = vunpack.c.h.b16 %v468
        %v832 = vunpack.c.l.b16 %v469
        %v833 = vunpack.c.h.b16 %v469
        %v834 = vunpack.c.l.b16 %v470
        %v835 = vunpack.c.h.b16 %v470
        %v836 = vunpack.c.l.b16 %v471
        %v837 = vunpack.c.h.b16 %v471
        %v838 = vunpack.c.l.b16 %v472
        %v839 = vunpack.c.h.b16 %v472
        %v840 = vunpack.c.l.b16 %v473
        %v841 = vunpack.c.h.b16 %v473
        %v842 = vunpack.c.l.b16 %v474
        %v843 = vunpack.c.h.b16 %v474
        %v844 = vunpack.c.l.b16 %v475
        %v845 = vunpack.c.h.b16 %v475
        %v846 = vunpack.c.l.b16 %v476
        %v847 = vunpack.c.h.b16 %v476
        %v848 = vunpack.c.l.b16 %v477
        %v849 = vunpack.c.h.b16 %v477
        %v850 = vunpack.c.l.b16 %v478
        %v851 = vunpack.c.h.b16 %v478
        %v852 = vunpack.c.l.b16 %v479
        %v853 = vunpack.c.h.b16 %v479
        %v854 = vunpack.c.l.b16 %v480
        %v855 = vunpack.c.h.b16 %v480
        %v856 = vunpack.c.l.b16 %v481
        %v857 = vunpack.c.h.b16 %v481
        %v858 = vunpack.c.l.b16 %v482
        %v859 = vunpack.c.h.b16 %v482
        %v860 = vunpack.c.l.b16 %v483
        %v861 = vunpack.c.h.b16 %v483
        %v862 = vunpack.c.l.b16 %v484
        %v863 = vunpack.c.h.b16 %v484
        %v864 = vunpack.c.l.b16 %v485
        %v865 = vunpack.c.h.b16 %v485
        %v866 = vunpack.c.l.b16 %v486
        %v867 = vunpack.c.h.b16 %v486
        %v868 = vunpack.c.l.b16 %v487
        %v869 = vunpack.c.h.b16 %v487
        %v870 = vunpack.c.l.b16 %v488
        %v871 = vunpack.c.h.b16 %v488
        %v872 = vunpack.c.l.b16 %v489
        %v873 = vunpack.c.h.b16 %v489
        %v874 = vunpack.c.l.b16 %v490
        %v875 = vunpack.c.h.b16 %v490
        %v876 = vunpack.c.l.b16 %v491
        %v877 = vunpack.c.h.b16 %v491
        %v878 = vunpack.c.l.b16 %v492
        %v879 = vunpack.c.h.b16 %v492
        %v880 = vunpack.c.l.b16 %v493
        %v881 = vunpack.c.h.b16 %v493
        %v882 = vunpack.c.l.b16 %v494
        %v883 = vunpack.c.h.b16 %v494
        %v884 = vunpack.c.l.b16 %v495
        %v885 = vunpack.c.h.b16 %v495
        %v886 = vunpack.c.l.b16 %v496
        %v887 = vunpack.c.h.b16 %v496
        %v888 = vunpack.c.l.b16 %v497
        %v889 = vunpack.c.h.b16 %v497
        %v890 = vunpack.c.l.b16 %v498
        %v891 = vunpack.c.h.b16 %v498
        %v892 = vunpack.c.l.b16 %v499
        %v893 = vunpack.c.h.b16 %v499
        %v894 = vunpack.c.l.b16 %v500
        %v895 = vunpack.c.h.b16 %v500
        %v896 = vunpack.c.l.b16 %v501
        %v897 = vunpack.c.h.b16 %v501
        %v898 = vunpack.c.l.b16 %v502
        %v899 = vunpack.c.h.b16 %v502
        %v900 = vunpack.c.l.b16 %v503
        %v901 = vunpack.c.h.b16 %v503
        %v902 = vunpack.c.l.b16 %v504
        %v903 = vunpack.c.h.b16 %v504
        %v904 = vunpack.c.l.b16 %v505
        %v905 = vunpack.c.h.b16 %v505
        %v906 = vunpack.c.l.b16 %v506
        %v907 = vunpack.c.h.b16 %v506
        %v908 = vunpack.c.l.b16 %v507
        %v909 = vunpack.c.h.b16 %v507
        %v910 = vunpack.c.l.b16 %v508
        %v911 = vunpack.c.h.b16 %v508
        %v912 = vunpack.c.l.b16 %v509
        %v913 = vunpack.c.h.b16 %v509
        %v914 = vunpack.c.l.b16 %v510
        %v915 = vunpack.c.h.b16 %v510
        %v916 = vunpack.c.l.b16 %v511
        %v917 = vunpack.c.h.b16 %v511
        %v918 = vunpack.c.l.b16 %v512
        %v919 = vunpack.c.h.b16 %v512
        %v920 = vunpack.c.l.b16 %v513
        %v921 = vunpack.c.h.b16 %v513
        %v922 = vunpack.c.l.b16 %v514
        %v923 = vunpack.c.h.b16 %v514
        %v924 = vunpack.c.l.b16 %v515
        %v925 = vunpack.c.h.b16 %v515
        %v926 = vunpack.c.l.b16 %v516
        %v927 = vunpack.c.h.b16 %v516
        %v928 = vunpack.c.l.b16 %v517
        %v929 = vunpack.c.h.b16 %v517
        %v930 = vunpack.c.l.b16 %v518
        %v931 = vunpack.c.h.b16 %v518
        %v932 = vunpack.c.l.b16 %v519
        %v933 = vunpack.c.h.b16 %v519
        %v934 = vunpack.c.l.b16 %v520
        %v935 = vunpack.c.h.b16 %v520
        %v936 = vunpack.c.l.b16 %v521
        %v937 = vunpack.c.h.b16 %v521
        %v938 = vunpack.c.l.b16 %v522
        %v939 = vunpack.c.h.b16 %v522
        %v940 = vunpack.c.l.b16 %v523
        %v941 = vunpack.c.h.b16 %v523
        %v942 = vunpack.c.l.b16 %v524
        %v943 = vunpack.c.h.b16 %v524
        %v944 = vunpack.c.l.b16 %v525
        %v945 = vunpack.c.h.b16 %v525
        %v946 = vunpack.c.l.b16 %v526
        %v947 = vunpack.c.h.b16 %v526
        %v948 = vunpack.c.l.b16 %v527
        %v949 = vunpack.c.h.b16 %v527
        %v950 = vunpack.c.l.b16 %v528
        %v951 = vunpack.c.h.b16 %v528
        %v952 = vunpack.c.l.b16 %v529
        %v953 = vunpack.c.h.b16 %v529
        %v954 = vunpack.c.l.b16 %v530
        %v955 = vunpack.c.h.b16 %v530
        %v956 = vunpack.c.l.b16 %v531
        %v957 = vunpack.c.h.b16 %v531
        %v958 = vpack.c.b16 %v710, %v702
        %v959 = vpack.c.b16 %v711, %v703
        %v960 = vpack.c.b16 %v712, %v704
        %v961 = vpack.c.b16 %v713, %v705
        %v962 = vpack.c.b16 %v714, %v706
        %v963 = vpack.c.b16 %v715, %v707
        %v964 = vpack.c.b16 %v716, %v708
        %v965 = vpack.c.b16 %v717, %v709
        %v966 = vpack.c.b16 %v726, %v718
        %v967 = vpack.c.b16 %v727, %v719
        %v968 = vpack.c.b16 %v728, %v720
        %v969 = vpack.c.b16 %v729, %v721
        %v970 = vpack.c.b16 %v730, %v722
        %v971 = vpack.c.b16 %v731, %v723
        %v972 = vpack.c.b16 %v732, %v724
        %v973 = vpack.c.b16 %v733, %v725
        %v974 = vpack.c.b16 %v742, %v734
        %v975 = vpack.c.b16 %v743, %v735
        %v976 = vpack.c.b16 %v744, %v736
        %v977 = vpack.c.b16 %v745, %v737
        %v978 = vpack.c.b16 %v746, %v738
        %v979 = vpack.c.b16 %v747, %v739
        %v980 = vpack.c.b16 %v748, %v740
        %v981 = vpack.c.b16 %v749, %v741
        %v982 = vpack.c.b16 %v758, %v750
        %v983 = vpack.c.b16 %v759, %v751
        %v984 = vpack.c.b16 %v760, %v752
        %v985 = vpack.c.b16 %v761, %v753
        %v986 = vpack.c.b16 %v762, %v754
        %v987 = vpack.c.b16 %v763, %v755
        %v988 = vpack.c.b16 %v764, %v756
        %v989 = vpack.c.b16 %v765, %v757
        %v990 = vpack.c.b16 %v774, %v766
        %v991 = vpack.c.b16 %v775, %v767
        %v992 = vpack.c.b16 %v776, %v768
        %v993 = vpack.c.b16 %v777, %v769
        %v994 = vpack.c.b16 %v778, %v770
        %v995 = vpack.c.b16 %v779, %v771
        %v996 = vpack.c.b16 %v780, %v772
        %v997 = vpack.c.b16 %v781, %v773
        %v998 = vpack.c.b16 %v790, %v782
        %v999 = vpack.c.b16 %v791, %v783
        %v1000 = vpack.c.b16 %v792, %v784
        %v1001 = vpack.c.b16 %v793, %v785
        %v1002 = vpack.c.b16 %v794, %v786
        %v1003 = vpack.c.b16 %v795, %v787
        %v1004 = vpack.c.b16 %v796, %v788
        %v1005 = vpack.c.b16 %v797, %v789
        %v1006 = vpack.c.b16 %v806, %v798
        %v1007 = vpack.c.b16 %v807, %v799
        %v1008 = vpack.c.b16 %v808, %v800
        %v1009 = vpack.c.b16 %v809, %v801
        %v1010 = vpack.c.b16 %v810, %v802
        %v1011 = vpack.c.b16 %v811, %v803
        %v1012 = vpack.c.b16 %v812, %v804
        %v1013 = vpack.c.b16 %v813, %v805
        %v1014 = vpack.c.b16 %v822, %v814
        %v1015 = vpack.c.b16 %v823, %v815
        %v1016 = vpack.c.b16 %v824, %v816
        %v1017 = vpack.c.b16 %v825, %v817
        %v1018 = vpack.c.b16 %v826, %v818
        %v1019 = vpack.c.b16 %v827, %v819
        %v1020 = vpack.c.b16 %v828, %v820
        %v1021 = vpack.c.b16 %v829, %v821
        %v1022 = vpack.c.b16 %v838, %v830
        %v1023 = vpack.c.b16 %v839, %v831
        %v1024 = vpack.c.b16 %v840, %v832
        %v1025 = vpack.c.b16 %v841, %v833
        %v1026 = vpack.c.b16 %v842, %v834
        %v1027 = vpack.c.b16 %v843, %v835
        %v1028 = vpack.c.b16 %v844, %v836
        %v1029 = vpack.c.b16 %v845, %v837
        %v1030 = vpack.c.b16 %v854, %v846
        %v1031 = vpack.c.b16 %v855, %v847
        %v1032 = vpack.c.b16 %v856, %v848
        %v1033 = vpack.c.b16 %v857, %v849
        %v1034 = vpack.c.b16 %v858, %v850
        %v1035 = vpack.c.b16 %v859, %v851
        %v1036 = vpack.c.b16 %v860, %v852
        %v1037 = vpack.c.b16 %v861, %v853
        %v1038 = vpack.c.b16 %v870, %v862
        %v1039 = vpack.c.b16 %v871, %v863
        %v1040 = vpack.c.b16 %v872, %v864
        %v1041 = vpack.c.b16 %v873, %v865
        %v1042 = vpack.c.b16 %v874, %v866
        %v1043 = vpack.c.b16 %v875, %v867
        %v1044 = vpack.c.b16 %v876, %v868
        %v1045 = vpack.c.b16 %v877, %v869
        %v1046 = vpack.c.b16 %v886, %v878
        %v1047 = vpack.c.b16 %v887, %v879
        %v1048 = vpack.c.b16 %v888, %v880
        %v1049 = vpack.c.b16 %v889, %v881
        %v1050 = vpack.c.b16 %v890, %v882
        %v1051 = vpack.c.b16 %v891, %v883
        %v1052 = vpack.c.b16 %v892, %v884
        %v1053 = vpack.c.b16 %v893, %v885
        %v1054 = vpack.c.b16 %v902, %v894
        %v1055 = vpack.c.b16 %v903, %v895
        %v1056 = vpack.c.b16 %v904, %v896
        %v1057 = vpack.c.b16 %v905, %v897
        %v1058 = vpack.c.b16 %v906, %v898
        %v1059 = vpack.c.b16 %v907, %v899
        %v1060 = vpack.c.b16 %v908, %v900
        %v1061 = vpack.c.b16 %v909, %v901
        %v1062 = vpack.c.b16 %v918, %v910
        %v1063 = vpack.c.b16 %v919, %v911
        %v1064 = vpack.c.b16 %v920, %v912
        %v1065 = vpack.c.b16 %v921, %v913
        %v1066 = vpack.c.b16 %v922, %v914
        %v1067 = vpack.c.b16 %v923, %v915
        %v1068 = vpack.c.b16 %v924, %v916
        %v1069 = vpack.c.b16 %v925, %v917
        %v1070 = vpack.c.b16 %v934, %v926
        %v1071 = vpack.c.b16 %v935, %v927
        %v1072 = vpack.c.b16 %v936, %v928
        %v1073 = vpack.c.b16 %v937, %v929
        %v1074 = vpack.c.b16 %v938, %v930
        %v1075 = vpack.c.b16 %v939, %v931
        %v1076 = vpack.c.b16 %v940, %v932
        %v1077 = vpack.c.b16 %v941, %v933
        %v1078 = vpack.c.b16 %v950, %v942
        %v1079 = vpack.c.b16 %v951, %v943
        %v1080 = vpack.c.b16 %v952, %v944
        %v1081 = vpack.c.b16 %v953, %v945
        %v1082 = vpack.c.b16 %v954, %v946
        %v1083 = vpack.c.b16 %v955, %v947
        %v1084 = vpack.c.b16 %v956, %v948
        %v1085 = vpack.c.b16 %v957, %v949
        %1214 = vmatprep.subr.bf16.mxu0 %v959
        %1215 = vmatpush1.bf16.msra.mxu0 %v958
        %1216 = vmatprep.subr.bf16.mxu0 %v967
        %1217 = vmatpush1.bf16.msra.mxu0 %v966
        %1218 = vmatprep.subr.bf16.mxu0 %v975
        %1219 = vmatpush1.bf16.msra.mxu0 %v974
        %1220 = vmatprep.subr.bf16.mxu0 %v983
        %1221 = vmatpush1.bf16.msra.mxu0 %v982
        %1222 = vmatprep.subr.bf16.mxu0 %v991
        %1223 = vmatpush1.bf16.msra.mxu0 %v990
        %1224 = vmatprep.subr.bf16.mxu0 %v999
        %1225 = vmatpush1.bf16.msra.mxu0 %v998
        %1226 = vmatprep.subr.bf16.mxu0 %v1007
        %1227 = vmatpush1.bf16.msra.mxu0 %v1006
        %1228 = vmatprep.subr.bf16.mxu0 %v1015
        %1229 = vmatpush1.bf16.msra.mxu0 %v1014
        %1230 = vmatprep.subr.bf16.mxu0 %v1023
        %1231 = vmatpush1.bf16.msra.mxu0 %v1022
        %1232 = vmatprep.subr.bf16.mxu0 %v1031
        %1233 = vmatpush1.bf16.msra.mxu0 %v1030
        %1234 = vmatprep.subr.bf16.mxu0 %v1039
        %1235 = vmatpush1.bf16.msra.mxu0 %v1038
        %1236 = vmatprep.subr.bf16.mxu0 %v1047
        %1237 = vmatpush1.bf16.msra.mxu0 %v1046
        %1238 = vmatprep.subr.bf16.mxu0 %v1055
        %1239 = vmatpush1.bf16.msra.mxu0 %v1054
        %1240 = vmatprep.subr.bf16.mxu0 %v1063
        %1241 = vmatpush1.bf16.msra.mxu0 %v1062
        %1242 = vmatprep.subr.bf16.mxu0 %v1071
        %1243 = vmatpush1.bf16.msra.mxu0 %v1070
        %1244 = vmatprep.subr.bf16.mxu0 %v1079
        %1245 = vmatpush1.bf16.msra.mxu0 %v1078
        %1246 = vmatprep.mubr.bf16.mxu0 %v389
        %1247 = vmatmul.mubr.bf16.gmra.mrb[0].mxu0 %v388
        %v1248 = vpop.f32.mrb[0].mxu0
        %v1249 = vadd.f32 %v537, %v1248
        %v1250 = vpop.f32.mrb[0].mxu0
        %v1251 = vadd.f32 %v541, %v1250
        %v1252 = vpop.f32.mrb[0].mxu0
        %v1253 = vadd.f32 %v537, %v1252
        %v1254 = vpop.f32.mrb[0].mxu0
        %v1255 = vadd.f32 %v541, %v1254
        %1256 = vmatprep.mubr.bf16.mxu0 %v391
        %1257 = vmatmul.mubr.bf16.gmra.mrb[0].mxu0 %v390
        %v1258 = vpop.f32.mrb[0].mxu0
        %v1259 = vadd.f32 %v537, %v1258
        %v1260 = vpop.f32.mrb[0].mxu0
        %v1261 = vadd.f32 %v541, %v1260
        %v1262 = vpop.f32.mrb[0].mxu0
        %v1263 = vadd.f32 %v537, %v1262
        %v1264 = vpop.f32.mrb[0].mxu0
        %v1265 = vadd.f32 %v541, %v1264
        %1266 = vmatprep.mubr.bf16.mxu0 %v393
        %1267 = vmatmul.mubr.bf16.gmra.mrb[0].mxu0 %v392
        %v1268 = vpop.f32.mrb[0].mxu0
        %v1269 = vadd.f32 %v537, %v1268
        %v1270 = vpop.f32.mrb[0].mxu0
        %v1271 = vadd.f32 %v541, %v1270
        %v1272 = vpop.f32.mrb[0].mxu0
        %v1273 = vadd.f32 %v537, %v1272
        %v1274 = vpop.f32.mrb[0].mxu0
        %v1275 = vadd.f32 %v541, %v1274
        %1276 = vmatprep.mubr.bf16.mxu0 %v395
        %1277 = vmatmul.mubr.bf16.gmra.mrb[0].mxu0 %v394
        %v1278 = vpop.f32.mrb[0].mxu0
        %v1279 = vadd.f32 %v537, %v1278
        %v1280 = vpop.f32.mrb[0].mxu0
        %v1281 = vadd.f32 %v541, %v1280
        %v1282 = vpop.f32.mrb[0].mxu0
        %v1283 = vadd.f32 %v537, %v1282
        %v1284 = vpop.f32.mrb[0].mxu0
        %v1285 = vadd.f32 %v541, %v1284
        %1286 = vmatprep.mubr.bf16.mxu0 %v397
        %1287 = vmatmul.mubr.bf16.gmra.mrb[0].mxu0 %v396
        %v1288 = vpop.f32.mrb[0].mxu0
        %v1289 = vadd.f32 %v537, %v1288
        %v1290 = vpop.f32.mrb[0].mxu0
        %v1291 = vadd.f32 %v541, %v1290
        %v1292 = vpop.f32.mrb[0].mxu0
        %v1293 = vadd.f32 %v537, %v1292
        %v1294 = vpop.f32.mrb[0].mxu0
        %v1295 = vadd.f32 %v541, %v1294
        %1296 = vmatprep.mubr.bf16.mxu0 %v399
        %1297 = vmatmul.mubr.bf16.gmra.mrb[0].mxu0 %v398
        %v1298 = vpop.f32.mrb[0].mxu0
        %v1299 = vadd.f32 %v537, %v1298
        %v1300 = vpop.f32.mrb[0].mxu0
        %v1301 = vadd.f32 %v541, %v1300
        %v1302 = vpop.f32.mrb[0].mxu0
        %v1303 = vadd.f32 %v537, %v1302
        %v1304 = vpop.f32.mrb[0].mxu0
        %v1305 = vadd.f32 %v541, %v1304
        %1306 = vmatprep.mubr.bf16.mxu0 %v401
        %1307 = vmatmul.mubr.bf16.gmra.mrb[0].mxu0 %v400
        %v1308 = vpop.f32.mrb[0].mxu0
        %v1309 = vadd.f32 %v537, %v1308
        %v1310 = vpop.f32.mrb[0].mxu0
        %v1311 = vadd.f32 %v541, %v1310
        %v1312 = vpop.f32.mrb[0].mxu0
        %v1313 = vadd.f32 %v537, %v1312
        %v1314 = vpop.f32.mrb[0].mxu0
        %v1315 = vadd.f32 %v541, %v1314
        %1316 = vmatprep.mubr.bf16.mxu0 %v403
        %1317 = vmatmul.mubr.bf16.gmra.mrb[0].mxu0 %v402
        %v1318 = vpop.f32.mrb[0].mxu0
        %v1319 = vadd.f32 %v537, %v1318
        %v1320 = vpop.f32.mrb[0].mxu0
        %v1321 = vadd.f32 %v541, %v1320
        %v1322 = vpop.f32.mrb[0].mxu0
        %v1323 = vadd.f32 %v537, %v1322
        %v1324 = vpop.f32.mrb[0].mxu0
        %v1325 = vadd.f32 %v541, %v1324
        %1326 = vdwg.mxu0
        %1327 = vmatprep.subr.bf16.mxu0 %v961
        %1328 = vmatpush1.bf16.msra.mxu0 %v960
        %1329 = vmatprep.subr.bf16.mxu0 %v969
        %1330 = vmatpush1.bf16.msra.mxu0 %v968
        %1331 = vmatprep.subr.bf16.mxu0 %v977
        %1332 = vmatpush1.bf16.msra.mxu0 %v976
        %1333 = vmatprep.subr.bf16.mxu0 %v985
        %1334 = vmatpush1.bf16.msra.mxu0 %v984
        %1335 = vmatprep.subr.bf16.mxu0 %v993
        %1336 = vmatpush1.bf16.msra.mxu0 %v992
        %1337 = vmatprep.subr.bf16.mxu0 %v1001
        %1338 = vmatpush1.bf16.msra.mxu0 %v1000
        %1339 = vmatprep.subr.bf16.mxu0 %v1009
        %1340 = vmatpush1.bf16.msra.mxu0 %v1008
        %1341 = vmatprep.subr.bf16.mxu0 %v1017
        %1342 = vmatpush1.bf16.msra.mxu0 %v1016
        %1343 = vmatprep.subr.bf16.mxu0 %v1025
        %1344 = vmatpush1.bf16.msra.mxu0 %v1024
        %1345 = vmatprep.subr.bf16.mxu0 %v1033
        %1346 = vmatpush1.bf16.msra.mxu0 %v1032
        %1347 = vmatprep.subr.bf16.mxu0 %v1041
        %1348 = vmatpush1.bf16.msra.mxu0 %v1040
        %1349 = vmatprep.subr.bf16.mxu0 %v1049
        %1350 = vmatpush1.bf16.msra.mxu0 %v1048
        %1351 = vmatprep.subr.bf16.mxu0 %v1057
        %1352 = vmatpush1.bf16.msra.mxu0 %v1056
        %1353 = vmatprep.subr.bf16.mxu0 %v1065
        %1354 = vmatpush1.bf16.msra.mxu0 %v1064
        %1355 = vmatprep.subr.bf16.mxu0 %v1073
        %1356 = vmatpush1.bf16.msra.mxu0 %v1072
        %1357 = vmatprep.subr.bf16.mxu0 %v1081
        %1358 = vmatpush1.bf16.msra.mxu0 %v1080
        %1359 = vmatprep.mubr.bf16.mxu0 %v389
        %1360 = vmatmul.mubr.bf16.gmra.mrb[0].mxu0 %v388
        %v1361 = vpop.f32.mrb[0].mxu0
        %v1362 = vadd.f32 %v545, %v1361
        %v1363 = vpop.f32.mrb[0].mxu0
        %v1364 = vadd.f32 %v549, %v1363
        %v1365 = vpop.f32.mrb[0].mxu0
        %v1366 = vadd.f32 %v545, %v1365
        %v1367 = vpop.f32.mrb[0].mxu0
        %v1368 = vadd.f32 %v549, %v1367
        %1369 = vmatprep.mubr.bf16.mxu0 %v391
        %1370 = vmatmul.mubr.bf16.gmra.mrb[0].mxu0 %v390
        %v1371 = vpop.f32.mrb[0].mxu0
        %v1372 = vadd.f32 %v545, %v1371
        %v1373 = vpop.f32.mrb[0].mxu0
        %v1374 = vadd.f32 %v549, %v1373
        %v1375 = vpop.f32.mrb[0].mxu0
        %v1376 = vadd.f32 %v545, %v1375
        %v1377 = vpop.f32.mrb[0].mxu0
        %v1378 = vadd.f32 %v549, %v1377
        %1379 = vmatprep.mubr.bf16.mxu0 %v393
        %1380 = vmatmul.mubr.bf16.gmra.mrb[0].mxu0 %v392
        %v1381 = vpop.f32.mrb[0].mxu0
        %v1382 = vadd.f32 %v545, %v1381
        %v1383 = vpop.f32.mrb[0].mxu0
        %v1384 = vadd.f32 %v549, %v1383
        %v1385 = vpop.f32.mrb[0].mxu0
        %v1386 = vadd.f32 %v545, %v1385
        %v1387 = vpop.f32.mrb[0].mxu0
        %v1388 = vadd.f32 %v549, %v1387
        %1389 = vmatprep.mubr.bf16.mxu0 %v395
        %1390 = vmatmul.mubr.bf16.gmra.mrb[0].mxu0 %v394
        %v1391 = vpop.f32.mrb[0].mxu0
        %v1392 = vadd.f32 %v545, %v1391
        %v1393 = vpop.f32.mrb[0].mxu0
        %v1394 = vadd.f32 %v549, %v1393
        %v1395 = vpop.f32.mrb[0].mxu0
        %v1396 = vadd.f32 %v545, %v1395
        %v1397 = vpop.f32.mrb[0].mxu0
        %v1398 = vadd.f32 %v549, %v1397
        %1399 = vmatprep.mubr.bf16.mxu0 %v397
        %1400 = vmatmul.mubr.bf16.gmra.mrb[0].mxu0 %v396
        %v1401 = vpop.f32.mrb[0].mxu0
        %v1402 = vadd.f32 %v545, %v1401
        %v1403 = vpop.f32.mrb[0].mxu0
        %v1404 = vadd.f32 %v549, %v1403
        %v1405 = vpop.f32.mrb[0].mxu0
        %v1406 = vadd.f32 %v545, %v1405
        %v1407 = vpop.f32.mrb[0].mxu0
        %v1408 = vadd.f32 %v549, %v1407
        %1409 = vmatprep.mubr.bf16.mxu0 %v399
        %1410 = vmatmul.mubr.bf16.gmra.mrb[0].mxu0 %v398
        %v1411 = vpop.f32.mrb[0].mxu0
        %v1412 = vadd.f32 %v545, %v1411
        %v1413 = vpop.f32.mrb[0].mxu0
        %v1414 = vadd.f32 %v549, %v1413
        %v1415 = vpop.f32.mrb[0].mxu0
        %v1416 = vadd.f32 %v545, %v1415
        %v1417 = vpop.f32.mrb[0].mxu0
        %v1418 = vadd.f32 %v549, %v1417
        %1419 = vmatprep.mubr.bf16.mxu0 %v401
        %1420 = vmatmul.mubr.bf16.gmra.mrb[0].mxu0 %v400
        %v1421 = vpop.f32.mrb[0].mxu0
        %v1422 = vadd.f32 %v545, %v1421
        %v1423 = vpop.f32.mrb[0].mxu0
        %v1424 = vadd.f32 %v549, %v1423
        %v1425 = vpop.f32.mrb[0].mxu0
        %v1426 = vadd.f32 %v545, %v1425
        %v1427 = vpop.f32.mrb[0].mxu0
        %v1428 = vadd.f32 %v549, %v1427
        %1429 = vmatprep.mubr.bf16.mxu0 %v403
        %1430 = vmatmul.mubr.bf16.gmra.mrb[0].mxu0 %v402
        %v1431 = vpop.f32.mrb[0].mxu0
        %v1432 = vadd.f32 %v545, %v1431
        %v1433 = vpop.f32.mrb[0].mxu0
        %v1434 = vadd.f32 %v549, %v1433
        %v1435 = vpop.f32.mrb[0].mxu0
        %v1436 = vadd.f32 %v545, %v1435
        %v1437 = vpop.f32.mrb[0].mxu0
        %v1438 = vadd.f32 %v549, %v1437
        %1439 = vdwg.mxu0
        %1440 = vmatprep.subr.bf16.mxu0 %v963
        %1441 = vmatpush1.bf16.msra.mxu0 %v962
        %1442 = vmatprep.subr.bf16.mxu0 %v971
        %1443 = vmatpush1.bf16.msra.mxu0 %v970
        %1444 = vmatprep.subr.bf16.mxu0 %v979
        %1445 = vmatpush1.bf16.msra.mxu0 %v978
        %1446 = vmatprep.subr.bf16.mxu0 %v987
        %1447 = vmatpush1.bf16.msra.mxu0 %v986
        %1448 = vmatprep.subr.bf16.mxu0 %v995
        %1449 = vmatpush1.bf16.msra.mxu0 %v994
        %1450 = vmatprep.subr.bf16.mxu0 %v1003
        %1451 = vmatpush1.bf16.msra.mxu0 %v1002
        %1452 = vmatprep.subr.bf16.mxu0 %v1011
        %1453 = vmatpush1.bf16.msra.mxu0 %v1010
        %1454 = vmatprep.subr.bf16.mxu0 %v1019
        %1455 = vmatpush1.bf16.msra.mxu0 %v1018
        %1456 = vmatprep.subr.bf16.mxu0 %v1027
        %1457 = vmatpush1.bf16.msra.mxu0 %v1026
        %1458 = vmatprep.subr.bf16.mxu0 %v1035
        %1459 = vmatpush1.bf16.msra.mxu0 %v1034
        %1460 = vmatprep.subr.bf16.mxu0 %v1043
        %1461 = vmatpush1.bf16.msra.mxu0 %v1042
        %1462 = vmatprep.subr.bf16.mxu0 %v1051
        %1463 = vmatpush1.bf16.msra.mxu0 %v1050
        %1464 = vmatprep.subr.bf16.mxu0 %v1059
        %1465 = vmatpush1.bf16.msra.mxu0 %v1058
        %1466 = vmatprep.subr.bf16.mxu0 %v1067
        %1467 = vmatpush1.bf16.msra.mxu0 %v1066
        %1468 = vmatprep.subr.bf16.mxu0 %v1075
        %1469 = vmatpush1.bf16.msra.mxu0 %v1074
        %1470 = vmatprep.subr.bf16.mxu0 %v1083
        %1471 = vmatpush1.bf16.msra.mxu0 %v1082
        %1472 = vmatprep.mubr.bf16.mxu0 %v389
        %1473 = vmatmul.mubr.bf16.gmra.mrb[0].mxu0 %v388
        %v1474 = vpop.f32.mrb[0].mxu0
        %v1475 = vadd.f32 %v553, %v1474
        %v1476 = vpop.f32.mrb[0].mxu0
        %v1477 = vadd.f32 %v557, %v1476
        %v1478 = vpop.f32.mrb[0].mxu0
        %v1479 = vadd.f32 %v553, %v1478
        %v1480 = vpop.f32.mrb[0].mxu0
        %v1481 = vadd.f32 %v557, %v1480
        %1482 = vmatprep.mubr.bf16.mxu0 %v391
        %1483 = vmatmul.mubr.bf16.gmra.mrb[0].mxu0 %v390
        %v1484 = vpop.f32.mrb[0].mxu0
        %v1485 = vadd.f32 %v553, %v1484
        %v1486 = vpop.f32.mrb[0].mxu0
        %v1487 = vadd.f32 %v557, %v1486
        %v1488 = vpop.f32.mrb[0].mxu0
        %v1489 = vadd.f32 %v553, %v1488
        %v1490 = vpop.f32.mrb[0].mxu0
        %v1491 = vadd.f32 %v557, %v1490
        %1492 = vmatprep.mubr.bf16.mxu0 %v393
        %1493 = vmatmul.mubr.bf16.gmra.mrb[0].mxu0 %v392
        %v1494 = vpop.f32.mrb[0].mxu0
        %v1495 = vadd.f32 %v553, %v1494
        %v1496 = vpop.f32.mrb[0].mxu0
        %v1497 = vadd.f32 %v557, %v1496
        %v1498 = vpop.f32.mrb[0].mxu0
        %v1499 = vadd.f32 %v553, %v1498
        %v1500 = vpop.f32.mrb[0].mxu0
        %v1501 = vadd.f32 %v557, %v1500
        %1502 = vmatprep.mubr.bf16.mxu0 %v395
        %1503 = vmatmul.mubr.bf16.gmra.mrb[0].mxu0 %v394
        %v1504 = vpop.f32.mrb[0].mxu0
        %v1505 = vadd.f32 %v553, %v1504
        %v1506 = vpop.f32.mrb[0].mxu0
        %v1507 = vadd.f32 %v557, %v1506
        %v1508 = vpop.f32.mrb[0].mxu0
        %v1509 = vadd.f32 %v553, %v1508
        %v1510 = vpop.f32.mrb[0].mxu0
        %v1511 = vadd.f32 %v557, %v1510
        %1512 = vmatprep.mubr.bf16.mxu0 %v397
        %1513 = vmatmul.mubr.bf16.gmra.mrb[0].mxu0 %v396
        %v1514 = vpop.f32.mrb[0].mxu0
        %v1515 = vadd.f32 %v553, %v1514
        %v1516 = vpop.f32.mrb[0].mxu0
        %v1517 = vadd.f32 %v557, %v1516
        %v1518 = vpop.f32.mrb[0].mxu0
        %v1519 = vadd.f32 %v553, %v1518
        %v1520 = vpop.f32.mrb[0].mxu0
        %v1521 = vadd.f32 %v557, %v1520
        %1522 = vmatprep.mubr.bf16.mxu0 %v399
        %1523 = vmatmul.mubr.bf16.gmra.mrb[0].mxu0 %v398
        %v1524 = vpop.f32.mrb[0].mxu0
        %v1525 = vadd.f32 %v553, %v1524
        %v1526 = vpop.f32.mrb[0].mxu0
        %v1527 = vadd.f32 %v557, %v1526
        %v1528 = vpop.f32.mrb[0].mxu0
        %v1529 = vadd.f32 %v553, %v1528
        %v1530 = vpop.f32.mrb[0].mxu0
        %v1531 = vadd.f32 %v557, %v1530
        %1532 = vmatprep.mubr.bf16.mxu0 %v401
        %1533 = vmatmul.mubr.bf16.gmra.mrb[0].mxu0 %v400
        %v1534 = vpop.f32.mrb[0].mxu0
        %v1535 = vadd.f32 %v553, %v1534
        %v1536 = vpop.f32.mrb[0].mxu0
        %v1537 = vadd.f32 %v557, %v1536
        %v1538 = vpop.f32.mrb[0].mxu0
        %v1539 = vadd.f32 %v553, %v1538
        %v1540 = vpop.f32.mrb[0].mxu0
        %v1541 = vadd.f32 %v557, %v1540
        %1542 = vmatprep.mubr.bf16.mxu0 %v403
        %1543 = vmatmul.mubr.bf16.gmra.mrb[0].mxu0 %v402
        %v1544 = vpop.f32.mrb[0].mxu0
        %v1545 = vadd.f32 %v553, %v1544
        %v1546 = vpop.f32.mrb[0].mxu0
        %v1547 = vadd.f32 %v557, %v1546
        %v1548 = vpop.f32.mrb[0].mxu0
        %v1549 = vadd.f32 %v553, %v1548
        %v1550 = vpop.f32.mrb[0].mxu0
        %v1551 = vadd.f32 %v557, %v1550
        %1552 = vdwg.mxu0
        %1553 = vmatprep.subr.bf16.mxu0 %v965
        %1554 = vmatpush1.bf16.msra.mxu0 %v964
        %1555 = vmatprep.subr.bf16.mxu0 %v973
        %1556 = vmatpush1.bf16.msra.mxu0 %v972
        %1557 = vmatprep.subr.bf16.mxu0 %v981
        %1558 = vmatpush1.bf16.msra.mxu0 %v980
        %1559 = vmatprep.subr.bf16.mxu0 %v989
        %1560 = vmatpush1.bf16.msra.mxu0 %v988
        %1561 = vmatprep.subr.bf16.mxu0 %v997
        %1562 = vmatpush1.bf16.msra.mxu0 %v996
        %1563 = vmatprep.subr.bf16.mxu0 %v1005
        %1564 = vmatpush1.bf16.msra.mxu0 %v1004
        %1565 = vmatprep.subr.bf16.mxu0 %v1013
        %1566 = vmatpush1.bf16.msra.mxu0 %v1012
        %1567 = vmatprep.subr.bf16.mxu0 %v1021
        %1568 = vmatpush1.bf16.msra.mxu0 %v1020
        %1569 = vmatprep.subr.bf16.mxu0 %v1029
        %1570 = vmatpush1.bf16.msra.mxu0 %v1028
        %1571 = vmatprep.subr.bf16.mxu0 %v1037
        %1572 = vmatpush1.bf16.msra.mxu0 %v1036
        %1573 = vmatprep.subr.bf16.mxu0 %v1045
        %1574 = vmatpush1.bf16.msra.mxu0 %v1044
        %1575 = vmatprep.subr.bf16.mxu0 %v1053
        %1576 = vmatpush1.bf16.msra.mxu0 %v1052
        %1577 = vmatprep.subr.bf16.mxu0 %v1061
        %1578 = vmatpush1.bf16.msra.mxu0 %v1060
        %1579 = vmatprep.subr.bf16.mxu0 %v1069
        %1580 = vmatpush1.bf16.msra.mxu0 %v1068
        %1581 = vmatprep.subr.bf16.mxu0 %v1077
        %1582 = vmatpush1.bf16.msra.mxu0 %v1076
        %1583 = vmatprep.subr.bf16.mxu0 %v1085
        %1584 = vmatpush1.bf16.msra.mxu0 %v1084
        %1585 = vmatprep.mubr.bf16.mxu0 %v389
        %1586 = vmatmul.mubr.bf16.gmra.mrb[0].mxu0 %v388
        %v1587 = vpop.f32.mrb[0].mxu0
        %v1588 = vadd.f32 %v561, %v1587
        %v1589 = vpop.f32.mrb[0].mxu0
        %v1590 = vadd.f32 %v565, %v1589
        %v1591 = vpop.f32.mrb[0].mxu0
        %v1592 = vadd.f32 %v561, %v1591
        %v1593 = vpop.f32.mrb[0].mxu0
        %v1594 = vadd.f32 %v565, %v1593
        %1595 = vmatprep.mubr.bf16.mxu0 %v391
        %1596 = vmatmul.mubr.bf16.gmra.mrb[0].mxu0 %v390
        %v1597 = vpop.f32.mrb[0].mxu0
        %v1598 = vadd.f32 %v561, %v1597
        %v1599 = vpop.f32.mrb[0].mxu0
        %v1600 = vadd.f32 %v565, %v1599
        %v1601 = vpop.f32.mrb[0].mxu0
        %v1602 = vadd.f32 %v561, %v1601
        %v1603 = vpop.f32.mrb[0].mxu0
        %v1604 = vadd.f32 %v565, %v1603
        %1605 = vmatprep.mubr.bf16.mxu0 %v393
        %1606 = vmatmul.mubr.bf16.gmra.mrb[0].mxu0 %v392
        %v1607 = vpop.f32.mrb[0].mxu0
        %v1608 = vadd.f32 %v561, %v1607
        %v1609 = vpop.f32.mrb[0].mxu0
        %v1610 = vadd.f32 %v565, %v1609
        %v1611 = vpop.f32.mrb[0].mxu0
        %v1612 = vadd.f32 %v561, %v1611
        %v1613 = vpop.f32.mrb[0].mxu0
        %v1614 = vadd.f32 %v565, %v1613
        %1615 = vmatprep.mubr.bf16.mxu0 %v395
        %1616 = vmatmul.mubr.bf16.gmra.mrb[0].mxu0 %v394
        %v1617 = vpop.f32.mrb[0].mxu0
        %v1618 = vadd.f32 %v561, %v1617
        %v1619 = vpop.f32.mrb[0].mxu0
        %v1620 = vadd.f32 %v565, %v1619
        %v1621 = vpop.f32.mrb[0].mxu0
        %v1622 = vadd.f32 %v561, %v1621
        %v1623 = vpop.f32.mrb[0].mxu0
        %v1624 = vadd.f32 %v565, %v1623
        %1625 = vmatprep.mubr.bf16.mxu0 %v397
        %1626 = vmatmul.mubr.bf16.gmra.mrb[0].mxu0 %v396
        %v1627 = vpop.f32.mrb[0].mxu0
        %v1628 = vadd.f32 %v561, %v1627
        %v1629 = vpop.f32.mrb[0].mxu0
        %v1630 = vadd.f32 %v565, %v1629
        %v1631 = vpop.f32.mrb[0].mxu0
        %v1632 = vadd.f32 %v561, %v1631
        %v1633 = vpop.f32.mrb[0].mxu0
        %v1634 = vadd.f32 %v565, %v1633
        %1635 = vmatprep.mubr.bf16.mxu0 %v399
        %1636 = vmatmul.mubr.bf16.gmra.mrb[0].mxu0 %v398
        %v1637 = vpop.f32.mrb[0].mxu0
        %v1638 = vadd.f32 %v561, %v1637
        %v1639 = vpop.f32.mrb[0].mxu0
        %v1640 = vadd.f32 %v565, %v1639
        %v1641 = vpop.f32.mrb[0].mxu0
        %v1642 = vadd.f32 %v561, %v1641
        %v1643 = vpop.f32.mrb[0].mxu0
        %v1644 = vadd.f32 %v565, %v1643
        %1645 = vmatprep.mubr.bf16.mxu0 %v401
        %1646 = vmatmul.mubr.bf16.gmra.mrb[0].mxu0 %v400
        %v1647 = vpop.f32.mrb[0].mxu0
        %v1648 = vadd.f32 %v561, %v1647
        %v1649 = vpop.f32.mrb[0].mxu0
        %v1650 = vadd.f32 %v565, %v1649
        %v1651 = vpop.f32.mrb[0].mxu0
        %v1652 = vadd.f32 %v561, %v1651
        %v1653 = vpop.f32.mrb[0].mxu0
        %v1654 = vadd.f32 %v565, %v1653
        %1655 = vmatprep.mubr.bf16.mxu0 %v403
        %1656 = vmatmul.mubr.bf16.gmra.mrb[0].mxu0 %v402
        %v1657 = vpop.f32.mrb[0].mxu0
        %v1658 = vadd.f32 %v561, %v1657
        %v1659 = vpop.f32.mrb[0].mxu0
        %v1660 = vadd.f32 %v565, %v1659
        %v1661 = vpop.f32.mrb[0].mxu0
        %v1662 = vadd.f32 %v561, %v1661
        %v1663 = vpop.f32.mrb[0].mxu0
        %v1664 = vadd.f32 %v565, %v1663
        %1665 = vdwg.mxu0
        %v1666 = vmul.f32 %v1249, 0.01
        %v1667 = vmul.f32 %v1251, 0.01
        %v1668 = vmul.f32 %v1362, 0.01
        %v1669 = vmul.f32 %v1364, 0.01
        %v1670 = vmul.f32 %v1475, 0.01
        %v1671 = vmul.f32 %v1477, 0.01
        %v1672 = vmul.f32 %v1588, 0.01
        %v1673 = vmul.f32 %v1590, 0.01
        %v1674 = vmul.f32 %v1253, 0.01
        %v1675 = vmul.f32 %v1255, 0.01
        %v1676 = vmul.f32 %v1366, 0.01
        %v1677 = vmul.f32 %v1368, 0.01
        %v1678 = vmul.f32 %v1479, 0.01
        %v1679 = vmul.f32 %v1481, 0.01
        %v1680 = vmul.f32 %v1592, 0.01
        %v1681 = vmul.f32 %v1594, 0.01
        %v1682 = vmul.f32 %v1259, 0.01
        %v1683 = vmul.f32 %v1261, 0.01
        %v1684 = vmul.f32 %v1372, 0.01
        %v1685 = vmul.f32 %v1374, 0.01
        %v1686 = vmul.f32 %v1485, 0.01
        %v1687 = vmul.f32 %v1487, 0.01
        %v1688 = vmul.f32 %v1598, 0.01
        %v1689 = vmul.f32 %v1600, 0.01
        %v1690 = vmul.f32 %v1263, 0.01
        %v1691 = vmul.f32 %v1265, 0.01
        %v1692 = vmul.f32 %v1376, 0.01
        %v1693 = vmul.f32 %v1378, 0.01
        %v1694 = vmul.f32 %v1489, 0.01
        %v1695 = vmul.f32 %v1491, 0.01
        %v1696 = vmul.f32 %v1602, 0.01
        %v1697 = vmul.f32 %v1604, 0.01
        %v1698 = vmul.f32 %v1269, 0.01
        %v1699 = vmul.f32 %v1271, 0.01
        %v1700 = vmul.f32 %v1382, 0.01
        %v1701 = vmul.f32 %v1384, 0.01
        %v1702 = vmul.f32 %v1495, 0.01
        %v1703 = vmul.f32 %v1497, 0.01
        %v1704 = vmul.f32 %v1608, 0.01
        %v1705 = vmul.f32 %v1610, 0.01
        %v1706 = vmul.f32 %v1273, 0.01
        %v1707 = vmul.f32 %v1275, 0.01
        %v1708 = vmul.f32 %v1386, 0.01
        %v1709 = vmul.f32 %v1388, 0.01
        %v1710 = vmul.f32 %v1499, 0.01
        %v1711 = vmul.f32 %v1501, 0.01
        %v1712 = vmul.f32 %v1612, 0.01
        %v1713 = vmul.f32 %v1614, 0.01
        %v1714 = vmul.f32 %v1279, 0.01
        %v1715 = vmul.f32 %v1281, 0.01
        %v1716 = vmul.f32 %v1392, 0.01
        %v1717 = vmul.f32 %v1394, 0.01
        %v1718 = vmul.f32 %v1505, 0.01
        %v1719 = vmul.f32 %v1507, 0.01
        %v1720 = vmul.f32 %v1618, 0.01
        %v1721 = vmul.f32 %v1620, 0.01
        %v1722 = vmul.f32 %v1283, 0.01
        %v1723 = vmul.f32 %v1285, 0.01
        %v1724 = vmul.f32 %v1396, 0.01
        %v1725 = vmul.f32 %v1398, 0.01
        %v1726 = vmul.f32 %v1509, 0.01
        %v1727 = vmul.f32 %v1511, 0.01
        %v1728 = vmul.f32 %v1622, 0.01
        %v1729 = vmul.f32 %v1624, 0.01
        %v1730 = vmul.f32 %v1289, 0.01
        %v1731 = vmul.f32 %v1291, 0.01
        %v1732 = vmul.f32 %v1402, 0.01
        %v1733 = vmul.f32 %v1404, 0.01
        %v1734 = vmul.f32 %v1515, 0.01
        %v1735 = vmul.f32 %v1517, 0.01
        %v1736 = vmul.f32 %v1628, 0.01
        %v1737 = vmul.f32 %v1630, 0.01
        %v1738 = vmul.f32 %v1293, 0.01
        %v1739 = vmul.f32 %v1295, 0.01
        %v1740 = vmul.f32 %v1406, 0.01
        %v1741 = vmul.f32 %v1408, 0.01
        %v1742 = vmul.f32 %v1519, 0.01
        %v1743 = vmul.f32 %v1521, 0.01
        %v1744 = vmul.f32 %v1632, 0.01
        %v1745 = vmul.f32 %v1634, 0.01
        %v1746 = vmul.f32 %v1299, 0.01
        %v1747 = vmul.f32 %v1301, 0.01
        %v1748 = vmul.f32 %v1412, 0.01
        %v1749 = vmul.f32 %v1414, 0.01
        %v1750 = vmul.f32 %v1525, 0.01
        %v1751 = vmul.f32 %v1527, 0.01
        %v1752 = vmul.f32 %v1638, 0.01
        %v1753 = vmul.f32 %v1640, 0.01
        %v1754 = vmul.f32 %v1303, 0.01
        %v1755 = vmul.f32 %v1305, 0.01
        %v1756 = vmul.f32 %v1416, 0.01
        %v1757 = vmul.f32 %v1418, 0.01
        %v1758 = vmul.f32 %v1529, 0.01
        %v1759 = vmul.f32 %v1531, 0.01
        %v1760 = vmul.f32 %v1642, 0.01
        %v1761 = vmul.f32 %v1644, 0.01
        %v1762 = vmul.f32 %v1309, 0.01
        %v1763 = vmul.f32 %v1311, 0.01
        %v1764 = vmul.f32 %v1422, 0.01
        %v1765 = vmul.f32 %v1424, 0.01
        %v1766 = vmul.f32 %v1535, 0.01
        %v1767 = vmul.f32 %v1537, 0.01
        %v1768 = vmul.f32 %v1648, 0.01
        %v1769 = vmul.f32 %v1650, 0.01
        %v1770 = vmul.f32 %v1313, 0.01
        %v1771 = vmul.f32 %v1315, 0.01
        %v1772 = vmul.f32 %v1426, 0.01
        %v1773 = vmul.f32 %v1428, 0.01
        %v1774 = vmul.f32 %v1539, 0.01
        %v1775 = vmul.f32 %v1541, 0.01
        %v1776 = vmul.f32 %v1652, 0.01
        %v1777 = vmul.f32 %v1654, 0.01
        %v1778 = vmul.f32 %v1319, 0.01
        %v1779 = vmul.f32 %v1321, 0.01
        %v1780 = vmul.f32 %v1432, 0.01
        %v1781 = vmul.f32 %v1434, 0.01
        %v1782 = vmul.f32 %v1545, 0.01
        %v1783 = vmul.f32 %v1547, 0.01
        %v1784 = vmul.f32 %v1658, 0.01
        %v1785 = vmul.f32 %v1660, 0.01
        %v1786 = vmul.f32 %v1323, 0.01
        %v1787 = vmul.f32 %v1325, 0.01
        %v1788 = vmul.f32 %v1436, 0.01
        %v1789 = vmul.f32 %v1438, 0.01
        %v1790 = vmul.f32 %v1549, 0.01
        %v1791 = vmul.f32 %v1551, 0.01
        %v1792 = vmul.f32 %v1662, 0.01
        %v1793 = vmul.f32 %v1664, 0.01
        %v1794 = vmax.f32 %v1249, %v1666
        %v1795 = vmax.f32 %v1251, %v1667
        %v1796 = vmax.f32 %v1362, %v1668
        %v1797 = vmax.f32 %v1364, %v1669
        %v1798 = vmax.f32 %v1475, %v1670
        %v1799 = vmax.f32 %v1477, %v1671
        %v1800 = vmax.f32 %v1588, %v1672
        %v1801 = vmax.f32 %v1590, %v1673
        %v1802 = vmax.f32 %v1253, %v1674
        %v1803 = vmax.f32 %v1255, %v1675
        %v1804 = vmax.f32 %v1366, %v1676
        %v1805 = vmax.f32 %v1368, %v1677
        %v1806 = vmax.f32 %v1479, %v1678
        %v1807 = vmax.f32 %v1481, %v1679
        %v1808 = vmax.f32 %v1592, %v1680
        %v1809 = vmax.f32 %v1594, %v1681
        %v1810 = vmax.f32 %v1259, %v1682
        %v1811 = vmax.f32 %v1261, %v1683
        %v1812 = vmax.f32 %v1372, %v1684
        %v1813 = vmax.f32 %v1374, %v1685
        %v1814 = vmax.f32 %v1485, %v1686
        %v1815 = vmax.f32 %v1487, %v1687
        %v1816 = vmax.f32 %v1598, %v1688
        %v1817 = vmax.f32 %v1600, %v1689
        %v1818 = vmax.f32 %v1263, %v1690
        %v1819 = vmax.f32 %v1265, %v1691
        %v1820 = vmax.f32 %v1376, %v1692
        %v1821 = vmax.f32 %v1378, %v1693
        %v1822 = vmax.f32 %v1489, %v1694
        %v1823 = vmax.f32 %v1491, %v1695
        %v1824 = vmax.f32 %v1602, %v1696
        %v1825 = vmax.f32 %v1604, %v1697
        %v1826 = vmax.f32 %v1269, %v1698
        %v1827 = vmax.f32 %v1271, %v1699
        %v1828 = vmax.f32 %v1382, %v1700
        %v1829 = vmax.f32 %v1384, %v1701
        %v1830 = vmax.f32 %v1495, %v1702
        %v1831 = vmax.f32 %v1497, %v1703
        %v1832 = vmax.f32 %v1608, %v1704
        %v1833 = vmax.f32 %v1610, %v1705
        %v1834 = vmax.f32 %v1273, %v1706
        %v1835 = vmax.f32 %v1275, %v1707
        %v1836 = vmax.f32 %v1386, %v1708
        %v1837 = vmax.f32 %v1388, %v1709
        %v1838 = vmax.f32 %v1499, %v1710
        %v1839 = vmax.f32 %v1501, %v1711
        %v1840 = vmax.f32 %v1612, %v1712
        %v1841 = vmax.f32 %v1614, %v1713
        %v1842 = vmax.f32 %v1279, %v1714
        %v1843 = vmax.f32 %v1281, %v1715
        %v1844 = vmax.f32 %v1392, %v1716
        %v1845 = vmax.f32 %v1394, %v1717
        %v1846 = vmax.f32 %v1505, %v1718
        %v1847 = vmax.f32 %v1507, %v1719
        %v1848 = vmax.f32 %v1618, %v1720
        %v1849 = vmax.f32 %v1620, %v1721
        %v1850 = vmax.f32 %v1283, %v1722
        %v1851 = vmax.f32 %v1285, %v1723
        %v1852 = vmax.f32 %v1396, %v1724
        %v1853 = vmax.f32 %v1398, %v1725
        %v1854 = vmax.f32 %v1509, %v1726
        %v1855 = vmax.f32 %v1511, %v1727
        %v1856 = vmax.f32 %v1622, %v1728
        %v1857 = vmax.f32 %v1624, %v1729
        %v1858 = vmax.f32 %v1289, %v1730
        %v1859 = vmax.f32 %v1291, %v1731
        %v1860 = vmax.f32 %v1402, %v1732
        %v1861 = vmax.f32 %v1404, %v1733
        %v1862 = vmax.f32 %v1515, %v1734
        %v1863 = vmax.f32 %v1517, %v1735
        %v1864 = vmax.f32 %v1628, %v1736
        %v1865 = vmax.f32 %v1630, %v1737
        %v1866 = vmax.f32 %v1293, %v1738
        %v1867 = vmax.f32 %v1295, %v1739
        %v1868 = vmax.f32 %v1406, %v1740
        %v1869 = vmax.f32 %v1408, %v1741
        %v1870 = vmax.f32 %v1519, %v1742
        %v1871 = vmax.f32 %v1521, %v1743
        %v1872 = vmax.f32 %v1632, %v1744
        %v1873 = vmax.f32 %v1634, %v1745
        %v1874 = vmax.f32 %v1299, %v1746
        %v1875 = vmax.f32 %v1301, %v1747
        %v1876 = vmax.f32 %v1412, %v1748
        %v1877 = vmax.f32 %v1414, %v1749
        %v1878 = vmax.f32 %v1525, %v1750
        %v1879 = vmax.f32 %v1527, %v1751
        %v1880 = vmax.f32 %v1638, %v1752
        %v1881 = vmax.f32 %v1640, %v1753
        %v1882 = vmax.f32 %v1303, %v1754
        %v1883 = vmax.f32 %v1305, %v1755
        %v1884 = vmax.f32 %v1416, %v1756
        %v1885 = vmax.f32 %v1418, %v1757
        %v1886 = vmax.f32 %v1529, %v1758
        %v1887 = vmax.f32 %v1531, %v1759
        %v1888 = vmax.f32 %v1642, %v1760
        %v1889 = vmax.f32 %v1644, %v1761
        %v1890 = vmax.f32 %v1309, %v1762
        %v1891 = vmax.f32 %v1311, %v1763
        %v1892 = vmax.f32 %v1422, %v1764
        %v1893 = vmax.f32 %v1424, %v1765
        %v1894 = vmax.f32 %v1535, %v1766
        %v1895 = vmax.f32 %v1537, %v1767
        %v1896 = vmax.f32 %v1648, %v1768
        %v1897 = vmax.f32 %v1650, %v1769
        %v1898 = vmax.f32 %v1313, %v1770
        %v1899 = vmax.f32 %v1315, %v1771
        %v1900 = vmax.f32 %v1426, %v1772
        %v1901 = vmax.f32 %v1428, %v1773
        %v1902 = vmax.f32 %v1539, %v1774
        %v1903 = vmax.f32 %v1541, %v1775
        %v1904 = vmax.f32 %v1652, %v1776
        %v1905 = vmax.f32 %v1654, %v1777
        %v1906 = vmax.f32 %v1319, %v1778
        %v1907 = vmax.f32 %v1321, %v1779
        %v1908 = vmax.f32 %v1432, %v1780
        %v1909 = vmax.f32 %v1434, %v1781
        %v1910 = vmax.f32 %v1545, %v1782
        %v1911 = vmax.f32 %v1547, %v1783
        %v1912 = vmax.f32 %v1658, %v1784
        %v1913 = vmax.f32 %v1660, %v1785
        %v1914 = vmax.f32 %v1323, %v1786
        %v1915 = vmax.f32 %v1325, %v1787
        %v1916 = vmax.f32 %v1436, %v1788
        %v1917 = vmax.f32 %v1438, %v1789
        %v1918 = vmax.f32 %v1549, %v1790
        %v1919 = vmax.f32 %v1551, %v1791
        %v1920 = vmax.f32 %v1662, %v1792
        %v1921 = vmax.f32 %v1664, %v1793
        %v1922 = vpack.c.bf16 %v1802, %v1794
        %v1923 = vpack.c.bf16 %v1803, %v1795
        %v1924 = vpack.c.bf16 %v1804, %v1796
        %v1925 = vpack.c.bf16 %v1805, %v1797
        %v1926 = vpack.c.bf16 %v1806, %v1798
        %v1927 = vpack.c.bf16 %v1807, %v1799
        %v1928 = vpack.c.bf16 %v1808, %v1800
        %v1929 = vpack.c.bf16 %v1809, %v1801
        %v1930 = vpack.c.bf16 %v1818, %v1810
        %v1931 = vpack.c.bf16 %v1819, %v1811
        %v1932 = vpack.c.bf16 %v1820, %v1812
        %v1933 = vpack.c.bf16 %v1821, %v1813
        %v1934 = vpack.c.bf16 %v1822, %v1814
        %v1935 = vpack.c.bf16 %v1823, %v1815
        %v1936 = vpack.c.bf16 %v1824, %v1816
        %v1937 = vpack.c.bf16 %v1825, %v1817
        %v1938 = vpack.c.bf16 %v1834, %v1826
        %v1939 = vpack.c.bf16 %v1835, %v1827
        %v1940 = vpack.c.bf16 %v1836, %v1828
        %v1941 = vpack.c.bf16 %v1837, %v1829
        %v1942 = vpack.c.bf16 %v1838, %v1830
        %v1943 = vpack.c.bf16 %v1839, %v1831
        %v1944 = vpack.c.bf16 %v1840, %v1832
        %v1945 = vpack.c.bf16 %v1841, %v1833
        %v1946 = vpack.c.bf16 %v1850, %v1842
        %v1947 = vpack.c.bf16 %v1851, %v1843
        %v1948 = vpack.c.bf16 %v1852, %v1844
        %v1949 = vpack.c.bf16 %v1853, %v1845
        %v1950 = vpack.c.bf16 %v1854, %v1846
        %v1951 = vpack.c.bf16 %v1855, %v1847
        %v1952 = vpack.c.bf16 %v1856, %v1848
        %v1953 = vpack.c.bf16 %v1857, %v1849
        %v1954 = vpack.c.bf16 %v1866, %v1858
        %v1955 = vpack.c.bf16 %v1867, %v1859
        %v1956 = vpack.c.bf16 %v1868, %v1860
        %v1957 = vpack.c.bf16 %v1869, %v1861
        %v1958 = vpack.c.bf16 %v1870, %v1862
        %v1959 = vpack.c.bf16 %v1871, %v1863
        %v1960 = vpack.c.bf16 %v1872, %v1864
        %v1961 = vpack.c.bf16 %v1873, %v1865
        %v1962 = vpack.c.bf16 %v1882, %v1874
        %v1963 = vpack.c.bf16 %v1883, %v1875
        %v1964 = vpack.c.bf16 %v1884, %v1876
        %v1965 = vpack.c.bf16 %v1885, %v1877
        %v1966 = vpack.c.bf16 %v1886, %v1878
        %v1967 = vpack.c.bf16 %v1887, %v1879
        %v1968 = vpack.c.bf16 %v1888, %v1880
        %v1969 = vpack.c.bf16 %v1889, %v1881
        %v1970 = vpack.c.bf16 %v1898, %v1890
        %v1971 = vpack.c.bf16 %v1899, %v1891
        %v1972 = vpack.c.bf16 %v1900, %v1892
        %v1973 = vpack.c.bf16 %v1901, %v1893
        %v1974 = vpack.c.bf16 %v1902, %v1894
        %v1975 = vpack.c.bf16 %v1903, %v1895
        %v1976 = vpack.c.bf16 %v1904, %v1896
        %v1977 = vpack.c.bf16 %v1905, %v1897
        %v1978 = vpack.c.bf16 %v1914, %v1906
        %v1979 = vpack.c.bf16 %v1915, %v1907
        %v1980 = vpack.c.bf16 %v1916, %v1908
        %v1981 = vpack.c.bf16 %v1917, %v1909
        %v1982 = vpack.c.bf16 %v1918, %v1910
        %v1983 = vpack.c.bf16 %v1919, %v1911
        %v1984 = vpack.c.bf16 %v1920, %v1912
        %v1985 = vpack.c.bf16 %v1921, %v1913
        %v1986 = vld [vmem:[#allocation8] sm:$0xff]
        %v1987 = vld [vmem:[#allocation8 + $0x8] sm:$0xff]
        %v1988 = vld [vmem:[#allocation8 + $0x10] sm:$0xff]
        %v1989 = vld [vmem:[#allocation8 + $0x18] sm:$0xff]
        %v1990 = vld [vmem:[#allocation8 + $0x20] sm:$0xff]
        %v1991 = vld [vmem:[#allocation8 + $0x28] sm:$0xff]
        %v1992 = vld [vmem:[#allocation8 + $0x30] sm:$0xff]
        %v1993 = vld [vmem:[#allocation8 + $0x38] sm:$0xff]
        %v1994 = vld [vmem:[#allocation8 + $0x40] sm:$0xff]
        %v1995 = vld [vmem:[#allocation8 + $0x48] sm:$0xff]
        %v1996 = vld [vmem:[#allocation8 + $0x50] sm:$0xff]
        %v1997 = vld [vmem:[#allocation8 + $0x58] sm:$0xff]
        %v1998 = vld [vmem:[#allocation8 + $0x60] sm:$0xff]
        %v1999 = vld [vmem:[#allocation8 + $0x68] sm:$0xff]
        %v2000 = vld [vmem:[#allocation8 + $0x70] sm:$0xff]
        %v2001 = vld [vmem:[#allocation8 + $0x78] sm:$0xff]
        %v2002 = vld [vmem:[#allocation8 + $0x80] sm:$0xff]
        %v2003 = vld [vmem:[#allocation8 + $0x88] sm:$0xff]
        %v2004 = vld [vmem:[#allocation8 + $0x90] sm:$0xff]
        %v2005 = vld [vmem:[#allocation8 + $0x98] sm:$0xff]
        %v2006 = vld [vmem:[#allocation8 + $0xa0] sm:$0xff]
        %v2007 = vld [vmem:[#allocation8 + $0xa8] sm:$0xff]
        %v2008 = vld [vmem:[#allocation8 + $0xb0] sm:$0xff]
        %v2009 = vld [vmem:[#allocation8 + $0xb8] sm:$0xff]
        %v2010 = vld [vmem:[#allocation8 + $0xc0] sm:$0xff]
        %v2011 = vld [vmem:[#allocation8 + $0xc8] sm:$0xff]
        %v2012 = vld [vmem:[#allocation8 + $0xd0] sm:$0xff]
        %v2013 = vld [vmem:[#allocation8 + $0xd8] sm:$0xff]
        %v2014 = vld [vmem:[#allocation8 + $0xe0] sm:$0xff]
        %v2015 = vld [vmem:[#allocation8 + $0xe8] sm:$0xff]
        %v2016 = vld [vmem:[#allocation8 + $0xf0] sm:$0xff]
        %v2017 = vld [vmem:[#allocation8 + $0xf8] sm:$0xff]
        %v2018 = vld [vmem:[#allocation8 + $0x100] sm:$0xff]
        %v2019 = vld [vmem:[#allocation8 + $0x108] sm:$0xff]
        %v2020 = vld [vmem:[#allocation8 + $0x110] sm:$0xff]
        %v2021 = vld [vmem:[#allocation8 + $0x118] sm:$0xff]
        %v2022 = vld [vmem:[#allocation8 + $0x120] sm:$0xff]
        %v2023 = vld [vmem:[#allocation8 + $0x128] sm:$0xff]
        %v2024 = vld [vmem:[#allocation8 + $0x130] sm:$0xff]
        %v2025 = vld [vmem:[#allocation8 + $0x138] sm:$0xff]
        %v2026 = vld [vmem:[#allocation8 + $0x140] sm:$0xff]
        %v2027 = vld [vmem:[#allocation8 + $0x148] sm:$0xff]
        %v2028 = vld [vmem:[#allocation8 + $0x150] sm:$0xff]
        %v2029 = vld [vmem:[#allocation8 + $0x158] sm:$0xff]
        %v2030 = vld [vmem:[#allocation8 + $0x160] sm:$0xff]
        %v2031 = vld [vmem:[#allocation8 + $0x168] sm:$0xff]
        %v2032 = vld [vmem:[#allocation8 + $0x170] sm:$0xff]
        %v2033 = vld [vmem:[#allocation8 + $0x178] sm:$0xff]
        %v2034 = vld [vmem:[#allocation8 + $0x180] sm:$0xff]
        %v2035 = vld [vmem:[#allocation8 + $0x188] sm:$0xff]
        %v2036 = vld [vmem:[#allocation8 + $0x190] sm:$0xff]
        %v2037 = vld [vmem:[#allocation8 + $0x198] sm:$0xff]
        %v2038 = vld [vmem:[#allocation8 + $0x1a0] sm:$0xff]
        %v2039 = vld [vmem:[#allocation8 + $0x1a8] sm:$0xff]
        %v2040 = vld [vmem:[#allocation8 + $0x1b0] sm:$0xff]
        %v2041 = vld [vmem:[#allocation8 + $0x1b8] sm:$0xff]
        %v2042 = vld [vmem:[#allocation8 + $0x1c0] sm:$0xff]
        %v2043 = vld [vmem:[#allocation8 + $0x1c8] sm:$0xff]
        %v2044 = vld [vmem:[#allocation8 + $0x1d0] sm:$0xff]
        %v2045 = vld [vmem:[#allocation8 + $0x1d8] sm:$0xff]
        %v2046 = vld [vmem:[#allocation8 + $0x1e0] sm:$0xff]
        %v2047 = vld [vmem:[#allocation8 + $0x1e8] sm:$0xff]
        %v2048 = vld [vmem:[#allocation8 + $0x1f0] sm:$0xff]
        %v2049 = vld [vmem:[#allocation8 + $0x1f8] sm:$0xff]
        %v2050 = vld [vmem:[#allocation8 + $0x200] sm:$0xff]
        %v2051 = vld [vmem:[#allocation8 + $0x208] sm:$0xff]
        %v2052 = vld [vmem:[#allocation8 + $0x210] sm:$0xff]
        %v2053 = vld [vmem:[#allocation8 + $0x218] sm:$0xff]
        %v2054 = vld [vmem:[#allocation8 + $0x220] sm:$0xff]
        %v2055 = vld [vmem:[#allocation8 + $0x228] sm:$0xff]
        %v2056 = vld [vmem:[#allocation8 + $0x230] sm:$0xff]
        %v2057 = vld [vmem:[#allocation8 + $0x238] sm:$0xff]
        %v2058 = vld [vmem:[#allocation8 + $0x240] sm:$0xff]
        %v2059 = vld [vmem:[#allocation8 + $0x248] sm:$0xff]
        %v2060 = vld [vmem:[#allocation8 + $0x250] sm:$0xff]
        %v2061 = vld [vmem:[#allocation8 + $0x258] sm:$0xff]
        %v2062 = vld [vmem:[#allocation8 + $0x260] sm:$0xff]
        %v2063 = vld [vmem:[#allocation8 + $0x268] sm:$0xff]
        %v2064 = vld [vmem:[#allocation8 + $0x270] sm:$0xff]
        %v2065 = vld [vmem:[#allocation8 + $0x278] sm:$0xff]
        %v2066 = vld [vmem:[#allocation8 + $0x280] sm:$0xff]
        %v2067 = vld [vmem:[#allocation8 + $0x288] sm:$0xff]
        %v2068 = vld [vmem:[#allocation8 + $0x290] sm:$0xff]
        %v2069 = vld [vmem:[#allocation8 + $0x298] sm:$0xff]
        %v2070 = vld [vmem:[#allocation8 + $0x2a0] sm:$0xff]
        %v2071 = vld [vmem:[#allocation8 + $0x2a8] sm:$0xff]
        %v2072 = vld [vmem:[#allocation8 + $0x2b0] sm:$0xff]
        %v2073 = vld [vmem:[#allocation8 + $0x2b8] sm:$0xff]
        %v2074 = vld [vmem:[#allocation8 + $0x2c0] sm:$0xff]
        %v2075 = vld [vmem:[#allocation8 + $0x2c8] sm:$0xff]
        %v2076 = vld [vmem:[#allocation8 + $0x2d0] sm:$0xff]
        %v2077 = vld [vmem:[#allocation8 + $0x2d8] sm:$0xff]
        %v2078 = vld [vmem:[#allocation8 + $0x2e0] sm:$0xff]
        %v2079 = vld [vmem:[#allocation8 + $0x2e8] sm:$0xff]
        %v2080 = vld [vmem:[#allocation8 + $0x2f0] sm:$0xff]
        %v2081 = vld [vmem:[#allocation8 + $0x2f8] sm:$0xff]
        %v2082 = vld [vmem:[#allocation8 + $0x300] sm:$0xff]
        %v2083 = vld [vmem:[#allocation8 + $0x308] sm:$0xff]
        %v2084 = vld [vmem:[#allocation8 + $0x310] sm:$0xff]
        %v2085 = vld [vmem:[#allocation8 + $0x318] sm:$0xff]
        %v2086 = vld [vmem:[#allocation8 + $0x320] sm:$0xff]
        %v2087 = vld [vmem:[#allocation8 + $0x328] sm:$0xff]
        %v2088 = vld [vmem:[#allocation8 + $0x330] sm:$0xff]
        %v2089 = vld [vmem:[#allocation8 + $0x338] sm:$0xff]
        %v2090 = vld [vmem:[#allocation8 + $0x340] sm:$0xff]
        %v2091 = vld [vmem:[#allocation8 + $0x348] sm:$0xff]
        %v2092 = vld [vmem:[#allocation8 + $0x350] sm:$0xff]
        %v2093 = vld [vmem:[#allocation8 + $0x358] sm:$0xff]
        %v2094 = vld [vmem:[#allocation8 + $0x360] sm:$0xff]
        %v2095 = vld [vmem:[#allocation8 + $0x368] sm:$0xff]
        %v2096 = vld [vmem:[#allocation8 + $0x370] sm:$0xff]
        %v2097 = vld [vmem:[#allocation8 + $0x378] sm:$0xff]
        %v2098 = vld [vmem:[#allocation8 + $0x380] sm:$0xff]
        %v2099 = vld [vmem:[#allocation8 + $0x388] sm:$0xff]
        %v2100 = vld [vmem:[#allocation8 + $0x390] sm:$0xff]
        %v2101 = vld [vmem:[#allocation8 + $0x398] sm:$0xff]
        %v2102 = vld [vmem:[#allocation8 + $0x3a0] sm:$0xff]
        %v2103 = vld [vmem:[#allocation8 + $0x3a8] sm:$0xff]
        %v2104 = vld [vmem:[#allocation8 + $0x3b0] sm:$0xff]
        %v2105 = vld [vmem:[#allocation8 + $0x3b8] sm:$0xff]
        %v2106 = vld [vmem:[#allocation8 + $0x3c0] sm:$0xff]
        %v2107 = vld [vmem:[#allocation8 + $0x3c8] sm:$0xff]
        %v2108 = vld [vmem:[#allocation8 + $0x3d0] sm:$0xff]
        %v2109 = vld [vmem:[#allocation8 + $0x3d8] sm:$0xff]
        %v2110 = vld [vmem:[#allocation8 + $0x3e0] sm:$0xff]
        %v2111 = vld [vmem:[#allocation8 + $0x3e8] sm:$0xff]
        %v2112 = vld [vmem:[#allocation8 + $0x3f0] sm:$0xff]
        %v2113 = vld [vmem:[#allocation8 + $0x3f8] sm:$0xff]
        %v2114 = vld [vmem:[#allocation8 + $0x400] sm:$0xff]
        %v2115 = vld [vmem:[#allocation8 + $0x408] sm:$0xff]
        %v2116 = vld [vmem:[#allocation8 + $0x410] sm:$0xff]
        %v2117 = vld [vmem:[#allocation8 + $0x418] sm:$0xff]
        %v2118 = vld [vmem:[#allocation8 + $0x420] sm:$0xff]
        %v2119 = vld [vmem:[#allocation8 + $0x428] sm:$0xff]
        %v2120 = vld [vmem:[#allocation8 + $0x430] sm:$0xff]
        %v2121 = vld [vmem:[#allocation8 + $0x438] sm:$0xff]
        %v2122 = vld [vmem:[#allocation8 + $0x440] sm:$0xff]
        %v2123 = vld [vmem:[#allocation8 + $0x448] sm:$0xff]
        %v2124 = vld [vmem:[#allocation8 + $0x450] sm:$0xff]
        %v2125 = vld [vmem:[#allocation8 + $0x458] sm:$0xff]
        %v2126 = vld [vmem:[#allocation8 + $0x460] sm:$0xff]
        %v2127 = vld [vmem:[#allocation8 + $0x468] sm:$0xff]
        %v2128 = vld [vmem:[#allocation8 + $0x470] sm:$0xff]
        %v2129 = vld [vmem:[#allocation8 + $0x478] sm:$0xff]
        %v2130 = vld [vmem:[#allocation8 + $0x480] sm:$0xff]
        %v2131 = vld [vmem:[#allocation8 + $0x488] sm:$0xff]
        %v2132 = vld [vmem:[#allocation8 + $0x490] sm:$0xff]
        %v2133 = vld [vmem:[#allocation8 + $0x498] sm:$0xff]
        %v2134 = vld [vmem:[#allocation8 + $0x4a0] sm:$0xff]
        %v2135 = vld [vmem:[#allocation8 + $0x4a8] sm:$0xff]
        %v2136 = vld [vmem:[#allocation8 + $0x4b0] sm:$0xff]
        %v2137 = vld [vmem:[#allocation8 + $0x4b8] sm:$0xff]
        %v2138 = vld [vmem:[#allocation8 + $0x4c0] sm:$0xff]
        %v2139 = vld [vmem:[#allocation8 + $0x4c8] sm:$0xff]
        %v2140 = vld [vmem:[#allocation8 + $0x4d0] sm:$0xff]
        %v2141 = vld [vmem:[#allocation8 + $0x4d8] sm:$0xff]
        %v2142 = vld [vmem:[#allocation8 + $0x4e0] sm:$0xff]
        %v2143 = vld [vmem:[#allocation8 + $0x4e8] sm:$0xff]
        %v2144 = vld [vmem:[#allocation8 + $0x4f0] sm:$0xff]
        %v2145 = vld [vmem:[#allocation8 + $0x4f8] sm:$0xff]
        %v2146 = vld [vmem:[#allocation8 + $0x500] sm:$0xff]
        %v2147 = vld [vmem:[#allocation8 + $0x508] sm:$0xff]
        %v2148 = vld [vmem:[#allocation8 + $0x510] sm:$0xff]
        %v2149 = vld [vmem:[#allocation8 + $0x518] sm:$0xff]
        %v2150 = vld [vmem:[#allocation8 + $0x520] sm:$0xff]
        %v2151 = vld [vmem:[#allocation8 + $0x528] sm:$0xff]
        %v2152 = vld [vmem:[#allocation8 + $0x530] sm:$0xff]
        %v2153 = vld [vmem:[#allocation8 + $0x538] sm:$0xff]
        %v2154 = vld [vmem:[#allocation8 + $0x540] sm:$0xff]
        %v2155 = vld [vmem:[#allocation8 + $0x548] sm:$0xff]
        %v2156 = vld [vmem:[#allocation8 + $0x550] sm:$0xff]
        %v2157 = vld [vmem:[#allocation8 + $0x558] sm:$0xff]
        %v2158 = vld [vmem:[#allocation8 + $0x560] sm:$0xff]
        %v2159 = vld [vmem:[#allocation8 + $0x568] sm:$0xff]
        %v2160 = vld [vmem:[#allocation8 + $0x570] sm:$0xff]
        %v2161 = vld [vmem:[#allocation8 + $0x578] sm:$0xff]
        %v2162 = vld [vmem:[#allocation8 + $0x580] sm:$0xff]
        %v2163 = vld [vmem:[#allocation8 + $0x588] sm:$0xff]
        %v2164 = vld [vmem:[#allocation8 + $0x590] sm:$0xff]
        %v2165 = vld [vmem:[#allocation8 + $0x598] sm:$0xff]
        %v2166 = vld [vmem:[#allocation8 + $0x5a0] sm:$0xff]
        %v2167 = vld [vmem:[#allocation8 + $0x5a8] sm:$0xff]
        %v2168 = vld [vmem:[#allocation8 + $0x5b0] sm:$0xff]
        %v2169 = vld [vmem:[#allocation8 + $0x5b8] sm:$0xff]
        %v2170 = vld [vmem:[#allocation8 + $0x5c0] sm:$0xff]
        %v2171 = vld [vmem:[#allocation8 + $0x5c8] sm:$0xff]
        %v2172 = vld [vmem:[#allocation8 + $0x5d0] sm:$0xff]
        %v2173 = vld [vmem:[#allocation8 + $0x5d8] sm:$0xff]
        %v2174 = vld [vmem:[#allocation8 + $0x5e0] sm:$0xff]
        %v2175 = vld [vmem:[#allocation8 + $0x5e8] sm:$0xff]
        %v2176 = vld [vmem:[#allocation8 + $0x5f0] sm:$0xff]
        %v2177 = vld [vmem:[#allocation8 + $0x5f8] sm:$0xff]
        %v2178 = vld [vmem:[#allocation8 + $0x600] sm:$0xff]
        %v2179 = vld [vmem:[#allocation8 + $0x608] sm:$0xff]
        %v2180 = vld [vmem:[#allocation8 + $0x610] sm:$0xff]
        %v2181 = vld [vmem:[#allocation8 + $0x618] sm:$0xff]
        %v2182 = vld [vmem:[#allocation8 + $0x620] sm:$0xff]
        %v2183 = vld [vmem:[#allocation8 + $0x628] sm:$0xff]
        %v2184 = vld [vmem:[#allocation8 + $0x630] sm:$0xff]
        %v2185 = vld [vmem:[#allocation8 + $0x638] sm:$0xff]
        %v2186 = vld [vmem:[#allocation8 + $0x640] sm:$0xff]
        %v2187 = vld [vmem:[#allocation8 + $0x648] sm:$0xff]
        %v2188 = vld [vmem:[#allocation8 + $0x650] sm:$0xff]
        %v2189 = vld [vmem:[#allocation8 + $0x658] sm:$0xff]
        %v2190 = vld [vmem:[#allocation8 + $0x660] sm:$0xff]
        %v2191 = vld [vmem:[#allocation8 + $0x668] sm:$0xff]
        %v2192 = vld [vmem:[#allocation8 + $0x670] sm:$0xff]
        %v2193 = vld [vmem:[#allocation8 + $0x678] sm:$0xff]
        %v2194 = vld [vmem:[#allocation8 + $0x680] sm:$0xff]
        %v2195 = vld [vmem:[#allocation8 + $0x688] sm:$0xff]
        %v2196 = vld [vmem:[#allocation8 + $0x690] sm:$0xff]
        %v2197 = vld [vmem:[#allocation8 + $0x698] sm:$0xff]
        %v2198 = vld [vmem:[#allocation8 + $0x6a0] sm:$0xff]
        %v2199 = vld [vmem:[#allocation8 + $0x6a8] sm:$0xff]
        %v2200 = vld [vmem:[#allocation8 + $0x6b0] sm:$0xff]
        %v2201 = vld [vmem:[#allocation8 + $0x6b8] sm:$0xff]
        %v2202 = vld [vmem:[#allocation8 + $0x6c0] sm:$0xff]
        %v2203 = vld [vmem:[#allocation8 + $0x6c8] sm:$0xff]
        %v2204 = vld [vmem:[#allocation8 + $0x6d0] sm:$0xff]
        %v2205 = vld [vmem:[#allocation8 + $0x6d8] sm:$0xff]
        %v2206 = vld [vmem:[#allocation8 + $0x6e0] sm:$0xff]
        %v2207 = vld [vmem:[#allocation8 + $0x6e8] sm:$0xff]
        %v2208 = vld [vmem:[#allocation8 + $0x6f0] sm:$0xff]
        %v2209 = vld [vmem:[#allocation8 + $0x6f8] sm:$0xff]
        %v2210 = vld [vmem:[#allocation8 + $0x700] sm:$0xff]
        %v2211 = vld [vmem:[#allocation8 + $0x708] sm:$0xff]
        %v2212 = vld [vmem:[#allocation8 + $0x710] sm:$0xff]
        %v2213 = vld [vmem:[#allocation8 + $0x718] sm:$0xff]
        %v2214 = vld [vmem:[#allocation8 + $0x720] sm:$0xff]
        %v2215 = vld [vmem:[#allocation8 + $0x728] sm:$0xff]
        %v2216 = vld [vmem:[#allocation8 + $0x730] sm:$0xff]
        %v2217 = vld [vmem:[#allocation8 + $0x738] sm:$0xff]
        %v2218 = vld [vmem:[#allocation8 + $0x740] sm:$0xff]
        %v2219 = vld [vmem:[#allocation8 + $0x748] sm:$0xff]
        %v2220 = vld [vmem:[#allocation8 + $0x750] sm:$0xff]
        %v2221 = vld [vmem:[#allocation8 + $0x758] sm:$0xff]
        %v2222 = vld [vmem:[#allocation8 + $0x760] sm:$0xff]
        %v2223 = vld [vmem:[#allocation8 + $0x768] sm:$0xff]
        %v2224 = vld [vmem:[#allocation8 + $0x770] sm:$0xff]
        %v2225 = vld [vmem:[#allocation8 + $0x778] sm:$0xff]
        %v2226 = vld [vmem:[#allocation8 + $0x780] sm:$0xff]
        %v2227 = vld [vmem:[#allocation8 + $0x788] sm:$0xff]
        %v2228 = vld [vmem:[#allocation8 + $0x790] sm:$0xff]
        %v2229 = vld [vmem:[#allocation8 + $0x798] sm:$0xff]
        %v2230 = vld [vmem:[#allocation8 + $0x7a0] sm:$0xff]
        %v2231 = vld [vmem:[#allocation8 + $0x7a8] sm:$0xff]
        %v2232 = vld [vmem:[#allocation8 + $0x7b0] sm:$0xff]
        %v2233 = vld [vmem:[#allocation8 + $0x7b8] sm:$0xff]
        %v2234 = vld [vmem:[#allocation8 + $0x7c0] sm:$0xff]
        %v2235 = vld [vmem:[#allocation8 + $0x7c8] sm:$0xff]
        %v2236 = vld [vmem:[#allocation8 + $0x7d0] sm:$0xff]
        %v2237 = vld [vmem:[#allocation8 + $0x7d8] sm:$0xff]
        %v2238 = vld [vmem:[#allocation8 + $0x7e0] sm:$0xff]
        %v2239 = vld [vmem:[#allocation8 + $0x7e8] sm:$0xff]
        %v2240 = vld [vmem:[#allocation8 + $0x7f0] sm:$0xff]
        %v2241 = vld [vmem:[#allocation8 + $0x7f8] sm:$0xff]
        %v2242 = vld [vmem:[%s4] sm:$0xf]
        %v2244 = vlaneseq
        %v2245 = vshrl.u32 %v2244, 7
        %v2246 = vsub.s32 0, %v2245
        %v2247 = vrot.slane %v2242, %v2246
        %v2248 = vlaneseq
        %v2249 = vshrl.u32 %v2248, 7
        %v2250 = vsub.s32 1, %v2249
        %v2251 = vrot.slane %v2242, %v2250
        %v2252 = vlaneseq
        %v2253 = vshrl.u32 %v2252, 7
        %v2254 = vsub.s32 2, %v2253
        %v2255 = vrot.slane %v2242, %v2254
        %v2256 = vlaneseq
        %v2257 = vshrl.u32 %v2256, 7
        %v2258 = vsub.s32 3, %v2257
        %v2259 = vrot.slane %v2242, %v2258
        %v2520 = vunpack.c.l.b16 %v1986
        %v2521 = vunpack.c.h.b16 %v1986
        %v2522 = vunpack.c.l.b16 %v1987
        %v2523 = vunpack.c.h.b16 %v1987
        %v2524 = vunpack.c.l.b16 %v1988
        %v2525 = vunpack.c.h.b16 %v1988
        %v2526 = vunpack.c.l.b16 %v1989
        %v2527 = vunpack.c.h.b16 %v1989
        %v2528 = vunpack.c.l.b16 %v1990
        %v2529 = vunpack.c.h.b16 %v1990
        %v2530 = vunpack.c.l.b16 %v1991
        %v2531 = vunpack.c.h.b16 %v1991
        %v2532 = vunpack.c.l.b16 %v1992
        %v2533 = vunpack.c.h.b16 %v1992
        %v2534 = vunpack.c.l.b16 %v1993
        %v2535 = vunpack.c.h.b16 %v1993
        %v2536 = vunpack.c.l.b16 %v1994
        %v2537 = vunpack.c.h.b16 %v1994
        %v2538 = vunpack.c.l.b16 %v1995
        %v2539 = vunpack.c.h.b16 %v1995
        %v2540 = vunpack.c.l.b16 %v1996
        %v2541 = vunpack.c.h.b16 %v1996
        %v2542 = vunpack.c.l.b16 %v1997
        %v2543 = vunpack.c.h.b16 %v1997
        %v2544 = vunpack.c.l.b16 %v1998
        %v2545 = vunpack.c.h.b16 %v1998
        %v2546 = vunpack.c.l.b16 %v1999
        %v2547 = vunpack.c.h.b16 %v1999
        %v2548 = vunpack.c.l.b16 %v2000
        %v2549 = vunpack.c.h.b16 %v2000
        %v2550 = vunpack.c.l.b16 %v2001
        %v2551 = vunpack.c.h.b16 %v2001
        %v2552 = vunpack.c.l.b16 %v2002
        %v2553 = vunpack.c.h.b16 %v2002
        %v2554 = vunpack.c.l.b16 %v2003
        %v2555 = vunpack.c.h.b16 %v2003
        %v2556 = vunpack.c.l.b16 %v2004
        %v2557 = vunpack.c.h.b16 %v2004
        %v2558 = vunpack.c.l.b16 %v2005
        %v2559 = vunpack.c.h.b16 %v2005
        %v2560 = vunpack.c.l.b16 %v2006
        %v2561 = vunpack.c.h.b16 %v2006
        %v2562 = vunpack.c.l.b16 %v2007
        %v2563 = vunpack.c.h.b16 %v2007
        %v2564 = vunpack.c.l.b16 %v2008
        %v2565 = vunpack.c.h.b16 %v2008
        %v2566 = vunpack.c.l.b16 %v2009
        %v2567 = vunpack.c.h.b16 %v2009
        %v2568 = vunpack.c.l.b16 %v2010
        %v2569 = vunpack.c.h.b16 %v2010
        %v2570 = vunpack.c.l.b16 %v2011
        %v2571 = vunpack.c.h.b16 %v2011
        %v2572 = vunpack.c.l.b16 %v2012
        %v2573 = vunpack.c.h.b16 %v2012
        %v2574 = vunpack.c.l.b16 %v2013
        %v2575 = vunpack.c.h.b16 %v2013
        %v2576 = vunpack.c.l.b16 %v2014
        %v2577 = vunpack.c.h.b16 %v2014
        %v2578 = vunpack.c.l.b16 %v2015
        %v2579 = vunpack.c.h.b16 %v2015
        %v2580 = vunpack.c.l.b16 %v2016
        %v2581 = vunpack.c.h.b16 %v2016
        %v2582 = vunpack.c.l.b16 %v2017
        %v2583 = vunpack.c.h.b16 %v2017
        %v2584 = vunpack.c.l.b16 %v2018
        %v2585 = vunpack.c.h.b16 %v2018
        %v2586 = vunpack.c.l.b16 %v2019
        %v2587 = vunpack.c.h.b16 %v2019
        %v2588 = vunpack.c.l.b16 %v2020
        %v2589 = vunpack.c.h.b16 %v2020
        %v2590 = vunpack.c.l.b16 %v2021
        %v2591 = vunpack.c.h.b16 %v2021
        %v2592 = vunpack.c.l.b16 %v2022
        %v2593 = vunpack.c.h.b16 %v2022
        %v2594 = vunpack.c.l.b16 %v2023
        %v2595 = vunpack.c.h.b16 %v2023
        %v2596 = vunpack.c.l.b16 %v2024
        %v2597 = vunpack.c.h.b16 %v2024
        %v2598 = vunpack.c.l.b16 %v2025
        %v2599 = vunpack.c.h.b16 %v2025
        %v2600 = vunpack.c.l.b16 %v2026
        %v2601 = vunpack.c.h.b16 %v2026
        %v2602 = vunpack.c.l.b16 %v2027
        %v2603 = vunpack.c.h.b16 %v2027
        %v2604 = vunpack.c.l.b16 %v2028
        %v2605 = vunpack.c.h.b16 %v2028
        %v2606 = vunpack.c.l.b16 %v2029
        %v2607 = vunpack.c.h.b16 %v2029
        %v2608 = vunpack.c.l.b16 %v2030
        %v2609 = vunpack.c.h.b16 %v2030
        %v2610 = vunpack.c.l.b16 %v2031
        %v2611 = vunpack.c.h.b16 %v2031
        %v2612 = vunpack.c.l.b16 %v2032
        %v2613 = vunpack.c.h.b16 %v2032
        %v2614 = vunpack.c.l.b16 %v2033
        %v2615 = vunpack.c.h.b16 %v2033
        %v2616 = vunpack.c.l.b16 %v2034
        %v2617 = vunpack.c.h.b16 %v2034
        %v2618 = vunpack.c.l.b16 %v2035
        %v2619 = vunpack.c.h.b16 %v2035
        %v2620 = vunpack.c.l.b16 %v2036
        %v2621 = vunpack.c.h.b16 %v2036
        %v2622 = vunpack.c.l.b16 %v2037
        %v2623 = vunpack.c.h.b16 %v2037
        %v2624 = vunpack.c.l.b16 %v2038
        %v2625 = vunpack.c.h.b16 %v2038
        %v2626 = vunpack.c.l.b16 %v2039
        %v2627 = vunpack.c.h.b16 %v2039
        %v2628 = vunpack.c.l.b16 %v2040
        %v2629 = vunpack.c.h.b16 %v2040
        %v2630 = vunpack.c.l.b16 %v2041
        %v2631 = vunpack.c.h.b16 %v2041
        %v2632 = vunpack.c.l.b16 %v2042
        %v2633 = vunpack.c.h.b16 %v2042
        %v2634 = vunpack.c.l.b16 %v2043
        %v2635 = vunpack.c.h.b16 %v2043
        %v2636 = vunpack.c.l.b16 %v2044
        %v2637 = vunpack.c.h.b16 %v2044
        %v2638 = vunpack.c.l.b16 %v2045
        %v2639 = vunpack.c.h.b16 %v2045
        %v2640 = vunpack.c.l.b16 %v2046
        %v2641 = vunpack.c.h.b16 %v2046
        %v2642 = vunpack.c.l.b16 %v2047
        %v2643 = vunpack.c.h.b16 %v2047
        %v2644 = vunpack.c.l.b16 %v2048
        %v2645 = vunpack.c.h.b16 %v2048
        %v2646 = vunpack.c.l.b16 %v2049
        %v2647 = vunpack.c.h.b16 %v2049
        %v2648 = vunpack.c.l.b16 %v2050
        %v2649 = vunpack.c.h.b16 %v2050
        %v2650 = vunpack.c.l.b16 %v2051
        %v2651 = vunpack.c.h.b16 %v2051
        %v2652 = vunpack.c.l.b16 %v2052
        %v2653 = vunpack.c.h.b16 %v2052
        %v2654 = vunpack.c.l.b16 %v2053
        %v2655 = vunpack.c.h.b16 %v2053
        %v2656 = vunpack.c.l.b16 %v2054
        %v2657 = vunpack.c.h.b16 %v2054
        %v2658 = vunpack.c.l.b16 %v2055
        %v2659 = vunpack.c.h.b16 %v2055
        %v2660 = vunpack.c.l.b16 %v2056
        %v2661 = vunpack.c.h.b16 %v2056
        %v2662 = vunpack.c.l.b16 %v2057
        %v2663 = vunpack.c.h.b16 %v2057
        %v2664 = vunpack.c.l.b16 %v2058
        %v2665 = vunpack.c.h.b16 %v2058
        %v2666 = vunpack.c.l.b16 %v2059
        %v2667 = vunpack.c.h.b16 %v2059
        %v2668 = vunpack.c.l.b16 %v2060
        %v2669 = vunpack.c.h.b16 %v2060
        %v2670 = vunpack.c.l.b16 %v2061
        %v2671 = vunpack.c.h.b16 %v2061
        %v2672 = vunpack.c.l.b16 %v2062
        %v2673 = vunpack.c.h.b16 %v2062
        %v2674 = vunpack.c.l.b16 %v2063
        %v2675 = vunpack.c.h.b16 %v2063
        %v2676 = vunpack.c.l.b16 %v2064
        %v2677 = vunpack.c.h.b16 %v2064
        %v2678 = vunpack.c.l.b16 %v2065
        %v2679 = vunpack.c.h.b16 %v2065
        %v2680 = vunpack.c.l.b16 %v2066
        %v2681 = vunpack.c.h.b16 %v2066
        %v2682 = vunpack.c.l.b16 %v2067
        %v2683 = vunpack.c.h.b16 %v2067
        %v2684 = vunpack.c.l.b16 %v2068
        %v2685 = vunpack.c.h.b16 %v2068
        %v2686 = vunpack.c.l.b16 %v2069
        %v2687 = vunpack.c.h.b16 %v2069
        %v2688 = vunpack.c.l.b16 %v2070
        %v2689 = vunpack.c.h.b16 %v2070
        %v2690 = vunpack.c.l.b16 %v2071
        %v2691 = vunpack.c.h.b16 %v2071
        %v2692 = vunpack.c.l.b16 %v2072
        %v2693 = vunpack.c.h.b16 %v2072
        %v2694 = vunpack.c.l.b16 %v2073
        %v2695 = vunpack.c.h.b16 %v2073
        %v2696 = vunpack.c.l.b16 %v2074
        %v2697 = vunpack.c.h.b16 %v2074
        %v2698 = vunpack.c.l.b16 %v2075
        %v2699 = vunpack.c.h.b16 %v2075
        %v2700 = vunpack.c.l.b16 %v2076
        %v2701 = vunpack.c.h.b16 %v2076
        %v2702 = vunpack.c.l.b16 %v2077
        %v2703 = vunpack.c.h.b16 %v2077
        %v2704 = vunpack.c.l.b16 %v2078
        %v2705 = vunpack.c.h.b16 %v2078
        %v2706 = vunpack.c.l.b16 %v2079
        %v2707 = vunpack.c.h.b16 %v2079
        %v2708 = vunpack.c.l.b16 %v2080
        %v2709 = vunpack.c.h.b16 %v2080
        %v2710 = vunpack.c.l.b16 %v2081
        %v2711 = vunpack.c.h.b16 %v2081
        %v2712 = vunpack.c.l.b16 %v2082
        %v2713 = vunpack.c.h.b16 %v2082
        %v2714 = vunpack.c.l.b16 %v2083
        %v2715 = vunpack.c.h.b16 %v2083
        %v2716 = vunpack.c.l.b16 %v2084
        %v2717 = vunpack.c.h.b16 %v2084
        %v2718 = vunpack.c.l.b16 %v2085
        %v2719 = vunpack.c.h.b16 %v2085
        %v2720 = vunpack.c.l.b16 %v2086
        %v2721 = vunpack.c.h.b16 %v2086
        %v2722 = vunpack.c.l.b16 %v2087
        %v2723 = vunpack.c.h.b16 %v2087
        %v2724 = vunpack.c.l.b16 %v2088
        %v2725 = vunpack.c.h.b16 %v2088
        %v2726 = vunpack.c.l.b16 %v2089
        %v2727 = vunpack.c.h.b16 %v2089
        %v2728 = vunpack.c.l.b16 %v2090
        %v2729 = vunpack.c.h.b16 %v2090
        %v2730 = vunpack.c.l.b16 %v2091
        %v2731 = vunpack.c.h.b16 %v2091
        %v2732 = vunpack.c.l.b16 %v2092
        %v2733 = vunpack.c.h.b16 %v2092
        %v2734 = vunpack.c.l.b16 %v2093
        %v2735 = vunpack.c.h.b16 %v2093
        %v2736 = vunpack.c.l.b16 %v2094
        %v2737 = vunpack.c.h.b16 %v2094
        %v2738 = vunpack.c.l.b16 %v2095
        %v2739 = vunpack.c.h.b16 %v2095
        %v2740 = vunpack.c.l.b16 %v2096
        %v2741 = vunpack.c.h.b16 %v2096
        %v2742 = vunpack.c.l.b16 %v2097
        %v2743 = vunpack.c.h.b16 %v2097
        %v2744 = vunpack.c.l.b16 %v2098
        %v2745 = vunpack.c.h.b16 %v2098
        %v2746 = vunpack.c.l.b16 %v2099
        %v2747 = vunpack.c.h.b16 %v2099
        %v2748 = vunpack.c.l.b16 %v2100
        %v2749 = vunpack.c.h.b16 %v2100
        %v2750 = vunpack.c.l.b16 %v2101
        %v2751 = vunpack.c.h.b16 %v2101
        %v2752 = vunpack.c.l.b16 %v2102
        %v2753 = vunpack.c.h.b16 %v2102
        %v2754 = vunpack.c.l.b16 %v2103
        %v2755 = vunpack.c.h.b16 %v2103
        %v2756 = vunpack.c.l.b16 %v2104
        %v2757 = vunpack.c.h.b16 %v2104
        %v2758 = vunpack.c.l.b16 %v2105
        %v2759 = vunpack.c.h.b16 %v2105
        %v2760 = vunpack.c.l.b16 %v2106
        %v2761 = vunpack.c.h.b16 %v2106
        %v2762 = vunpack.c.l.b16 %v2107
        %v2763 = vunpack.c.h.b16 %v2107
        %v2764 = vunpack.c.l.b16 %v2108
        %v2765 = vunpack.c.h.b16 %v2108
        %v2766 = vunpack.c.l.b16 %v2109
        %v2767 = vunpack.c.h.b16 %v2109
        %v2768 = vunpack.c.l.b16 %v2110
        %v2769 = vunpack.c.h.b16 %v2110
        %v2770 = vunpack.c.l.b16 %v2111
        %v2771 = vunpack.c.h.b16 %v2111
        %v2772 = vunpack.c.l.b16 %v2112
        %v2773 = vunpack.c.h.b16 %v2112
        %v2774 = vunpack.c.l.b16 %v2113
        %v2775 = vunpack.c.h.b16 %v2113
        %v2776 = vunpack.c.l.b16 %v2114
        %v2777 = vunpack.c.h.b16 %v2114
        %v2778 = vunpack.c.l.b16 %v2115
        %v2779 = vunpack.c.h.b16 %v2115
        %v2780 = vunpack.c.l.b16 %v2116
        %v2781 = vunpack.c.h.b16 %v2116
        %v2782 = vunpack.c.l.b16 %v2117
        %v2783 = vunpack.c.h.b16 %v2117
        %v2784 = vunpack.c.l.b16 %v2118
        %v2785 = vunpack.c.h.b16 %v2118
        %v2786 = vunpack.c.l.b16 %v2119
        %v2787 = vunpack.c.h.b16 %v2119
        %v2788 = vunpack.c.l.b16 %v2120
        %v2789 = vunpack.c.h.b16 %v2120
        %v2790 = vunpack.c.l.b16 %v2121
        %v2791 = vunpack.c.h.b16 %v2121
        %v2792 = vunpack.c.l.b16 %v2122
        %v2793 = vunpack.c.h.b16 %v2122
        %v2794 = vunpack.c.l.b16 %v2123
        %v2795 = vunpack.c.h.b16 %v2123
        %v2796 = vunpack.c.l.b16 %v2124
        %v2797 = vunpack.c.h.b16 %v2124
        %v2798 = vunpack.c.l.b16 %v2125
        %v2799 = vunpack.c.h.b16 %v2125
        %v2800 = vunpack.c.l.b16 %v2126
        %v2801 = vunpack.c.h.b16 %v2126
        %v2802 = vunpack.c.l.b16 %v2127
        %v2803 = vunpack.c.h.b16 %v2127
        %v2804 = vunpack.c.l.b16 %v2128
        %v2805 = vunpack.c.h.b16 %v2128
        %v2806 = vunpack.c.l.b16 %v2129
        %v2807 = vunpack.c.h.b16 %v2129
        %v2808 = vunpack.c.l.b16 %v2130
        %v2809 = vunpack.c.h.b16 %v2130
        %v2810 = vunpack.c.l.b16 %v2131
        %v2811 = vunpack.c.h.b16 %v2131
        %v2812 = vunpack.c.l.b16 %v2132
        %v2813 = vunpack.c.h.b16 %v2132
        %v2814 = vunpack.c.l.b16 %v2133
        %v2815 = vunpack.c.h.b16 %v2133
        %v2816 = vunpack.c.l.b16 %v2134
        %v2817 = vunpack.c.h.b16 %v2134
        %v2818 = vunpack.c.l.b16 %v2135
        %v2819 = vunpack.c.h.b16 %v2135
        %v2820 = vunpack.c.l.b16 %v2136
        %v2821 = vunpack.c.h.b16 %v2136
        %v2822 = vunpack.c.l.b16 %v2137
        %v2823 = vunpack.c.h.b16 %v2137
        %v2824 = vunpack.c.l.b16 %v2138
        %v2825 = vunpack.c.h.b16 %v2138
        %v2826 = vunpack.c.l.b16 %v2139
        %v2827 = vunpack.c.h.b16 %v2139
        %v2828 = vunpack.c.l.b16 %v2140
        %v2829 = vunpack.c.h.b16 %v2140
        %v2830 = vunpack.c.l.b16 %v2141
        %v2831 = vunpack.c.h.b16 %v2141
        %v2832 = vunpack.c.l.b16 %v2142
        %v2833 = vunpack.c.h.b16 %v2142
        %v2834 = vunpack.c.l.b16 %v2143
        %v2835 = vunpack.c.h.b16 %v2143
        %v2836 = vunpack.c.l.b16 %v2144
        %v2837 = vunpack.c.h.b16 %v2144
        %v2838 = vunpack.c.l.b16 %v2145
        %v2839 = vunpack.c.h.b16 %v2145
        %v2840 = vunpack.c.l.b16 %v2146
        %v2841 = vunpack.c.h.b16 %v2146
        %v2842 = vunpack.c.l.b16 %v2147
        %v2843 = vunpack.c.h.b16 %v2147
        %v2844 = vunpack.c.l.b16 %v2148
        %v2845 = vunpack.c.h.b16 %v2148
        %v2846 = vunpack.c.l.b16 %v2149
        %v2847 = vunpack.c.h.b16 %v2149
        %v2848 = vunpack.c.l.b16 %v2150
        %v2849 = vunpack.c.h.b16 %v2150
        %v2850 = vunpack.c.l.b16 %v2151
        %v2851 = vunpack.c.h.b16 %v2151
        %v2852 = vunpack.c.l.b16 %v2152
        %v2853 = vunpack.c.h.b16 %v2152
        %v2854 = vunpack.c.l.b16 %v2153
        %v2855 = vunpack.c.h.b16 %v2153
        %v2856 = vunpack.c.l.b16 %v2154
        %v2857 = vunpack.c.h.b16 %v2154
        %v2858 = vunpack.c.l.b16 %v2155
        %v2859 = vunpack.c.h.b16 %v2155
        %v2860 = vunpack.c.l.b16 %v2156
        %v2861 = vunpack.c.h.b16 %v2156
        %v2862 = vunpack.c.l.b16 %v2157
        %v2863 = vunpack.c.h.b16 %v2157
        %v2864 = vunpack.c.l.b16 %v2158
        %v2865 = vunpack.c.h.b16 %v2158
        %v2866 = vunpack.c.l.b16 %v2159
        %v2867 = vunpack.c.h.b16 %v2159
        %v2868 = vunpack.c.l.b16 %v2160
        %v2869 = vunpack.c.h.b16 %v2160
        %v2870 = vunpack.c.l.b16 %v2161
        %v2871 = vunpack.c.h.b16 %v2161
        %v2872 = vunpack.c.l.b16 %v2162
        %v2873 = vunpack.c.h.b16 %v2162
        %v2874 = vunpack.c.l.b16 %v2163
        %v2875 = vunpack.c.h.b16 %v2163
        %v2876 = vunpack.c.l.b16 %v2164
        %v2877 = vunpack.c.h.b16 %v2164
        %v2878 = vunpack.c.l.b16 %v2165
        %v2879 = vunpack.c.h.b16 %v2165
        %v2880 = vunpack.c.l.b16 %v2166
        %v2881 = vunpack.c.h.b16 %v2166
        %v2882 = vunpack.c.l.b16 %v2167
        %v2883 = vunpack.c.h.b16 %v2167
        %v2884 = vunpack.c.l.b16 %v2168
        %v2885 = vunpack.c.h.b16 %v2168
        %v2886 = vunpack.c.l.b16 %v2169
        %v2887 = vunpack.c.h.b16 %v2169
        %v2888 = vunpack.c.l.b16 %v2170
        %v2889 = vunpack.c.h.b16 %v2170
        %v2890 = vunpack.c.l.b16 %v2171
        %v2891 = vunpack.c.h.b16 %v2171
        %v2892 = vunpack.c.l.b16 %v2172
        %v2893 = vunpack.c.h.b16 %v2172
        %v2894 = vunpack.c.l.b16 %v2173
        %v2895 = vunpack.c.h.b16 %v2173
        %v2896 = vunpack.c.l.b16 %v2174
        %v2897 = vunpack.c.h.b16 %v2174
        %v2898 = vunpack.c.l.b16 %v2175
        %v2899 = vunpack.c.h.b16 %v2175
        %v2900 = vunpack.c.l.b16 %v2176
        %v2901 = vunpack.c.h.b16 %v2176
        %v2902 = vunpack.c.l.b16 %v2177
        %v2903 = vunpack.c.h.b16 %v2177
        %v2904 = vunpack.c.l.b16 %v2178
        %v2905 = vunpack.c.h.b16 %v2178
        %v2906 = vunpack.c.l.b16 %v2179
        %v2907 = vunpack.c.h.b16 %v2179
        %v2908 = vunpack.c.l.b16 %v2180
        %v2909 = vunpack.c.h.b16 %v2180
        %v2910 = vunpack.c.l.b16 %v2181
        %v2911 = vunpack.c.h.b16 %v2181
        %v2912 = vunpack.c.l.b16 %v2182
        %v2913 = vunpack.c.h.b16 %v2182
        %v2914 = vunpack.c.l.b16 %v2183
        %v2915 = vunpack.c.h.b16 %v2183
        %v2916 = vunpack.c.l.b16 %v2184
        %v2917 = vunpack.c.h.b16 %v2184
        %v2918 = vunpack.c.l.b16 %v2185
        %v2919 = vunpack.c.h.b16 %v2185
        %v2920 = vunpack.c.l.b16 %v2186
        %v2921 = vunpack.c.h.b16 %v2186
        %v2922 = vunpack.c.l.b16 %v2187
        %v2923 = vunpack.c.h.b16 %v2187
        %v2924 = vunpack.c.l.b16 %v2188
        %v2925 = vunpack.c.h.b16 %v2188
        %v2926 = vunpack.c.l.b16 %v2189
        %v2927 = vunpack.c.h.b16 %v2189
        %v2928 = vunpack.c.l.b16 %v2190
        %v2929 = vunpack.c.h.b16 %v2190
        %v2930 = vunpack.c.l.b16 %v2191
        %v2931 = vunpack.c.h.b16 %v2191
        %v2932 = vunpack.c.l.b16 %v2192
        %v2933 = vunpack.c.h.b16 %v2192
        %v2934 = vunpack.c.l.b16 %v2193
        %v2935 = vunpack.c.h.b16 %v2193
        %v2936 = vunpack.c.l.b16 %v2194
        %v2937 = vunpack.c.h.b16 %v2194
        %v2938 = vunpack.c.l.b16 %v2195
        %v2939 = vunpack.c.h.b16 %v2195
        %v2940 = vunpack.c.l.b16 %v2196
        %v2941 = vunpack.c.h.b16 %v2196
        %v2942 = vunpack.c.l.b16 %v2197
        %v2943 = vunpack.c.h.b16 %v2197
        %v2944 = vunpack.c.l.b16 %v2198
        %v2945 = vunpack.c.h.b16 %v2198
        %v2946 = vunpack.c.l.b16 %v2199
        %v2947 = vunpack.c.h.b16 %v2199
        %v2948 = vunpack.c.l.b16 %v2200
        %v2949 = vunpack.c.h.b16 %v2200
        %v2950 = vunpack.c.l.b16 %v2201
        %v2951 = vunpack.c.h.b16 %v2201
        %v2952 = vunpack.c.l.b16 %v2202
        %v2953 = vunpack.c.h.b16 %v2202
        %v2954 = vunpack.c.l.b16 %v2203
        %v2955 = vunpack.c.h.b16 %v2203
        %v2956 = vunpack.c.l.b16 %v2204
        %v2957 = vunpack.c.h.b16 %v2204
        %v2958 = vunpack.c.l.b16 %v2205
        %v2959 = vunpack.c.h.b16 %v2205
        %v2960 = vunpack.c.l.b16 %v2206
        %v2961 = vunpack.c.h.b16 %v2206
        %v2962 = vunpack.c.l.b16 %v2207
        %v2963 = vunpack.c.h.b16 %v2207
        %v2964 = vunpack.c.l.b16 %v2208
        %v2965 = vunpack.c.h.b16 %v2208
        %v2966 = vunpack.c.l.b16 %v2209
        %v2967 = vunpack.c.h.b16 %v2209
        %v2968 = vunpack.c.l.b16 %v2210
        %v2969 = vunpack.c.h.b16 %v2210
        %v2970 = vunpack.c.l.b16 %v2211
        %v2971 = vunpack.c.h.b16 %v2211
        %v2972 = vunpack.c.l.b16 %v2212
        %v2973 = vunpack.c.h.b16 %v2212
        %v2974 = vunpack.c.l.b16 %v2213
        %v2975 = vunpack.c.h.b16 %v2213
        %v2976 = vunpack.c.l.b16 %v2214
        %v2977 = vunpack.c.h.b16 %v2214
        %v2978 = vunpack.c.l.b16 %v2215
        %v2979 = vunpack.c.h.b16 %v2215
        %v2980 = vunpack.c.l.b16 %v2216
        %v2981 = vunpack.c.h.b16 %v2216
        %v2982 = vunpack.c.l.b16 %v2217
        %v2983 = vunpack.c.h.b16 %v2217
        %v2984 = vunpack.c.l.b16 %v2218
        %v2985 = vunpack.c.h.b16 %v2218
        %v2986 = vunpack.c.l.b16 %v2219
        %v2987 = vunpack.c.h.b16 %v2219
        %v2988 = vunpack.c.l.b16 %v2220
        %v2989 = vunpack.c.h.b16 %v2220
        %v2990 = vunpack.c.l.b16 %v2221
        %v2991 = vunpack.c.h.b16 %v2221
        %v2992 = vunpack.c.l.b16 %v2222
        %v2993 = vunpack.c.h.b16 %v2222
        %v2994 = vunpack.c.l.b16 %v2223
        %v2995 = vunpack.c.h.b16 %v2223
        %v2996 = vunpack.c.l.b16 %v2224
        %v2997 = vunpack.c.h.b16 %v2224
        %v2998 = vunpack.c.l.b16 %v2225
        %v2999 = vunpack.c.h.b16 %v2225
        %v3000 = vunpack.c.l.b16 %v2226
        %v3001 = vunpack.c.h.b16 %v2226
        %v3002 = vunpack.c.l.b16 %v2227
        %v3003 = vunpack.c.h.b16 %v2227
        %v3004 = vunpack.c.l.b16 %v2228
        %v3005 = vunpack.c.h.b16 %v2228
        %v3006 = vunpack.c.l.b16 %v2229
        %v3007 = vunpack.c.h.b16 %v2229
        %v3008 = vunpack.c.l.b16 %v2230
        %v3009 = vunpack.c.h.b16 %v2230
        %v3010 = vunpack.c.l.b16 %v2231
        %v3011 = vunpack.c.h.b16 %v2231
        %v3012 = vunpack.c.l.b16 %v2232
        %v3013 = vunpack.c.h.b16 %v2232
        %v3014 = vunpack.c.l.b16 %v2233
        %v3015 = vunpack.c.h.b16 %v2233
        %v3016 = vunpack.c.l.b16 %v2234
        %v3017 = vunpack.c.h.b16 %v2234
        %v3018 = vunpack.c.l.b16 %v2235
        %v3019 = vunpack.c.h.b16 %v2235
        %v3020 = vunpack.c.l.b16 %v2236
        %v3021 = vunpack.c.h.b16 %v2236
        %v3022 = vunpack.c.l.b16 %v2237
        %v3023 = vunpack.c.h.b16 %v2237
        %v3024 = vunpack.c.l.b16 %v2238
        %v3025 = vunpack.c.h.b16 %v2238
        %v3026 = vunpack.c.l.b16 %v2239
        %v3027 = vunpack.c.h.b16 %v2239
        %v3028 = vunpack.c.l.b16 %v2240
        %v3029 = vunpack.c.h.b16 %v2240
        %v3030 = vunpack.c.l.b16 %v2241
        %v3031 = vunpack.c.h.b16 %v2241
        %v3032 = vpack.c.b16 %v2524, %v2520
        %v3033 = vpack.c.b16 %v2525, %v2521
        %v3034 = vpack.c.b16 %v2526, %v2522
        %v3035 = vpack.c.b16 %v2527, %v2523
        %v3036 = vpack.c.b16 %v2532, %v2528
        %v3037 = vpack.c.b16 %v2533, %v2529
        %v3038 = vpack.c.b16 %v2534, %v2530
        %v3039 = vpack.c.b16 %v2535, %v2531
        %v3040 = vpack.c.b16 %v2540, %v2536
        %v3041 = vpack.c.b16 %v2541, %v2537
        %v3042 = vpack.c.b16 %v2542, %v2538
        %v3043 = vpack.c.b16 %v2543, %v2539
        %v3044 = vpack.c.b16 %v2548, %v2544
        %v3045 = vpack.c.b16 %v2549, %v2545
        %v3046 = vpack.c.b16 %v2550, %v2546
        %v3047 = vpack.c.b16 %v2551, %v2547
        %v3048 = vpack.c.b16 %v2556, %v2552
        %v3049 = vpack.c.b16 %v2557, %v2553
        %v3050 = vpack.c.b16 %v2558, %v2554
        %v3051 = vpack.c.b16 %v2559, %v2555
        %v3052 = vpack.c.b16 %v2564, %v2560
        %v3053 = vpack.c.b16 %v2565, %v2561
        %v3054 = vpack.c.b16 %v2566, %v2562
        %v3055 = vpack.c.b16 %v2567, %v2563
        %v3056 = vpack.c.b16 %v2572, %v2568
        %v3057 = vpack.c.b16 %v2573, %v2569
        %v3058 = vpack.c.b16 %v2574, %v2570
        %v3059 = vpack.c.b16 %v2575, %v2571
        %v3060 = vpack.c.b16 %v2580, %v2576
        %v3061 = vpack.c.b16 %v2581, %v2577
        %v3062 = vpack.c.b16 %v2582, %v2578
        %v3063 = vpack.c.b16 %v2583, %v2579
        %v3064 = vpack.c.b16 %v2588, %v2584
        %v3065 = vpack.c.b16 %v2589, %v2585
        %v3066 = vpack.c.b16 %v2590, %v2586
        %v3067 = vpack.c.b16 %v2591, %v2587
        %v3068 = vpack.c.b16 %v2596, %v2592
        %v3069 = vpack.c.b16 %v2597, %v2593
        %v3070 = vpack.c.b16 %v2598, %v2594
        %v3071 = vpack.c.b16 %v2599, %v2595
        %v3072 = vpack.c.b16 %v2604, %v2600
        %v3073 = vpack.c.b16 %v2605, %v2601
        %v3074 = vpack.c.b16 %v2606, %v2602
        %v3075 = vpack.c.b16 %v2607, %v2603
        %v3076 = vpack.c.b16 %v2612, %v2608
        %v3077 = vpack.c.b16 %v2613, %v2609
        %v3078 = vpack.c.b16 %v2614, %v2610
        %v3079 = vpack.c.b16 %v2615, %v2611
        %v3080 = vpack.c.b16 %v2620, %v2616
        %v3081 = vpack.c.b16 %v2621, %v2617
        %v3082 = vpack.c.b16 %v2622, %v2618
        %v3083 = vpack.c.b16 %v2623, %v2619
        %v3084 = vpack.c.b16 %v2628, %v2624
        %v3085 = vpack.c.b16 %v2629, %v2625
        %v3086 = vpack.c.b16 %v2630, %v2626
        %v3087 = vpack.c.b16 %v2631, %v2627
        %v3088 = vpack.c.b16 %v2636, %v2632
        %v3089 = vpack.c.b16 %v2637, %v2633
        %v3090 = vpack.c.b16 %v2638, %v2634
        %v3091 = vpack.c.b16 %v2639, %v2635
        %v3092 = vpack.c.b16 %v2644, %v2640
        %v3093 = vpack.c.b16 %v2645, %v2641
        %v3094 = vpack.c.b16 %v2646, %v2642
        %v3095 = vpack.c.b16 %v2647, %v2643
        %v3096 = vpack.c.b16 %v2652, %v2648
        %v3097 = vpack.c.b16 %v2653, %v2649
        %v3098 = vpack.c.b16 %v2654, %v2650
        %v3099 = vpack.c.b16 %v2655, %v2651
        %v3100 = vpack.c.b16 %v2660, %v2656
        %v3101 = vpack.c.b16 %v2661, %v2657
        %v3102 = vpack.c.b16 %v2662, %v2658
        %v3103 = vpack.c.b16 %v2663, %v2659
        %v3104 = vpack.c.b16 %v2668, %v2664
        %v3105 = vpack.c.b16 %v2669, %v2665
        %v3106 = vpack.c.b16 %v2670, %v2666
        %v3107 = vpack.c.b16 %v2671, %v2667
        %v3108 = vpack.c.b16 %v2676, %v2672
        %v3109 = vpack.c.b16 %v2677, %v2673
        %v3110 = vpack.c.b16 %v2678, %v2674
        %v3111 = vpack.c.b16 %v2679, %v2675
        %v3112 = vpack.c.b16 %v2684, %v2680
        %v3113 = vpack.c.b16 %v2685, %v2681
        %v3114 = vpack.c.b16 %v2686, %v2682
        %v3115 = vpack.c.b16 %v2687, %v2683
        %v3116 = vpack.c.b16 %v2692, %v2688
        %v3117 = vpack.c.b16 %v2693, %v2689
        %v3118 = vpack.c.b16 %v2694, %v2690
        %v3119 = vpack.c.b16 %v2695, %v2691
        %v3120 = vpack.c.b16 %v2700, %v2696
        %v3121 = vpack.c.b16 %v2701, %v2697
        %v3122 = vpack.c.b16 %v2702, %v2698
        %v3123 = vpack.c.b16 %v2703, %v2699
        %v3124 = vpack.c.b16 %v2708, %v2704
        %v3125 = vpack.c.b16 %v2709, %v2705
        %v3126 = vpack.c.b16 %v2710, %v2706
        %v3127 = vpack.c.b16 %v2711, %v2707
        %v3128 = vpack.c.b16 %v2716, %v2712
        %v3129 = vpack.c.b16 %v2717, %v2713
        %v3130 = vpack.c.b16 %v2718, %v2714
        %v3131 = vpack.c.b16 %v2719, %v2715
        %v3132 = vpack.c.b16 %v2724, %v2720
        %v3133 = vpack.c.b16 %v2725, %v2721
        %v3134 = vpack.c.b16 %v2726, %v2722
        %v3135 = vpack.c.b16 %v2727, %v2723
        %v3136 = vpack.c.b16 %v2732, %v2728
        %v3137 = vpack.c.b16 %v2733, %v2729
        %v3138 = vpack.c.b16 %v2734, %v2730
        %v3139 = vpack.c.b16 %v2735, %v2731
        %v3140 = vpack.c.b16 %v2740, %v2736
        %v3141 = vpack.c.b16 %v2741, %v2737
        %v3142 = vpack.c.b16 %v2742, %v2738
        %v3143 = vpack.c.b16 %v2743, %v2739
        %v3144 = vpack.c.b16 %v2748, %v2744
        %v3145 = vpack.c.b16 %v2749, %v2745
        %v3146 = vpack.c.b16 %v2750, %v2746
        %v3147 = vpack.c.b16 %v2751, %v2747
        %v3148 = vpack.c.b16 %v2756, %v2752
        %v3149 = vpack.c.b16 %v2757, %v2753
        %v3150 = vpack.c.b16 %v2758, %v2754
        %v3151 = vpack.c.b16 %v2759, %v2755
        %v3152 = vpack.c.b16 %v2764, %v2760
        %v3153 = vpack.c.b16 %v2765, %v2761
        %v3154 = vpack.c.b16 %v2766, %v2762
        %v3155 = vpack.c.b16 %v2767, %v2763
        %v3156 = vpack.c.b16 %v2772, %v2768
        %v3157 = vpack.c.b16 %v2773, %v2769
        %v3158 = vpack.c.b16 %v2774, %v2770
        %v3159 = vpack.c.b16 %v2775, %v2771
        %v3160 = vpack.c.b16 %v2780, %v2776
        %v3161 = vpack.c.b16 %v2781, %v2777
        %v3162 = vpack.c.b16 %v2782, %v2778
        %v3163 = vpack.c.b16 %v2783, %v2779
        %v3164 = vpack.c.b16 %v2788, %v2784
        %v3165 = vpack.c.b16 %v2789, %v2785
        %v3166 = vpack.c.b16 %v2790, %v2786
        %v3167 = vpack.c.b16 %v2791, %v2787
        %v3168 = vpack.c.b16 %v2796, %v2792
        %v3169 = vpack.c.b16 %v2797, %v2793
        %v3170 = vpack.c.b16 %v2798, %v2794
        %v3171 = vpack.c.b16 %v2799, %v2795
        %v3172 = vpack.c.b16 %v2804, %v2800
        %v3173 = vpack.c.b16 %v2805, %v2801
        %v3174 = vpack.c.b16 %v2806, %v2802
        %v3175 = vpack.c.b16 %v2807, %v2803
        %v3176 = vpack.c.b16 %v2812, %v2808
        %v3177 = vpack.c.b16 %v2813, %v2809
        %v3178 = vpack.c.b16 %v2814, %v2810
        %v3179 = vpack.c.b16 %v2815, %v2811
        %v3180 = vpack.c.b16 %v2820, %v2816
        %v3181 = vpack.c.b16 %v2821, %v2817
        %v3182 = vpack.c.b16 %v2822, %v2818
        %v3183 = vpack.c.b16 %v2823, %v2819
        %v3184 = vpack.c.b16 %v2828, %v2824
        %v3185 = vpack.c.b16 %v2829, %v2825
        %v3186 = vpack.c.b16 %v2830, %v2826
        %v3187 = vpack.c.b16 %v2831, %v2827
        %v3188 = vpack.c.b16 %v2836, %v2832
        %v3189 = vpack.c.b16 %v2837, %v2833
        %v3190 = vpack.c.b16 %v2838, %v2834
        %v3191 = vpack.c.b16 %v2839, %v2835
        %v3192 = vpack.c.b16 %v2844, %v2840
        %v3193 = vpack.c.b16 %v2845, %v2841
        %v3194 = vpack.c.b16 %v2846, %v2842
        %v3195 = vpack.c.b16 %v2847, %v2843
        %v3196 = vpack.c.b16 %v2852, %v2848
        %v3197 = vpack.c.b16 %v2853, %v2849
        %v3198 = vpack.c.b16 %v2854, %v2850
        %v3199 = vpack.c.b16 %v2855, %v2851
        %v3200 = vpack.c.b16 %v2860, %v2856
        %v3201 = vpack.c.b16 %v2861, %v2857
        %v3202 = vpack.c.b16 %v2862, %v2858
        %v3203 = vpack.c.b16 %v2863, %v2859
        %v3204 = vpack.c.b16 %v2868, %v2864
        %v3205 = vpack.c.b16 %v2869, %v2865
        %v3206 = vpack.c.b16 %v2870, %v2866
        %v3207 = vpack.c.b16 %v2871, %v2867
        %v3208 = vpack.c.b16 %v2876, %v2872
        %v3209 = vpack.c.b16 %v2877, %v2873
        %v3210 = vpack.c.b16 %v2878, %v2874
        %v3211 = vpack.c.b16 %v2879, %v2875
        %v3212 = vpack.c.b16 %v2884, %v2880
        %v3213 = vpack.c.b16 %v2885, %v2881
        %v3214 = vpack.c.b16 %v2886, %v2882
        %v3215 = vpack.c.b16 %v2887, %v2883
        %v3216 = vpack.c.b16 %v2892, %v2888
        %v3217 = vpack.c.b16 %v2893, %v2889
        %v3218 = vpack.c.b16 %v2894, %v2890
        %v3219 = vpack.c.b16 %v2895, %v2891
        %v3220 = vpack.c.b16 %v2900, %v2896
        %v3221 = vpack.c.b16 %v2901, %v2897
        %v3222 = vpack.c.b16 %v2902, %v2898
        %v3223 = vpack.c.b16 %v2903, %v2899
        %v3224 = vpack.c.b16 %v2908, %v2904
        %v3225 = vpack.c.b16 %v2909, %v2905
        %v3226 = vpack.c.b16 %v2910, %v2906
        %v3227 = vpack.c.b16 %v2911, %v2907
        %v3228 = vpack.c.b16 %v2916, %v2912
        %v3229 = vpack.c.b16 %v2917, %v2913
        %v3230 = vpack.c.b16 %v2918, %v2914
        %v3231 = vpack.c.b16 %v2919, %v2915
        %v3232 = vpack.c.b16 %v2924, %v2920
        %v3233 = vpack.c.b16 %v2925, %v2921
        %v3234 = vpack.c.b16 %v2926, %v2922
        %v3235 = vpack.c.b16 %v2927, %v2923
        %v3236 = vpack.c.b16 %v2932, %v2928
        %v3237 = vpack.c.b16 %v2933, %v2929
        %v3238 = vpack.c.b16 %v2934, %v2930
        %v3239 = vpack.c.b16 %v2935, %v2931
        %v3240 = vpack.c.b16 %v2940, %v2936
        %v3241 = vpack.c.b16 %v2941, %v2937
        %v3242 = vpack.c.b16 %v2942, %v2938
        %v3243 = vpack.c.b16 %v2943, %v2939
        %v3244 = vpack.c.b16 %v2948, %v2944
        %v3245 = vpack.c.b16 %v2949, %v2945
        %v3246 = vpack.c.b16 %v2950, %v2946
        %v3247 = vpack.c.b16 %v2951, %v2947
        %v3248 = vpack.c.b16 %v2956, %v2952
        %v3249 = vpack.c.b16 %v2957, %v2953
        %v3250 = vpack.c.b16 %v2958, %v2954
        %v3251 = vpack.c.b16 %v2959, %v2955
        %v3252 = vpack.c.b16 %v2964, %v2960
        %v3253 = vpack.c.b16 %v2965, %v2961
        %v3254 = vpack.c.b16 %v2966, %v2962
        %v3255 = vpack.c.b16 %v2967, %v2963
        %v3256 = vpack.c.b16 %v2972, %v2968
        %v3257 = vpack.c.b16 %v2973, %v2969
        %v3258 = vpack.c.b16 %v2974, %v2970
        %v3259 = vpack.c.b16 %v2975, %v2971
        %v3260 = vpack.c.b16 %v2980, %v2976
        %v3261 = vpack.c.b16 %v2981, %v2977
        %v3262 = vpack.c.b16 %v2982, %v2978
        %v3263 = vpack.c.b16 %v2983, %v2979
        %v3264 = vpack.c.b16 %v2988, %v2984
        %v3265 = vpack.c.b16 %v2989, %v2985
        %v3266 = vpack.c.b16 %v2990, %v2986
        %v3267 = vpack.c.b16 %v2991, %v2987
        %v3268 = vpack.c.b16 %v2996, %v2992
        %v3269 = vpack.c.b16 %v2997, %v2993
        %v3270 = vpack.c.b16 %v2998, %v2994
        %v3271 = vpack.c.b16 %v2999, %v2995
        %v3272 = vpack.c.b16 %v3004, %v3000
        %v3273 = vpack.c.b16 %v3005, %v3001
        %v3274 = vpack.c.b16 %v3006, %v3002
        %v3275 = vpack.c.b16 %v3007, %v3003
        %v3276 = vpack.c.b16 %v3012, %v3008
        %v3277 = vpack.c.b16 %v3013, %v3009
        %v3278 = vpack.c.b16 %v3014, %v3010
        %v3279 = vpack.c.b16 %v3015, %v3011
        %v3280 = vpack.c.b16 %v3020, %v3016
        %v3281 = vpack.c.b16 %v3021, %v3017
        %v3282 = vpack.c.b16 %v3022, %v3018
        %v3283 = vpack.c.b16 %v3023, %v3019
        %v3284 = vpack.c.b16 %v3028, %v3024
        %v3285 = vpack.c.b16 %v3029, %v3025
        %v3286 = vpack.c.b16 %v3030, %v3026
        %v3287 = vpack.c.b16 %v3031, %v3027
        %3544 = vmatprep.subr.bf16.mxu0 %v3033
        %3545 = vmatpush1.bf16.msra.mxu0 %v3032
        %3546 = vmatprep.subr.bf16.mxu0 %v3037
        %3547 = vmatpush1.bf16.msra.mxu0 %v3036
        %3548 = vmatprep.subr.bf16.mxu0 %v3041
        %3549 = vmatpush1.bf16.msra.mxu0 %v3040
        %3550 = vmatprep.subr.bf16.mxu0 %v3045
        %3551 = vmatpush1.bf16.msra.mxu0 %v3044
        %3552 = vmatprep.subr.bf16.mxu0 %v3049
        %3553 = vmatpush1.bf16.msra.mxu0 %v3048
        %3554 = vmatprep.subr.bf16.mxu0 %v3053
        %3555 = vmatpush1.bf16.msra.mxu0 %v3052
        %3556 = vmatprep.subr.bf16.mxu0 %v3057
        %3557 = vmatpush1.bf16.msra.mxu0 %v3056
        %3558 = vmatprep.subr.bf16.mxu0 %v3061
        %3559 = vmatpush1.bf16.msra.mxu0 %v3060
        %3560 = vmatprep.subr.bf16.mxu0 %v3065
        %3561 = vmatpush1.bf16.msra.mxu0 %v3064
        %3562 = vmatprep.subr.bf16.mxu0 %v3069
        %3563 = vmatpush1.bf16.msra.mxu0 %v3068
        %3564 = vmatprep.subr.bf16.mxu0 %v3073
        %3565 = vmatpush1.bf16.msra.mxu0 %v3072
        %3566 = vmatprep.subr.bf16.mxu0 %v3077
        %3567 = vmatpush1.bf16.msra.mxu0 %v3076
        %3568 = vmatprep.subr.bf16.mxu0 %v3081
        %3569 = vmatpush1.bf16.msra.mxu0 %v3080
        %3570 = vmatprep.subr.bf16.mxu0 %v3085
        %3571 = vmatpush1.bf16.msra.mxu0 %v3084
        %3572 = vmatprep.subr.bf16.mxu0 %v3089
        %3573 = vmatpush1.bf16.msra.mxu0 %v3088
        %3574 = vmatprep.subr.bf16.mxu0 %v3093
        %3575 = vmatpush1.bf16.msra.mxu0 %v3092
        %3576 = vmatprep.mubr.bf16.mxu0 %v1923
        %3577 = vmatmul.mubr.bf16.gmra.mrb[0].mxu0 %v1922
        %v3578 = vpop.f32.mrb[0].mxu0
        %v3579 = vadd.f32 %v2247, %v3578
        %v3580 = vpop.f32.mrb[0].mxu0
        %v3581 = vadd.f32 %v2251, %v3580
        %v3582 = vpop.f32.mrb[0].mxu0
        %v3583 = vadd.f32 %v2247, %v3582
        %v3584 = vpop.f32.mrb[0].mxu0
        %v3585 = vadd.f32 %v2251, %v3584
        %3586 = vmatprep.mubr.bf16.mxu0 %v1931
        %3587 = vmatmul.mubr.bf16.gmra.mrb[0].mxu0 %v1930
        %v3588 = vpop.f32.mrb[0].mxu0
        %v3589 = vadd.f32 %v2247, %v3588
        %v3590 = vpop.f32.mrb[0].mxu0
        %v3591 = vadd.f32 %v2251, %v3590
        %v3592 = vpop.f32.mrb[0].mxu0
        %v3593 = vadd.f32 %v2247, %v3592
        %v3594 = vpop.f32.mrb[0].mxu0
        %v3595 = vadd.f32 %v2251, %v3594
        %3596 = vmatprep.mubr.bf16.mxu0 %v1939
        %3597 = vmatmul.mubr.bf16.gmra.mrb[0].mxu0 %v1938
        %v3598 = vpop.f32.mrb[0].mxu0
        %v3599 = vadd.f32 %v2247, %v3598
        %v3600 = vpop.f32.mrb[0].mxu0
        %v3601 = vadd.f32 %v2251, %v3600
        %v3602 = vpop.f32.mrb[0].mxu0
        %v3603 = vadd.f32 %v2247, %v3602
        %v3604 = vpop.f32.mrb[0].mxu0
        %v3605 = vadd.f32 %v2251, %v3604
        %3606 = vmatprep.mubr.bf16.mxu0 %v1947
        %3607 = vmatmul.mubr.bf16.gmra.mrb[0].mxu0 %v1946
        %v3608 = vpop.f32.mrb[0].mxu0
        %v3609 = vadd.f32 %v2247, %v3608
        %v3610 = vpop.f32.mrb[0].mxu0
        %v3611 = vadd.f32 %v2251, %v3610
        %v3612 = vpop.f32.mrb[0].mxu0
        %v3613 = vadd.f32 %v2247, %v3612
        %v3614 = vpop.f32.mrb[0].mxu0
        %v3615 = vadd.f32 %v2251, %v3614
        %3616 = vmatprep.mubr.bf16.mxu0 %v1955
        %3617 = vmatmul.mubr.bf16.gmra.mrb[0].mxu0 %v1954
        %v3618 = vpop.f32.mrb[0].mxu0
        %v3619 = vadd.f32 %v2247, %v3618
        %v3620 = vpop.f32.mrb[0].mxu0
        %v3621 = vadd.f32 %v2251, %v3620
        %v3622 = vpop.f32.mrb[0].mxu0
        %v3623 = vadd.f32 %v2247, %v3622
        %v3624 = vpop.f32.mrb[0].mxu0
        %v3625 = vadd.f32 %v2251, %v3624
        %3626 = vmatprep.mubr.bf16.mxu0 %v1963
        %3627 = vmatmul.mubr.bf16.gmra.mrb[0].mxu0 %v1962
        %v3628 = vpop.f32.mrb[0].mxu0
        %v3629 = vadd.f32 %v2247, %v3628
        %v3630 = vpop.f32.mrb[0].mxu0
        %v3631 = vadd.f32 %v2251, %v3630
        %v3632 = vpop.f32.mrb[0].mxu0
        %v3633 = vadd.f32 %v2247, %v3632
        %v3634 = vpop.f32.mrb[0].mxu0
        %v3635 = vadd.f32 %v2251, %v3634
        %3636 = vmatprep.mubr.bf16.mxu0 %v1971
        %3637 = vmatmul.mubr.bf16.gmra.mrb[0].mxu0 %v1970
        %v3638 = vpop.f32.mrb[0].mxu0
        %v3639 = vadd.f32 %v2247, %v3638
        %v3640 = vpop.f32.mrb[0].mxu0
        %v3641 = vadd.f32 %v2251, %v3640
        %v3642 = vpop.f32.mrb[0].mxu0
        %v3643 = vadd.f32 %v2247, %v3642
        %v3644 = vpop.f32.mrb[0].mxu0
        %v3645 = vadd.f32 %v2251, %v3644
        %3646 = vmatprep.mubr.bf16.mxu0 %v1979
        %3647 = vmatmul.mubr.bf16.gmra.mrb[0].mxu0 %v1978
        %v3648 = vpop.f32.mrb[0].mxu0
        %v3649 = vadd.f32 %v2247, %v3648
        %v3650 = vpop.f32.mrb[0].mxu0
        %v3651 = vadd.f32 %v2251, %v3650
        %v3652 = vpop.f32.mrb[0].mxu0
        %v3653 = vadd.f32 %v2247, %v3652
        %v3654 = vpop.f32.mrb[0].mxu0
        %v3655 = vadd.f32 %v2251, %v3654
        %3656 = vdwg.mxu0
        %3657 = vmatprep.subr.bf16.mxu0 %v3097
        %3658 = vmatpush1.bf16.msra.mxu0 %v3096
        %3659 = vmatprep.subr.bf16.mxu0 %v3101
        %3660 = vmatpush1.bf16.msra.mxu0 %v3100
        %3661 = vmatprep.subr.bf16.mxu0 %v3105
        %3662 = vmatpush1.bf16.msra.mxu0 %v3104
        %3663 = vmatprep.subr.bf16.mxu0 %v3109
        %3664 = vmatpush1.bf16.msra.mxu0 %v3108
        %3665 = vmatprep.subr.bf16.mxu0 %v3113
        %3666 = vmatpush1.bf16.msra.mxu0 %v3112
        %3667 = vmatprep.subr.bf16.mxu0 %v3117
        %3668 = vmatpush1.bf16.msra.mxu0 %v3116
        %3669 = vmatprep.subr.bf16.mxu0 %v3121
        %3670 = vmatpush1.bf16.msra.mxu0 %v3120
        %3671 = vmatprep.subr.bf16.mxu0 %v3125
        %3672 = vmatpush1.bf16.msra.mxu0 %v3124
        %3673 = vmatprep.subr.bf16.mxu0 %v3129
        %3674 = vmatpush1.bf16.msra.mxu0 %v3128
        %3675 = vmatprep.subr.bf16.mxu0 %v3133
        %3676 = vmatpush1.bf16.msra.mxu0 %v3132
        %3677 = vmatprep.subr.bf16.mxu0 %v3137
        %3678 = vmatpush1.bf16.msra.mxu0 %v3136
        %3679 = vmatprep.subr.bf16.mxu0 %v3141
        %3680 = vmatpush1.bf16.msra.mxu0 %v3140
        %3681 = vmatprep.subr.bf16.mxu0 %v3145
        %3682 = vmatpush1.bf16.msra.mxu0 %v3144
        %3683 = vmatprep.subr.bf16.mxu0 %v3149
        %3684 = vmatpush1.bf16.msra.mxu0 %v3148
        %3685 = vmatprep.subr.bf16.mxu0 %v3153
        %3686 = vmatpush1.bf16.msra.mxu0 %v3152
        %3687 = vmatprep.subr.bf16.mxu0 %v3157
        %3688 = vmatpush1.bf16.msra.mxu0 %v3156
        %3689 = vmatprep.mubr.bf16.mxu0 %v1925
        %3690 = vmatmul.mubr.bf16.gmra.mrb[0].mxu0 %v1924
        %v3691 = vpop.f32.mrb[0].mxu0
        %v3692 = vadd.f32 %v3579, %v3691
        %v3693 = vpop.f32.mrb[0].mxu0
        %v3694 = vadd.f32 %v3581, %v3693
        %v3695 = vpop.f32.mrb[0].mxu0
        %v3696 = vadd.f32 %v3583, %v3695
        %v3697 = vpop.f32.mrb[0].mxu0
        %v3698 = vadd.f32 %v3585, %v3697
        %3699 = vmatprep.mubr.bf16.mxu0 %v1933
        %3700 = vmatmul.mubr.bf16.gmra.mrb[0].mxu0 %v1932
        %v3701 = vpop.f32.mrb[0].mxu0
        %v3702 = vadd.f32 %v3589, %v3701
        %v3703 = vpop.f32.mrb[0].mxu0
        %v3704 = vadd.f32 %v3591, %v3703
        %v3705 = vpop.f32.mrb[0].mxu0
        %v3706 = vadd.f32 %v3593, %v3705
        %v3707 = vpop.f32.mrb[0].mxu0
        %v3708 = vadd.f32 %v3595, %v3707
        %3709 = vmatprep.mubr.bf16.mxu0 %v1941
        %3710 = vmatmul.mubr.bf16.gmra.mrb[0].mxu0 %v1940
        %v3711 = vpop.f32.mrb[0].mxu0
        %v3712 = vadd.f32 %v3599, %v3711
        %v3713 = vpop.f32.mrb[0].mxu0
        %v3714 = vadd.f32 %v3601, %v3713
        %v3715 = vpop.f32.mrb[0].mxu0
        %v3716 = vadd.f32 %v3603, %v3715
        %v3717 = vpop.f32.mrb[0].mxu0
        %v3718 = vadd.f32 %v3605, %v3717
        %3719 = vmatprep.mubr.bf16.mxu0 %v1949
        %3720 = vmatmul.mubr.bf16.gmra.mrb[0].mxu0 %v1948
        %v3721 = vpop.f32.mrb[0].mxu0
        %v3722 = vadd.f32 %v3609, %v3721
        %v3723 = vpop.f32.mrb[0].mxu0
        %v3724 = vadd.f32 %v3611, %v3723
        %v3725 = vpop.f32.mrb[0].mxu0
        %v3726 = vadd.f32 %v3613, %v3725
        %v3727 = vpop.f32.mrb[0].mxu0
        %v3728 = vadd.f32 %v3615, %v3727
        %3729 = vmatprep.mubr.bf16.mxu0 %v1957
        %3730 = vmatmul.mubr.bf16.gmra.mrb[0].mxu0 %v1956
        %v3731 = vpop.f32.mrb[0].mxu0
        %v3732 = vadd.f32 %v3619, %v3731
        %v3733 = vpop.f32.mrb[0].mxu0
        %v3734 = vadd.f32 %v3621, %v3733
        %v3735 = vpop.f32.mrb[0].mxu0
        %v3736 = vadd.f32 %v3623, %v3735
        %v3737 = vpop.f32.mrb[0].mxu0
        %v3738 = vadd.f32 %v3625, %v3737
        %3739 = vmatprep.mubr.bf16.mxu0 %v1965
        %3740 = vmatmul.mubr.bf16.gmra.mrb[0].mxu0 %v1964
        %v3741 = vpop.f32.mrb[0].mxu0
        %v3742 = vadd.f32 %v3629, %v3741
        %v3743 = vpop.f32.mrb[0].mxu0
        %v3744 = vadd.f32 %v3631, %v3743
        %v3745 = vpop.f32.mrb[0].mxu0
        %v3746 = vadd.f32 %v3633, %v3745
        %v3747 = vpop.f32.mrb[0].mxu0
        %v3748 = vadd.f32 %v3635, %v3747
        %3749 = vmatprep.mubr.bf16.mxu0 %v1973
        %3750 = vmatmul.mubr.bf16.gmra.mrb[0].mxu0 %v1972
        %v3751 = vpop.f32.mrb[0].mxu0
        %v3752 = vadd.f32 %v3639, %v3751
        %v3753 = vpop.f32.mrb[0].mxu0
        %v3754 = vadd.f32 %v3641, %v3753
        %v3755 = vpop.f32.mrb[0].mxu0
        %v3756 = vadd.f32 %v3643, %v3755
        %v3757 = vpop.f32.mrb[0].mxu0
        %v3758 = vadd.f32 %v3645, %v3757
        %3759 = vmatprep.mubr.bf16.mxu0 %v1981
        %3760 = vmatmul.mubr.bf16.gmra.mrb[0].mxu0 %v1980
        %v3761 = vpop.f32.mrb[0].mxu0
        %v3762 = vadd.f32 %v3649, %v3761
        %v3763 = vpop.f32.mrb[0].mxu0
        %v3764 = vadd.f32 %v3651, %v3763
        %v3765 = vpop.f32.mrb[0].mxu0
        %v3766 = vadd.f32 %v3653, %v3765
        %v3767 = vpop.f32.mrb[0].mxu0
        %v3768 = vadd.f32 %v3655, %v3767
        %3769 = vdwg.mxu0
        %3770 = vmatprep.subr.bf16.mxu0 %v3161
        %3771 = vmatpush1.bf16.msra.mxu0 %v3160
        %3772 = vmatprep.subr.bf16.mxu0 %v3165
        %3773 = vmatpush1.bf16.msra.mxu0 %v3164
        %3774 = vmatprep.subr.bf16.mxu0 %v3169
        %3775 = vmatpush1.bf16.msra.mxu0 %v3168
        %3776 = vmatprep.subr.bf16.mxu0 %v3173
        %3777 = vmatpush1.bf16.msra.mxu0 %v3172
        %3778 = vmatprep.subr.bf16.mxu0 %v3177
        %3779 = vmatpush1.bf16.msra.mxu0 %v3176
        %3780 = vmatprep.subr.bf16.mxu0 %v3181
        %3781 = vmatpush1.bf16.msra.mxu0 %v3180
        %3782 = vmatprep.subr.bf16.mxu0 %v3185
        %3783 = vmatpush1.bf16.msra.mxu0 %v3184
        %3784 = vmatprep.subr.bf16.mxu0 %v3189
        %3785 = vmatpush1.bf16.msra.mxu0 %v3188
        %3786 = vmatprep.subr.bf16.mxu0 %v3193
        %3787 = vmatpush1.bf16.msra.mxu0 %v3192
        %3788 = vmatprep.subr.bf16.mxu0 %v3197
        %3789 = vmatpush1.bf16.msra.mxu0 %v3196
        %3790 = vmatprep.subr.bf16.mxu0 %v3201
        %3791 = vmatpush1.bf16.msra.mxu0 %v3200
        %3792 = vmatprep.subr.bf16.mxu0 %v3205
        %3793 = vmatpush1.bf16.msra.mxu0 %v3204
        %3794 = vmatprep.subr.bf16.mxu0 %v3209
        %3795 = vmatpush1.bf16.msra.mxu0 %v3208
        %3796 = vmatprep.subr.bf16.mxu0 %v3213
        %3797 = vmatpush1.bf16.msra.mxu0 %v3212
        %3798 = vmatprep.subr.bf16.mxu0 %v3217
        %3799 = vmatpush1.bf16.msra.mxu0 %v3216
        %3800 = vmatprep.subr.bf16.mxu0 %v3221
        %3801 = vmatpush1.bf16.msra.mxu0 %v3220
        %3802 = vmatprep.mubr.bf16.mxu0 %v1927
        %3803 = vmatmul.mubr.bf16.gmra.mrb[0].mxu0 %v1926
        %v3804 = vpop.f32.mrb[0].mxu0
        %v3805 = vadd.f32 %v3692, %v3804
        %v3806 = vpop.f32.mrb[0].mxu0
        %v3807 = vadd.f32 %v3694, %v3806
        %v3808 = vpop.f32.mrb[0].mxu0
        %v3809 = vadd.f32 %v3696, %v3808
        %v3810 = vpop.f32.mrb[0].mxu0
        %v3811 = vadd.f32 %v3698, %v3810
        %3812 = vmatprep.mubr.bf16.mxu0 %v1935
        %3813 = vmatmul.mubr.bf16.gmra.mrb[0].mxu0 %v1934
        %v3814 = vpop.f32.mrb[0].mxu0
        %v3815 = vadd.f32 %v3702, %v3814
        %v3816 = vpop.f32.mrb[0].mxu0
        %v3817 = vadd.f32 %v3704, %v3816
        %v3818 = vpop.f32.mrb[0].mxu0
        %v3819 = vadd.f32 %v3706, %v3818
        %v3820 = vpop.f32.mrb[0].mxu0
        %v3821 = vadd.f32 %v3708, %v3820
        %3822 = vmatprep.mubr.bf16.mxu0 %v1943
        %3823 = vmatmul.mubr.bf16.gmra.mrb[0].mxu0 %v1942
        %v3824 = vpop.f32.mrb[0].mxu0
        %v3825 = vadd.f32 %v3712, %v3824
        %v3826 = vpop.f32.mrb[0].mxu0
        %v3827 = vadd.f32 %v3714, %v3826
        %v3828 = vpop.f32.mrb[0].mxu0
        %v3829 = vadd.f32 %v3716, %v3828
        %v3830 = vpop.f32.mrb[0].mxu0
        %v3831 = vadd.f32 %v3718, %v3830
        %3832 = vmatprep.mubr.bf16.mxu0 %v1951
        %3833 = vmatmul.mubr.bf16.gmra.mrb[0].mxu0 %v1950
        %v3834 = vpop.f32.mrb[0].mxu0
        %v3835 = vadd.f32 %v3722, %v3834
        %v3836 = vpop.f32.mrb[0].mxu0
        %v3837 = vadd.f32 %v3724, %v3836
        %v3838 = vpop.f32.mrb[0].mxu0
        %v3839 = vadd.f32 %v3726, %v3838
        %v3840 = vpop.f32.mrb[0].mxu0
        %v3841 = vadd.f32 %v3728, %v3840
        %3842 = vmatprep.mubr.bf16.mxu0 %v1959
        %3843 = vmatmul.mubr.bf16.gmra.mrb[0].mxu0 %v1958
        %v3844 = vpop.f32.mrb[0].mxu0
        %v3845 = vadd.f32 %v3732, %v3844
        %v3846 = vpop.f32.mrb[0].mxu0
        %v3847 = vadd.f32 %v3734, %v3846
        %v3848 = vpop.f32.mrb[0].mxu0
        %v3849 = vadd.f32 %v3736, %v3848
        %v3850 = vpop.f32.mrb[0].mxu0
        %v3851 = vadd.f32 %v3738, %v3850
        %3852 = vmatprep.mubr.bf16.mxu0 %v1967
        %3853 = vmatmul.mubr.bf16.gmra.mrb[0].mxu0 %v1966
        %v3854 = vpop.f32.mrb[0].mxu0
        %v3855 = vadd.f32 %v3742, %v3854
        %v3856 = vpop.f32.mrb[0].mxu0
        %v3857 = vadd.f32 %v3744, %v3856
        %v3858 = vpop.f32.mrb[0].mxu0
        %v3859 = vadd.f32 %v3746, %v3858
        %v3860 = vpop.f32.mrb[0].mxu0
        %v3861 = vadd.f32 %v3748, %v3860
        %3862 = vmatprep.mubr.bf16.mxu0 %v1975
        %3863 = vmatmul.mubr.bf16.gmra.mrb[0].mxu0 %v1974
        %v3864 = vpop.f32.mrb[0].mxu0
        %v3865 = vadd.f32 %v3752, %v3864
        %v3866 = vpop.f32.mrb[0].mxu0
        %v3867 = vadd.f32 %v3754, %v3866
        %v3868 = vpop.f32.mrb[0].mxu0
        %v3869 = vadd.f32 %v3756, %v3868
        %v3870 = vpop.f32.mrb[0].mxu0
        %v3871 = vadd.f32 %v3758, %v3870
        %3872 = vmatprep.mubr.bf16.mxu0 %v1983
        %3873 = vmatmul.mubr.bf16.gmra.mrb[0].mxu0 %v1982
        %v3874 = vpop.f32.mrb[0].mxu0
        %v3875 = vadd.f32 %v3762, %v3874
        %v3876 = vpop.f32.mrb[0].mxu0
        %v3877 = vadd.f32 %v3764, %v3876
        %v3878 = vpop.f32.mrb[0].mxu0
        %v3879 = vadd.f32 %v3766, %v3878
        %v3880 = vpop.f32.mrb[0].mxu0
        %v3881 = vadd.f32 %v3768, %v3880
        %3882 = vdwg.mxu0
        %3883 = vmatprep.subr.bf16.mxu0 %v3225
        %3884 = vmatpush1.bf16.msra.mxu0 %v3224
        %3885 = vmatprep.subr.bf16.mxu0 %v3229
        %3886 = vmatpush1.bf16.msra.mxu0 %v3228
        %3887 = vmatprep.subr.bf16.mxu0 %v3233
        %3888 = vmatpush1.bf16.msra.mxu0 %v3232
        %3889 = vmatprep.subr.bf16.mxu0 %v3237
        %3890 = vmatpush1.bf16.msra.mxu0 %v3236
        %3891 = vmatprep.subr.bf16.mxu0 %v3241
        %3892 = vmatpush1.bf16.msra.mxu0 %v3240
        %3893 = vmatprep.subr.bf16.mxu0 %v3245
        %3894 = vmatpush1.bf16.msra.mxu0 %v3244
        %3895 = vmatprep.subr.bf16.mxu0 %v3249
        %3896 = vmatpush1.bf16.msra.mxu0 %v3248
        %3897 = vmatprep.subr.bf16.mxu0 %v3253
        %3898 = vmatpush1.bf16.msra.mxu0 %v3252
        %3899 = vmatprep.subr.bf16.mxu0 %v3257
        %3900 = vmatpush1.bf16.msra.mxu0 %v3256
        %3901 = vmatprep.subr.bf16.mxu0 %v3261
        %3902 = vmatpush1.bf16.msra.mxu0 %v3260
        %3903 = vmatprep.subr.bf16.mxu0 %v3265
        %3904 = vmatpush1.bf16.msra.mxu0 %v3264
        %3905 = vmatprep.subr.bf16.mxu0 %v3269
        %3906 = vmatpush1.bf16.msra.mxu0 %v3268
        %3907 = vmatprep.subr.bf16.mxu0 %v3273
        %3908 = vmatpush1.bf16.msra.mxu0 %v3272
        %3909 = vmatprep.subr.bf16.mxu0 %v3277
        %3910 = vmatpush1.bf16.msra.mxu0 %v3276
        %3911 = vmatprep.subr.bf16.mxu0 %v3281
        %3912 = vmatpush1.bf16.msra.mxu0 %v3280
        %3913 = vmatprep.subr.bf16.mxu0 %v3285
        %3914 = vmatpush1.bf16.msra.mxu0 %v3284
        %3915 = vmatprep.mubr.bf16.mxu0 %v1929
        %3916 = vmatmul.mubr.bf16.gmra.mrb[0].mxu0 %v1928
        %v3917 = vpop.f32.mrb[0].mxu0
        %v3918 = vadd.f32 %v3805, %v3917
        %v3919 = vpop.f32.mrb[0].mxu0
        %v3920 = vadd.f32 %v3807, %v3919
        %v3921 = vpop.f32.mrb[0].mxu0
        %v3922 = vadd.f32 %v3809, %v3921
        %v3923 = vpop.f32.mrb[0].mxu0
        %v3924 = vadd.f32 %v3811, %v3923
        %3925 = vmatprep.mubr.bf16.mxu0 %v1937
        %3926 = vmatmul.mubr.bf16.gmra.mrb[0].mxu0 %v1936
        %v3927 = vpop.f32.mrb[0].mxu0
        %v3928 = vadd.f32 %v3815, %v3927
        %v3929 = vpop.f32.mrb[0].mxu0
        %v3930 = vadd.f32 %v3817, %v3929
        %v3931 = vpop.f32.mrb[0].mxu0
        %v3932 = vadd.f32 %v3819, %v3931
        %v3933 = vpop.f32.mrb[0].mxu0
        %v3934 = vadd.f32 %v3821, %v3933
        %3935 = vmatprep.mubr.bf16.mxu0 %v1945
        %3936 = vmatmul.mubr.bf16.gmra.mrb[0].mxu0 %v1944
        %v3937 = vpop.f32.mrb[0].mxu0
        %v3938 = vadd.f32 %v3825, %v3937
        %v3939 = vpop.f32.mrb[0].mxu0
        %v3940 = vadd.f32 %v3827, %v3939
        %v3941 = vpop.f32.mrb[0].mxu0
        %v3942 = vadd.f32 %v3829, %v3941
        %v3943 = vpop.f32.mrb[0].mxu0
        %v3944 = vadd.f32 %v3831, %v3943
        %3945 = vmatprep.mubr.bf16.mxu0 %v1953
        %3946 = vmatmul.mubr.bf16.gmra.mrb[0].mxu0 %v1952
        %v3947 = vpop.f32.mrb[0].mxu0
        %v3948 = vadd.f32 %v3835, %v3947
        %v3949 = vpop.f32.mrb[0].mxu0
        %v3950 = vadd.f32 %v3837, %v3949
        %v3951 = vpop.f32.mrb[0].mxu0
        %v3952 = vadd.f32 %v3839, %v3951
        %v3953 = vpop.f32.mrb[0].mxu0
        %v3954 = vadd.f32 %v3841, %v3953
        %3955 = vmatprep.mubr.bf16.mxu0 %v1961
        %3956 = vmatmul.mubr.bf16.gmra.mrb[0].mxu0 %v1960
        %v3957 = vpop.f32.mrb[0].mxu0
        %v3958 = vadd.f32 %v3845, %v3957
        %v3959 = vpop.f32.mrb[0].mxu0
        %v3960 = vadd.f32 %v3847, %v3959
        %v3961 = vpop.f32.mrb[0].mxu0
        %v3962 = vadd.f32 %v3849, %v3961
        %v3963 = vpop.f32.mrb[0].mxu0
        %v3964 = vadd.f32 %v3851, %v3963
        %3965 = vmatprep.mubr.bf16.mxu0 %v1969
        %3966 = vmatmul.mubr.bf16.gmra.mrb[0].mxu0 %v1968
        %v3967 = vpop.f32.mrb[0].mxu0
        %v3968 = vadd.f32 %v3855, %v3967
        %v3969 = vpop.f32.mrb[0].mxu0
        %v3970 = vadd.f32 %v3857, %v3969
        %v3971 = vpop.f32.mrb[0].mxu0
        %v3972 = vadd.f32 %v3859, %v3971
        %v3973 = vpop.f32.mrb[0].mxu0
        %v3974 = vadd.f32 %v3861, %v3973
        %3975 = vmatprep.mubr.bf16.mxu0 %v1977
        %3976 = vmatmul.mubr.bf16.gmra.mrb[0].mxu0 %v1976
        %v3977 = vpop.f32.mrb[0].mxu0
        %v3978 = vadd.f32 %v3865, %v3977
        %v3979 = vpop.f32.mrb[0].mxu0
        %v3980 = vadd.f32 %v3867, %v3979
        %v3981 = vpop.f32.mrb[0].mxu0
        %v3982 = vadd.f32 %v3869, %v3981
        %v3983 = vpop.f32.mrb[0].mxu0
        %v3984 = vadd.f32 %v3871, %v3983
        %3985 = vmatprep.mubr.bf16.mxu0 %v1985
        %3986 = vmatmul.mubr.bf16.gmra.mrb[0].mxu0 %v1984
        %v3987 = vpop.f32.mrb[0].mxu0
        %v3988 = vadd.f32 %v3875, %v3987
        %v3989 = vpop.f32.mrb[0].mxu0
        %v3990 = vadd.f32 %v3877, %v3989
        %v3991 = vpop.f32.mrb[0].mxu0
        %v3992 = vadd.f32 %v3879, %v3991
        %v3993 = vpop.f32.mrb[0].mxu0
        %v3994 = vadd.f32 %v3881, %v3993
        %3995 = vdwg.mxu0
        %3996 = vmatprep.subr.bf16.mxu0 %v3035
        %3997 = vmatpush1.bf16.msra.mxu0 %v3034
        %3998 = vmatprep.subr.bf16.mxu0 %v3039
        %3999 = vmatpush1.bf16.msra.mxu0 %v3038
        %4000 = vmatprep.subr.bf16.mxu0 %v3043
        %4001 = vmatpush1.bf16.msra.mxu0 %v3042
        %4002 = vmatprep.subr.bf16.mxu0 %v3047
        %4003 = vmatpush1.bf16.msra.mxu0 %v3046
        %4004 = vmatprep.subr.bf16.mxu0 %v3051
        %4005 = vmatpush1.bf16.msra.mxu0 %v3050
        %4006 = vmatprep.subr.bf16.mxu0 %v3055
        %4007 = vmatpush1.bf16.msra.mxu0 %v3054
        %4008 = vmatprep.subr.bf16.mxu0 %v3059
        %4009 = vmatpush1.bf16.msra.mxu0 %v3058
        %4010 = vmatprep.subr.bf16.mxu0 %v3063
        %4011 = vmatpush1.bf16.msra.mxu0 %v3062
        %4012 = vmatprep.subr.bf16.mxu0 %v3067
        %4013 = vmatpush1.bf16.msra.mxu0 %v3066
        %4014 = vmatprep.subr.bf16.mxu0 %v3071
        %4015 = vmatpush1.bf16.msra.mxu0 %v3070
        %4016 = vmatprep.subr.bf16.mxu0 %v3075
        %4017 = vmatpush1.bf16.msra.mxu0 %v3074
        %4018 = vmatprep.subr.bf16.mxu0 %v3079
        %4019 = vmatpush1.bf16.msra.mxu0 %v3078
        %4020 = vmatprep.subr.bf16.mxu0 %v3083
        %4021 = vmatpush1.bf16.msra.mxu0 %v3082
        %4022 = vmatprep.subr.bf16.mxu0 %v3087
        %4023 = vmatpush1.bf16.msra.mxu0 %v3086
        %4024 = vmatprep.subr.bf16.mxu0 %v3091
        %4025 = vmatpush1.bf16.msra.mxu0 %v3090
        %4026 = vmatprep.subr.bf16.mxu0 %v3095
        %4027 = vmatpush1.bf16.msra.mxu0 %v3094
        %4028 = vmatprep.mubr.bf16.mxu0 %v1923
        %4029 = vmatmul.mubr.bf16.gmra.mrb[0].mxu0 %v1922
        %v4030 = vpop.f32.mrb[0].mxu0
        %v4031 = vadd.f32 %v2255, %v4030
        %v4032 = vpop.f32.mrb[0].mxu0
        %v4033 = vadd.f32 %v2259, %v4032
        %v4034 = vpop.f32.mrb[0].mxu0
        %v4035 = vadd.f32 %v2255, %v4034
        %v4036 = vpop.f32.mrb[0].mxu0
        %v4037 = vadd.f32 %v2259, %v4036
        %4038 = vmatprep.mubr.bf16.mxu0 %v1931
        %4039 = vmatmul.mubr.bf16.gmra.mrb[0].mxu0 %v1930
        %v4040 = vpop.f32.mrb[0].mxu0
        %v4041 = vadd.f32 %v2255, %v4040
        %v4042 = vpop.f32.mrb[0].mxu0
        %v4043 = vadd.f32 %v2259, %v4042
        %v4044 = vpop.f32.mrb[0].mxu0
        %v4045 = vadd.f32 %v2255, %v4044
        %v4046 = vpop.f32.mrb[0].mxu0
        %v4047 = vadd.f32 %v2259, %v4046
        %4048 = vmatprep.mubr.bf16.mxu0 %v1939
        %4049 = vmatmul.mubr.bf16.gmra.mrb[0].mxu0 %v1938
        %v4050 = vpop.f32.mrb[0].mxu0
        %v4051 = vadd.f32 %v2255, %v4050
        %v4052 = vpop.f32.mrb[0].mxu0
        %v4053 = vadd.f32 %v2259, %v4052
        %v4054 = vpop.f32.mrb[0].mxu0
        %v4055 = vadd.f32 %v2255, %v4054
        %v4056 = vpop.f32.mrb[0].mxu0
        %v4057 = vadd.f32 %v2259, %v4056
        %4058 = vmatprep.mubr.bf16.mxu0 %v1947
        %4059 = vmatmul.mubr.bf16.gmra.mrb[0].mxu0 %v1946
        %v4060 = vpop.f32.mrb[0].mxu0
        %v4061 = vadd.f32 %v2255, %v4060
        %v4062 = vpop.f32.mrb[0].mxu0
        %v4063 = vadd.f32 %v2259, %v4062
        %v4064 = vpop.f32.mrb[0].mxu0
        %v4065 = vadd.f32 %v2255, %v4064
        %v4066 = vpop.f32.mrb[0].mxu0
        %v4067 = vadd.f32 %v2259, %v4066
        %4068 = vmatprep.mubr.bf16.mxu0 %v1955
        %4069 = vmatmul.mubr.bf16.gmra.mrb[0].mxu0 %v1954
        %v4070 = vpop.f32.mrb[0].mxu0
        %v4071 = vadd.f32 %v2255, %v4070
        %v4072 = vpop.f32.mrb[0].mxu0
        %v4073 = vadd.f32 %v2259, %v4072
        %v4074 = vpop.f32.mrb[0].mxu0
        %v4075 = vadd.f32 %v2255, %v4074
        %v4076 = vpop.f32.mrb[0].mxu0
        %v4077 = vadd.f32 %v2259, %v4076
        %4078 = vmatprep.mubr.bf16.mxu0 %v1963
        %4079 = vmatmul.mubr.bf16.gmra.mrb[0].mxu0 %v1962
        %v4080 = vpop.f32.mrb[0].mxu0
        %v4081 = vadd.f32 %v2255, %v4080
        %v4082 = vpop.f32.mrb[0].mxu0
        %v4083 = vadd.f32 %v2259, %v4082
        %v4084 = vpop.f32.mrb[0].mxu0
        %v4085 = vadd.f32 %v2255, %v4084
        %v4086 = vpop.f32.mrb[0].mxu0
        %v4087 = vadd.f32 %v2259, %v4086
        %4088 = vmatprep.mubr.bf16.mxu0 %v1971
        %4089 = vmatmul.mubr.bf16.gmra.mrb[0].mxu0 %v1970
        %v4090 = vpop.f32.mrb[0].mxu0
        %v4091 = vadd.f32 %v2255, %v4090
        %v4092 = vpop.f32.mrb[0].mxu0
        %v4093 = vadd.f32 %v2259, %v4092
        %v4094 = vpop.f32.mrb[0].mxu0
        %v4095 = vadd.f32 %v2255, %v4094
        %v4096 = vpop.f32.mrb[0].mxu0
        %v4097 = vadd.f32 %v2259, %v4096
        %4098 = vmatprep.mubr.bf16.mxu0 %v1979
        %4099 = vmatmul.mubr.bf16.gmra.mrb[0].mxu0 %v1978
        %v4100 = vpop.f32.mrb[0].mxu0
        %v4101 = vadd.f32 %v2255, %v4100
        %v4102 = vpop.f32.mrb[0].mxu0
        %v4103 = vadd.f32 %v2259, %v4102
        %v4104 = vpop.f32.mrb[0].mxu0
        %v4105 = vadd.f32 %v2255, %v4104
        %v4106 = vpop.f32.mrb[0].mxu0
        %v4107 = vadd.f32 %v2259, %v4106
        %4108 = vdwg.mxu0
        %4109 = vmatprep.subr.bf16.mxu0 %v3099
        %4110 = vmatpush1.bf16.msra.mxu0 %v3098
        %4111 = vmatprep.subr.bf16.mxu0 %v3103
        %4112 = vmatpush1.bf16.msra.mxu0 %v3102
        %4113 = vmatprep.subr.bf16.mxu0 %v3107
        %4114 = vmatpush1.bf16.msra.mxu0 %v3106
        %4115 = vmatprep.subr.bf16.mxu0 %v3111
        %4116 = vmatpush1.bf16.msra.mxu0 %v3110
        %4117 = vmatprep.subr.bf16.mxu0 %v3115
        %4118 = vmatpush1.bf16.msra.mxu0 %v3114
        %4119 = vmatprep.subr.bf16.mxu0 %v3119
        %4120 = vmatpush1.bf16.msra.mxu0 %v3118
        %4121 = vmatprep.subr.bf16.mxu0 %v3123
        %4122 = vmatpush1.bf16.msra.mxu0 %v3122
        %4123 = vmatprep.subr.bf16.mxu0 %v3127
        %4124 = vmatpush1.bf16.msra.mxu0 %v3126
        %4125 = vmatprep.subr.bf16.mxu0 %v3131
        %4126 = vmatpush1.bf16.msra.mxu0 %v3130
        %4127 = vmatprep.subr.bf16.mxu0 %v3135
        %4128 = vmatpush1.bf16.msra.mxu0 %v3134
        %4129 = vmatprep.subr.bf16.mxu0 %v3139
        %4130 = vmatpush1.bf16.msra.mxu0 %v3138
        %4131 = vmatprep.subr.bf16.mxu0 %v3143
        %4132 = vmatpush1.bf16.msra.mxu0 %v3142
        %4133 = vmatprep.subr.bf16.mxu0 %v3147
        %4134 = vmatpush1.bf16.msra.mxu0 %v3146
        %4135 = vmatprep.subr.bf16.mxu0 %v3151
        %4136 = vmatpush1.bf16.msra.mxu0 %v3150
        %4137 = vmatprep.subr.bf16.mxu0 %v3155
        %4138 = vmatpush1.bf16.msra.mxu0 %v3154
        %4139 = vmatprep.subr.bf16.mxu0 %v3159
        %4140 = vmatpush1.bf16.msra.mxu0 %v3158
        %4141 = vmatprep.mubr.bf16.mxu0 %v1925
        %4142 = vmatmul.mubr.bf16.gmra.mrb[0].mxu0 %v1924
        %v4143 = vpop.f32.mrb[0].mxu0
        %v4144 = vadd.f32 %v4031, %v4143
        %v4145 = vpop.f32.mrb[0].mxu0
        %v4146 = vadd.f32 %v4033, %v4145
        %v4147 = vpop.f32.mrb[0].mxu0
        %v4148 = vadd.f32 %v4035, %v4147
        %v4149 = vpop.f32.mrb[0].mxu0
        %v4150 = vadd.f32 %v4037, %v4149
        %4151 = vmatprep.mubr.bf16.mxu0 %v1933
        %4152 = vmatmul.mubr.bf16.gmra.mrb[0].mxu0 %v1932
        %v4153 = vpop.f32.mrb[0].mxu0
        %v4154 = vadd.f32 %v4041, %v4153
        %v4155 = vpop.f32.mrb[0].mxu0
        %v4156 = vadd.f32 %v4043, %v4155
        %v4157 = vpop.f32.mrb[0].mxu0
        %v4158 = vadd.f32 %v4045, %v4157
        %v4159 = vpop.f32.mrb[0].mxu0
        %v4160 = vadd.f32 %v4047, %v4159
        %4161 = vmatprep.mubr.bf16.mxu0 %v1941
        %4162 = vmatmul.mubr.bf16.gmra.mrb[0].mxu0 %v1940
        %v4163 = vpop.f32.mrb[0].mxu0
        %v4164 = vadd.f32 %v4051, %v4163
        %v4165 = vpop.f32.mrb[0].mxu0
        %v4166 = vadd.f32 %v4053, %v4165
        %v4167 = vpop.f32.mrb[0].mxu0
        %v4168 = vadd.f32 %v4055, %v4167
        %v4169 = vpop.f32.mrb[0].mxu0
        %v4170 = vadd.f32 %v4057, %v4169
        %4171 = vmatprep.mubr.bf16.mxu0 %v1949
        %4172 = vmatmul.mubr.bf16.gmra.mrb[0].mxu0 %v1948
        %v4173 = vpop.f32.mrb[0].mxu0
        %v4174 = vadd.f32 %v4061, %v4173
        %v4175 = vpop.f32.mrb[0].mxu0
        %v4176 = vadd.f32 %v4063, %v4175
        %v4177 = vpop.f32.mrb[0].mxu0
        %v4178 = vadd.f32 %v4065, %v4177
        %v4179 = vpop.f32.mrb[0].mxu0
        %v4180 = vadd.f32 %v4067, %v4179
        %4181 = vmatprep.mubr.bf16.mxu0 %v1957
        %4182 = vmatmul.mubr.bf16.gmra.mrb[0].mxu0 %v1956
        %v4183 = vpop.f32.mrb[0].mxu0
        %v4184 = vadd.f32 %v4071, %v4183
        %v4185 = vpop.f32.mrb[0].mxu0
        %v4186 = vadd.f32 %v4073, %v4185
        %v4187 = vpop.f32.mrb[0].mxu0
        %v4188 = vadd.f32 %v4075, %v4187
        %v4189 = vpop.f32.mrb[0].mxu0
        %v4190 = vadd.f32 %v4077, %v4189
        %4191 = vmatprep.mubr.bf16.mxu0 %v1965
        %4192 = vmatmul.mubr.bf16.gmra.mrb[0].mxu0 %v1964
        %v4193 = vpop.f32.mrb[0].mxu0
        %v4194 = vadd.f32 %v4081, %v4193
        %v4195 = vpop.f32.mrb[0].mxu0
        %v4196 = vadd.f32 %v4083, %v4195
        %v4197 = vpop.f32.mrb[0].mxu0
        %v4198 = vadd.f32 %v4085, %v4197
        %v4199 = vpop.f32.mrb[0].mxu0
        %v4200 = vadd.f32 %v4087, %v4199
        %4201 = vmatprep.mubr.bf16.mxu0 %v1973
        %4202 = vmatmul.mubr.bf16.gmra.mrb[0].mxu0 %v1972
        %v4203 = vpop.f32.mrb[0].mxu0
        %v4204 = vadd.f32 %v4091, %v4203
        %v4205 = vpop.f32.mrb[0].mxu0
        %v4206 = vadd.f32 %v4093, %v4205
        %v4207 = vpop.f32.mrb[0].mxu0
        %v4208 = vadd.f32 %v4095, %v4207
        %v4209 = vpop.f32.mrb[0].mxu0
        %v4210 = vadd.f32 %v4097, %v4209
        %4211 = vmatprep.mubr.bf16.mxu0 %v1981
        %4212 = vmatmul.mubr.bf16.gmra.mrb[0].mxu0 %v1980
        %v4213 = vpop.f32.mrb[0].mxu0
        %v4214 = vadd.f32 %v4101, %v4213
        %v4215 = vpop.f32.mrb[0].mxu0
        %v4216 = vadd.f32 %v4103, %v4215
        %v4217 = vpop.f32.mrb[0].mxu0
        %v4218 = vadd.f32 %v4105, %v4217
        %v4219 = vpop.f32.mrb[0].mxu0
        %v4220 = vadd.f32 %v4107, %v4219
        %4221 = vdwg.mxu0
        %4222 = vmatprep.subr.bf16.mxu0 %v3163
        %4223 = vmatpush1.bf16.msra.mxu0 %v3162
        %4224 = vmatprep.subr.bf16.mxu0 %v3167
        %4225 = vmatpush1.bf16.msra.mxu0 %v3166
        %4226 = vmatprep.subr.bf16.mxu0 %v3171
        %4227 = vmatpush1.bf16.msra.mxu0 %v3170
        %4228 = vmatprep.subr.bf16.mxu0 %v3175
        %4229 = vmatpush1.bf16.msra.mxu0 %v3174
        %4230 = vmatprep.subr.bf16.mxu0 %v3179
        %4231 = vmatpush1.bf16.msra.mxu0 %v3178
        %4232 = vmatprep.subr.bf16.mxu0 %v3183
        %4233 = vmatpush1.bf16.msra.mxu0 %v3182
        %4234 = vmatprep.subr.bf16.mxu0 %v3187
        %4235 = vmatpush1.bf16.msra.mxu0 %v3186
        %4236 = vmatprep.subr.bf16.mxu0 %v3191
        %4237 = vmatpush1.bf16.msra.mxu0 %v3190
        %4238 = vmatprep.subr.bf16.mxu0 %v3195
        %4239 = vmatpush1.bf16.msra.mxu0 %v3194
        %4240 = vmatprep.subr.bf16.mxu0 %v3199
        %4241 = vmatpush1.bf16.msra.mxu0 %v3198
        %4242 = vmatprep.subr.bf16.mxu0 %v3203
        %4243 = vmatpush1.bf16.msra.mxu0 %v3202
        %4244 = vmatprep.subr.bf16.mxu0 %v3207
        %4245 = vmatpush1.bf16.msra.mxu0 %v3206
        %4246 = vmatprep.subr.bf16.mxu0 %v3211
        %4247 = vmatpush1.bf16.msra.mxu0 %v3210
        %4248 = vmatprep.subr.bf16.mxu0 %v3215
        %4249 = vmatpush1.bf16.msra.mxu0 %v3214
        %4250 = vmatprep.subr.bf16.mxu0 %v3219
        %4251 = vmatpush1.bf16.msra.mxu0 %v3218
        %4252 = vmatprep.subr.bf16.mxu0 %v3223
        %4253 = vmatpush1.bf16.msra.mxu0 %v3222
        %4254 = vmatprep.mubr.bf16.mxu0 %v1927
        %4255 = vmatmul.mubr.bf16.gmra.mrb[0].mxu0 %v1926
        %v4256 = vpop.f32.mrb[0].mxu0
        %v4257 = vadd.f32 %v4144, %v4256
        %v4258 = vpop.f32.mrb[0].mxu0
        %v4259 = vadd.f32 %v4146, %v4258
        %v4260 = vpop.f32.mrb[0].mxu0
        %v4261 = vadd.f32 %v4148, %v4260
        %v4262 = vpop.f32.mrb[0].mxu0
        %v4263 = vadd.f32 %v4150, %v4262
        %4264 = vmatprep.mubr.bf16.mxu0 %v1935
        %4265 = vmatmul.mubr.bf16.gmra.mrb[0].mxu0 %v1934
        %v4266 = vpop.f32.mrb[0].mxu0
        %v4267 = vadd.f32 %v4154, %v4266
        %v4268 = vpop.f32.mrb[0].mxu0
        %v4269 = vadd.f32 %v4156, %v4268
        %v4270 = vpop.f32.mrb[0].mxu0
        %v4271 = vadd.f32 %v4158, %v4270
        %v4272 = vpop.f32.mrb[0].mxu0
        %v4273 = vadd.f32 %v4160, %v4272
        %4274 = vmatprep.mubr.bf16.mxu0 %v1943
        %4275 = vmatmul.mubr.bf16.gmra.mrb[0].mxu0 %v1942
        %v4276 = vpop.f32.mrb[0].mxu0
        %v4277 = vadd.f32 %v4164, %v4276
        %v4278 = vpop.f32.mrb[0].mxu0
        %v4279 = vadd.f32 %v4166, %v4278
        %v4280 = vpop.f32.mrb[0].mxu0
        %v4281 = vadd.f32 %v4168, %v4280
        %v4282 = vpop.f32.mrb[0].mxu0
        %v4283 = vadd.f32 %v4170, %v4282
        %4284 = vmatprep.mubr.bf16.mxu0 %v1951
        %4285 = vmatmul.mubr.bf16.gmra.mrb[0].mxu0 %v1950
        %v4286 = vpop.f32.mrb[0].mxu0
        %v4287 = vadd.f32 %v4174, %v4286
        %v4288 = vpop.f32.mrb[0].mxu0
        %v4289 = vadd.f32 %v4176, %v4288
        %v4290 = vpop.f32.mrb[0].mxu0
        %v4291 = vadd.f32 %v4178, %v4290
        %v4292 = vpop.f32.mrb[0].mxu0
        %v4293 = vadd.f32 %v4180, %v4292
        %4294 = vmatprep.mubr.bf16.mxu0 %v1959
        %4295 = vmatmul.mubr.bf16.gmra.mrb[0].mxu0 %v1958
        %v4296 = vpop.f32.mrb[0].mxu0
        %v4297 = vadd.f32 %v4184, %v4296
        %v4298 = vpop.f32.mrb[0].mxu0
        %v4299 = vadd.f32 %v4186, %v4298
        %v4300 = vpop.f32.mrb[0].mxu0
        %v4301 = vadd.f32 %v4188, %v4300
        %v4302 = vpop.f32.mrb[0].mxu0
        %v4303 = vadd.f32 %v4190, %v4302
        %4304 = vmatprep.mubr.bf16.mxu0 %v1967
        %4305 = vmatmul.mubr.bf16.gmra.mrb[0].mxu0 %v1966
        %v4306 = vpop.f32.mrb[0].mxu0
        %v4307 = vadd.f32 %v4194, %v4306
        %v4308 = vpop.f32.mrb[0].mxu0
        %v4309 = vadd.f32 %v4196, %v4308
        %v4310 = vpop.f32.mrb[0].mxu0
        %v4311 = vadd.f32 %v4198, %v4310
        %v4312 = vpop.f32.mrb[0].mxu0
        %v4313 = vadd.f32 %v4200, %v4312
        %4314 = vmatprep.mubr.bf16.mxu0 %v1975
        %4315 = vmatmul.mubr.bf16.gmra.mrb[0].mxu0 %v1974
        %v4316 = vpop.f32.mrb[0].mxu0
        %v4317 = vadd.f32 %v4204, %v4316
        %v4318 = vpop.f32.mrb[0].mxu0
        %v4319 = vadd.f32 %v4206, %v4318
        %v4320 = vpop.f32.mrb[0].mxu0
        %v4321 = vadd.f32 %v4208, %v4320
        %v4322 = vpop.f32.mrb[0].mxu0
        %v4323 = vadd.f32 %v4210, %v4322
        %4324 = vmatprep.mubr.bf16.mxu0 %v1983
        %4325 = vmatmul.mubr.bf16.gmra.mrb[0].mxu0 %v1982
        %v4326 = vpop.f32.mrb[0].mxu0
        %v4327 = vadd.f32 %v4214, %v4326
        %v4328 = vpop.f32.mrb[0].mxu0
        %v4329 = vadd.f32 %v4216, %v4328
        %v4330 = vpop.f32.mrb[0].mxu0
        %v4331 = vadd.f32 %v4218, %v4330
        %v4332 = vpop.f32.mrb[0].mxu0
        %v4333 = vadd.f32 %v4220, %v4332
        %4334 = vdwg.mxu0
        %4335 = vmatprep.subr.bf16.mxu0 %v3227
        %4336 = vmatpush1.bf16.msra.mxu0 %v3226
        %4337 = vmatprep.subr.bf16.mxu0 %v3231
        %4338 = vmatpush1.bf16.msra.mxu0 %v3230
        %4339 = vmatprep.subr.bf16.mxu0 %v3235
        %4340 = vmatpush1.bf16.msra.mxu0 %v3234
        %4341 = vmatprep.subr.bf16.mxu0 %v3239
        %4342 = vmatpush1.bf16.msra.mxu0 %v3238
        %4343 = vmatprep.subr.bf16.mxu0 %v3243
        %4344 = vmatpush1.bf16.msra.mxu0 %v3242
        %4345 = vmatprep.subr.bf16.mxu0 %v3247
        %4346 = vmatpush1.bf16.msra.mxu0 %v3246
        %4347 = vmatprep.subr.bf16.mxu0 %v3251
        %4348 = vmatpush1.bf16.msra.mxu0 %v3250
        %4349 = vmatprep.subr.bf16.mxu0 %v3255
        %4350 = vmatpush1.bf16.msra.mxu0 %v3254
        %4351 = vmatprep.subr.bf16.mxu0 %v3259
        %4352 = vmatpush1.bf16.msra.mxu0 %v3258
        %4353 = vmatprep.subr.bf16.mxu0 %v3263
        %4354 = vmatpush1.bf16.msra.mxu0 %v3262
        %4355 = vmatprep.subr.bf16.mxu0 %v3267
        %4356 = vmatpush1.bf16.msra.mxu0 %v3266
        %4357 = vmatprep.subr.bf16.mxu0 %v3271
        %4358 = vmatpush1.bf16.msra.mxu0 %v3270
        %4359 = vmatprep.subr.bf16.mxu0 %v3275
        %4360 = vmatpush1.bf16.msra.mxu0 %v3274
        %4361 = vmatprep.subr.bf16.mxu0 %v3279
        %4362 = vmatpush1.bf16.msra.mxu0 %v3278
        %4363 = vmatprep.subr.bf16.mxu0 %v3283
        %4364 = vmatpush1.bf16.msra.mxu0 %v3282
        %4365 = vmatprep.subr.bf16.mxu0 %v3287
        %4366 = vmatpush1.bf16.msra.mxu0 %v3286
        %4367 = vmatprep.mubr.bf16.mxu0 %v1929
        %4368 = vmatmul.mubr.bf16.gmra.mrb[0].mxu0 %v1928
        %v4369 = vpop.f32.mrb[0].mxu0
        %v4370 = vadd.f32 %v4257, %v4369
        %v4371 = vpop.f32.mrb[0].mxu0
        %v4372 = vadd.f32 %v4259, %v4371
        %v4373 = vpop.f32.mrb[0].mxu0
        %v4374 = vadd.f32 %v4261, %v4373
        %v4375 = vpop.f32.mrb[0].mxu0
        %v4376 = vadd.f32 %v4263, %v4375
        %4377 = vmatprep.mubr.bf16.mxu0 %v1937
        %4378 = vmatmul.mubr.bf16.gmra.mrb[0].mxu0 %v1936
        %v4379 = vpop.f32.mrb[0].mxu0
        %v4380 = vadd.f32 %v4267, %v4379
        %v4381 = vpop.f32.mrb[0].mxu0
        %v4382 = vadd.f32 %v4269, %v4381
        %v4383 = vpop.f32.mrb[0].mxu0
        %v4384 = vadd.f32 %v4271, %v4383
        %v4385 = vpop.f32.mrb[0].mxu0
        %v4386 = vadd.f32 %v4273, %v4385
        %4387 = vmatprep.mubr.bf16.mxu0 %v1945
        %4388 = vmatmul.mubr.bf16.gmra.mrb[0].mxu0 %v1944
        %v4389 = vpop.f32.mrb[0].mxu0
        %v4390 = vadd.f32 %v4277, %v4389
        %v4391 = vpop.f32.mrb[0].mxu0
        %v4392 = vadd.f32 %v4279, %v4391
        %v4393 = vpop.f32.mrb[0].mxu0
        %v4394 = vadd.f32 %v4281, %v4393
        %v4395 = vpop.f32.mrb[0].mxu0
        %v4396 = vadd.f32 %v4283, %v4395
        %4397 = vmatprep.mubr.bf16.mxu0 %v1953
        %4398 = vmatmul.mubr.bf16.gmra.mrb[0].mxu0 %v1952
        %v4399 = vpop.f32.mrb[0].mxu0
        %v4400 = vadd.f32 %v4287, %v4399
        %v4401 = vpop.f32.mrb[0].mxu0
        %v4402 = vadd.f32 %v4289, %v4401
        %v4403 = vpop.f32.mrb[0].mxu0
        %v4404 = vadd.f32 %v4291, %v4403
        %v4405 = vpop.f32.mrb[0].mxu0
        %v4406 = vadd.f32 %v4293, %v4405
        %4407 = vmatprep.mubr.bf16.mxu0 %v1961
        %4408 = vmatmul.mubr.bf16.gmra.mrb[0].mxu0 %v1960
        %v4409 = vpop.f32.mrb[0].mxu0
        %v4410 = vadd.f32 %v4297, %v4409
        %v4411 = vpop.f32.mrb[0].mxu0
        %v4412 = vadd.f32 %v4299, %v4411
        %v4413 = vpop.f32.mrb[0].mxu0
        %v4414 = vadd.f32 %v4301, %v4413
        %v4415 = vpop.f32.mrb[0].mxu0
        %v4416 = vadd.f32 %v4303, %v4415
        %4417 = vmatprep.mubr.bf16.mxu0 %v1969
        %4418 = vmatmul.mubr.bf16.gmra.mrb[0].mxu0 %v1968
        %v4419 = vpop.f32.mrb[0].mxu0
        %v4420 = vadd.f32 %v4307, %v4419
        %v4421 = vpop.f32.mrb[0].mxu0
        %v4422 = vadd.f32 %v4309, %v4421
        %v4423 = vpop.f32.mrb[0].mxu0
        %v4424 = vadd.f32 %v4311, %v4423
        %v4425 = vpop.f32.mrb[0].mxu0
        %v4426 = vadd.f32 %v4313, %v4425
        %4427 = vmatprep.mubr.bf16.mxu0 %v1977
        %4428 = vmatmul.mubr.bf16.gmra.mrb[0].mxu0 %v1976
        %v4429 = vpop.f32.mrb[0].mxu0
        %v4430 = vadd.f32 %v4317, %v4429
        %v4431 = vpop.f32.mrb[0].mxu0
        %v4432 = vadd.f32 %v4319, %v4431
        %v4433 = vpop.f32.mrb[0].mxu0
        %v4434 = vadd.f32 %v4321, %v4433
        %v4435 = vpop.f32.mrb[0].mxu0
        %v4436 = vadd.f32 %v4323, %v4435
        %4437 = vmatprep.mubr.bf16.mxu0 %v1985
        %4438 = vmatmul.mubr.bf16.gmra.mrb[0].mxu0 %v1984
        %v4439 = vpop.f32.mrb[0].mxu0
        %v4440 = vadd.f32 %v4327, %v4439
        %v4441 = vpop.f32.mrb[0].mxu0
        %v4442 = vadd.f32 %v4329, %v4441
        %v4443 = vpop.f32.mrb[0].mxu0
        %v4444 = vadd.f32 %v4331, %v4443
        %v4445 = vpop.f32.mrb[0].mxu0
        %v4446 = vadd.f32 %v4333, %v4445
        %4447 = vdwg.mxu0
        %v4448 = vmul.f32 %v3918, 0.01
        %v4449 = vmul.f32 %v3920, 0.01
        %v4450 = vmul.f32 %v4370, 0.01
        %v4451 = vmul.f32 %v4372, 0.01
        %v4452 = vmul.f32 %v3922, 0.01
        %v4453 = vmul.f32 %v3924, 0.01
        %v4454 = vmul.f32 %v4374, 0.01
        %v4455 = vmul.f32 %v4376, 0.01
        %v4456 = vmul.f32 %v3928, 0.01
        %v4457 = vmul.f32 %v3930, 0.01
        %v4458 = vmul.f32 %v4380, 0.01
        %v4459 = vmul.f32 %v4382, 0.01
        %v4460 = vmul.f32 %v3932, 0.01
        %v4461 = vmul.f32 %v3934, 0.01
        %v4462 = vmul.f32 %v4384, 0.01
        %v4463 = vmul.f32 %v4386, 0.01
        %v4464 = vmul.f32 %v3938, 0.01
        %v4465 = vmul.f32 %v3940, 0.01
        %v4466 = vmul.f32 %v4390, 0.01
        %v4467 = vmul.f32 %v4392, 0.01
        %v4468 = vmul.f32 %v3942, 0.01
        %v4469 = vmul.f32 %v3944, 0.01
        %v4470 = vmul.f32 %v4394, 0.01
        %v4471 = vmul.f32 %v4396, 0.01
        %v4472 = vmul.f32 %v3948, 0.01
        %v4473 = vmul.f32 %v3950, 0.01
        %v4474 = vmul.f32 %v4400, 0.01
        %v4475 = vmul.f32 %v4402, 0.01
        %v4476 = vmul.f32 %v3952, 0.01
        %v4477 = vmul.f32 %v3954, 0.01
        %v4478 = vmul.f32 %v4404, 0.01
        %v4479 = vmul.f32 %v4406, 0.01
        %v4480 = vmul.f32 %v3958, 0.01
        %v4481 = vmul.f32 %v3960, 0.01
        %v4482 = vmul.f32 %v4410, 0.01
        %v4483 = vmul.f32 %v4412, 0.01
        %v4484 = vmul.f32 %v3962, 0.01
        %v4485 = vmul.f32 %v3964, 0.01
        %v4486 = vmul.f32 %v4414, 0.01
        %v4487 = vmul.f32 %v4416, 0.01
        %v4488 = vmul.f32 %v3968, 0.01
        %v4489 = vmul.f32 %v3970, 0.01
        %v4490 = vmul.f32 %v4420, 0.01
        %v4491 = vmul.f32 %v4422, 0.01
        %v4492 = vmul.f32 %v3972, 0.01
        %v4493 = vmul.f32 %v3974, 0.01
        %v4494 = vmul.f32 %v4424, 0.01
        %v4495 = vmul.f32 %v4426, 0.01
        %v4496 = vmul.f32 %v3978, 0.01
        %v4497 = vmul.f32 %v3980, 0.01
        %v4498 = vmul.f32 %v4430, 0.01
        %v4499 = vmul.f32 %v4432, 0.01
        %v4500 = vmul.f32 %v3982, 0.01
        %v4501 = vmul.f32 %v3984, 0.01
        %v4502 = vmul.f32 %v4434, 0.01
        %v4503 = vmul.f32 %v4436, 0.01
        %v4504 = vmul.f32 %v3988, 0.01
        %v4505 = vmul.f32 %v3990, 0.01
        %v4506 = vmul.f32 %v4440, 0.01
        %v4507 = vmul.f32 %v4442, 0.01
        %v4508 = vmul.f32 %v3992, 0.01
        %v4509 = vmul.f32 %v3994, 0.01
        %v4510 = vmul.f32 %v4444, 0.01
        %v4511 = vmul.f32 %v4446, 0.01
        %v4512 = vmax.f32 %v3918, %v4448
        %v4513 = vmax.f32 %v3920, %v4449
        %v4514 = vmax.f32 %v4370, %v4450
        %v4515 = vmax.f32 %v4372, %v4451
        %v4516 = vmax.f32 %v3922, %v4452
        %v4517 = vmax.f32 %v3924, %v4453
        %v4518 = vmax.f32 %v4374, %v4454
        %v4519 = vmax.f32 %v4376, %v4455
        %v4520 = vmax.f32 %v3928, %v4456
        %v4521 = vmax.f32 %v3930, %v4457
        %v4522 = vmax.f32 %v4380, %v4458
        %v4523 = vmax.f32 %v4382, %v4459
        %v4524 = vmax.f32 %v3932, %v4460
        %v4525 = vmax.f32 %v3934, %v4461
        %v4526 = vmax.f32 %v4384, %v4462
        %v4527 = vmax.f32 %v4386, %v4463
        %v4528 = vmax.f32 %v3938, %v4464
        %v4529 = vmax.f32 %v3940, %v4465
        %v4530 = vmax.f32 %v4390, %v4466
        %v4531 = vmax.f32 %v4392, %v4467
        %v4532 = vmax.f32 %v3942, %v4468
        %v4533 = vmax.f32 %v3944, %v4469
        %v4534 = vmax.f32 %v4394, %v4470
        %v4535 = vmax.f32 %v4396, %v4471
        %v4536 = vmax.f32 %v3948, %v4472
        %v4537 = vmax.f32 %v3950, %v4473
        %v4538 = vmax.f32 %v4400, %v4474
        %v4539 = vmax.f32 %v4402, %v4475
        %v4540 = vmax.f32 %v3952, %v4476
        %v4541 = vmax.f32 %v3954, %v4477
        %v4542 = vmax.f32 %v4404, %v4478
        %v4543 = vmax.f32 %v4406, %v4479
        %v4544 = vmax.f32 %v3958, %v4480
        %v4545 = vmax.f32 %v3960, %v4481
        %v4546 = vmax.f32 %v4410, %v4482
        %v4547 = vmax.f32 %v4412, %v4483
        %v4548 = vmax.f32 %v3962, %v4484
        %v4549 = vmax.f32 %v3964, %v4485
        %v4550 = vmax.f32 %v4414, %v4486
        %v4551 = vmax.f32 %v4416, %v4487
        %v4552 = vmax.f32 %v3968, %v4488
        %v4553 = vmax.f32 %v3970, %v4489
        %v4554 = vmax.f32 %v4420, %v4490
        %v4555 = vmax.f32 %v4422, %v4491
        %v4556 = vmax.f32 %v3972, %v4492
        %v4557 = vmax.f32 %v3974, %v4493
        %v4558 = vmax.f32 %v4424, %v4494
        %v4559 = vmax.f32 %v4426, %v4495
        %v4560 = vmax.f32 %v3978, %v4496
        %v4561 = vmax.f32 %v3980, %v4497
        %v4562 = vmax.f32 %v4430, %v4498
        %v4563 = vmax.f32 %v4432, %v4499
        %v4564 = vmax.f32 %v3982, %v4500
        %v4565 = vmax.f32 %v3984, %v4501
        %v4566 = vmax.f32 %v4434, %v4502
        %v4567 = vmax.f32 %v4436, %v4503
        %v4568 = vmax.f32 %v3988, %v4504
        %v4569 = vmax.f32 %v3990, %v4505
        %v4570 = vmax.f32 %v4440, %v4506
        %v4571 = vmax.f32 %v4442, %v4507
        %v4572 = vmax.f32 %v3992, %v4508
        %v4573 = vmax.f32 %v3994, %v4509
        %v4574 = vmax.f32 %v4444, %v4510
        %v4575 = vmax.f32 %v4446, %v4511
        %v4576 = vpack.c.bf16 %v4516, %v4512
        %v4577 = vpack.c.bf16 %v4517, %v4513
        %v4578 = vpack.c.bf16 %v4518, %v4514
        %v4579 = vpack.c.bf16 %v4519, %v4515
        %v4580 = vpack.c.bf16 %v4524, %v4520
        %v4581 = vpack.c.bf16 %v4525, %v4521
        %v4582 = vpack.c.bf16 %v4526, %v4522
        %v4583 = vpack.c.bf16 %v4527, %v4523
        %v4584 = vpack.c.bf16 %v4532, %v4528
        %v4585 = vpack.c.bf16 %v4533, %v4529
        %v4586 = vpack.c.bf16 %v4534, %v4530
        %v4587 = vpack.c.bf16 %v4535, %v4531
        %v4588 = vpack.c.bf16 %v4540, %v4536
        %v4589 = vpack.c.bf16 %v4541, %v4537
        %v4590 = vpack.c.bf16 %v4542, %v4538
        %v4591 = vpack.c.bf16 %v4543, %v4539
        %v4592 = vpack.c.bf16 %v4548, %v4544
        %v4593 = vpack.c.bf16 %v4549, %v4545
        %v4594 = vpack.c.bf16 %v4550, %v4546
        %v4595 = vpack.c.bf16 %v4551, %v4547
        %v4596 = vpack.c.bf16 %v4556, %v4552
        %v4597 = vpack.c.bf16 %v4557, %v4553
        %v4598 = vpack.c.bf16 %v4558, %v4554
        %v4599 = vpack.c.bf16 %v4559, %v4555
        %v4600 = vpack.c.bf16 %v4564, %v4560
        %v4601 = vpack.c.bf16 %v4565, %v4561
        %v4602 = vpack.c.bf16 %v4566, %v4562
        %v4603 = vpack.c.bf16 %v4567, %v4563
        %v4604 = vpack.c.bf16 %v4572, %v4568
        %v4605 = vpack.c.bf16 %v4573, %v4569
        %v4606 = vpack.c.bf16 %v4574, %v4570
        %v4607 = vpack.c.bf16 %v4575, %v4571
        %v4608 = vld [vmem:[#allocation10] sm:$0xff]
        %v4609 = vld [vmem:[#allocation10 + $0x8] sm:$0xff]
        %v4610 = vld [vmem:[#allocation10 + $0x10] sm:$0xff]
        %v4611 = vld [vmem:[#allocation10 + $0x18] sm:$0xff]
        %v4612 = vld [vmem:[#allocation10 + $0x20] sm:$0xff]
        %v4613 = vld [vmem:[#allocation10 + $0x28] sm:$0xff]
        %v4614 = vld [vmem:[#allocation10 + $0x30] sm:$0xff]
        %v4615 = vld [vmem:[#allocation10 + $0x38] sm:$0xff]
        %v4616 = vld [vmem:[#allocation10 + $0x40] sm:$0xff]
        %v4617 = vld [vmem:[#allocation10 + $0x48] sm:$0xff]
        %v4618 = vld [vmem:[#allocation10 + $0x50] sm:$0xff]
        %v4619 = vld [vmem:[#allocation10 + $0x58] sm:$0xff]
        %v4620 = vld [vmem:[#allocation10 + $0x60] sm:$0xff]
        %v4621 = vld [vmem:[#allocation10 + $0x68] sm:$0xff]
        %v4622 = vld [vmem:[#allocation10 + $0x70] sm:$0xff]
        %v4623 = vld [vmem:[#allocation10 + $0x78] sm:$0xff]
        %v4624 = vld [vmem:[#allocation10 + $0x80] sm:$0xff]
        %v4625 = vld [vmem:[#allocation10 + $0x88] sm:$0xff]
        %v4626 = vld [vmem:[#allocation10 + $0x90] sm:$0xff]
        %v4627 = vld [vmem:[#allocation10 + $0x98] sm:$0xff]
        %v4628 = vld [vmem:[#allocation10 + $0xa0] sm:$0xff]
        %v4629 = vld [vmem:[#allocation10 + $0xa8] sm:$0xff]
        %v4630 = vld [vmem:[#allocation10 + $0xb0] sm:$0xff]
        %v4631 = vld [vmem:[#allocation10 + $0xb8] sm:$0xff]
        %v4632 = vld [vmem:[#allocation10 + $0xc0] sm:$0xff]
        %v4633 = vld [vmem:[#allocation10 + $0xc8] sm:$0xff]
        %v4634 = vld [vmem:[#allocation10 + $0xd0] sm:$0xff]
        %v4635 = vld [vmem:[#allocation10 + $0xd8] sm:$0xff]
        %v4636 = vld [vmem:[#allocation10 + $0xe0] sm:$0xff]
        %v4637 = vld [vmem:[#allocation10 + $0xe8] sm:$0xff]
        %v4638 = vld [vmem:[#allocation10 + $0xf0] sm:$0xff]
        %v4639 = vld [vmem:[#allocation10 + $0xf8] sm:$0xff]
        %v4640 = vld [vmem:[#allocation10 + $0x100] sm:$0xff]
        %v4641 = vld [vmem:[#allocation10 + $0x108] sm:$0xff]
        %v4642 = vld [vmem:[#allocation10 + $0x110] sm:$0xff]
        %v4643 = vld [vmem:[#allocation10 + $0x118] sm:$0xff]
        %v4644 = vld [vmem:[#allocation10 + $0x120] sm:$0xff]
        %v4645 = vld [vmem:[#allocation10 + $0x128] sm:$0xff]
        %v4646 = vld [vmem:[#allocation10 + $0x130] sm:$0xff]
        %v4647 = vld [vmem:[#allocation10 + $0x138] sm:$0xff]
        %v4648 = vld [vmem:[#allocation10 + $0x140] sm:$0xff]
        %v4649 = vld [vmem:[#allocation10 + $0x148] sm:$0xff]
        %v4650 = vld [vmem:[#allocation10 + $0x150] sm:$0xff]
        %v4651 = vld [vmem:[#allocation10 + $0x158] sm:$0xff]
        %v4652 = vld [vmem:[#allocation10 + $0x160] sm:$0xff]
        %v4653 = vld [vmem:[#allocation10 + $0x168] sm:$0xff]
        %v4654 = vld [vmem:[#allocation10 + $0x170] sm:$0xff]
        %v4655 = vld [vmem:[#allocation10 + $0x178] sm:$0xff]
        %v4656 = vld [vmem:[#allocation10 + $0x180] sm:$0xff]
        %v4657 = vld [vmem:[#allocation10 + $0x188] sm:$0xff]
        %v4658 = vld [vmem:[#allocation10 + $0x190] sm:$0xff]
        %v4659 = vld [vmem:[#allocation10 + $0x198] sm:$0xff]
        %v4660 = vld [vmem:[#allocation10 + $0x1a0] sm:$0xff]
        %v4661 = vld [vmem:[#allocation10 + $0x1a8] sm:$0xff]
        %v4662 = vld [vmem:[#allocation10 + $0x1b0] sm:$0xff]
        %v4663 = vld [vmem:[#allocation10 + $0x1b8] sm:$0xff]
        %v4664 = vld [vmem:[#allocation10 + $0x1c0] sm:$0xff]
        %v4665 = vld [vmem:[#allocation10 + $0x1c8] sm:$0xff]
        %v4666 = vld [vmem:[#allocation10 + $0x1d0] sm:$0xff]
        %v4667 = vld [vmem:[#allocation10 + $0x1d8] sm:$0xff]
        %v4668 = vld [vmem:[#allocation10 + $0x1e0] sm:$0xff]
        %v4669 = vld [vmem:[#allocation10 + $0x1e8] sm:$0xff]
        %v4670 = vld [vmem:[#allocation10 + $0x1f0] sm:$0xff]
        %v4671 = vld [vmem:[#allocation10 + $0x1f8] sm:$0xff]
        %v4672 = vld [vmem:[%s6] sm:$0x3]
        %v4674 = vlaneseq
        %v4675 = vshrl.u32 %v4674, 7
        %v4676 = vsub.s32 0, %v4675
        %v4677 = vrot.slane %v4672, %v4676
        %v4678 = vlaneseq
        %v4679 = vshrl.u32 %v4678, 7
        %v4680 = vsub.s32 1, %v4679
        %v4681 = vrot.slane %v4672, %v4680
        %v4748 = vunpack.c.l.b16 %v4608
        %v4749 = vunpack.c.h.b16 %v4608
        %v4750 = vunpack.c.l.b16 %v4609
        %v4751 = vunpack.c.h.b16 %v4609
        %v4752 = vunpack.c.l.b16 %v4610
        %v4753 = vunpack.c.h.b16 %v4610
        %v4754 = vunpack.c.l.b16 %v4611
        %v4755 = vunpack.c.h.b16 %v4611
        %v4756 = vunpack.c.l.b16 %v4612
        %v4757 = vunpack.c.h.b16 %v4612
        %v4758 = vunpack.c.l.b16 %v4613
        %v4759 = vunpack.c.h.b16 %v4613
        %v4760 = vunpack.c.l.b16 %v4614
        %v4761 = vunpack.c.h.b16 %v4614
        %v4762 = vunpack.c.l.b16 %v4615
        %v4763 = vunpack.c.h.b16 %v4615
        %v4764 = vunpack.c.l.b16 %v4616
        %v4765 = vunpack.c.h.b16 %v4616
        %v4766 = vunpack.c.l.b16 %v4617
        %v4767 = vunpack.c.h.b16 %v4617
        %v4768 = vunpack.c.l.b16 %v4618
        %v4769 = vunpack.c.h.b16 %v4618
        %v4770 = vunpack.c.l.b16 %v4619
        %v4771 = vunpack.c.h.b16 %v4619
        %v4772 = vunpack.c.l.b16 %v4620
        %v4773 = vunpack.c.h.b16 %v4620
        %v4774 = vunpack.c.l.b16 %v4621
        %v4775 = vunpack.c.h.b16 %v4621
        %v4776 = vunpack.c.l.b16 %v4622
        %v4777 = vunpack.c.h.b16 %v4622
        %v4778 = vunpack.c.l.b16 %v4623
        %v4779 = vunpack.c.h.b16 %v4623
        %v4780 = vunpack.c.l.b16 %v4624
        %v4781 = vunpack.c.h.b16 %v4624
        %v4782 = vunpack.c.l.b16 %v4625
        %v4783 = vunpack.c.h.b16 %v4625
        %v4784 = vunpack.c.l.b16 %v4626
        %v4785 = vunpack.c.h.b16 %v4626
        %v4786 = vunpack.c.l.b16 %v4627
        %v4787 = vunpack.c.h.b16 %v4627
        %v4788 = vunpack.c.l.b16 %v4628
        %v4789 = vunpack.c.h.b16 %v4628
        %v4790 = vunpack.c.l.b16 %v4629
        %v4791 = vunpack.c.h.b16 %v4629
        %v4792 = vunpack.c.l.b16 %v4630
        %v4793 = vunpack.c.h.b16 %v4630
        %v4794 = vunpack.c.l.b16 %v4631
        %v4795 = vunpack.c.h.b16 %v4631
        %v4796 = vunpack.c.l.b16 %v4632
        %v4797 = vunpack.c.h.b16 %v4632
        %v4798 = vunpack.c.l.b16 %v4633
        %v4799 = vunpack.c.h.b16 %v4633
        %v4800 = vunpack.c.l.b16 %v4634
        %v4801 = vunpack.c.h.b16 %v4634
        %v4802 = vunpack.c.l.b16 %v4635
        %v4803 = vunpack.c.h.b16 %v4635
        %v4804 = vunpack.c.l.b16 %v4636
        %v4805 = vunpack.c.h.b16 %v4636
        %v4806 = vunpack.c.l.b16 %v4637
        %v4807 = vunpack.c.h.b16 %v4637
        %v4808 = vunpack.c.l.b16 %v4638
        %v4809 = vunpack.c.h.b16 %v4638
        %v4810 = vunpack.c.l.b16 %v4639
        %v4811 = vunpack.c.h.b16 %v4639
        %v4812 = vunpack.c.l.b16 %v4640
        %v4813 = vunpack.c.h.b16 %v4640
        %v4814 = vunpack.c.l.b16 %v4641
        %v4815 = vunpack.c.h.b16 %v4641
        %v4816 = vunpack.c.l.b16 %v4642
        %v4817 = vunpack.c.h.b16 %v4642
        %v4818 = vunpack.c.l.b16 %v4643
        %v4819 = vunpack.c.h.b16 %v4643
        %v4820 = vunpack.c.l.b16 %v4644
        %v4821 = vunpack.c.h.b16 %v4644
        %v4822 = vunpack.c.l.b16 %v4645
        %v4823 = vunpack.c.h.b16 %v4645
        %v4824 = vunpack.c.l.b16 %v4646
        %v4825 = vunpack.c.h.b16 %v4646
        %v4826 = vunpack.c.l.b16 %v4647
        %v4827 = vunpack.c.h.b16 %v4647
        %v4828 = vunpack.c.l.b16 %v4648
        %v4829 = vunpack.c.h.b16 %v4648
        %v4830 = vunpack.c.l.b16 %v4649
        %v4831 = vunpack.c.h.b16 %v4649
        %v4832 = vunpack.c.l.b16 %v4650
        %v4833 = vunpack.c.h.b16 %v4650
        %v4834 = vunpack.c.l.b16 %v4651
        %v4835 = vunpack.c.h.b16 %v4651
        %v4836 = vunpack.c.l.b16 %v4652
        %v4837 = vunpack.c.h.b16 %v4652
        %v4838 = vunpack.c.l.b16 %v4653
        %v4839 = vunpack.c.h.b16 %v4653
        %v4840 = vunpack.c.l.b16 %v4654
        %v4841 = vunpack.c.h.b16 %v4654
        %v4842 = vunpack.c.l.b16 %v4655
        %v4843 = vunpack.c.h.b16 %v4655
        %v4844 = vunpack.c.l.b16 %v4656
        %v4845 = vunpack.c.h.b16 %v4656
        %v4846 = vunpack.c.l.b16 %v4657
        %v4847 = vunpack.c.h.b16 %v4657
        %v4848 = vunpack.c.l.b16 %v4658
        %v4849 = vunpack.c.h.b16 %v4658
        %v4850 = vunpack.c.l.b16 %v4659
        %v4851 = vunpack.c.h.b16 %v4659
        %v4852 = vunpack.c.l.b16 %v4660
        %v4853 = vunpack.c.h.b16 %v4660
        %v4854 = vunpack.c.l.b16 %v4661
        %v4855 = vunpack.c.h.b16 %v4661
        %v4856 = vunpack.c.l.b16 %v4662
        %v4857 = vunpack.c.h.b16 %v4662
        %v4858 = vunpack.c.l.b16 %v4663
        %v4859 = vunpack.c.h.b16 %v4663
        %v4860 = vunpack.c.l.b16 %v4664
        %v4861 = vunpack.c.h.b16 %v4664
        %v4862 = vunpack.c.l.b16 %v4665
        %v4863 = vunpack.c.h.b16 %v4665
        %v4864 = vunpack.c.l.b16 %v4666
        %v4865 = vunpack.c.h.b16 %v4666
        %v4866 = vunpack.c.l.b16 %v4667
        %v4867 = vunpack.c.h.b16 %v4667
        %v4868 = vunpack.c.l.b16 %v4668
        %v4869 = vunpack.c.h.b16 %v4668
        %v4870 = vunpack.c.l.b16 %v4669
        %v4871 = vunpack.c.h.b16 %v4669
        %v4872 = vunpack.c.l.b16 %v4670
        %v4873 = vunpack.c.h.b16 %v4670
        %v4874 = vunpack.c.l.b16 %v4671
        %v4875 = vunpack.c.h.b16 %v4671
        %v4876 = vpack.c.b16 %v4750, %v4748
        %v4877 = vpack.c.b16 %v4751, %v4749
        %v4878 = vpack.c.b16 %v4754, %v4752
        %v4879 = vpack.c.b16 %v4755, %v4753
        %v4880 = vpack.c.b16 %v4758, %v4756
        %v4881 = vpack.c.b16 %v4759, %v4757
        %v4882 = vpack.c.b16 %v4762, %v4760
        %v4883 = vpack.c.b16 %v4763, %v4761
        %v4884 = vpack.c.b16 %v4766, %v4764
        %v4885 = vpack.c.b16 %v4767, %v4765
        %v4886 = vpack.c.b16 %v4770, %v4768
        %v4887 = vpack.c.b16 %v4771, %v4769
        %v4888 = vpack.c.b16 %v4774, %v4772
        %v4889 = vpack.c.b16 %v4775, %v4773
        %v4890 = vpack.c.b16 %v4778, %v4776
        %v4891 = vpack.c.b16 %v4779, %v4777
        %v4892 = vpack.c.b16 %v4782, %v4780
        %v4893 = vpack.c.b16 %v4783, %v4781
        %v4894 = vpack.c.b16 %v4786, %v4784
        %v4895 = vpack.c.b16 %v4787, %v4785
        %v4896 = vpack.c.b16 %v4790, %v4788
        %v4897 = vpack.c.b16 %v4791, %v4789
        %v4898 = vpack.c.b16 %v4794, %v4792
        %v4899 = vpack.c.b16 %v4795, %v4793
        %v4900 = vpack.c.b16 %v4798, %v4796
        %v4901 = vpack.c.b16 %v4799, %v4797
        %v4902 = vpack.c.b16 %v4802, %v4800
        %v4903 = vpack.c.b16 %v4803, %v4801
        %v4904 = vpack.c.b16 %v4806, %v4804
        %v4905 = vpack.c.b16 %v4807, %v4805
        %v4906 = vpack.c.b16 %v4810, %v4808
        %v4907 = vpack.c.b16 %v4811, %v4809
        %v4908 = vpack.c.b16 %v4814, %v4812
        %v4909 = vpack.c.b16 %v4815, %v4813
        %v4910 = vpack.c.b16 %v4818, %v4816
        %v4911 = vpack.c.b16 %v4819, %v4817
        %v4912 = vpack.c.b16 %v4822, %v4820
        %v4913 = vpack.c.b16 %v4823, %v4821
        %v4914 = vpack.c.b16 %v4826, %v4824
        %v4915 = vpack.c.b16 %v4827, %v4825
        %v4916 = vpack.c.b16 %v4830, %v4828
        %v4917 = vpack.c.b16 %v4831, %v4829
        %v4918 = vpack.c.b16 %v4834, %v4832
        %v4919 = vpack.c.b16 %v4835, %v4833
        %v4920 = vpack.c.b16 %v4838, %v4836
        %v4921 = vpack.c.b16 %v4839, %v4837
        %v4922 = vpack.c.b16 %v4842, %v4840
        %v4923 = vpack.c.b16 %v4843, %v4841
        %v4924 = vpack.c.b16 %v4846, %v4844
        %v4925 = vpack.c.b16 %v4847, %v4845
        %v4926 = vpack.c.b16 %v4850, %v4848
        %v4927 = vpack.c.b16 %v4851, %v4849
        %v4928 = vpack.c.b16 %v4854, %v4852
        %v4929 = vpack.c.b16 %v4855, %v4853
        %v4930 = vpack.c.b16 %v4858, %v4856
        %v4931 = vpack.c.b16 %v4859, %v4857
        %v4932 = vpack.c.b16 %v4862, %v4860
        %v4933 = vpack.c.b16 %v4863, %v4861
        %v4934 = vpack.c.b16 %v4866, %v4864
        %v4935 = vpack.c.b16 %v4867, %v4865
        %v4936 = vpack.c.b16 %v4870, %v4868
        %v4937 = vpack.c.b16 %v4871, %v4869
        %v4938 = vpack.c.b16 %v4874, %v4872
        %v4939 = vpack.c.b16 %v4875, %v4873
        %5004 = vmatprep.subr.bf16.mxu0 %v4877
        %5005 = vmatpush1.bf16.msra.mxu0 %v4876
        %5006 = vmatprep.subr.bf16.mxu0 %v4879
        %5007 = vmatpush1.bf16.msra.mxu0 %v4878
        %5008 = vmatprep.subr.bf16.mxu0 %v4881
        %5009 = vmatpush1.bf16.msra.mxu0 %v4880
        %5010 = vmatprep.subr.bf16.mxu0 %v4883
        %5011 = vmatpush1.bf16.msra.mxu0 %v4882
        %5012 = vmatprep.subr.bf16.mxu0 %v4885
        %5013 = vmatpush1.bf16.msra.mxu0 %v4884
        %5014 = vmatprep.subr.bf16.mxu0 %v4887
        %5015 = vmatpush1.bf16.msra.mxu0 %v4886
        %5016 = vmatprep.subr.bf16.mxu0 %v4889
        %5017 = vmatpush1.bf16.msra.mxu0 %v4888
        %5018 = vmatprep.subr.bf16.mxu0 %v4891
        %5019 = vmatpush1.bf16.msra.mxu0 %v4890
        %5020 = vmatprep.subr.bf16.mxu0 %v4893
        %5021 = vmatpush1.bf16.msra.mxu0 %v4892
        %5022 = vmatprep.subr.bf16.mxu0 %v4895
        %5023 = vmatpush1.bf16.msra.mxu0 %v4894
        %5024 = vmatprep.subr.bf16.mxu0 %v4897
        %5025 = vmatpush1.bf16.msra.mxu0 %v4896
        %5026 = vmatprep.subr.bf16.mxu0 %v4899
        %5027 = vmatpush1.bf16.msra.mxu0 %v4898
        %5028 = vmatprep.subr.bf16.mxu0 %v4901
        %5029 = vmatpush1.bf16.msra.mxu0 %v4900
        %5030 = vmatprep.subr.bf16.mxu0 %v4903
        %5031 = vmatpush1.bf16.msra.mxu0 %v4902
        %5032 = vmatprep.subr.bf16.mxu0 %v4905
        %5033 = vmatpush1.bf16.msra.mxu0 %v4904
        %5034 = vmatprep.subr.bf16.mxu0 %v4907
        %5035 = vmatpush1.bf16.msra.mxu0 %v4906
        %5036 = vmatprep.mubr.bf16.mxu0 %v4577
        %5037 = vmatmul.mubr.bf16.gmra.mrb[0].mxu0 %v4576
        %v5038 = vpop.f32.mrb[0].mxu0
        %v5039 = vadd.f32 %v4677, %v5038
        %v5040 = vpop.f32.mrb[0].mxu0
        %v5041 = vadd.f32 %v4681, %v5040
        %v5042 = vpop.f32.mrb[0].mxu0
        %v5043 = vadd.f32 %v4677, %v5042
        %v5044 = vpop.f32.mrb[0].mxu0
        %v5045 = vadd.f32 %v4681, %v5044
        %5046 = vmatprep.mubr.bf16.mxu0 %v4581
        %5047 = vmatmul.mubr.bf16.gmra.mrb[0].mxu0 %v4580
        %v5048 = vpop.f32.mrb[0].mxu0
        %v5049 = vadd.f32 %v4677, %v5048
        %v5050 = vpop.f32.mrb[0].mxu0
        %v5051 = vadd.f32 %v4681, %v5050
        %v5052 = vpop.f32.mrb[0].mxu0
        %v5053 = vadd.f32 %v4677, %v5052
        %v5054 = vpop.f32.mrb[0].mxu0
        %v5055 = vadd.f32 %v4681, %v5054
        %5056 = vmatprep.mubr.bf16.mxu0 %v4585
        %5057 = vmatmul.mubr.bf16.gmra.mrb[0].mxu0 %v4584
        %v5058 = vpop.f32.mrb[0].mxu0
        %v5059 = vadd.f32 %v4677, %v5058
        %v5060 = vpop.f32.mrb[0].mxu0
        %v5061 = vadd.f32 %v4681, %v5060
        %v5062 = vpop.f32.mrb[0].mxu0
        %v5063 = vadd.f32 %v4677, %v5062
        %v5064 = vpop.f32.mrb[0].mxu0
        %v5065 = vadd.f32 %v4681, %v5064
        %5066 = vmatprep.mubr.bf16.mxu0 %v4589
        %5067 = vmatmul.mubr.bf16.gmra.mrb[0].mxu0 %v4588
        %v5068 = vpop.f32.mrb[0].mxu0
        %v5069 = vadd.f32 %v4677, %v5068
        %v5070 = vpop.f32.mrb[0].mxu0
        %v5071 = vadd.f32 %v4681, %v5070
        %v5072 = vpop.f32.mrb[0].mxu0
        %v5073 = vadd.f32 %v4677, %v5072
        %v5074 = vpop.f32.mrb[0].mxu0
        %v5075 = vadd.f32 %v4681, %v5074
        %5076 = vmatprep.mubr.bf16.mxu0 %v4593
        %5077 = vmatmul.mubr.bf16.gmra.mrb[0].mxu0 %v4592
        %v5078 = vpop.f32.mrb[0].mxu0
        %v5079 = vadd.f32 %v4677, %v5078
        %v5080 = vpop.f32.mrb[0].mxu0
        %v5081 = vadd.f32 %v4681, %v5080
        %v5082 = vpop.f32.mrb[0].mxu0
        %v5083 = vadd.f32 %v4677, %v5082
        %v5084 = vpop.f32.mrb[0].mxu0
        %v5085 = vadd.f32 %v4681, %v5084
        %5086 = vmatprep.mubr.bf16.mxu0 %v4597
        %5087 = vmatmul.mubr.bf16.gmra.mrb[0].mxu0 %v4596
        %v5088 = vpop.f32.mrb[0].mxu0
        %v5089 = vadd.f32 %v4677, %v5088
        %v5090 = vpop.f32.mrb[0].mxu0
        %v5091 = vadd.f32 %v4681, %v5090
        %v5092 = vpop.f32.mrb[0].mxu0
        %v5093 = vadd.f32 %v4677, %v5092
        %v5094 = vpop.f32.mrb[0].mxu0
        %v5095 = vadd.f32 %v4681, %v5094
        %5096 = vmatprep.mubr.bf16.mxu0 %v4601
        %5097 = vmatmul.mubr.bf16.gmra.mrb[0].mxu0 %v4600
        %v5098 = vpop.f32.mrb[0].mxu0
        %v5099 = vadd.f32 %v4677, %v5098
        %v5100 = vpop.f32.mrb[0].mxu0
        %v5101 = vadd.f32 %v4681, %v5100
        %v5102 = vpop.f32.mrb[0].mxu0
        %v5103 = vadd.f32 %v4677, %v5102
        %v5104 = vpop.f32.mrb[0].mxu0
        %v5105 = vadd.f32 %v4681, %v5104
        %5106 = vmatprep.mubr.bf16.mxu0 %v4605
        %5107 = vmatmul.mubr.bf16.gmra.mrb[0].mxu0 %v4604
        %v5108 = vpop.f32.mrb[0].mxu0
        %v5109 = vadd.f32 %v4677, %v5108
        %v5110 = vpop.f32.mrb[0].mxu0
        %v5111 = vadd.f32 %v4681, %v5110
        %v5112 = vpop.f32.mrb[0].mxu0
        %v5113 = vadd.f32 %v4677, %v5112
        %v5114 = vpop.f32.mrb[0].mxu0
        %v5115 = vadd.f32 %v4681, %v5114
        %5116 = vdwg.mxu0
        %5117 = vmatprep.subr.bf16.mxu0 %v4909
        %5118 = vmatpush1.bf16.msra.mxu0 %v4908
        %5119 = vmatprep.subr.bf16.mxu0 %v4911
        %5120 = vmatpush1.bf16.msra.mxu0 %v4910
        %5121 = vmatprep.subr.bf16.mxu0 %v4913
        %5122 = vmatpush1.bf16.msra.mxu0 %v4912
        %5123 = vmatprep.subr.bf16.mxu0 %v4915
        %5124 = vmatpush1.bf16.msra.mxu0 %v4914
        %5125 = vmatprep.subr.bf16.mxu0 %v4917
        %5126 = vmatpush1.bf16.msra.mxu0 %v4916
        %5127 = vmatprep.subr.bf16.mxu0 %v4919
        %5128 = vmatpush1.bf16.msra.mxu0 %v4918
        %5129 = vmatprep.subr.bf16.mxu0 %v4921
        %5130 = vmatpush1.bf16.msra.mxu0 %v4920
        %5131 = vmatprep.subr.bf16.mxu0 %v4923
        %5132 = vmatpush1.bf16.msra.mxu0 %v4922
        %5133 = vmatprep.subr.bf16.mxu0 %v4925
        %5134 = vmatpush1.bf16.msra.mxu0 %v4924
        %5135 = vmatprep.subr.bf16.mxu0 %v4927
        %5136 = vmatpush1.bf16.msra.mxu0 %v4926
        %5137 = vmatprep.subr.bf16.mxu0 %v4929
        %5138 = vmatpush1.bf16.msra.mxu0 %v4928
        %5139 = vmatprep.subr.bf16.mxu0 %v4931
        %5140 = vmatpush1.bf16.msra.mxu0 %v4930
        %5141 = vmatprep.subr.bf16.mxu0 %v4933
        %5142 = vmatpush1.bf16.msra.mxu0 %v4932
        %5143 = vmatprep.subr.bf16.mxu0 %v4935
        %5144 = vmatpush1.bf16.msra.mxu0 %v4934
        %5145 = vmatprep.subr.bf16.mxu0 %v4937
        %5146 = vmatpush1.bf16.msra.mxu0 %v4936
        %5147 = vmatprep.subr.bf16.mxu0 %v4939
        %5148 = vmatpush1.bf16.msra.mxu0 %v4938
        %5149 = vmatprep.mubr.bf16.mxu0 %v4579
        %5150 = vmatmul.mubr.bf16.gmra.mrb[0].mxu0 %v4578
        %v5151 = vpop.f32.mrb[0].mxu0
        %v5152 = vadd.f32 %v5039, %v5151
        %v5153 = vpop.f32.mrb[0].mxu0
        %v5154 = vadd.f32 %v5041, %v5153
        %v5155 = vpop.f32.mrb[0].mxu0
        %v5156 = vadd.f32 %v5043, %v5155
        %v5157 = vpop.f32.mrb[0].mxu0
        %v5158 = vadd.f32 %v5045, %v5157
        %5159 = vmatprep.mubr.bf16.mxu0 %v4583
        %5160 = vmatmul.mubr.bf16.gmra.mrb[0].mxu0 %v4582
        %v5161 = vpop.f32.mrb[0].mxu0
        %v5162 = vadd.f32 %v5049, %v5161
        %v5163 = vpop.f32.mrb[0].mxu0
        %v5164 = vadd.f32 %v5051, %v5163
        %v5165 = vpop.f32.mrb[0].mxu0
        %v5166 = vadd.f32 %v5053, %v5165
        %v5167 = vpop.f32.mrb[0].mxu0
        %v5168 = vadd.f32 %v5055, %v5167
        %5169 = vmatprep.mubr.bf16.mxu0 %v4587
        %5170 = vmatmul.mubr.bf16.gmra.mrb[0].mxu0 %v4586
        %v5171 = vpop.f32.mrb[0].mxu0
        %v5172 = vadd.f32 %v5059, %v5171
        %v5173 = vpop.f32.mrb[0].mxu0
        %v5174 = vadd.f32 %v5061, %v5173
        %v5175 = vpop.f32.mrb[0].mxu0
        %v5176 = vadd.f32 %v5063, %v5175
        %v5177 = vpop.f32.mrb[0].mxu0
        %v5178 = vadd.f32 %v5065, %v5177
        %5179 = vmatprep.mubr.bf16.mxu0 %v4591
        %5180 = vmatmul.mubr.bf16.gmra.mrb[0].mxu0 %v4590
        %v5181 = vpop.f32.mrb[0].mxu0
        %v5182 = vadd.f32 %v5069, %v5181
        %v5183 = vpop.f32.mrb[0].mxu0
        %v5184 = vadd.f32 %v5071, %v5183
        %v5185 = vpop.f32.mrb[0].mxu0
        %v5186 = vadd.f32 %v5073, %v5185
        %v5187 = vpop.f32.mrb[0].mxu0
        %v5188 = vadd.f32 %v5075, %v5187
        %5189 = vmatprep.mubr.bf16.mxu0 %v4595
        %5190 = vmatmul.mubr.bf16.gmra.mrb[0].mxu0 %v4594
        %v5191 = vpop.f32.mrb[0].mxu0
        %v5192 = vadd.f32 %v5079, %v5191
        %v5193 = vpop.f32.mrb[0].mxu0
        %v5194 = vadd.f32 %v5081, %v5193
        %v5195 = vpop.f32.mrb[0].mxu0
        %v5196 = vadd.f32 %v5083, %v5195
        %v5197 = vpop.f32.mrb[0].mxu0
        %v5198 = vadd.f32 %v5085, %v5197
        %5199 = vmatprep.mubr.bf16.mxu0 %v4599
        %5200 = vmatmul.mubr.bf16.gmra.mrb[0].mxu0 %v4598
        %v5201 = vpop.f32.mrb[0].mxu0
        %v5202 = vadd.f32 %v5089, %v5201
        %v5203 = vpop.f32.mrb[0].mxu0
        %v5204 = vadd.f32 %v5091, %v5203
        %v5205 = vpop.f32.mrb[0].mxu0
        %v5206 = vadd.f32 %v5093, %v5205
        %v5207 = vpop.f32.mrb[0].mxu0
        %v5208 = vadd.f32 %v5095, %v5207
        %5209 = vmatprep.mubr.bf16.mxu0 %v4603
        %5210 = vmatmul.mubr.bf16.gmra.mrb[0].mxu0 %v4602
        %v5211 = vpop.f32.mrb[0].mxu0
        %v5212 = vadd.f32 %v5099, %v5211
        %v5213 = vpop.f32.mrb[0].mxu0
        %v5214 = vadd.f32 %v5101, %v5213
        %v5215 = vpop.f32.mrb[0].mxu0
        %v5216 = vadd.f32 %v5103, %v5215
        %v5217 = vpop.f32.mrb[0].mxu0
        %v5218 = vadd.f32 %v5105, %v5217
        %5219 = vmatprep.mubr.bf16.mxu0 %v4607
        %5220 = vmatmul.mubr.bf16.gmra.mrb[0].mxu0 %v4606
        %v5221 = vpop.f32.mrb[0].mxu0
        %v5222 = vadd.f32 %v5109, %v5221
        %v5223 = vpop.f32.mrb[0].mxu0
        %v5224 = vadd.f32 %v5111, %v5223
        %v5225 = vpop.f32.mrb[0].mxu0
        %v5226 = vadd.f32 %v5113, %v5225
        %v5227 = vpop.f32.mrb[0].mxu0
        %v5228 = vadd.f32 %v5115, %v5227
        %5229 = vdwg.mxu0
        %5230 = vst [vmem:[%s353] sm:$0xff] %v5152
        %5231 = vst [vmem:[%s353 + $0x8] sm:$0xff] %v5154
        %5232 = vst [vmem:[%s353 + $0x10] sm:$0xff] %v5156
        %5233 = vst [vmem:[%s353 + $0x18] sm:$0xff] %v5158
        %5234 = vst [vmem:[%s353 + $0x20] sm:$0xff] %v5162
        %5235 = vst [vmem:[%s353 + $0x28] sm:$0xff] %v5164
        %5236 = vst [vmem:[%s353 + $0x30] sm:$0xff] %v5166
        %5237 = vst [vmem:[%s353 + $0x38] sm:$0xff] %v5168
        %5238 = vst [vmem:[%s353 + $0x40] sm:$0xff] %v5172
        %5239 = vst [vmem:[%s353 + $0x48] sm:$0xff] %v5174
        %5240 = vst [vmem:[%s353 + $0x50] sm:$0xff] %v5176
        %5241 = vst [vmem:[%s353 + $0x58] sm:$0xff] %v5178
        %5242 = vst [vmem:[%s353 + $0x60] sm:$0xff] %v5182
        %5243 = vst [vmem:[%s353 + $0x68] sm:$0xff] %v5184
        %5244 = vst [vmem:[%s353 + $0x70] sm:$0xff] %v5186
        %5245 = vst [vmem:[%s353 + $0x78] sm:$0xff] %v5188
        %5246 = vst [vmem:[%s353 + $0x80] sm:$0xff] %v5192
        %5247 = vst [vmem:[%s353 + $0x88] sm:$0xff] %v5194
        %5248 = vst [vmem:[%s353 + $0x90] sm:$0xff] %v5196
        %5249 = vst [vmem:[%s353 + $0x98] sm:$0xff] %v5198
        %5250 = vst [vmem:[%s353 + $0xa0] sm:$0xff] %v5202
        %5251 = vst [vmem:[%s353 + $0xa8] sm:$0xff] %v5204
        %5252 = vst [vmem:[%s353 + $0xb0] sm:$0xff] %v5206
        %5253 = vst [vmem:[%s353 + $0xb8] sm:$0xff] %v5208
        %5254 = vst [vmem:[%s353 + $0xc0] sm:$0xff] %v5212
        %5255 = vst [vmem:[%s353 + $0xc8] sm:$0xff] %v5214
        %5256 = vst [vmem:[%s353 + $0xd0] sm:$0xff] %v5216
        %5257 = vst [vmem:[%s353 + $0xd8] sm:$0xff] %v5218
        %5258 = vst [vmem:[%s353 + $0xe0] sm:$0xff] %v5222
        %5259 = vst [vmem:[%s353 + $0xe8] sm:$0xff] %v5224
        %5260 = vst [vmem:[%s353 + $0xf0] sm:$0xff] %v5226
        %5261 = vst [vmem:[%s353 + $0xf8] sm:$0xff] %v5228
        %s5262 = sand.u32 %s186, 1
        %s5263 = scalar_lea.sflag [#allocation4], %s5262
        %s5264 = sand.u32 %s186, 1
        %s5265 = smul.addr %s5264, 256
        %s5266 = scalar_lea.vmem [#allocation11], %s5265
        // Predicated region
        $region69: #{fn.1} parent=47 // pred_check
          %p5267 = pneg %p196
        $region70: #{fn.1} parent=47 // pred_check_branch
          %5269 = sbr.rel (%p5267) target = $region72
        $region71: #{fn.1} parent=47 // pred_region
          %s5270 = smul.u32 16, %s26
          %s5272 = ssub.s32 4096, 4096
          %5273 = vsyncadd %s5263, %s5272
          %s5274 = smul.addr %s5270, 2
          %s5275 = smul.addr %s5274, 128
          %s5276 = scalar_lea.hbm %s7, %s5275
          %s5277 = sshll.u32 %s5266, 4
          %s5278 = int_to_ptr.vmem [resolvable:$true] %s5277
          %5283 = dma.vmem_to_hbm [thread:$0]  %s5278, 4096, %s5276, %s5263, 256, 256, 16
        $region72: #{fn.1} parent=47 // pred_fallthru
          _
      $region48: #{fn.1} parent=5 // pred_fallthru
        _
      %p5284 = scmp.le.s32.totalorder 2, %s21
      // Predicated region
      $region73: #{fn.1} parent=5 // pred_check
        %p5285 = pneg %p5284
      $region74: #{fn.1} parent=5 // pred_check_branch
        %5287 = sbr.rel (%p5285) target = $region76
      $region75: #{fn.1} parent=5 // pred_region
        %s5288 = ssub.s32 %s21, 2
        // Predicated region
        $region77: #{fn.1} parent=75 // pred_check
          %p5289 = pneg %p202
        $region78: #{fn.1} parent=75 // pred_check_branch
          %5291 = sbr.rel (%p5289) target = $region80
        $region79: #{fn.1} parent=75 // pred_region
          %s5292 = sand.u32 %s187, 1
          %s5293 = scalar_lea.sflag [#allocation4], %s5292
          %s5294 = sand.u32 %s187, 1
          %s5295 = smul.addr %s5294, 256
          %s5296 = scalar_lea.vmem [#allocation11], %s5295
          %5297 = dma.done %s5293, 4096
        $region80: #{fn.1} parent=75 // pred_fallthru
          _
      $region76: #{fn.1} parent=5 // pred_fallthru
        _
    $region6: #{fn.1} parent=1 // loop_footer
      %s25 = sadd.s32 1, %s21
    $region7: #{fn.1} parent=1 // loop_footer_branch
      %20 = sbr.rel target = $region3
    $region8: #{fn.1} parent=1 // loop_exit
      _
    %5298 = vsyncpa [#allocation3], 1
    %s5299 = scalar_lea.sflag [#allocation3], 1
    %5300 = vsyncpa %s5299, 1
    %5301 = vsyncpa [#allocation6], 1
    %5302 = vsyncpa [#allocation9], 1
    %5303 = vsyncpa [#allocation4], 1
    %s5304 = scalar_lea.sflag [#allocation4], 1
    %5305 = vsyncpa %s5304, 1

</llo_original>
